<compile_context>
chip_gen: v5e
topology: v5e:2x2
jax: 0.10.0
libtpu: 0.0.40
codegen_flags: <defaults>
</compile_context>

<pallas_src>
import functools

import jax
import jax.numpy as jnp
from jax import lax
from jax.experimental import pallas as pl
from jax.experimental.pallas import tpu as pltpu


def _preact_block_kernel(x_ref, s1_ref, b1_ref, w1_ref, s2_ref, b2_ref, w2_ref,
                         o_ref, a_slab, b_slab, *, H, W, Cin, P, NB, has_sc_conv):
    """One batch-block of NB images per grid step.

    x_ref  : (NB, H, W, Cin)            input images
    s1/b1  : (1, Cin) f32               folded BN1 scale / bias
    w1_ref : (9*Cin, P) bf16            conv1 3x3 weights, taps packed along K
    s2/b2  : (1, P) f32                 folded BN2 scale / bias
    w2_ref : (9*P [+ Cin], P) bf16      conv2 3x3 weights (+ 1x1 shortcut as last K block)
    o_ref  : (NB, H, W, P)              output images
    a_slab : ((H+2)*(W+2)+2, Cin) bf16  flat zero-padded relu(bn1(x))        [VMEM scratch]
    b_slab : ((H+2)*(W+2)+2, P)   bf16  flat zero-padded relu(bn2(conv1(.))) [VMEM scratch]
    """
    SW = W + 2                       # padded row width
    WIDE = H * SW                    # "wide" matmul rows (2 junk columns per image row)
    cdt = a_slab.dtype               # bf16 MXU operand dtype

    s1 = s1_ref[...]
    b1 = b1_ref[...]
    s2 = s2_ref[...]
    b2 = b2_ref[...]
    w1 = w1_ref[...]
    w2 = w2_ref[...]

    # Constant-zero regions of the flat slabs: padded top row, padded bottom row + 2 tail
    # rows (tail keeps the shifted tap views in bounds).  Left/right pad columns are written
    # together with each interior row below, so border zeroing stays O(H + W).
    a_slab[pl.ds(0, SW), :] = jnp.zeros((SW, Cin), cdt)
    a_slab[pl.ds((H + 1) * SW, SW + 2), :] = jnp.zeros((SW + 2, Cin), cdt)
    b_slab[pl.ds(0, SW), :] = jnp.zeros((SW, P), cdt)
    b_slab[pl.ds((H + 1) * SW, SW + 2), :] = jnp.zeros((SW + 2, P), cdt)

    zpad_a = jnp.zeros((1, Cin), cdt)
    zpad_b = jnp.zeros((1, P), cdt)

    for b in range(NB):
        # ---- bn1 + relu (f32), write flat padded slab A ---------------------------------
        x_im = x_ref[b].astype(jnp.float32)                        # (H, W, Cin)
        a = jnp.maximum(x_im * s1 + b1, 0.0).astype(cdt)           # relu(bn1(x)), bf16
        for i in range(H):
            a_slab[pl.ds((i + 1) * SW, SW), :] = jnp.concatenate(
                [zpad_a, a[i], zpad_a], axis=0)                    # pad cols written in-row

        # ---- conv1: single K-packed MXU matmul over contiguous tap views ----------------
        lhs1 = jnp.concatenate(
            [a_slab[pl.ds(dy * SW + dx, WIDE), :] for dy in range(3) for dx in range(3)],
            axis=-1)                                               # (WIDE, 9*Cin) bf16
        acc1 = jnp.dot(lhs1, w1, preferred_element_type=jnp.float32)   # (WIDE, P) f32

        # ---- bn2 + relu, write flat padded slab B (valid columns only) ------------------
        bact = jnp.maximum(acc1 * s2 + b2, 0.0).astype(cdt)        # (WIDE, P) bf16
        for i in range(H):
            b_slab[pl.ds((i + 1) * SW, SW), :] = jnp.concatenate(
                [zpad_b, bact[i * SW:i * SW + W, :], zpad_b], axis=0)

        # ---- conv2 (+ folded 1x1 shortcut): single K-packed MXU matmul ------------------
        taps = [b_slab[pl.ds(dy * SW + dx, WIDE), :] for dy in range(3) for dx in range(3)]
        if has_sc_conv:
            taps.append(a_slab[pl.ds(SW + 1, WIDE), :])            # center tap == 1x1 conv LHS
        lhs2 = jnp.concatenate(taps, axis=-1)                      # (WIDE, 9*P [+ Cin])
        acc2 = jnp.dot(lhs2, w2, preferred_element_type=jnp.float32)   # (WIDE, P) f32

        # ---- extract valid columns, add identity shortcut, store ------------------------
        for i in range(H):
            row = acc2[i * SW:i * SW + W, :]                       # (W, P) f32
            if not has_sc_conv:
                row = row + x_im[i]                                # identity shortcut (Cin==P)
            o_ref[b, i, :, :] = row.astype(o_ref.dtype)


def _fold_bn(gamma, beta, mean, var, eps):
    s = gamma / jnp.sqrt(var + eps)
    return s, beta - mean * s


def _pick_vmem_limit_bytes():
    phys = 64 * 1024 * 1024          # conservative fallback (v7x physical VMEM)
    try:
        phys = int(getattr(pltpu.get_tpu_info(), "vmem_capacity_bytes", phys))
    except Exception:
        pass
    return (phys * 3) // 4           # ~48 MiB on v7x, ~96 MiB on v5e / v6e


def preact_block_forward_nhwc(x, params, stride=1, compute_dtype=jnp.bfloat16,
                              out_dtype=None):
    """PreActBlock forward in NHWC. x: (N, H, W, Cin). Returns (N, H, W, P)."""
    assert stride == 1, "kernel implements stride=1 only"  # TODO(synk): strided conv
    eps = 1e-5
    N, H, W, Cin = x.shape
    P = params["w1"].shape[0]                  # torch conv weight layout: (out, in, kh, kw)
    out_dtype = x.dtype if out_dtype is None else out_dtype

    # Fold inference-mode BatchNorm into per-channel scale / bias (f32).
    s1, b1 = _fold_bn(params["bn1_gamma"], params["bn1_beta"],
                      params["bn1_mean"], params["bn1_var"], eps)
    s2, b2 = _fold_bn(params["bn2_gamma"], params["bn2_beta"],
                      params["bn2_mean"], params["bn2_var"], eps)
    s1 = s1.reshape(1, Cin).astype(jnp.float32)
    b1 = b1.reshape(1, Cin).astype(jnp.float32)
    s2 = s2.reshape(1, P).astype(jnp.float32)
    b2 = b2.reshape(1, P).astype(jnp.float32)

    # OIHW -> HWIO -> taps packed along the contraction dim, bf16 MXU operands.
    w1p = jnp.transpose(params["w1"], (2, 3, 1, 0)).reshape(9 * Cin, P).astype(compute_dtype)
    w2p = jnp.transpose(params["w2"], (2, 3, 1, 0)).reshape(9 * P, P).astype(compute_dtype)

    has_sc = (stride != 1) or (Cin != P)
    if has_sc:
        wsc = jnp.transpose(params["wsc"][:, :, 0, 0], (1, 0)).astype(compute_dtype)  # (Cin,P)
        w2p = jnp.concatenate([w2p, wsc], axis=0)      # shortcut folded as last K block
    K2 = w2p.shape[0]

    # Images per grid step: amortise per-step overhead, keep per-step blocks modest.
    NB = 1
    for d in (8, 4, 2):
        if N % d == 0:
            NB = d
            break
    while NB > 1 and NB * H * W * max(Cin, P) * 4 > 8 * 1024 * 1024:
        NB //= 2

    SW = W + 2
    SLAB = (H + 2) * SW
    WIDE = H * SW

    kernel = functools.partial(_preact_block_kernel,
                               H=H, W=W, Cin=Cin, P=P, NB=NB, has_sc_conv=has_sc)

    flops = 2 * N * WIDE * P * (9 * Cin + K2)            # MXU flops only (advisory)
    bytes_accessed = (N * H * W * Cin * x.dtype.itemsize
                      + N * H * W * P * jnp.dtype(out_dtype).itemsize
                      + int(w1p.size + w2p.size) * 2
                      + int(s1.size + b1.size + s2.size + b2.size) * 4)

    out = pl.pallas_call(
        kernel,
        out_shape=jax.ShapeDtypeStruct((N, H, W, P), out_dtype),
        grid_spec=pltpu.PrefetchScalarGridSpec(
            num_scalar_prefetch=0,
            grid=(N // NB,),                                       # NB images per grid step
            in_specs=[
                pl.BlockSpec((NB, H, W, Cin), lambda n: (n, 0, 0, 0)),   # x
                pl.BlockSpec((1, Cin), lambda n: (0, 0)),                # s1
                pl.BlockSpec((1, Cin), lambda n: (0, 0)),                # b1
                pl.BlockSpec((9 * Cin, P), lambda n: (0, 0)),            # w1 packed
                pl.BlockSpec((1, P), lambda n: (0, 0)),                  # s2
                pl.BlockSpec((1, P), lambda n: (0, 0)),                  # b2
                pl.BlockSpec((K2, P), lambda n: (0, 0)),                 # w2 packed (+ wsc)
            ],
            out_specs=pl.BlockSpec((NB, H, W, P), lambda n: (n, 0, 0, 0)),
            scratch_shapes=[
                pltpu.VMEM((SLAB + 2, Cin), compute_dtype),   # flat padded relu(bn1(x))
                pltpu.VMEM((SLAB + 2, P), compute_dtype),     # flat padded relu(bn2(conv1))
            ],
        ),
        compiler_params=pltpu.CompilerParams(
            dimension_semantics=("parallel",),                 # batch axis -> megacore
            vmem_limit_bytes=_pick_vmem_limit_bytes(),
        ),
        cost_estimate=pl.CostEstimate(flops=flops, transcendentals=0,
                                      bytes_accessed=bytes_accessed),
    )(x, s1, b1, w1p, s2, b2, w2p)
    return out


def preact_block_forward(x_nchw, params, stride=1):
    """NCHW wrapper matching the PyTorch module (the transposes are layout glue only)."""
    x = jnp.transpose(x_nchw, (0, 2, 3, 1)).astype(jnp.float32)    # NCHW -> NHWC
    out = preact_block_forward_nhwc(x, params, stride)
    return jnp.transpose(out, (0, 3, 1, 2))                        # NHWC -> NCHW


# ----------------------------- pure-JAX reference ------------------------------------
def preact_block_ref(x, params, stride=1, conv_dtype=jnp.float32):
    """Reference PreActBlock. conv_dtype=bf16 reproduces the kernel's mixed precision."""
    eps = 1e-5

    def bn(y, g, b, m, v):
        g = g[None, :, None, None]; b = b[None, :, None, None]
        m = m[None, :, None, None]; v = v[None, :, None, None]
        return (y - m) / jnp.sqrt(v + eps) * g + b

    def conv(y, w, s, p):
        return lax.conv_general_dilated(
            y.astype(conv_dtype), w.astype(conv_dtype), (s, s), [(p, p), (p, p)],
            dimension_numbers=("NCHW", "OIHW", "NCHW"),
            preferred_element_type=jnp.float32)

    out = jax.nn.relu(bn(x, params["bn1_gamma"], params["bn1_beta"],
                         params["bn1_mean"], params["bn1_var"]))
    has_sc = (stride != 1) or (x.shape[1] != params["w1"].shape[0])
    shortcut = conv(out, params["wsc"], stride, 0) if has_sc else x
    out = conv(out, params["w1"], stride, 1)
    out = jax.nn.relu(bn(out, params["bn2_gamma"], params["bn2_beta"],
                         params["bn2_mean"], params["bn2_var"]))
    out = conv(out, params["w2"], 1, 1)
    return out + shortcut


def _make_params(key, cin, p):
    ks = jax.random.split(key, 12)
    params = {
        "w1": jax.random.normal(ks[0], (p, cin, 3, 3), jnp.float32) * 0.2,
        "w2": jax.random.normal(ks[1], (p, p, 3, 3), jnp.float32) * 0.2,
        "bn1_gamma": jax.random.uniform(ks[3], (cin,), minval=0.5, maxval=1.5),
        "bn1_beta": jax.random.normal(ks[4], (cin,)) * 0.1,
        "bn1_mean": jax.random.normal(ks[5], (cin,)) * 0.1,
        "bn1_var": jax.random.uniform(ks[6], (cin,), minval=0.5, maxval=1.5),
        "bn2_gamma": jax.random.uniform(ks[7], (p,), minval=0.5, maxval=1.5),
        "bn2_beta": jax.random.normal(ks[8], (p,)) * 0.1,
        "bn2_mean": jax.random.normal(ks[9], (p,)) * 0.1,
        "bn2_var": jax.random.uniform(ks[10], (p,), minval=0.5, maxval=1.5),
    }
    if cin != p:
        params["wsc"] = jax.random.normal(ks[2], (p, cin, 1, 1), jnp.float32) * 0.3
    return params


if __name__ == "__main__":
    key = jax.random.PRNGKey(0)
    k_par, k_x, k_par2, k_x2 = jax.random.split(key, 4)

    # Case 1: projection (1x1 conv) shortcut, Cin != P.
    N, H, W, cin, p = 2, 16, 16, 4, 8
    params = _make_params(k_par, cin, p)
    x = jax.random.normal(k_x, (N, cin, H, W), jnp.float32)

    out = jax.block_until_ready(preact_block_forward(x, params))
    assert out.shape == (N, p, H, W), out.shape

    # Tight check vs. a reference using the same mixed precision (bf16 operands, f32 accum).
    ref_mixed = jax.block_until_ready(preact_block_ref(x, params, conv_dtype=jnp.bfloat16))
    assert jnp.allclose(out, ref_mixed, atol=1e-2, rtol=1e-2), \
        float(jnp.max(jnp.abs(out - ref_mixed)))
    # Loose check vs. the exact f32 module (bf16 operand rounding is the only difference).
    ref_f32 = jax.block_until_ready(preact_block_ref(x, params))
    assert jnp.allclose(out, ref_f32, atol=1e-1, rtol=1e-1), \
        float(jnp.max(jnp.abs(out - ref_f32)))

    # Case 2: identity shortcut, Cin == P.
    params2 = _make_params(k_par2, p, p)
    x2 = jax.random.normal(k_x2, (N, p, H, W), jnp.float32)
    out2 = jax.block_until_ready(preact_block_forward(x2, params2))
    ref2 = jax.block_until_ready(preact_block_ref(x2, params2, conv_dtype=jnp.bfloat16))
    assert out2.shape == (N, p, H, W), out2.shape
    assert jnp.allclose(out2, ref2, atol=1e-2, rtol=1e-2), \
        float(jnp.max(jnp.abs(out2 - ref2)))

    print("KERNEL_OK")
</pallas_src>

<mosaic_0001>
module attributes {stable_mosaic.version = 11 : i64} {
  func.func @_preact_block_kernel(%arg0: i32, %arg1: memref<2x16x16x4xf32, #tpu.memory_space<vmem>>, %arg2: memref<1x4xf32, #tpu.memory_space<vmem>>, %arg3: memref<1x4xf32, #tpu.memory_space<vmem>>, %arg4: memref<36x8xbf16, #tpu.memory_space<vmem>>, %arg5: memref<1x8xf32, #tpu.memory_space<vmem>>, %arg6: memref<1x8xf32, #tpu.memory_space<vmem>>, %arg7: memref<76x8xbf16, #tpu.memory_space<vmem>>, %arg8: memref<2x16x16x8xf32, #tpu.memory_space<vmem>>, %arg9: memref<326x4xbf16, #tpu.memory_space<vmem>>, %arg10: memref<326x8xbf16, #tpu.memory_space<vmem>>) attributes {dimension_semantics = [#tpu.dimension_semantics<parallel>], iteration_bounds = array<i64: 1>, scalar_prefetch = 0 : i64, scratch_operands = 2 : i64, tpu.core_type = #tpu.core_type<tc>, window_params = [{transform_indices = @transform_0, window_bounds = array<i64: 2, 16, 16, 4>}, {pipeline_mode = #tpu.pipeline_mode<synchronous>, transform_indices = @transform_1, window_bounds = array<i64: 1, 4>}, {pipeline_mode = #tpu.pipeline_mode<synchronous>, transform_indices = @transform_2, window_bounds = array<i64: 1, 4>}, {pipeline_mode = #tpu.pipeline_mode<synchronous>, transform_indices = @transform_3, window_bounds = array<i64: 36, 8>}, {pipeline_mode = #tpu.pipeline_mode<synchronous>, transform_indices = @transform_4, window_bounds = array<i64: 1, 8>}, {pipeline_mode = #tpu.pipeline_mode<synchronous>, transform_indices = @transform_5, window_bounds = array<i64: 1, 8>}, {pipeline_mode = #tpu.pipeline_mode<synchronous>, transform_indices = @transform_6, window_bounds = array<i64: 76, 8>}, {transform_indices = @transform_7, window_bounds = array<i64: 2, 16, 16, 8>}]} {
    %c0 = arith.constant 0 : index
    %c0_0 = arith.constant 0 : index
    %0 = vector.load %arg2[%c0, %c0_0] : memref<1x4xf32, #tpu.memory_space<vmem>>, vector<1x4xf32>
    %c0_1 = arith.constant 0 : index
    %c0_2 = arith.constant 0 : index
    %1 = vector.load %arg3[%c0_1, %c0_2] : memref<1x4xf32, #tpu.memory_space<vmem>>, vector<1x4xf32>
    %c0_3 = arith.constant 0 : index
    %c0_4 = arith.constant 0 : index
    %2 = vector.load %arg5[%c0_3, %c0_4] : memref<1x8xf32, #tpu.memory_space<vmem>>, vector<1x8xf32>
    %c0_5 = arith.constant 0 : index
    %c0_6 = arith.constant 0 : index
    %3 = vector.load %arg6[%c0_5, %c0_6] : memref<1x8xf32, #tpu.memory_space<vmem>>, vector<1x8xf32>
    %c0_7 = arith.constant 0 : index
    %c0_8 = arith.constant 0 : index
    %4 = vector.load %arg4[%c0_7, %c0_8] : memref<36x8xbf16, #tpu.memory_space<vmem>>, vector<36x8xbf16>
    %c0_9 = arith.constant 0 : index
    %c0_10 = arith.constant 0 : index
    %5 = vector.load %arg7[%c0_9, %c0_10] : memref<76x8xbf16, #tpu.memory_space<vmem>>, vector<76x8xbf16>
    %cst = arith.constant 0.000000e+00 : bf16
    %6 = vector.broadcast %cst : bf16 to vector<18x4xbf16>
    %c0_11 = arith.constant 0 : index
    %c0_12 = arith.constant 0 : index
    %7 = vector.load %arg9[%c0_11, %c0_12] : memref<326x4xbf16, #tpu.memory_space<vmem>>, vector<18x4xbf16>
    tpu.vector_store %arg9[%c0_11, %c0_12], %6 {strides = array<i32>} : memref<326x4xbf16, #tpu.memory_space<vmem>>, vector<18x4xbf16>,
    %cst_13 = arith.constant 0.000000e+00 : bf16
    %8 = vector.broadcast %cst_13 : bf16 to vector<20x4xbf16>
    %c306 = arith.constant 306 : index
    %c0_14 = arith.constant 0 : index
    %9 = vector.load %arg9[%c306, %c0_14] : memref<326x4xbf16, #tpu.memory_space<vmem>>, vector<20x4xbf16>
    tpu.vector_store %arg9[%c306, %c0_14], %8 {strides = array<i32>} : memref<326x4xbf16, #tpu.memory_space<vmem>>, vector<20x4xbf16>,
    %cst_15 = arith.constant 0.000000e+00 : bf16
    %10 = vector.broadcast %cst_15 : bf16 to vector<18x8xbf16>
    %c0_16 = arith.constant 0 : index
    %c0_17 = arith.constant 0 : index
    %11 = vector.load %arg10[%c0_16, %c0_17] : memref<326x8xbf16, #tpu.memory_space<vmem>>, vector<18x8xbf16>
    tpu.vector_store %arg10[%c0_16, %c0_17], %10 {strides = array<i32>} : memref<326x8xbf16, #tpu.memory_space<vmem>>, vector<18x8xbf16>,
    %cst_18 = arith.constant 0.000000e+00 : bf16
    %12 = vector.broadcast %cst_18 : bf16 to vector<20x8xbf16>
    %c306_19 = arith.constant 306 : index
    %c0_20 = arith.constant 0 : index
    %13 = vector.load %arg10[%c306_19, %c0_20] : memref<326x8xbf16, #tpu.memory_space<vmem>>, vector<20x8xbf16>
    tpu.vector_store %arg10[%c306_19, %c0_20], %12 {strides = array<i32>} : memref<326x8xbf16, #tpu.memory_space<vmem>>, vector<20x8xbf16>,
    %cst_21 = arith.constant 0.000000e+00 : bf16
    %14 = vector.broadcast %cst_21 : bf16 to vector<1x4xbf16>
    %cst_22 = arith.constant 0.000000e+00 : bf16
    %15 = vector.broadcast %cst_22 : bf16 to vector<1x8xbf16>
    %c0_23 = arith.constant 0 : index
    %c0_24 = arith.constant 0 : index
    %c0_25 = arith.constant 0 : index
    %c0_26 = arith.constant 0 : index
    %16 = vector.load %arg1[%c0_23, %c0_24, %c0_25, %c0_26] : memref<2x16x16x4xf32, #tpu.memory_space<vmem>>, vector<1x16x16x4xf32>
    %17 = vector.shape_cast %16 : vector<1x16x16x4xf32> to vector<16x16x4xf32>
    %18 = vector.shape_cast %0 : vector<1x4xf32> to vector<1x1x4xf32>
    %19 = vector.broadcast %18 : vector<1x1x4xf32> to vector<16x16x4xf32>
    %20 = arith.mulf %17, %19 : vector<16x16x4xf32>
    %21 = vector.shape_cast %1 : vector<1x4xf32> to vector<1x1x4xf32>
    %22 = vector.broadcast %21 : vector<1x1x4xf32> to vector<16x16x4xf32>
    %23 = arith.addf %20, %22 : vector<16x16x4xf32>
    %cst_27 = arith.constant 0.000000e+00 : f32
    %24 = vector.broadcast %cst_27 : f32 to vector<16x16x4xf32>
    %25 = arith.maximumf %23, %24 : vector<16x16x4xf32>
    %26 = arith.truncf %25 : vector<16x16x4xf32> to vector<16x16x4xbf16>
    %27 = vector.extract_strided_slice %26 {offsets = [0, 0, 0], sizes = [1, 16, 4], strides = [1, 1, 1]} : vector<16x16x4xbf16> to vector<1x16x4xbf16>
    %28 = vector.shape_cast %27 : vector<1x16x4xbf16> to vector<16x4xbf16>
    %29 = tpu.concatenate %14, %28, %14 in 0 : vector<1x4xbf16>, vector<16x4xbf16>, vector<1x4xbf16> -> vector<18x4xbf16>
    %c18 = arith.constant 18 : index
    %c0_28 = arith.constant 0 : index
    %30 = vector.load %arg9[%c18, %c0_28] : memref<326x4xbf16, #tpu.memory_space<vmem>>, vector<18x4xbf16>
    tpu.vector_store %arg9[%c18, %c0_28], %29 {strides = array<i32>} : memref<326x4xbf16, #tpu.memory_space<vmem>>, vector<18x4xbf16>,
    %31 = vector.extract_strided_slice %26 {offsets = [1, 0, 0], sizes = [1, 16, 4], strides = [1, 1, 1]} : vector<16x16x4xbf16> to vector<1x16x4xbf16>
    %32 = vector.shape_cast %31 : vector<1x16x4xbf16> to vector<16x4xbf16>
    %33 = tpu.concatenate %14, %32, %14 in 0 : vector<1x4xbf16>, vector<16x4xbf16>, vector<1x4xbf16> -> vector<18x4xbf16>
    %c36 = arith.constant 36 : index
    %c0_29 = arith.constant 0 : index
    %34 = vector.load %arg9[%c36, %c0_29] : memref<326x4xbf16, #tpu.memory_space<vmem>>, vector<18x4xbf16>
    tpu.vector_store %arg9[%c36, %c0_29], %33 {strides = array<i32>} : memref<326x4xbf16, #tpu.memory_space<vmem>>, vector<18x4xbf16>,
    %35 = vector.extract_strided_slice %26 {offsets = [2, 0, 0], sizes = [1, 16, 4], strides = [1, 1, 1]} : vector<16x16x4xbf16> to vector<1x16x4xbf16>
    %36 = vector.shape_cast %35 : vector<1x16x4xbf16> to vector<16x4xbf16>
    %37 = tpu.concatenate %14, %36, %14 in 0 : vector<1x4xbf16>, vector<16x4xbf16>, vector<1x4xbf16> -> vector<18x4xbf16>
    %c54 = arith.constant 54 : index
    %c0_30 = arith.constant 0 : index
    %38 = vector.load %arg9[%c54, %c0_30] : memref<326x4xbf16, #tpu.memory_space<vmem>>, vector<18x4xbf16>
    tpu.vector_store %arg9[%c54, %c0_30], %37 {strides = array<i32>} : memref<326x4xbf16, #tpu.memory_space<vmem>>, vector<18x4xbf16>,
    %39 = vector.extract_strided_slice %26 {offsets = [3, 0, 0], sizes = [1, 16, 4], strides = [1, 1, 1]} : vector<16x16x4xbf16> to vector<1x16x4xbf16>
    %40 = vector.shape_cast %39 : vector<1x16x4xbf16> to vector<16x4xbf16>
    %41 = tpu.concatenate %14, %40, %14 in 0 : vector<1x4xbf16>, vector<16x4xbf16>, vector<1x4xbf16> -> vector<18x4xbf16>
    %c72 = arith.constant 72 : index
    %c0_31 = arith.constant 0 : index
    %42 = vector.load %arg9[%c72, %c0_31] : memref<326x4xbf16, #tpu.memory_space<vmem>>, vector<18x4xbf16>
    tpu.vector_store %arg9[%c72, %c0_31], %41 {strides = array<i32>} : memref<326x4xbf16, #tpu.memory_space<vmem>>, vector<18x4xbf16>,
    %43 = vector.extract_strided_slice %26 {offsets = [4, 0, 0], sizes = [1, 16, 4], strides = [1, 1, 1]} : vector<16x16x4xbf16> to vector<1x16x4xbf16>
    %44 = vector.shape_cast %43 : vector<1x16x4xbf16> to vector<16x4xbf16>
    %45 = tpu.concatenate %14, %44, %14 in 0 : vector<1x4xbf16>, vector<16x4xbf16>, vector<1x4xbf16> -> vector<18x4xbf16>
    %c90 = arith.constant 90 : index
    %c0_32 = arith.constant 0 : index
    %46 = vector.load %arg9[%c90, %c0_32] : memref<326x4xbf16, #tpu.memory_space<vmem>>, vector<18x4xbf16>
    tpu.vector_store %arg9[%c90, %c0_32], %45 {strides = array<i32>} : memref<326x4xbf16, #tpu.memory_space<vmem>>, vector<18x4xbf16>,
    %47 = vector.extract_strided_slice %26 {offsets = [5, 0, 0], sizes = [1, 16, 4], strides = [1, 1, 1]} : vector<16x16x4xbf16> to vector<1x16x4xbf16>
    %48 = vector.shape_cast %47 : vector<1x16x4xbf16> to vector<16x4xbf16>
    %49 = tpu.concatenate %14, %48, %14 in 0 : vector<1x4xbf16>, vector<16x4xbf16>, vector<1x4xbf16> -> vector<18x4xbf16>
    %c108 = arith.constant 108 : index
    %c0_33 = arith.constant 0 : index
    %50 = vector.load %arg9[%c108, %c0_33] : memref<326x4xbf16, #tpu.memory_space<vmem>>, vector<18x4xbf16>
    tpu.vector_store %arg9[%c108, %c0_33], %49 {strides = array<i32>} : memref<326x4xbf16, #tpu.memory_space<vmem>>, vector<18x4xbf16>,
    %51 = vector.extract_strided_slice %26 {offsets = [6, 0, 0], sizes = [1, 16, 4], strides = [1, 1, 1]} : vector<16x16x4xbf16> to vector<1x16x4xbf16>
    %52 = vector.shape_cast %51 : vector<1x16x4xbf16> to vector<16x4xbf16>
    %53 = tpu.concatenate %14, %52, %14 in 0 : vector<1x4xbf16>, vector<16x4xbf16>, vector<1x4xbf16> -> vector<18x4xbf16>
    %c126 = arith.constant 126 : index
    %c0_34 = arith.constant 0 : index
    %54 = vector.load %arg9[%c126, %c0_34] : memref<326x4xbf16, #tpu.memory_space<vmem>>, vector<18x4xbf16>
    tpu.vector_store %arg9[%c126, %c0_34], %53 {strides = array<i32>} : memref<326x4xbf16, #tpu.memory_space<vmem>>, vector<18x4xbf16>,
    %55 = vector.extract_strided_slice %26 {offsets = [7, 0, 0], sizes = [1, 16, 4], strides = [1, 1, 1]} : vector<16x16x4xbf16> to vector<1x16x4xbf16>
    %56 = vector.shape_cast %55 : vector<1x16x4xbf16> to vector<16x4xbf16>
    %57 = tpu.concatenate %14, %56, %14 in 0 : vector<1x4xbf16>, vector<16x4xbf16>, vector<1x4xbf16> -> vector<18x4xbf16>
    %c144 = arith.constant 144 : index
    %c0_35 = arith.constant 0 : index
    %58 = vector.load %arg9[%c144, %c0_35] : memref<326x4xbf16, #tpu.memory_space<vmem>>, vector<18x4xbf16>
    tpu.vector_store %arg9[%c144, %c0_35], %57 {strides = array<i32>} : memref<326x4xbf16, #tpu.memory_space<vmem>>, vector<18x4xbf16>,
    %59 = vector.extract_strided_slice %26 {offsets = [8, 0, 0], sizes = [1, 16, 4], strides = [1, 1, 1]} : vector<16x16x4xbf16> to vector<1x16x4xbf16>
    %60 = vector.shape_cast %59 : vector<1x16x4xbf16> to vector<16x4xbf16>
    %61 = tpu.concatenate %14, %60, %14 in 0 : vector<1x4xbf16>, vector<16x4xbf16>, vector<1x4xbf16> -> vector<18x4xbf16>
    %c162 = arith.constant 162 : index
    %c0_36 = arith.constant 0 : index
    %62 = vector.load %arg9[%c162, %c0_36] : memref<326x4xbf16, #tpu.memory_space<vmem>>, vector<18x4xbf16>
    tpu.vector_store %arg9[%c162, %c0_36], %61 {strides = array<i32>} : memref<326x4xbf16, #tpu.memory_space<vmem>>, vector<18x4xbf16>,
    %63 = vector.extract_strided_slice %26 {offsets = [9, 0, 0], sizes = [1, 16, 4], strides = [1, 1, 1]} : vector<16x16x4xbf16> to vector<1x16x4xbf16>
    %64 = vector.shape_cast %63 : vector<1x16x4xbf16> to vector<16x4xbf16>
    %65 = tpu.concatenate %14, %64, %14 in 0 : vector<1x4xbf16>, vector<16x4xbf16>, vector<1x4xbf16> -> vector<18x4xbf16>
    %c180 = arith.constant 180 : index
    %c0_37 = arith.constant 0 : index
    %66 = vector.load %arg9[%c180, %c0_37] : memref<326x4xbf16, #tpu.memory_space<vmem>>, vector<18x4xbf16>
    tpu.vector_store %arg9[%c180, %c0_37], %65 {strides = array<i32>} : memref<326x4xbf16, #tpu.memory_space<vmem>>, vector<18x4xbf16>,
    %67 = vector.extract_strided_slice %26 {offsets = [10, 0, 0], sizes = [1, 16, 4], strides = [1, 1, 1]} : vector<16x16x4xbf16> to vector<1x16x4xbf16>
    %68 = vector.shape_cast %67 : vector<1x16x4xbf16> to vector<16x4xbf16>
    %69 = tpu.concatenate %14, %68, %14 in 0 : vector<1x4xbf16>, vector<16x4xbf16>, vector<1x4xbf16> -> vector<18x4xbf16>
    %c198 = arith.constant 198 : index
    %c0_38 = arith.constant 0 : index
    %70 = vector.load %arg9[%c198, %c0_38] : memref<326x4xbf16, #tpu.memory_space<vmem>>, vector<18x4xbf16>
    tpu.vector_store %arg9[%c198, %c0_38], %69 {strides = array<i32>} : memref<326x4xbf16, #tpu.memory_space<vmem>>, vector<18x4xbf16>,
    %71 = vector.extract_strided_slice %26 {offsets = [11, 0, 0], sizes = [1, 16, 4], strides = [1, 1, 1]} : vector<16x16x4xbf16> to vector<1x16x4xbf16>
    %72 = vector.shape_cast %71 : vector<1x16x4xbf16> to vector<16x4xbf16>
    %73 = tpu.concatenate %14, %72, %14 in 0 : vector<1x4xbf16>, vector<16x4xbf16>, vector<1x4xbf16> -> vector<18x4xbf16>
    %c216 = arith.constant 216 : index
    %c0_39 = arith.constant 0 : index
    %74 = vector.load %arg9[%c216, %c0_39] : memref<326x4xbf16, #tpu.memory_space<vmem>>, vector<18x4xbf16>
    tpu.vector_store %arg9[%c216, %c0_39], %73 {strides = array<i32>} : memref<326x4xbf16, #tpu.memory_space<vmem>>, vector<18x4xbf16>,
    %75 = vector.extract_strided_slice %26 {offsets = [12, 0, 0], sizes = [1, 16, 4], strides = [1, 1, 1]} : vector<16x16x4xbf16> to vector<1x16x4xbf16>
    %76 = vector.shape_cast %75 : vector<1x16x4xbf16> to vector<16x4xbf16>
    %77 = tpu.concatenate %14, %76, %14 in 0 : vector<1x4xbf16>, vector<16x4xbf16>, vector<1x4xbf16> -> vector<18x4xbf16>
    %c234 = arith.constant 234 : index
    %c0_40 = arith.constant 0 : index
    %78 = vector.load %arg9[%c234, %c0_40] : memref<326x4xbf16, #tpu.memory_space<vmem>>, vector<18x4xbf16>
    tpu.vector_store %arg9[%c234, %c0_40], %77 {strides = array<i32>} : memref<326x4xbf16, #tpu.memory_space<vmem>>, vector<18x4xbf16>,
    %79 = vector.extract_strided_slice %26 {offsets = [13, 0, 0], sizes = [1, 16, 4], strides = [1, 1, 1]} : vector<16x16x4xbf16> to vector<1x16x4xbf16>
    %80 = vector.shape_cast %79 : vector<1x16x4xbf16> to vector<16x4xbf16>
    %81 = tpu.concatenate %14, %80, %14 in 0 : vector<1x4xbf16>, vector<16x4xbf16>, vector<1x4xbf16> -> vector<18x4xbf16>
    %c252 = arith.constant 252 : index
    %c0_41 = arith.constant 0 : index
    %82 = vector.load %arg9[%c252, %c0_41] : memref<326x4xbf16, #tpu.memory_space<vmem>>, vector<18x4xbf16>
    tpu.vector_store %arg9[%c252, %c0_41], %81 {strides = array<i32>} : memref<326x4xbf16, #tpu.memory_space<vmem>>, vector<18x4xbf16>,
    %83 = vector.extract_strided_slice %26 {offsets = [14, 0, 0], sizes = [1, 16, 4], strides = [1, 1, 1]} : vector<16x16x4xbf16> to vector<1x16x4xbf16>
    %84 = vector.shape_cast %83 : vector<1x16x4xbf16> to vector<16x4xbf16>
    %85 = tpu.concatenate %14, %84, %14 in 0 : vector<1x4xbf16>, vector<16x4xbf16>, vector<1x4xbf16> -> vector<18x4xbf16>
    %c270 = arith.constant 270 : index
    %c0_42 = arith.constant 0 : index
    %86 = vector.load %arg9[%c270, %c0_42] : memref<326x4xbf16, #tpu.memory_space<vmem>>, vector<18x4xbf16>
    tpu.vector_store %arg9[%c270, %c0_42], %85 {strides = array<i32>} : memref<326x4xbf16, #tpu.memory_space<vmem>>, vector<18x4xbf16>,
    %87 = vector.extract_strided_slice %26 {offsets = [15, 0, 0], sizes = [1, 16, 4], strides = [1, 1, 1]} : vector<16x16x4xbf16> to vector<1x16x4xbf16>
    %88 = vector.shape_cast %87 : vector<1x16x4xbf16> to vector<16x4xbf16>
    %89 = tpu.concatenate %14, %88, %14 in 0 : vector<1x4xbf16>, vector<16x4xbf16>, vector<1x4xbf16> -> vector<18x4xbf16>
    %c288 = arith.constant 288 : index
    %c0_43 = arith.constant 0 : index
    %90 = vector.load %arg9[%c288, %c0_43] : memref<326x4xbf16, #tpu.memory_space<vmem>>, vector<18x4xbf16>
    tpu.vector_store %arg9[%c288, %c0_43], %89 {strides = array<i32>} : memref<326x4xbf16, #tpu.memory_space<vmem>>, vector<18x4xbf16>,
    %c0_44 = arith.constant 0 : index
    %c0_45 = arith.constant 0 : index
    %91 = vector.load %arg9[%c0_44, %c0_45] : memref<326x4xbf16, #tpu.memory_space<vmem>>, vector<288x4xbf16>
    %c1 = arith.constant 1 : index
    %c0_46 = arith.constant 0 : index
    %92 = vector.load %arg9[%c1, %c0_46] : memref<326x4xbf16, #tpu.memory_space<vmem>>, vector<288x4xbf16>
    %c2 = arith.constant 2 : index
    %c0_47 = arith.constant 0 : index
    %93 = vector.load %arg9[%c2, %c0_47] : memref<326x4xbf16, #tpu.memory_space<vmem>>, vector<288x4xbf16>
    %c18_48 = arith.constant 18 : index
    %c0_49 = arith.constant 0 : index
    %94 = vector.load %arg9[%c18_48, %c0_49] : memref<326x4xbf16, #tpu.memory_space<vmem>>, vector<288x4xbf16>
    %c19 = arith.constant 19 : index
    %c0_50 = arith.constant 0 : index
    %95 = vector.load %arg9[%c19, %c0_50] : memref<326x4xbf16, #tpu.memory_space<vmem>>, vector<288x4xbf16>
    %c20 = arith.constant 20 : index
    %c0_51 = arith.constant 0 : index
    %96 = vector.load %arg9[%c20, %c0_51] : memref<326x4xbf16, #tpu.memory_space<vmem>>, vector<288x4xbf16>
    %c36_52 = arith.constant 36 : index
    %c0_53 = arith.constant 0 : index
    %97 = vector.load %arg9[%c36_52, %c0_53] : memref<326x4xbf16, #tpu.memory_space<vmem>>, vector<288x4xbf16>
    %c37 = arith.constant 37 : index
    %c0_54 = arith.constant 0 : index
    %98 = vector.load %arg9[%c37, %c0_54] : memref<326x4xbf16, #tpu.memory_space<vmem>>, vector<288x4xbf16>
    %c38 = arith.constant 38 : index
    %c0_55 = arith.constant 0 : index
    %99 = vector.load %arg9[%c38, %c0_55] : memref<326x4xbf16, #tpu.memory_space<vmem>>, vector<288x4xbf16>
    %100 = tpu.concatenate %91, %92, %93, %94, %95, %96, %97, %98, %99 in 1 : vector<288x4xbf16>, vector<288x4xbf16>, vector<288x4xbf16>, vector<288x4xbf16>, vector<288x4xbf16>, vector<288x4xbf16>, vector<288x4xbf16>, vector<288x4xbf16>, vector<288x4xbf16> -> vector<288x36xbf16>
    %cst_56 = arith.constant dense<0.000000e+00> : vector<288x8xf32>
    %101 = tpu.matmul %100, %4, %cst_56 {dimension_numbers = #tpu.dot_dimension_numbers<[1], [0], [0], [1], [0, 0, 1, 1], [], []>} : vector<288x36xbf16>, vector<36x8xbf16>, vector<288x8xf32> -> vector<288x8xf32>
    %102 = vector.broadcast %2 : vector<1x8xf32> to vector<288x8xf32>
    %103 = arith.mulf %101, %102 : vector<288x8xf32>
    %104 = vector.broadcast %3 : vector<1x8xf32> to vector<288x8xf32>
    %105 = arith.addf %103, %104 : vector<288x8xf32>
    %cst_57 = arith.constant 0.000000e+00 : f32
    %106 = vector.broadcast %cst_57 : f32 to vector<288x8xf32>
    %107 = arith.maximumf %105, %106 : vector<288x8xf32>
    %108 = arith.truncf %107 : vector<288x8xf32> to vector<288x8xbf16>
    %109 = vector.extract_strided_slice %108 {offsets = [0, 0], sizes = [16, 8], strides = [1, 1]} : vector<288x8xbf16> to vector<16x8xbf16>
    %110 = tpu.concatenate %15, %109, %15 in 0 : vector<1x8xbf16>, vector<16x8xbf16>, vector<1x8xbf16> -> vector<18x8xbf16>
    %c18_58 = arith.constant 18 : index
    %c0_59 = arith.constant 0 : index
    %111 = vector.load %arg10[%c18_58, %c0_59] : memref<326x8xbf16, #tpu.memory_space<vmem>>, vector<18x8xbf16>
    tpu.vector_store %arg10[%c18_58, %c0_59], %110 {strides = array<i32>} : memref<326x8xbf16, #tpu.memory_space<vmem>>, vector<18x8xbf16>,
    %112 = vector.extract_strided_slice %108 {offsets = [18, 0], sizes = [16, 8], strides = [1, 1]} : vector<288x8xbf16> to vector<16x8xbf16>
    %113 = tpu.concatenate %15, %112, %15 in 0 : vector<1x8xbf16>, vector<16x8xbf16>, vector<1x8xbf16> -> vector<18x8xbf16>
    %c36_60 = arith.constant 36 : index
    %c0_61 = arith.constant 0 : index
    %114 = vector.load %arg10[%c36_60, %c0_61] : memref<326x8xbf16, #tpu.memory_space<vmem>>, vector<18x8xbf16>
    tpu.vector_store %arg10[%c36_60, %c0_61], %113 {strides = array<i32>} : memref<326x8xbf16, #tpu.memory_space<vmem>>, vector<18x8xbf16>,
    %115 = vector.extract_strided_slice %108 {offsets = [36, 0], sizes = [16, 8], strides = [1, 1]} : vector<288x8xbf16> to vector<16x8xbf16>
    %116 = tpu.concatenate %15, %115, %15 in 0 : vector<1x8xbf16>, vector<16x8xbf16>, vector<1x8xbf16> -> vector<18x8xbf16>
    %c54_62 = arith.constant 54 : index
    %c0_63 = arith.constant 0 : index
    %117 = vector.load %arg10[%c54_62, %c0_63] : memref<326x8xbf16, #tpu.memory_space<vmem>>, vector<18x8xbf16>
    tpu.vector_store %arg10[%c54_62, %c0_63], %116 {strides = array<i32>} : memref<326x8xbf16, #tpu.memory_space<vmem>>, vector<18x8xbf16>,
    %118 = vector.extract_strided_slice %108 {offsets = [54, 0], sizes = [16, 8], strides = [1, 1]} : vector<288x8xbf16> to vector<16x8xbf16>
    %119 = tpu.concatenate %15, %118, %15 in 0 : vector<1x8xbf16>, vector<16x8xbf16>, vector<1x8xbf16> -> vector<18x8xbf16>
    %c72_64 = arith.constant 72 : index
    %c0_65 = arith.constant 0 : index
    %120 = vector.load %arg10[%c72_64, %c0_65] : memref<326x8xbf16, #tpu.memory_space<vmem>>, vector<18x8xbf16>
    tpu.vector_store %arg10[%c72_64, %c0_65], %119 {strides = array<i32>} : memref<326x8xbf16, #tpu.memory_space<vmem>>, vector<18x8xbf16>,
    %121 = vector.extract_strided_slice %108 {offsets = [72, 0], sizes = [16, 8], strides = [1, 1]} : vector<288x8xbf16> to vector<16x8xbf16>
    %122 = tpu.concatenate %15, %121, %15 in 0 : vector<1x8xbf16>, vector<16x8xbf16>, vector<1x8xbf16> -> vector<18x8xbf16>
    %c90_66 = arith.constant 90 : index
    %c0_67 = arith.constant 0 : index
    %123 = vector.load %arg10[%c90_66, %c0_67] : memref<326x8xbf16, #tpu.memory_space<vmem>>, vector<18x8xbf16>
    tpu.vector_store %arg10[%c90_66, %c0_67], %122 {strides = array<i32>} : memref<326x8xbf16, #tpu.memory_space<vmem>>, vector<18x8xbf16>,
    %124 = vector.extract_strided_slice %108 {offsets = [90, 0], sizes = [16, 8], strides = [1, 1]} : vector<288x8xbf16> to vector<16x8xbf16>
    %125 = tpu.concatenate %15, %124, %15 in 0 : vector<1x8xbf16>, vector<16x8xbf16>, vector<1x8xbf16> -> vector<18x8xbf16>
    %c108_68 = arith.constant 108 : index
    %c0_69 = arith.constant 0 : index
    %126 = vector.load %arg10[%c108_68, %c0_69] : memref<326x8xbf16, #tpu.memory_space<vmem>>, vector<18x8xbf16>
    tpu.vector_store %arg10[%c108_68, %c0_69], %125 {strides = array<i32>} : memref<326x8xbf16, #tpu.memory_space<vmem>>, vector<18x8xbf16>,
    %127 = vector.extract_strided_slice %108 {offsets = [108, 0], sizes = [16, 8], strides = [1, 1]} : vector<288x8xbf16> to vector<16x8xbf16>
    %128 = tpu.concatenate %15, %127, %15 in 0 : vector<1x8xbf16>, vector<16x8xbf16>, vector<1x8xbf16> -> vector<18x8xbf16>
    %c126_70 = arith.constant 126 : index
    %c0_71 = arith.constant 0 : index
    %129 = vector.load %arg10[%c126_70, %c0_71] : memref<326x8xbf16, #tpu.memory_space<vmem>>, vector<18x8xbf16>
    tpu.vector_store %arg10[%c126_70, %c0_71], %128 {strides = array<i32>} : memref<326x8xbf16, #tpu.memory_space<vmem>>, vector<18x8xbf16>,
    %130 = vector.extract_strided_slice %108 {offsets = [126, 0], sizes = [16, 8], strides = [1, 1]} : vector<288x8xbf16> to vector<16x8xbf16>
    %131 = tpu.concatenate %15, %130, %15 in 0 : vector<1x8xbf16>, vector<16x8xbf16>, vector<1x8xbf16> -> vector<18x8xbf16>
    %c144_72 = arith.constant 144 : index
    %c0_73 = arith.constant 0 : index
    %132 = vector.load %arg10[%c144_72, %c0_73] : memref<326x8xbf16, #tpu.memory_space<vmem>>, vector<18x8xbf16>
    tpu.vector_store %arg10[%c144_72, %c0_73], %131 {strides = array<i32>} : memref<326x8xbf16, #tpu.memory_space<vmem>>, vector<18x8xbf16>,
    %133 = vector.extract_strided_slice %108 {offsets = [144, 0], sizes = [16, 8], strides = [1, 1]} : vector<288x8xbf16> to vector<16x8xbf16>
    %134 = tpu.concatenate %15, %133, %15 in 0 : vector<1x8xbf16>, vector<16x8xbf16>, vector<1x8xbf16> -> vector<18x8xbf16>
    %c162_74 = arith.constant 162 : index
    %c0_75 = arith.constant 0 : index
    %135 = vector.load %arg10[%c162_74, %c0_75] : memref<326x8xbf16, #tpu.memory_space<vmem>>, vector<18x8xbf16>
    tpu.vector_store %arg10[%c162_74, %c0_75], %134 {strides = array<i32>} : memref<326x8xbf16, #tpu.memory_space<vmem>>, vector<18x8xbf16>,
    %136 = vector.extract_strided_slice %108 {offsets = [162, 0], sizes = [16, 8], strides = [1, 1]} : vector<288x8xbf16> to vector<16x8xbf16>
    %137 = tpu.concatenate %15, %136, %15 in 0 : vector<1x8xbf16>, vector<16x8xbf16>, vector<1x8xbf16> -> vector<18x8xbf16>
    %c180_76 = arith.constant 180 : index
    %c0_77 = arith.constant 0 : index
    %138 = vector.load %arg10[%c180_76, %c0_77] : memref<326x8xbf16, #tpu.memory_space<vmem>>, vector<18x8xbf16>
    tpu.vector_store %arg10[%c180_76, %c0_77], %137 {strides = array<i32>} : memref<326x8xbf16, #tpu.memory_space<vmem>>, vector<18x8xbf16>,
    %139 = vector.extract_strided_slice %108 {offsets = [180, 0], sizes = [16, 8], strides = [1, 1]} : vector<288x8xbf16> to vector<16x8xbf16>
    %140 = tpu.concatenate %15, %139, %15 in 0 : vector<1x8xbf16>, vector<16x8xbf16>, vector<1x8xbf16> -> vector<18x8xbf16>
    %c198_78 = arith.constant 198 : index
    %c0_79 = arith.constant 0 : index
    %141 = vector.load %arg10[%c198_78, %c0_79] : memref<326x8xbf16, #tpu.memory_space<vmem>>, vector<18x8xbf16>
    tpu.vector_store %arg10[%c198_78, %c0_79], %140 {strides = array<i32>} : memref<326x8xbf16, #tpu.memory_space<vmem>>, vector<18x8xbf16>,
    %142 = vector.extract_strided_slice %108 {offsets = [198, 0], sizes = [16, 8], strides = [1, 1]} : vector<288x8xbf16> to vector<16x8xbf16>
    %143 = tpu.concatenate %15, %142, %15 in 0 : vector<1x8xbf16>, vector<16x8xbf16>, vector<1x8xbf16> -> vector<18x8xbf16>
    %c216_80 = arith.constant 216 : index
    %c0_81 = arith.constant 0 : index
    %144 = vector.load %arg10[%c216_80, %c0_81] : memref<326x8xbf16, #tpu.memory_space<vmem>>, vector<18x8xbf16>
    tpu.vector_store %arg10[%c216_80, %c0_81], %143 {strides = array<i32>} : memref<326x8xbf16, #tpu.memory_space<vmem>>, vector<18x8xbf16>,
    %145 = vector.extract_strided_slice %108 {offsets = [216, 0], sizes = [16, 8], strides = [1, 1]} : vector<288x8xbf16> to vector<16x8xbf16>
    %146 = tpu.concatenate %15, %145, %15 in 0 : vector<1x8xbf16>, vector<16x8xbf16>, vector<1x8xbf16> -> vector<18x8xbf16>
    %c234_82 = arith.constant 234 : index
    %c0_83 = arith.constant 0 : index
    %147 = vector.load %arg10[%c234_82, %c0_83] : memref<326x8xbf16, #tpu.memory_space<vmem>>, vector<18x8xbf16>
    tpu.vector_store %arg10[%c234_82, %c0_83], %146 {strides = array<i32>} : memref<326x8xbf16, #tpu.memory_space<vmem>>, vector<18x8xbf16>,
    %148 = vector.extract_strided_slice %108 {offsets = [234, 0], sizes = [16, 8], strides = [1, 1]} : vector<288x8xbf16> to vector<16x8xbf16>
    %149 = tpu.concatenate %15, %148, %15 in 0 : vector<1x8xbf16>, vector<16x8xbf16>, vector<1x8xbf16> -> vector<18x8xbf16>
    %c252_84 = arith.constant 252 : index
    %c0_85 = arith.constant 0 : index
    %150 = vector.load %arg10[%c252_84, %c0_85] : memref<326x8xbf16, #tpu.memory_space<vmem>>, vector<18x8xbf16>
    tpu.vector_store %arg10[%c252_84, %c0_85], %149 {strides = array<i32>} : memref<326x8xbf16, #tpu.memory_space<vmem>>, vector<18x8xbf16>,
    %151 = vector.extract_strided_slice %108 {offsets = [252, 0], sizes = [16, 8], strides = [1, 1]} : vector<288x8xbf16> to vector<16x8xbf16>
    %152 = tpu.concatenate %15, %151, %15 in 0 : vector<1x8xbf16>, vector<16x8xbf16>, vector<1x8xbf16> -> vector<18x8xbf16>
    %c270_86 = arith.constant 270 : index
    %c0_87 = arith.constant 0 : index
    %153 = vector.load %arg10[%c270_86, %c0_87] : memref<326x8xbf16, #tpu.memory_space<vmem>>, vector<18x8xbf16>
    tpu.vector_store %arg10[%c270_86, %c0_87], %152 {strides = array<i32>} : memref<326x8xbf16, #tpu.memory_space<vmem>>, vector<18x8xbf16>,
    %154 = vector.extract_strided_slice %108 {offsets = [270, 0], sizes = [16, 8], strides = [1, 1]} : vector<288x8xbf16> to vector<16x8xbf16>
    %155 = tpu.concatenate %15, %154, %15 in 0 : vector<1x8xbf16>, vector<16x8xbf16>, vector<1x8xbf16> -> vector<18x8xbf16>
    %c288_88 = arith.constant 288 : index
    %c0_89 = arith.constant 0 : index
    %156 = vector.load %arg10[%c288_88, %c0_89] : memref<326x8xbf16, #tpu.memory_space<vmem>>, vector<18x8xbf16>
    tpu.vector_store %arg10[%c288_88, %c0_89], %155 {strides = array<i32>} : memref<326x8xbf16, #tpu.memory_space<vmem>>, vector<18x8xbf16>,
    %c0_90 = arith.constant 0 : index
    %c0_91 = arith.constant 0 : index
    %157 = vector.load %arg10[%c0_90, %c0_91] : memref<326x8xbf16, #tpu.memory_space<vmem>>, vector<288x8xbf16>
    %c1_92 = arith.constant 1 : index
    %c0_93 = arith.constant 0 : index
    %158 = vector.load %arg10[%c1_92, %c0_93] : memref<326x8xbf16, #tpu.memory_space<vmem>>, vector<288x8xbf16>
    %c2_94 = arith.constant 2 : index
    %c0_95 = arith.constant 0 : index
    %159 = vector.load %arg10[%c2_94, %c0_95] : memref<326x8xbf16, #tpu.memory_space<vmem>>, vector<288x8xbf16>
    %c18_96 = arith.constant 18 : index
    %c0_97 = arith.constant 0 : index
    %160 = vector.load %arg10[%c18_96, %c0_97] : memref<326x8xbf16, #tpu.memory_space<vmem>>, vector<288x8xbf16>
    %c19_98 = arith.constant 19 : index
    %c0_99 = arith.constant 0 : index
    %161 = vector.load %arg10[%c19_98, %c0_99] : memref<326x8xbf16, #tpu.memory_space<vmem>>, vector<288x8xbf16>
    %c20_100 = arith.constant 20 : index
    %c0_101 = arith.constant 0 : index
    %162 = vector.load %arg10[%c20_100, %c0_101] : memref<326x8xbf16, #tpu.memory_space<vmem>>, vector<288x8xbf16>
    %c36_102 = arith.constant 36 : index
    %c0_103 = arith.constant 0 : index
    %163 = vector.load %arg10[%c36_102, %c0_103] : memref<326x8xbf16, #tpu.memory_space<vmem>>, vector<288x8xbf16>
    %c37_104 = arith.constant 37 : index
    %c0_105 = arith.constant 0 : index
    %164 = vector.load %arg10[%c37_104, %c0_105] : memref<326x8xbf16, #tpu.memory_space<vmem>>, vector<288x8xbf16>
    %c38_106 = arith.constant 38 : index
    %c0_107 = arith.constant 0 : index
    %165 = vector.load %arg10[%c38_106, %c0_107] : memref<326x8xbf16, #tpu.memory_space<vmem>>, vector<288x8xbf16>
    %c19_108 = arith.constant 19 : index
    %c0_109 = arith.constant 0 : index
    %166 = vector.load %arg9[%c19_108, %c0_109] : memref<326x4xbf16, #tpu.memory_space<vmem>>, vector<288x4xbf16>
    %167 = tpu.concatenate %157, %158, %159, %160, %161, %162, %163, %164, %165, %166 in 1 : vector<288x8xbf16>, vector<288x8xbf16>, vector<288x8xbf16>, vector<288x8xbf16>, vector<288x8xbf16>, vector<288x8xbf16>, vector<288x8xbf16>, vector<288x8xbf16>, vector<288x8xbf16>, vector<288x4xbf16> -> vector<288x76xbf16>
    %cst_110 = arith.constant dense<0.000000e+00> : vector<288x8xf32>
    %168 = tpu.matmul %167, %5, %cst_110 {dimension_numbers = #tpu.dot_dimension_numbers<[1], [0], [0], [1], [0, 0, 1, 1], [], []>} : vector<288x76xbf16>, vector<76x8xbf16>, vector<288x8xf32> -> vector<288x8xf32>
    %169 = vector.extract_strided_slice %168 {offsets = [0, 0], sizes = [16, 8], strides = [1, 1]} : vector<288x8xf32> to vector<16x8xf32>
    %c0_111 = arith.constant 0 : index
    %c0_112 = arith.constant 0 : index
    %c0_113 = arith.constant 0 : index
    %c0_114 = arith.constant 0 : index
    %170 = vector.load %arg8[%c0_111, %c0_112, %c0_113, %c0_114] : memref<2x16x16x8xf32, #tpu.memory_space<vmem>>, vector<1x1x16x8xf32>
    %171 = vector.shape_cast %170 : vector<1x1x16x8xf32> to vector<16x8xf32>
    %172 = vector.shape_cast %169 : vector<16x8xf32> to vector<1x1x16x8xf32>
    tpu.vector_store %arg8[%c0_111, %c0_112, %c0_113, %c0_114], %172 {strides = array<i32>} : memref<2x16x16x8xf32, #tpu.memory_space<vmem>>, vector<1x1x16x8xf32>,
    %173 = vector.extract_strided_slice %168 {offsets = [18, 0], sizes = [16, 8], strides = [1, 1]} : vector<288x8xf32> to vector<16x8xf32>
    %c0_115 = arith.constant 0 : index
    %c1_116 = arith.constant 1 : index
    %c0_117 = arith.constant 0 : index
    %c0_118 = arith.constant 0 : index
    %174 = vector.load %arg8[%c0_115, %c1_116, %c0_117, %c0_118] : memref<2x16x16x8xf32, #tpu.memory_space<vmem>>, vector<1x1x16x8xf32>
    %175 = vector.shape_cast %174 : vector<1x1x16x8xf32> to vector<16x8xf32>
    %176 = vector.shape_cast %173 : vector<16x8xf32> to vector<1x1x16x8xf32>
    tpu.vector_store %arg8[%c0_115, %c1_116, %c0_117, %c0_118], %176 {strides = array<i32>} : memref<2x16x16x8xf32, #tpu.memory_space<vmem>>, vector<1x1x16x8xf32>,
    %177 = vector.extract_strided_slice %168 {offsets = [36, 0], sizes = [16, 8], strides = [1, 1]} : vector<288x8xf32> to vector<16x8xf32>
    %c0_119 = arith.constant 0 : index
    %c2_120 = arith.constant 2 : index
    %c0_121 = arith.constant 0 : index
    %c0_122 = arith.constant 0 : index
    %178 = vector.load %arg8[%c0_119, %c2_120, %c0_121, %c0_122] : memref<2x16x16x8xf32, #tpu.memory_space<vmem>>, vector<1x1x16x8xf32>
    %179 = vector.shape_cast %178 : vector<1x1x16x8xf32> to vector<16x8xf32>
    %180 = vector.shape_cast %177 : vector<16x8xf32> to vector<1x1x16x8xf32>
    tpu.vector_store %arg8[%c0_119, %c2_120, %c0_121, %c0_122], %180 {strides = array<i32>} : memref<2x16x16x8xf32, #tpu.memory_space<vmem>>, vector<1x1x16x8xf32>,
    %181 = vector.extract_strided_slice %168 {offsets = [54, 0], sizes = [16, 8], strides = [1, 1]} : vector<288x8xf32> to vector<16x8xf32>
    %c0_123 = arith.constant 0 : index
    %c3 = arith.constant 3 : index
    %c0_124 = arith.constant 0 : index
    %c0_125 = arith.constant 0 : index
    %182 = vector.load %arg8[%c0_123, %c3, %c0_124, %c0_125] : memref<2x16x16x8xf32, #tpu.memory_space<vmem>>, vector<1x1x16x8xf32>
    %183 = vector.shape_cast %182 : vector<1x1x16x8xf32> to vector<16x8xf32>
    %184 = vector.shape_cast %181 : vector<16x8xf32> to vector<1x1x16x8xf32>
    tpu.vector_store %arg8[%c0_123, %c3, %c0_124, %c0_125], %184 {strides = array<i32>} : memref<2x16x16x8xf32, #tpu.memory_space<vmem>>, vector<1x1x16x8xf32>,
    %185 = vector.extract_strided_slice %168 {offsets = [72, 0], sizes = [16, 8], strides = [1, 1]} : vector<288x8xf32> to vector<16x8xf32>
    %c0_126 = arith.constant 0 : index
    %c4 = arith.constant 4 : index
    %c0_127 = arith.constant 0 : index
    %c0_128 = arith.constant 0 : index
    %186 = vector.load %arg8[%c0_126, %c4, %c0_127, %c0_128] : memref<2x16x16x8xf32, #tpu.memory_space<vmem>>, vector<1x1x16x8xf32>
    %187 = vector.shape_cast %186 : vector<1x1x16x8xf32> to vector<16x8xf32>
    %188 = vector.shape_cast %185 : vector<16x8xf32> to vector<1x1x16x8xf32>
    tpu.vector_store %arg8[%c0_126, %c4, %c0_127, %c0_128], %188 {strides = array<i32>} : memref<2x16x16x8xf32, #tpu.memory_space<vmem>>, vector<1x1x16x8xf32>,
    %189 = vector.extract_strided_slice %168 {offsets = [90, 0], sizes = [16, 8], strides = [1, 1]} : vector<288x8xf32> to vector<16x8xf32>
    %c0_129 = arith.constant 0 : index
    %c5 = arith.constant 5 : index
    %c0_130 = arith.constant 0 : index
    %c0_131 = arith.constant 0 : index
    %190 = vector.load %arg8[%c0_129, %c5, %c0_130, %c0_131] : memref<2x16x16x8xf32, #tpu.memory_space<vmem>>, vector<1x1x16x8xf32>
    %191 = vector.shape_cast %190 : vector<1x1x16x8xf32> to vector<16x8xf32>
    %192 = vector.shape_cast %189 : vector<16x8xf32> to vector<1x1x16x8xf32>
    tpu.vector_store %arg8[%c0_129, %c5, %c0_130, %c0_131], %192 {strides = array<i32>} : memref<2x16x16x8xf32, #tpu.memory_space<vmem>>, vector<1x1x16x8xf32>,
    %193 = vector.extract_strided_slice %168 {offsets = [108, 0], sizes = [16, 8], strides = [1, 1]} : vector<288x8xf32> to vector<16x8xf32>
    %c0_132 = arith.constant 0 : index
    %c6 = arith.constant 6 : index
    %c0_133 = arith.constant 0 : index
    %c0_134 = arith.constant 0 : index
    %194 = vector.load %arg8[%c0_132, %c6, %c0_133, %c0_134] : memref<2x16x16x8xf32, #tpu.memory_space<vmem>>, vector<1x1x16x8xf32>
    %195 = vector.shape_cast %194 : vector<1x1x16x8xf32> to vector<16x8xf32>
    %196 = vector.shape_cast %193 : vector<16x8xf32> to vector<1x1x16x8xf32>
    tpu.vector_store %arg8[%c0_132, %c6, %c0_133, %c0_134], %196 {strides = array<i32>} : memref<2x16x16x8xf32, #tpu.memory_space<vmem>>, vector<1x1x16x8xf32>,
    %197 = vector.extract_strided_slice %168 {offsets = [126, 0], sizes = [16, 8], strides = [1, 1]} : vector<288x8xf32> to vector<16x8xf32>
    %c0_135 = arith.constant 0 : index
    %c7 = arith.constant 7 : index
    %c0_136 = arith.constant 0 : index
    %c0_137 = arith.constant 0 : index
    %198 = vector.load %arg8[%c0_135, %c7, %c0_136, %c0_137] : memref<2x16x16x8xf32, #tpu.memory_space<vmem>>, vector<1x1x16x8xf32>
    %199 = vector.shape_cast %198 : vector<1x1x16x8xf32> to vector<16x8xf32>
    %200 = vector.shape_cast %197 : vector<16x8xf32> to vector<1x1x16x8xf32>
    tpu.vector_store %arg8[%c0_135, %c7, %c0_136, %c0_137], %200 {strides = array<i32>} : memref<2x16x16x8xf32, #tpu.memory_space<vmem>>, vector<1x1x16x8xf32>,
    %201 = vector.extract_strided_slice %168 {offsets = [144, 0], sizes = [16, 8], strides = [1, 1]} : vector<288x8xf32> to vector<16x8xf32>
    %c0_138 = arith.constant 0 : index
    %c8 = arith.constant 8 : index
    %c0_139 = arith.constant 0 : index
    %c0_140 = arith.constant 0 : index
    %202 = vector.load %arg8[%c0_138, %c8, %c0_139, %c0_140] : memref<2x16x16x8xf32, #tpu.memory_space<vmem>>, vector<1x1x16x8xf32>
    %203 = vector.shape_cast %202 : vector<1x1x16x8xf32> to vector<16x8xf32>
    %204 = vector.shape_cast %201 : vector<16x8xf32> to vector<1x1x16x8xf32>
    tpu.vector_store %arg8[%c0_138, %c8, %c0_139, %c0_140], %204 {strides = array<i32>} : memref<2x16x16x8xf32, #tpu.memory_space<vmem>>, vector<1x1x16x8xf32>,
    %205 = vector.extract_strided_slice %168 {offsets = [162, 0], sizes = [16, 8], strides = [1, 1]} : vector<288x8xf32> to vector<16x8xf32>
    %c0_141 = arith.constant 0 : index
    %c9 = arith.constant 9 : index
    %c0_142 = arith.constant 0 : index
    %c0_143 = arith.constant 0 : index
    %206 = vector.load %arg8[%c0_141, %c9, %c0_142, %c0_143] : memref<2x16x16x8xf32, #tpu.memory_space<vmem>>, vector<1x1x16x8xf32>
    %207 = vector.shape_cast %206 : vector<1x1x16x8xf32> to vector<16x8xf32>
    %208 = vector.shape_cast %205 : vector<16x8xf32> to vector<1x1x16x8xf32>
    tpu.vector_store %arg8[%c0_141, %c9, %c0_142, %c0_143], %208 {strides = array<i32>} : memref<2x16x16x8xf32, #tpu.memory_space<vmem>>, vector<1x1x16x8xf32>,
    %209 = vector.extract_strided_slice %168 {offsets = [180, 0], sizes = [16, 8], strides = [1, 1]} : vector<288x8xf32> to vector<16x8xf32>
    %c0_144 = arith.constant 0 : index
    %c10 = arith.constant 10 : index
    %c0_145 = arith.constant 0 : index
    %c0_146 = arith.constant 0 : index
    %210 = vector.load %arg8[%c0_144, %c10, %c0_145, %c0_146] : memref<2x16x16x8xf32, #tpu.memory_space<vmem>>, vector<1x1x16x8xf32>
    %211 = vector.shape_cast %210 : vector<1x1x16x8xf32> to vector<16x8xf32>
    %212 = vector.shape_cast %209 : vector<16x8xf32> to vector<1x1x16x8xf32>
    tpu.vector_store %arg8[%c0_144, %c10, %c0_145, %c0_146], %212 {strides = array<i32>} : memref<2x16x16x8xf32, #tpu.memory_space<vmem>>, vector<1x1x16x8xf32>,
    %213 = vector.extract_strided_slice %168 {offsets = [198, 0], sizes = [16, 8], strides = [1, 1]} : vector<288x8xf32> to vector<16x8xf32>
    %c0_147 = arith.constant 0 : index
    %c11 = arith.constant 11 : index
    %c0_148 = arith.constant 0 : index
    %c0_149 = arith.constant 0 : index
    %214 = vector.load %arg8[%c0_147, %c11, %c0_148, %c0_149] : memref<2x16x16x8xf32, #tpu.memory_space<vmem>>, vector<1x1x16x8xf32>
    %215 = vector.shape_cast %214 : vector<1x1x16x8xf32> to vector<16x8xf32>
    %216 = vector.shape_cast %213 : vector<16x8xf32> to vector<1x1x16x8xf32>
    tpu.vector_store %arg8[%c0_147, %c11, %c0_148, %c0_149], %216 {strides = array<i32>} : memref<2x16x16x8xf32, #tpu.memory_space<vmem>>, vector<1x1x16x8xf32>,
    %217 = vector.extract_strided_slice %168 {offsets = [216, 0], sizes = [16, 8], strides = [1, 1]} : vector<288x8xf32> to vector<16x8xf32>
    %c0_150 = arith.constant 0 : index
    %c12 = arith.constant 12 : index
    %c0_151 = arith.constant 0 : index
    %c0_152 = arith.constant 0 : index
    %218 = vector.load %arg8[%c0_150, %c12, %c0_151, %c0_152] : memref<2x16x16x8xf32, #tpu.memory_space<vmem>>, vector<1x1x16x8xf32>
    %219 = vector.shape_cast %218 : vector<1x1x16x8xf32> to vector<16x8xf32>
    %220 = vector.shape_cast %217 : vector<16x8xf32> to vector<1x1x16x8xf32>
    tpu.vector_store %arg8[%c0_150, %c12, %c0_151, %c0_152], %220 {strides = array<i32>} : memref<2x16x16x8xf32, #tpu.memory_space<vmem>>, vector<1x1x16x8xf32>,
    %221 = vector.extract_strided_slice %168 {offsets = [234, 0], sizes = [16, 8], strides = [1, 1]} : vector<288x8xf32> to vector<16x8xf32>
    %c0_153 = arith.constant 0 : index
    %c13 = arith.constant 13 : index
    %c0_154 = arith.constant 0 : index
    %c0_155 = arith.constant 0 : index
    %222 = vector.load %arg8[%c0_153, %c13, %c0_154, %c0_155] : memref<2x16x16x8xf32, #tpu.memory_space<vmem>>, vector<1x1x16x8xf32>
    %223 = vector.shape_cast %222 : vector<1x1x16x8xf32> to vector<16x8xf32>
    %224 = vector.shape_cast %221 : vector<16x8xf32> to vector<1x1x16x8xf32>
    tpu.vector_store %arg8[%c0_153, %c13, %c0_154, %c0_155], %224 {strides = array<i32>} : memref<2x16x16x8xf32, #tpu.memory_space<vmem>>, vector<1x1x16x8xf32>,
    %225 = vector.extract_strided_slice %168 {offsets = [252, 0], sizes = [16, 8], strides = [1, 1]} : vector<288x8xf32> to vector<16x8xf32>
    %c0_156 = arith.constant 0 : index
    %c14 = arith.constant 14 : index
    %c0_157 = arith.constant 0 : index
    %c0_158 = arith.constant 0 : index
    %226 = vector.load %arg8[%c0_156, %c14, %c0_157, %c0_158] : memref<2x16x16x8xf32, #tpu.memory_space<vmem>>, vector<1x1x16x8xf32>
    %227 = vector.shape_cast %226 : vector<1x1x16x8xf32> to vector<16x8xf32>
    %228 = vector.shape_cast %225 : vector<16x8xf32> to vector<1x1x16x8xf32>
    tpu.vector_store %arg8[%c0_156, %c14, %c0_157, %c0_158], %228 {strides = array<i32>} : memref<2x16x16x8xf32, #tpu.memory_space<vmem>>, vector<1x1x16x8xf32>,
    %229 = vector.extract_strided_slice %168 {offsets = [270, 0], sizes = [16, 8], strides = [1, 1]} : vector<288x8xf32> to vector<16x8xf32>
    %c0_159 = arith.constant 0 : index
    %c15 = arith.constant 15 : index
    %c0_160 = arith.constant 0 : index
    %c0_161 = arith.constant 0 : index
    %230 = vector.load %arg8[%c0_159, %c15, %c0_160, %c0_161] : memref<2x16x16x8xf32, #tpu.memory_space<vmem>>, vector<1x1x16x8xf32>
    %231 = vector.shape_cast %230 : vector<1x1x16x8xf32> to vector<16x8xf32>
    %232 = vector.shape_cast %229 : vector<16x8xf32> to vector<1x1x16x8xf32>
    tpu.vector_store %arg8[%c0_159, %c15, %c0_160, %c0_161], %232 {strides = array<i32>} : memref<2x16x16x8xf32, #tpu.memory_space<vmem>>, vector<1x1x16x8xf32>,
    %c1_162 = arith.constant 1 : index
    %c0_163 = arith.constant 0 : index
    %c0_164 = arith.constant 0 : index
    %c0_165 = arith.constant 0 : index
    %233 = vector.load %arg1[%c1_162, %c0_163, %c0_164, %c0_165] : memref<2x16x16x4xf32, #tpu.memory_space<vmem>>, vector<1x16x16x4xf32>
    %234 = vector.shape_cast %233 : vector<1x16x16x4xf32> to vector<16x16x4xf32>
    %235 = vector.shape_cast %0 : vector<1x4xf32> to vector<1x1x4xf32>
    %236 = vector.broadcast %235 : vector<1x1x4xf32> to vector<16x16x4xf32>
    %237 = arith.mulf %234, %236 : vector<16x16x4xf32>
    %238 = vector.shape_cast %1 : vector<1x4xf32> to vector<1x1x4xf32>
    %239 = vector.broadcast %238 : vector<1x1x4xf32> to vector<16x16x4xf32>
    %240 = arith.addf %237, %239 : vector<16x16x4xf32>
    %cst_166 = arith.constant 0.000000e+00 : f32
    %241 = vector.broadcast %cst_166 : f32 to vector<16x16x4xf32>
    %242 = arith.maximumf %240, %241 : vector<16x16x4xf32>
    %243 = arith.truncf %242 : vector<16x16x4xf32> to vector<16x16x4xbf16>
    %244 = vector.extract_strided_slice %243 {offsets = [0, 0, 0], sizes = [1, 16, 4], strides = [1, 1, 1]} : vector<16x16x4xbf16> to vector<1x16x4xbf16>
    %245 = vector.shape_cast %244 : vector<1x16x4xbf16> to vector<16x4xbf16>
    %246 = tpu.concatenate %14, %245, %14 in 0 : vector<1x4xbf16>, vector<16x4xbf16>, vector<1x4xbf16> -> vector<18x4xbf16>
    %c18_167 = arith.constant 18 : index
    %c0_168 = arith.constant 0 : index
    %247 = vector.load %arg9[%c18_167, %c0_168] : memref<326x4xbf16, #tpu.memory_space<vmem>>, vector<18x4xbf16>
    tpu.vector_store %arg9[%c18_167, %c0_168], %246 {strides = array<i32>} : memref<326x4xbf16, #tpu.memory_space<vmem>>, vector<18x4xbf16>,
    %248 = vector.extract_strided_slice %243 {offsets = [1, 0, 0], sizes = [1, 16, 4], strides = [1, 1, 1]} : vector<16x16x4xbf16> to vector<1x16x4xbf16>
    %249 = vector.shape_cast %248 : vector<1x16x4xbf16> to vector<16x4xbf16>
    %250 = tpu.concatenate %14, %249, %14 in 0 : vector<1x4xbf16>, vector<16x4xbf16>, vector<1x4xbf16> -> vector<18x4xbf16>
    %c36_169 = arith.constant 36 : index
    %c0_170 = arith.constant 0 : index
    %251 = vector.load %arg9[%c36_169, %c0_170] : memref<326x4xbf16, #tpu.memory_space<vmem>>, vector<18x4xbf16>
    tpu.vector_store %arg9[%c36_169, %c0_170], %250 {strides = array<i32>} : memref<326x4xbf16, #tpu.memory_space<vmem>>, vector<18x4xbf16>,
    %252 = vector.extract_strided_slice %243 {offsets = [2, 0, 0], sizes = [1, 16, 4], strides = [1, 1, 1]} : vector<16x16x4xbf16> to vector<1x16x4xbf16>
    %253 = vector.shape_cast %252 : vector<1x16x4xbf16> to vector<16x4xbf16>
    %254 = tpu.concatenate %14, %253, %14 in 0 : vector<1x4xbf16>, vector<16x4xbf16>, vector<1x4xbf16> -> vector<18x4xbf16>
    %c54_171 = arith.constant 54 : index
    %c0_172 = arith.constant 0 : index
    %255 = vector.load %arg9[%c54_171, %c0_172] : memref<326x4xbf16, #tpu.memory_space<vmem>>, vector<18x4xbf16>
    tpu.vector_store %arg9[%c54_171, %c0_172], %254 {strides = array<i32>} : memref<326x4xbf16, #tpu.memory_space<vmem>>, vector<18x4xbf16>,
    %256 = vector.extract_strided_slice %243 {offsets = [3, 0, 0], sizes = [1, 16, 4], strides = [1, 1, 1]} : vector<16x16x4xbf16> to vector<1x16x4xbf16>
    %257 = vector.shape_cast %256 : vector<1x16x4xbf16> to vector<16x4xbf16>
    %258 = tpu.concatenate %14, %257, %14 in 0 : vector<1x4xbf16>, vector<16x4xbf16>, vector<1x4xbf16> -> vector<18x4xbf16>
    %c72_173 = arith.constant 72 : index
    %c0_174 = arith.constant 0 : index
    %259 = vector.load %arg9[%c72_173, %c0_174] : memref<326x4xbf16, #tpu.memory_space<vmem>>, vector<18x4xbf16>
    tpu.vector_store %arg9[%c72_173, %c0_174], %258 {strides = array<i32>} : memref<326x4xbf16, #tpu.memory_space<vmem>>, vector<18x4xbf16>,
    %260 = vector.extract_strided_slice %243 {offsets = [4, 0, 0], sizes = [1, 16, 4], strides = [1, 1, 1]} : vector<16x16x4xbf16> to vector<1x16x4xbf16>
    %261 = vector.shape_cast %260 : vector<1x16x4xbf16> to vector<16x4xbf16>
    %262 = tpu.concatenate %14, %261, %14 in 0 : vector<1x4xbf16>, vector<16x4xbf16>, vector<1x4xbf16> -> vector<18x4xbf16>
    %c90_175 = arith.constant 90 : index
    %c0_176 = arith.constant 0 : index
    %263 = vector.load %arg9[%c90_175, %c0_176] : memref<326x4xbf16, #tpu.memory_space<vmem>>, vector<18x4xbf16>
    tpu.vector_store %arg9[%c90_175, %c0_176], %262 {strides = array<i32>} : memref<326x4xbf16, #tpu.memory_space<vmem>>, vector<18x4xbf16>,
    %264 = vector.extract_strided_slice %243 {offsets = [5, 0, 0], sizes = [1, 16, 4], strides = [1, 1, 1]} : vector<16x16x4xbf16> to vector<1x16x4xbf16>
    %265 = vector.shape_cast %264 : vector<1x16x4xbf16> to vector<16x4xbf16>
    %266 = tpu.concatenate %14, %265, %14 in 0 : vector<1x4xbf16>, vector<16x4xbf16>, vector<1x4xbf16> -> vector<18x4xbf16>
    %c108_177 = arith.constant 108 : index
    %c0_178 = arith.constant 0 : index
    %267 = vector.load %arg9[%c108_177, %c0_178] : memref<326x4xbf16, #tpu.memory_space<vmem>>, vector<18x4xbf16>
    tpu.vector_store %arg9[%c108_177, %c0_178], %266 {strides = array<i32>} : memref<326x4xbf16, #tpu.memory_space<vmem>>, vector<18x4xbf16>,
    %268 = vector.extract_strided_slice %243 {offsets = [6, 0, 0], sizes = [1, 16, 4], strides = [1, 1, 1]} : vector<16x16x4xbf16> to vector<1x16x4xbf16>
    %269 = vector.shape_cast %268 : vector<1x16x4xbf16> to vector<16x4xbf16>
    %270 = tpu.concatenate %14, %269, %14 in 0 : vector<1x4xbf16>, vector<16x4xbf16>, vector<1x4xbf16> -> vector<18x4xbf16>
    %c126_179 = arith.constant 126 : index
    %c0_180 = arith.constant 0 : index
    %271 = vector.load %arg9[%c126_179, %c0_180] : memref<326x4xbf16, #tpu.memory_space<vmem>>, vector<18x4xbf16>
    tpu.vector_store %arg9[%c126_179, %c0_180], %270 {strides = array<i32>} : memref<326x4xbf16, #tpu.memory_space<vmem>>, vector<18x4xbf16>,
    %272 = vector.extract_strided_slice %243 {offsets = [7, 0, 0], sizes = [1, 16, 4], strides = [1, 1, 1]} : vector<16x16x4xbf16> to vector<1x16x4xbf16>
    %273 = vector.shape_cast %272 : vector<1x16x4xbf16> to vector<16x4xbf16>
    %274 = tpu.concatenate %14, %273, %14 in 0 : vector<1x4xbf16>, vector<16x4xbf16>, vector<1x4xbf16> -> vector<18x4xbf16>
    %c144_181 = arith.constant 144 : index
    %c0_182 = arith.constant 0 : index
    %275 = vector.load %arg9[%c144_181, %c0_182] : memref<326x4xbf16, #tpu.memory_space<vmem>>, vector<18x4xbf16>
    tpu.vector_store %arg9[%c144_181, %c0_182], %274 {strides = array<i32>} : memref<326x4xbf16, #tpu.memory_space<vmem>>, vector<18x4xbf16>,
    %276 = vector.extract_strided_slice %243 {offsets = [8, 0, 0], sizes = [1, 16, 4], strides = [1, 1, 1]} : vector<16x16x4xbf16> to vector<1x16x4xbf16>
    %277 = vector.shape_cast %276 : vector<1x16x4xbf16> to vector<16x4xbf16>
    %278 = tpu.concatenate %14, %277, %14 in 0 : vector<1x4xbf16>, vector<16x4xbf16>, vector<1x4xbf16> -> vector<18x4xbf16>
    %c162_183 = arith.constant 162 : index
    %c0_184 = arith.constant 0 : index
    %279 = vector.load %arg9[%c162_183, %c0_184] : memref<326x4xbf16, #tpu.memory_space<vmem>>, vector<18x4xbf16>
    tpu.vector_store %arg9[%c162_183, %c0_184], %278 {strides = array<i32>} : memref<326x4xbf16, #tpu.memory_space<vmem>>, vector<18x4xbf16>,
    %280 = vector.extract_strided_slice %243 {offsets = [9, 0, 0], sizes = [1, 16, 4], strides = [1, 1, 1]} : vector<16x16x4xbf16> to vector<1x16x4xbf16>
    %281 = vector.shape_cast %280 : vector<1x16x4xbf16> to vector<16x4xbf16>
    %282 = tpu.concatenate %14, %281, %14 in 0 : vector<1x4xbf16>, vector<16x4xbf16>, vector<1x4xbf16> -> vector<18x4xbf16>
    %c180_185 = arith.constant 180 : index
    %c0_186 = arith.constant 0 : index
    %283 = vector.load %arg9[%c180_185, %c0_186] : memref<326x4xbf16, #tpu.memory_space<vmem>>, vector<18x4xbf16>
    tpu.vector_store %arg9[%c180_185, %c0_186], %282 {strides = array<i32>} : memref<326x4xbf16, #tpu.memory_space<vmem>>, vector<18x4xbf16>,
    %284 = vector.extract_strided_slice %243 {offsets = [10, 0, 0], sizes = [1, 16, 4], strides = [1, 1, 1]} : vector<16x16x4xbf16> to vector<1x16x4xbf16>
    %285 = vector.shape_cast %284 : vector<1x16x4xbf16> to vector<16x4xbf16>
    %286 = tpu.concatenate %14, %285, %14 in 0 : vector<1x4xbf16>, vector<16x4xbf16>, vector<1x4xbf16> -> vector<18x4xbf16>
    %c198_187 = arith.constant 198 : index
    %c0_188 = arith.constant 0 : index
    %287 = vector.load %arg9[%c198_187, %c0_188] : memref<326x4xbf16, #tpu.memory_space<vmem>>, vector<18x4xbf16>
    tpu.vector_store %arg9[%c198_187, %c0_188], %286 {strides = array<i32>} : memref<326x4xbf16, #tpu.memory_space<vmem>>, vector<18x4xbf16>,
    %288 = vector.extract_strided_slice %243 {offsets = [11, 0, 0], sizes = [1, 16, 4], strides = [1, 1, 1]} : vector<16x16x4xbf16> to vector<1x16x4xbf16>
    %289 = vector.shape_cast %288 : vector<1x16x4xbf16> to vector<16x4xbf16>
    %290 = tpu.concatenate %14, %289, %14 in 0 : vector<1x4xbf16>, vector<16x4xbf16>, vector<1x4xbf16> -> vector<18x4xbf16>
    %c216_189 = arith.constant 216 : index
    %c0_190 = arith.constant 0 : index
    %291 = vector.load %arg9[%c216_189, %c0_190] : memref<326x4xbf16, #tpu.memory_space<vmem>>, vector<18x4xbf16>
    tpu.vector_store %arg9[%c216_189, %c0_190], %290 {strides = array<i32>} : memref<326x4xbf16, #tpu.memory_space<vmem>>, vector<18x4xbf16>,
    %292 = vector.extract_strided_slice %243 {offsets = [12, 0, 0], sizes = [1, 16, 4], strides = [1, 1, 1]} : vector<16x16x4xbf16> to vector<1x16x4xbf16>
    %293 = vector.shape_cast %292 : vector<1x16x4xbf16> to vector<16x4xbf16>
    %294 = tpu.concatenate %14, %293, %14 in 0 : vector<1x4xbf16>, vector<16x4xbf16>, vector<1x4xbf16> -> vector<18x4xbf16>
    %c234_191 = arith.constant 234 : index
    %c0_192 = arith.constant 0 : index
    %295 = vector.load %arg9[%c234_191, %c0_192] : memref<326x4xbf16, #tpu.memory_space<vmem>>, vector<18x4xbf16>
    tpu.vector_store %arg9[%c234_191, %c0_192], %294 {strides = array<i32>} : memref<326x4xbf16, #tpu.memory_space<vmem>>, vector<18x4xbf16>,
    %296 = vector.extract_strided_slice %243 {offsets = [13, 0, 0], sizes = [1, 16, 4], strides = [1, 1, 1]} : vector<16x16x4xbf16> to vector<1x16x4xbf16>
    %297 = vector.shape_cast %296 : vector<1x16x4xbf16> to vector<16x4xbf16>
    %298 = tpu.concatenate %14, %297, %14 in 0 : vector<1x4xbf16>, vector<16x4xbf16>, vector<1x4xbf16> -> vector<18x4xbf16>
    %c252_193 = arith.constant 252 : index
    %c0_194 = arith.constant 0 : index
    %299 = vector.load %arg9[%c252_193, %c0_194] : memref<326x4xbf16, #tpu.memory_space<vmem>>, vector<18x4xbf16>
    tpu.vector_store %arg9[%c252_193, %c0_194], %298 {strides = array<i32>} : memref<326x4xbf16, #tpu.memory_space<vmem>>, vector<18x4xbf16>,
    %300 = vector.extract_strided_slice %243 {offsets = [14, 0, 0], sizes = [1, 16, 4], strides = [1, 1, 1]} : vector<16x16x4xbf16> to vector<1x16x4xbf16>
    %301 = vector.shape_cast %300 : vector<1x16x4xbf16> to vector<16x4xbf16>
    %302 = tpu.concatenate %14, %301, %14 in 0 : vector<1x4xbf16>, vector<16x4xbf16>, vector<1x4xbf16> -> vector<18x4xbf16>
    %c270_195 = arith.constant 270 : index
    %c0_196 = arith.constant 0 : index
    %303 = vector.load %arg9[%c270_195, %c0_196] : memref<326x4xbf16, #tpu.memory_space<vmem>>, vector<18x4xbf16>
    tpu.vector_store %arg9[%c270_195, %c0_196], %302 {strides = array<i32>} : memref<326x4xbf16, #tpu.memory_space<vmem>>, vector<18x4xbf16>,
    %304 = vector.extract_strided_slice %243 {offsets = [15, 0, 0], sizes = [1, 16, 4], strides = [1, 1, 1]} : vector<16x16x4xbf16> to vector<1x16x4xbf16>
    %305 = vector.shape_cast %304 : vector<1x16x4xbf16> to vector<16x4xbf16>
    %306 = tpu.concatenate %14, %305, %14 in 0 : vector<1x4xbf16>, vector<16x4xbf16>, vector<1x4xbf16> -> vector<18x4xbf16>
    %c288_197 = arith.constant 288 : index
    %c0_198 = arith.constant 0 : index
    %307 = vector.load %arg9[%c288_197, %c0_198] : memref<326x4xbf16, #tpu.memory_space<vmem>>, vector<18x4xbf16>
    tpu.vector_store %arg9[%c288_197, %c0_198], %306 {strides = array<i32>} : memref<326x4xbf16, #tpu.memory_space<vmem>>, vector<18x4xbf16>,
    %c0_199 = arith.constant 0 : index
    %c0_200 = arith.constant 0 : index
    %308 = vector.load %arg9[%c0_199, %c0_200] : memref<326x4xbf16, #tpu.memory_space<vmem>>, vector<288x4xbf16>
    %c1_201 = arith.constant 1 : index
    %c0_202 = arith.constant 0 : index
    %309 = vector.load %arg9[%c1_201, %c0_202] : memref<326x4xbf16, #tpu.memory_space<vmem>>, vector<288x4xbf16>
    %c2_203 = arith.constant 2 : index
    %c0_204 = arith.constant 0 : index
    %310 = vector.load %arg9[%c2_203, %c0_204] : memref<326x4xbf16, #tpu.memory_space<vmem>>, vector<288x4xbf16>
    %c18_205 = arith.constant 18 : index
    %c0_206 = arith.constant 0 : index
    %311 = vector.load %arg9[%c18_205, %c0_206] : memref<326x4xbf16, #tpu.memory_space<vmem>>, vector<288x4xbf16>
    %c19_207 = arith.constant 19 : index
    %c0_208 = arith.constant 0 : index
    %312 = vector.load %arg9[%c19_207, %c0_208] : memref<326x4xbf16, #tpu.memory_space<vmem>>, vector<288x4xbf16>
    %c20_209 = arith.constant 20 : index
    %c0_210 = arith.constant 0 : index
    %313 = vector.load %arg9[%c20_209, %c0_210] : memref<326x4xbf16, #tpu.memory_space<vmem>>, vector<288x4xbf16>
    %c36_211 = arith.constant 36 : index
    %c0_212 = arith.constant 0 : index
    %314 = vector.load %arg9[%c36_211, %c0_212] : memref<326x4xbf16, #tpu.memory_space<vmem>>, vector<288x4xbf16>
    %c37_213 = arith.constant 37 : index
    %c0_214 = arith.constant 0 : index
    %315 = vector.load %arg9[%c37_213, %c0_214] : memref<326x4xbf16, #tpu.memory_space<vmem>>, vector<288x4xbf16>
    %c38_215 = arith.constant 38 : index
    %c0_216 = arith.constant 0 : index
    %316 = vector.load %arg9[%c38_215, %c0_216] : memref<326x4xbf16, #tpu.memory_space<vmem>>, vector<288x4xbf16>
    %317 = tpu.concatenate %308, %309, %310, %311, %312, %313, %314, %315, %316 in 1 : vector<288x4xbf16>, vector<288x4xbf16>, vector<288x4xbf16>, vector<288x4xbf16>, vector<288x4xbf16>, vector<288x4xbf16>, vector<288x4xbf16>, vector<288x4xbf16>, vector<288x4xbf16> -> vector<288x36xbf16>
    %cst_217 = arith.constant dense<0.000000e+00> : vector<288x8xf32>
    %318 = tpu.matmul %317, %4, %cst_217 {dimension_numbers = #tpu.dot_dimension_numbers<[1], [0], [0], [1], [0, 0, 1, 1], [], []>} : vector<288x36xbf16>, vector<36x8xbf16>, vector<288x8xf32> -> vector<288x8xf32>
    %319 = vector.broadcast %2 : vector<1x8xf32> to vector<288x8xf32>
    %320 = arith.mulf %318, %319 : vector<288x8xf32>
    %321 = vector.broadcast %3 : vector<1x8xf32> to vector<288x8xf32>
    %322 = arith.addf %320, %321 : vector<288x8xf32>
    %cst_218 = arith.constant 0.000000e+00 : f32
    %323 = vector.broadcast %cst_218 : f32 to vector<288x8xf32>
    %324 = arith.maximumf %322, %323 : vector<288x8xf32>
    %325 = arith.truncf %324 : vector<288x8xf32> to vector<288x8xbf16>
    %326 = vector.extract_strided_slice %325 {offsets = [0, 0], sizes = [16, 8], strides = [1, 1]} : vector<288x8xbf16> to vector<16x8xbf16>
    %327 = tpu.concatenate %15, %326, %15 in 0 : vector<1x8xbf16>, vector<16x8xbf16>, vector<1x8xbf16> -> vector<18x8xbf16>
    %c18_219 = arith.constant 18 : index
    %c0_220 = arith.constant 0 : index
    %328 = vector.load %arg10[%c18_219, %c0_220] : memref<326x8xbf16, #tpu.memory_space<vmem>>, vector<18x8xbf16>
    tpu.vector_store %arg10[%c18_219, %c0_220], %327 {strides = array<i32>} : memref<326x8xbf16, #tpu.memory_space<vmem>>, vector<18x8xbf16>,
    %329 = vector.extract_strided_slice %325 {offsets = [18, 0], sizes = [16, 8], strides = [1, 1]} : vector<288x8xbf16> to vector<16x8xbf16>
    %330 = tpu.concatenate %15, %329, %15 in 0 : vector<1x8xbf16>, vector<16x8xbf16>, vector<1x8xbf16> -> vector<18x8xbf16>
    %c36_221 = arith.constant 36 : index
    %c0_222 = arith.constant 0 : index
    %331 = vector.load %arg10[%c36_221, %c0_222] : memref<326x8xbf16, #tpu.memory_space<vmem>>, vector<18x8xbf16>
    tpu.vector_store %arg10[%c36_221, %c0_222], %330 {strides = array<i32>} : memref<326x8xbf16, #tpu.memory_space<vmem>>, vector<18x8xbf16>,
    %332 = vector.extract_strided_slice %325 {offsets = [36, 0], sizes = [16, 8], strides = [1, 1]} : vector<288x8xbf16> to vector<16x8xbf16>
    %333 = tpu.concatenate %15, %332, %15 in 0 : vector<1x8xbf16>, vector<16x8xbf16>, vector<1x8xbf16> -> vector<18x8xbf16>
    %c54_223 = arith.constant 54 : index
    %c0_224 = arith.constant 0 : index
    %334 = vector.load %arg10[%c54_223, %c0_224] : memref<326x8xbf16, #tpu.memory_space<vmem>>, vector<18x8xbf16>
    tpu.vector_store %arg10[%c54_223, %c0_224], %333 {strides = array<i32>} : memref<326x8xbf16, #tpu.memory_space<vmem>>, vector<18x8xbf16>,
    %335 = vector.extract_strided_slice %325 {offsets = [54, 0], sizes = [16, 8], strides = [1, 1]} : vector<288x8xbf16> to vector<16x8xbf16>
    %336 = tpu.concatenate %15, %335, %15 in 0 : vector<1x8xbf16>, vector<16x8xbf16>, vector<1x8xbf16> -> vector<18x8xbf16>
    %c72_225 = arith.constant 72 : index
    %c0_226 = arith.constant 0 : index
    %337 = vector.load %arg10[%c72_225, %c0_226] : memref<326x8xbf16, #tpu.memory_space<vmem>>, vector<18x8xbf16>
    tpu.vector_store %arg10[%c72_225, %c0_226], %336 {strides = array<i32>} : memref<326x8xbf16, #tpu.memory_space<vmem>>, vector<18x8xbf16>,
    %338 = vector.extract_strided_slice %325 {offsets = [72, 0], sizes = [16, 8], strides = [1, 1]} : vector<288x8xbf16> to vector<16x8xbf16>
    %339 = tpu.concatenate %15, %338, %15 in 0 : vector<1x8xbf16>, vector<16x8xbf16>, vector<1x8xbf16> -> vector<18x8xbf16>
    %c90_227 = arith.constant 90 : index
    %c0_228 = arith.constant 0 : index
    %340 = vector.load %arg10[%c90_227, %c0_228] : memref<326x8xbf16, #tpu.memory_space<vmem>>, vector<18x8xbf16>
    tpu.vector_store %arg10[%c90_227, %c0_228], %339 {strides = array<i32>} : memref<326x8xbf16, #tpu.memory_space<vmem>>, vector<18x8xbf16>,
    %341 = vector.extract_strided_slice %325 {offsets = [90, 0], sizes = [16, 8], strides = [1, 1]} : vector<288x8xbf16> to vector<16x8xbf16>
    %342 = tpu.concatenate %15, %341, %15 in 0 : vector<1x8xbf16>, vector<16x8xbf16>, vector<1x8xbf16> -> vector<18x8xbf16>
    %c108_229 = arith.constant 108 : index
    %c0_230 = arith.constant 0 : index
    %343 = vector.load %arg10[%c108_229, %c0_230] : memref<326x8xbf16, #tpu.memory_space<vmem>>, vector<18x8xbf16>
    tpu.vector_store %arg10[%c108_229, %c0_230], %342 {strides = array<i32>} : memref<326x8xbf16, #tpu.memory_space<vmem>>, vector<18x8xbf16>,
    %344 = vector.extract_strided_slice %325 {offsets = [108, 0], sizes = [16, 8], strides = [1, 1]} : vector<288x8xbf16> to vector<16x8xbf16>
    %345 = tpu.concatenate %15, %344, %15 in 0 : vector<1x8xbf16>, vector<16x8xbf16>, vector<1x8xbf16> -> vector<18x8xbf16>
    %c126_231 = arith.constant 126 : index
    %c0_232 = arith.constant 0 : index
    %346 = vector.load %arg10[%c126_231, %c0_232] : memref<326x8xbf16, #tpu.memory_space<vmem>>, vector<18x8xbf16>
    tpu.vector_store %arg10[%c126_231, %c0_232], %345 {strides = array<i32>} : memref<326x8xbf16, #tpu.memory_space<vmem>>, vector<18x8xbf16>,
    %347 = vector.extract_strided_slice %325 {offsets = [126, 0], sizes = [16, 8], strides = [1, 1]} : vector<288x8xbf16> to vector<16x8xbf16>
    %348 = tpu.concatenate %15, %347, %15 in 0 : vector<1x8xbf16>, vector<16x8xbf16>, vector<1x8xbf16> -> vector<18x8xbf16>
    %c144_233 = arith.constant 144 : index
    %c0_234 = arith.constant 0 : index
    %349 = vector.load %arg10[%c144_233, %c0_234] : memref<326x8xbf16, #tpu.memory_space<vmem>>, vector<18x8xbf16>
    tpu.vector_store %arg10[%c144_233, %c0_234], %348 {strides = array<i32>} : memref<326x8xbf16, #tpu.memory_space<vmem>>, vector<18x8xbf16>,
    %350 = vector.extract_strided_slice %325 {offsets = [144, 0], sizes = [16, 8], strides = [1, 1]} : vector<288x8xbf16> to vector<16x8xbf16>
    %351 = tpu.concatenate %15, %350, %15 in 0 : vector<1x8xbf16>, vector<16x8xbf16>, vector<1x8xbf16> -> vector<18x8xbf16>
    %c162_235 = arith.constant 162 : index
    %c0_236 = arith.constant 0 : index
    %352 = vector.load %arg10[%c162_235, %c0_236] : memref<326x8xbf16, #tpu.memory_space<vmem>>, vector<18x8xbf16>
    tpu.vector_store %arg10[%c162_235, %c0_236], %351 {strides = array<i32>} : memref<326x8xbf16, #tpu.memory_space<vmem>>, vector<18x8xbf16>,
    %353 = vector.extract_strided_slice %325 {offsets = [162, 0], sizes = [16, 8], strides = [1, 1]} : vector<288x8xbf16> to vector<16x8xbf16>
    %354 = tpu.concatenate %15, %353, %15 in 0 : vector<1x8xbf16>, vector<16x8xbf16>, vector<1x8xbf16> -> vector<18x8xbf16>
    %c180_237 = arith.constant 180 : index
    %c0_238 = arith.constant 0 : index
    %355 = vector.load %arg10[%c180_237, %c0_238] : memref<326x8xbf16, #tpu.memory_space<vmem>>, vector<18x8xbf16>
    tpu.vector_store %arg10[%c180_237, %c0_238], %354 {strides = array<i32>} : memref<326x8xbf16, #tpu.memory_space<vmem>>, vector<18x8xbf16>,
    %356 = vector.extract_strided_slice %325 {offsets = [180, 0], sizes = [16, 8], strides = [1, 1]} : vector<288x8xbf16> to vector<16x8xbf16>
    %357 = tpu.concatenate %15, %356, %15 in 0 : vector<1x8xbf16>, vector<16x8xbf16>, vector<1x8xbf16> -> vector<18x8xbf16>
    %c198_239 = arith.constant 198 : index
    %c0_240 = arith.constant 0 : index
    %358 = vector.load %arg10[%c198_239, %c0_240] : memref<326x8xbf16, #tpu.memory_space<vmem>>, vector<18x8xbf16>
    tpu.vector_store %arg10[%c198_239, %c0_240], %357 {strides = array<i32>} : memref<326x8xbf16, #tpu.memory_space<vmem>>, vector<18x8xbf16>,
    %359 = vector.extract_strided_slice %325 {offsets = [198, 0], sizes = [16, 8], strides = [1, 1]} : vector<288x8xbf16> to vector<16x8xbf16>
    %360 = tpu.concatenate %15, %359, %15 in 0 : vector<1x8xbf16>, vector<16x8xbf16>, vector<1x8xbf16> -> vector<18x8xbf16>
    %c216_241 = arith.constant 216 : index
    %c0_242 = arith.constant 0 : index
    %361 = vector.load %arg10[%c216_241, %c0_242] : memref<326x8xbf16, #tpu.memory_space<vmem>>, vector<18x8xbf16>
    tpu.vector_store %arg10[%c216_241, %c0_242], %360 {strides = array<i32>} : memref<326x8xbf16, #tpu.memory_space<vmem>>, vector<18x8xbf16>,
    %362 = vector.extract_strided_slice %325 {offsets = [216, 0], sizes = [16, 8], strides = [1, 1]} : vector<288x8xbf16> to vector<16x8xbf16>
    %363 = tpu.concatenate %15, %362, %15 in 0 : vector<1x8xbf16>, vector<16x8xbf16>, vector<1x8xbf16> -> vector<18x8xbf16>
    %c234_243 = arith.constant 234 : index
    %c0_244 = arith.constant 0 : index
    %364 = vector.load %arg10[%c234_243, %c0_244] : memref<326x8xbf16, #tpu.memory_space<vmem>>, vector<18x8xbf16>
    tpu.vector_store %arg10[%c234_243, %c0_244], %363 {strides = array<i32>} : memref<326x8xbf16, #tpu.memory_space<vmem>>, vector<18x8xbf16>,
    %365 = vector.extract_strided_slice %325 {offsets = [234, 0], sizes = [16, 8], strides = [1, 1]} : vector<288x8xbf16> to vector<16x8xbf16>
    %366 = tpu.concatenate %15, %365, %15 in 0 : vector<1x8xbf16>, vector<16x8xbf16>, vector<1x8xbf16> -> vector<18x8xbf16>
    %c252_245 = arith.constant 252 : index
    %c0_246 = arith.constant 0 : index
    %367 = vector.load %arg10[%c252_245, %c0_246] : memref<326x8xbf16, #tpu.memory_space<vmem>>, vector<18x8xbf16>
    tpu.vector_store %arg10[%c252_245, %c0_246], %366 {strides = array<i32>} : memref<326x8xbf16, #tpu.memory_space<vmem>>, vector<18x8xbf16>,
    %368 = vector.extract_strided_slice %325 {offsets = [252, 0], sizes = [16, 8], strides = [1, 1]} : vector<288x8xbf16> to vector<16x8xbf16>
    %369 = tpu.concatenate %15, %368, %15 in 0 : vector<1x8xbf16>, vector<16x8xbf16>, vector<1x8xbf16> -> vector<18x8xbf16>
    %c270_247 = arith.constant 270 : index
    %c0_248 = arith.constant 0 : index
    %370 = vector.load %arg10[%c270_247, %c0_248] : memref<326x8xbf16, #tpu.memory_space<vmem>>, vector<18x8xbf16>
    tpu.vector_store %arg10[%c270_247, %c0_248], %369 {strides = array<i32>} : memref<326x8xbf16, #tpu.memory_space<vmem>>, vector<18x8xbf16>,
    %371 = vector.extract_strided_slice %325 {offsets = [270, 0], sizes = [16, 8], strides = [1, 1]} : vector<288x8xbf16> to vector<16x8xbf16>
    %372 = tpu.concatenate %15, %371, %15 in 0 : vector<1x8xbf16>, vector<16x8xbf16>, vector<1x8xbf16> -> vector<18x8xbf16>
    %c288_249 = arith.constant 288 : index
    %c0_250 = arith.constant 0 : index
    %373 = vector.load %arg10[%c288_249, %c0_250] : memref<326x8xbf16, #tpu.memory_space<vmem>>, vector<18x8xbf16>
    tpu.vector_store %arg10[%c288_249, %c0_250], %372 {strides = array<i32>} : memref<326x8xbf16, #tpu.memory_space<vmem>>, vector<18x8xbf16>,
    %c0_251 = arith.constant 0 : index
    %c0_252 = arith.constant 0 : index
    %374 = vector.load %arg10[%c0_251, %c0_252] : memref<326x8xbf16, #tpu.memory_space<vmem>>, vector<288x8xbf16>
    %c1_253 = arith.constant 1 : index
    %c0_254 = arith.constant 0 : index
    %375 = vector.load %arg10[%c1_253, %c0_254] : memref<326x8xbf16, #tpu.memory_space<vmem>>, vector<288x8xbf16>
    %c2_255 = arith.constant 2 : index
    %c0_256 = arith.constant 0 : index
    %376 = vector.load %arg10[%c2_255, %c0_256] : memref<326x8xbf16, #tpu.memory_space<vmem>>, vector<288x8xbf16>
    %c18_257 = arith.constant 18 : index
    %c0_258 = arith.constant 0 : index
    %377 = vector.load %arg10[%c18_257, %c0_258] : memref<326x8xbf16, #tpu.memory_space<vmem>>, vector<288x8xbf16>
    %c19_259 = arith.constant 19 : index
    %c0_260 = arith.constant 0 : index
    %378 = vector.load %arg10[%c19_259, %c0_260] : memref<326x8xbf16, #tpu.memory_space<vmem>>, vector<288x8xbf16>
    %c20_261 = arith.constant 20 : index
    %c0_262 = arith.constant 0 : index
    %379 = vector.load %arg10[%c20_261, %c0_262] : memref<326x8xbf16, #tpu.memory_space<vmem>>, vector<288x8xbf16>
    %c36_263 = arith.constant 36 : index
    %c0_264 = arith.constant 0 : index
    %380 = vector.load %arg10[%c36_263, %c0_264] : memref<326x8xbf16, #tpu.memory_space<vmem>>, vector<288x8xbf16>
    %c37_265 = arith.constant 37 : index
    %c0_266 = arith.constant 0 : index
    %381 = vector.load %arg10[%c37_265, %c0_266] : memref<326x8xbf16, #tpu.memory_space<vmem>>, vector<288x8xbf16>
    %c38_267 = arith.constant 38 : index
    %c0_268 = arith.constant 0 : index
    %382 = vector.load %arg10[%c38_267, %c0_268] : memref<326x8xbf16, #tpu.memory_space<vmem>>, vector<288x8xbf16>
    %c19_269 = arith.constant 19 : index
    %c0_270 = arith.constant 0 : index
    %383 = vector.load %arg9[%c19_269, %c0_270] : memref<326x4xbf16, #tpu.memory_space<vmem>>, vector<288x4xbf16>
    %384 = tpu.concatenate %374, %375, %376, %377, %378, %379, %380, %381, %382, %383 in 1 : vector<288x8xbf16>, vector<288x8xbf16>, vector<288x8xbf16>, vector<288x8xbf16>, vector<288x8xbf16>, vector<288x8xbf16>, vector<288x8xbf16>, vector<288x8xbf16>, vector<288x8xbf16>, vector<288x4xbf16> -> vector<288x76xbf16>
    %cst_271 = arith.constant dense<0.000000e+00> : vector<288x8xf32>
    %385 = tpu.matmul %384, %5, %cst_271 {dimension_numbers = #tpu.dot_dimension_numbers<[1], [0], [0], [1], [0, 0, 1, 1], [], []>} : vector<288x76xbf16>, vector<76x8xbf16>, vector<288x8xf32> -> vector<288x8xf32>
    %386 = vector.extract_strided_slice %385 {offsets = [0, 0], sizes = [16, 8], strides = [1, 1]} : vector<288x8xf32> to vector<16x8xf32>
    %c1_272 = arith.constant 1 : index
    %c0_273 = arith.constant 0 : index
    %c0_274 = arith.constant 0 : index
    %c0_275 = arith.constant 0 : index
    %387 = vector.load %arg8[%c1_272, %c0_273, %c0_274, %c0_275] : memref<2x16x16x8xf32, #tpu.memory_space<vmem>>, vector<1x1x16x8xf32>
    %388 = vector.shape_cast %387 : vector<1x1x16x8xf32> to vector<16x8xf32>
    %389 = vector.shape_cast %386 : vector<16x8xf32> to vector<1x1x16x8xf32>
    tpu.vector_store %arg8[%c1_272, %c0_273, %c0_274, %c0_275], %389 {strides = array<i32>} : memref<2x16x16x8xf32, #tpu.memory_space<vmem>>, vector<1x1x16x8xf32>,
    %390 = vector.extract_strided_slice %385 {offsets = [18, 0], sizes = [16, 8], strides = [1, 1]} : vector<288x8xf32> to vector<16x8xf32>
    %c1_276 = arith.constant 1 : index
    %c1_277 = arith.constant 1 : index
    %c0_278 = arith.constant 0 : index
    %c0_279 = arith.constant 0 : index
    %391 = vector.load %arg8[%c1_276, %c1_277, %c0_278, %c0_279] : memref<2x16x16x8xf32, #tpu.memory_space<vmem>>, vector<1x1x16x8xf32>
    %392 = vector.shape_cast %391 : vector<1x1x16x8xf32> to vector<16x8xf32>
    %393 = vector.shape_cast %390 : vector<16x8xf32> to vector<1x1x16x8xf32>
    tpu.vector_store %arg8[%c1_276, %c1_277, %c0_278, %c0_279], %393 {strides = array<i32>} : memref<2x16x16x8xf32, #tpu.memory_space<vmem>>, vector<1x1x16x8xf32>,
    %394 = vector.extract_strided_slice %385 {offsets = [36, 0], sizes = [16, 8], strides = [1, 1]} : vector<288x8xf32> to vector<16x8xf32>
    %c1_280 = arith.constant 1 : index
    %c2_281 = arith.constant 2 : index
    %c0_282 = arith.constant 0 : index
    %c0_283 = arith.constant 0 : index
    %395 = vector.load %arg8[%c1_280, %c2_281, %c0_282, %c0_283] : memref<2x16x16x8xf32, #tpu.memory_space<vmem>>, vector<1x1x16x8xf32>
    %396 = vector.shape_cast %395 : vector<1x1x16x8xf32> to vector<16x8xf32>
    %397 = vector.shape_cast %394 : vector<16x8xf32> to vector<1x1x16x8xf32>
    tpu.vector_store %arg8[%c1_280, %c2_281, %c0_282, %c0_283], %397 {strides = array<i32>} : memref<2x16x16x8xf32, #tpu.memory_space<vmem>>, vector<1x1x16x8xf32>,
    %398 = vector.extract_strided_slice %385 {offsets = [54, 0], sizes = [16, 8], strides = [1, 1]} : vector<288x8xf32> to vector<16x8xf32>
    %c1_284 = arith.constant 1 : index
    %c3_285 = arith.constant 3 : index
    %c0_286 = arith.constant 0 : index
    %c0_287 = arith.constant 0 : index
    %399 = vector.load %arg8[%c1_284, %c3_285, %c0_286, %c0_287] : memref<2x16x16x8xf32, #tpu.memory_space<vmem>>, vector<1x1x16x8xf32>
    %400 = vector.shape_cast %399 : vector<1x1x16x8xf32> to vector<16x8xf32>
    %401 = vector.shape_cast %398 : vector<16x8xf32> to vector<1x1x16x8xf32>
    tpu.vector_store %arg8[%c1_284, %c3_285, %c0_286, %c0_287], %401 {strides = array<i32>} : memref<2x16x16x8xf32, #tpu.memory_space<vmem>>, vector<1x1x16x8xf32>,
    %402 = vector.extract_strided_slice %385 {offsets = [72, 0], sizes = [16, 8], strides = [1, 1]} : vector<288x8xf32> to vector<16x8xf32>
    %c1_288 = arith.constant 1 : index
    %c4_289 = arith.constant 4 : index
    %c0_290 = arith.constant 0 : index
    %c0_291 = arith.constant 0 : index
    %403 = vector.load %arg8[%c1_288, %c4_289, %c0_290, %c0_291] : memref<2x16x16x8xf32, #tpu.memory_space<vmem>>, vector<1x1x16x8xf32>
    %404 = vector.shape_cast %403 : vector<1x1x16x8xf32> to vector<16x8xf32>
    %405 = vector.shape_cast %402 : vector<16x8xf32> to vector<1x1x16x8xf32>
    tpu.vector_store %arg8[%c1_288, %c4_289, %c0_290, %c0_291], %405 {strides = array<i32>} : memref<2x16x16x8xf32, #tpu.memory_space<vmem>>, vector<1x1x16x8xf32>,
    %406 = vector.extract_strided_slice %385 {offsets = [90, 0], sizes = [16, 8], strides = [1, 1]} : vector<288x8xf32> to vector<16x8xf32>
    %c1_292 = arith.constant 1 : index
    %c5_293 = arith.constant 5 : index
    %c0_294 = arith.constant 0 : index
    %c0_295 = arith.constant 0 : index
    %407 = vector.load %arg8[%c1_292, %c5_293, %c0_294, %c0_295] : memref<2x16x16x8xf32, #tpu.memory_space<vmem>>, vector<1x1x16x8xf32>
    %408 = vector.shape_cast %407 : vector<1x1x16x8xf32> to vector<16x8xf32>
    %409 = vector.shape_cast %406 : vector<16x8xf32> to vector<1x1x16x8xf32>
    tpu.vector_store %arg8[%c1_292, %c5_293, %c0_294, %c0_295], %409 {strides = array<i32>} : memref<2x16x16x8xf32, #tpu.memory_space<vmem>>, vector<1x1x16x8xf32>,
    %410 = vector.extract_strided_slice %385 {offsets = [108, 0], sizes = [16, 8], strides = [1, 1]} : vector<288x8xf32> to vector<16x8xf32>
    %c1_296 = arith.constant 1 : index
    %c6_297 = arith.constant 6 : index
    %c0_298 = arith.constant 0 : index
    %c0_299 = arith.constant 0 : index
    %411 = vector.load %arg8[%c1_296, %c6_297, %c0_298, %c0_299] : memref<2x16x16x8xf32, #tpu.memory_space<vmem>>, vector<1x1x16x8xf32>
    %412 = vector.shape_cast %411 : vector<1x1x16x8xf32> to vector<16x8xf32>
    %413 = vector.shape_cast %410 : vector<16x8xf32> to vector<1x1x16x8xf32>
    tpu.vector_store %arg8[%c1_296, %c6_297, %c0_298, %c0_299], %413 {strides = array<i32>} : memref<2x16x16x8xf32, #tpu.memory_space<vmem>>, vector<1x1x16x8xf32>,
    %414 = vector.extract_strided_slice %385 {offsets = [126, 0], sizes = [16, 8], strides = [1, 1]} : vector<288x8xf32> to vector<16x8xf32>
    %c1_300 = arith.constant 1 : index
    %c7_301 = arith.constant 7 : index
    %c0_302 = arith.constant 0 : index
    %c0_303 = arith.constant 0 : index
    %415 = vector.load %arg8[%c1_300, %c7_301, %c0_302, %c0_303] : memref<2x16x16x8xf32, #tpu.memory_space<vmem>>, vector<1x1x16x8xf32>
    %416 = vector.shape_cast %415 : vector<1x1x16x8xf32> to vector<16x8xf32>
    %417 = vector.shape_cast %414 : vector<16x8xf32> to vector<1x1x16x8xf32>
    tpu.vector_store %arg8[%c1_300, %c7_301, %c0_302, %c0_303], %417 {strides = array<i32>} : memref<2x16x16x8xf32, #tpu.memory_space<vmem>>, vector<1x1x16x8xf32>,
    %418 = vector.extract_strided_slice %385 {offsets = [144, 0], sizes = [16, 8], strides = [1, 1]} : vector<288x8xf32> to vector<16x8xf32>
    %c1_304 = arith.constant 1 : index
    %c8_305 = arith.constant 8 : index
    %c0_306 = arith.constant 0 : index
    %c0_307 = arith.constant 0 : index
    %419 = vector.load %arg8[%c1_304, %c8_305, %c0_306, %c0_307] : memref<2x16x16x8xf32, #tpu.memory_space<vmem>>, vector<1x1x16x8xf32>
    %420 = vector.shape_cast %419 : vector<1x1x16x8xf32> to vector<16x8xf32>
    %421 = vector.shape_cast %418 : vector<16x8xf32> to vector<1x1x16x8xf32>
    tpu.vector_store %arg8[%c1_304, %c8_305, %c0_306, %c0_307], %421 {strides = array<i32>} : memref<2x16x16x8xf32, #tpu.memory_space<vmem>>, vector<1x1x16x8xf32>,
    %422 = vector.extract_strided_slice %385 {offsets = [162, 0], sizes = [16, 8], strides = [1, 1]} : vector<288x8xf32> to vector<16x8xf32>
    %c1_308 = arith.constant 1 : index
    %c9_309 = arith.constant 9 : index
    %c0_310 = arith.constant 0 : index
    %c0_311 = arith.constant 0 : index
    %423 = vector.load %arg8[%c1_308, %c9_309, %c0_310, %c0_311] : memref<2x16x16x8xf32, #tpu.memory_space<vmem>>, vector<1x1x16x8xf32>
    %424 = vector.shape_cast %423 : vector<1x1x16x8xf32> to vector<16x8xf32>
    %425 = vector.shape_cast %422 : vector<16x8xf32> to vector<1x1x16x8xf32>
    tpu.vector_store %arg8[%c1_308, %c9_309, %c0_310, %c0_311], %425 {strides = array<i32>} : memref<2x16x16x8xf32, #tpu.memory_space<vmem>>, vector<1x1x16x8xf32>,
    %426 = vector.extract_strided_slice %385 {offsets = [180, 0], sizes = [16, 8], strides = [1, 1]} : vector<288x8xf32> to vector<16x8xf32>
    %c1_312 = arith.constant 1 : index
    %c10_313 = arith.constant 10 : index
    %c0_314 = arith.constant 0 : index
    %c0_315 = arith.constant 0 : index
    %427 = vector.load %arg8[%c1_312, %c10_313, %c0_314, %c0_315] : memref<2x16x16x8xf32, #tpu.memory_space<vmem>>, vector<1x1x16x8xf32>
    %428 = vector.shape_cast %427 : vector<1x1x16x8xf32> to vector<16x8xf32>
    %429 = vector.shape_cast %426 : vector<16x8xf32> to vector<1x1x16x8xf32>
    tpu.vector_store %arg8[%c1_312, %c10_313, %c0_314, %c0_315], %429 {strides = array<i32>} : memref<2x16x16x8xf32, #tpu.memory_space<vmem>>, vector<1x1x16x8xf32>,
    %430 = vector.extract_strided_slice %385 {offsets = [198, 0], sizes = [16, 8], strides = [1, 1]} : vector<288x8xf32> to vector<16x8xf32>
    %c1_316 = arith.constant 1 : index
    %c11_317 = arith.constant 11 : index
    %c0_318 = arith.constant 0 : index
    %c0_319 = arith.constant 0 : index
    %431 = vector.load %arg8[%c1_316, %c11_317, %c0_318, %c0_319] : memref<2x16x16x8xf32, #tpu.memory_space<vmem>>, vector<1x1x16x8xf32>
    %432 = vector.shape_cast %431 : vector<1x1x16x8xf32> to vector<16x8xf32>
    %433 = vector.shape_cast %430 : vector<16x8xf32> to vector<1x1x16x8xf32>
    tpu.vector_store %arg8[%c1_316, %c11_317, %c0_318, %c0_319], %433 {strides = array<i32>} : memref<2x16x16x8xf32, #tpu.memory_space<vmem>>, vector<1x1x16x8xf32>,
    %434 = vector.extract_strided_slice %385 {offsets = [216, 0], sizes = [16, 8], strides = [1, 1]} : vector<288x8xf32> to vector<16x8xf32>
    %c1_320 = arith.constant 1 : index
    %c12_321 = arith.constant 12 : index
    %c0_322 = arith.constant 0 : index
    %c0_323 = arith.constant 0 : index
    %435 = vector.load %arg8[%c1_320, %c12_321, %c0_322, %c0_323] : memref<2x16x16x8xf32, #tpu.memory_space<vmem>>, vector<1x1x16x8xf32>
    %436 = vector.shape_cast %435 : vector<1x1x16x8xf32> to vector<16x8xf32>
    %437 = vector.shape_cast %434 : vector<16x8xf32> to vector<1x1x16x8xf32>
    tpu.vector_store %arg8[%c1_320, %c12_321, %c0_322, %c0_323], %437 {strides = array<i32>} : memref<2x16x16x8xf32, #tpu.memory_space<vmem>>, vector<1x1x16x8xf32>,
    %438 = vector.extract_strided_slice %385 {offsets = [234, 0], sizes = [16, 8], strides = [1, 1]} : vector<288x8xf32> to vector<16x8xf32>
    %c1_324 = arith.constant 1 : index
    %c13_325 = arith.constant 13 : index
    %c0_326 = arith.constant 0 : index
    %c0_327 = arith.constant 0 : index
    %439 = vector.load %arg8[%c1_324, %c13_325, %c0_326, %c0_327] : memref<2x16x16x8xf32, #tpu.memory_space<vmem>>, vector<1x1x16x8xf32>
    %440 = vector.shape_cast %439 : vector<1x1x16x8xf32> to vector<16x8xf32>
    %441 = vector.shape_cast %438 : vector<16x8xf32> to vector<1x1x16x8xf32>
    tpu.vector_store %arg8[%c1_324, %c13_325, %c0_326, %c0_327], %441 {strides = array<i32>} : memref<2x16x16x8xf32, #tpu.memory_space<vmem>>, vector<1x1x16x8xf32>,
    %442 = vector.extract_strided_slice %385 {offsets = [252, 0], sizes = [16, 8], strides = [1, 1]} : vector<288x8xf32> to vector<16x8xf32>
    %c1_328 = arith.constant 1 : index
    %c14_329 = arith.constant 14 : index
    %c0_330 = arith.constant 0 : index
    %c0_331 = arith.constant 0 : index
    %443 = vector.load %arg8[%c1_328, %c14_329, %c0_330, %c0_331] : memref<2x16x16x8xf32, #tpu.memory_space<vmem>>, vector<1x1x16x8xf32>
    %444 = vector.shape_cast %443 : vector<1x1x16x8xf32> to vector<16x8xf32>
    %445 = vector.shape_cast %442 : vector<16x8xf32> to vector<1x1x16x8xf32>
    tpu.vector_store %arg8[%c1_328, %c14_329, %c0_330, %c0_331], %445 {strides = array<i32>} : memref<2x16x16x8xf32, #tpu.memory_space<vmem>>, vector<1x1x16x8xf32>,
    %446 = vector.extract_strided_slice %385 {offsets = [270, 0], sizes = [16, 8], strides = [1, 1]} : vector<288x8xf32> to vector<16x8xf32>
    %c1_332 = arith.constant 1 : index
    %c15_333 = arith.constant 15 : index
    %c0_334 = arith.constant 0 : index
    %c0_335 = arith.constant 0 : index
    %447 = vector.load %arg8[%c1_332, %c15_333, %c0_334, %c0_335] : memref<2x16x16x8xf32, #tpu.memory_space<vmem>>, vector<1x1x16x8xf32>
    %448 = vector.shape_cast %447 : vector<1x1x16x8xf32> to vector<16x8xf32>
    %449 = vector.shape_cast %446 : vector<16x8xf32> to vector<1x1x16x8xf32>
    tpu.vector_store %arg8[%c1_332, %c15_333, %c0_334, %c0_335], %449 {strides = array<i32>} : memref<2x16x16x8xf32, #tpu.memory_space<vmem>>, vector<1x1x16x8xf32>,
    return
  }
  func.func @transform_0(%arg0: i32) -> (i32, i32, i32, i32) {
    %c0_i32 = arith.constant 0 : i32
    %c0_i32_0 = arith.constant 0 : i32
    %c0_i32_1 = arith.constant 0 : i32
    %c0_i32_2 = arith.constant 0 : i32
    return %arg0, %c0_i32, %c0_i32_0, %c0_i32_1 : i32, i32, i32, i32
  }
  func.func @transform_1(%arg0: i32) -> (i32, i32) {
    %c0_i32 = arith.constant 0 : i32
    %c0_i32_0 = arith.constant 0 : i32
    %c0_i32_1 = arith.constant 0 : i32
    return %c0_i32, %c0_i32_0 : i32, i32
  }
  func.func @transform_2(%arg0: i32) -> (i32, i32) {
    %c0_i32 = arith.constant 0 : i32
    %c0_i32_0 = arith.constant 0 : i32
    %c0_i32_1 = arith.constant 0 : i32
    return %c0_i32, %c0_i32_0 : i32, i32
  }
  func.func @transform_3(%arg0: i32) -> (i32, i32) {
    %c0_i32 = arith.constant 0 : i32
    %c0_i32_0 = arith.constant 0 : i32
    %c0_i32_1 = arith.constant 0 : i32
    return %c0_i32, %c0_i32_0 : i32, i32
  }
  func.func @transform_4(%arg0: i32) -> (i32, i32) {
    %c0_i32 = arith.constant 0 : i32
    %c0_i32_0 = arith.constant 0 : i32
    %c0_i32_1 = arith.constant 0 : i32
    return %c0_i32, %c0_i32_0 : i32, i32
  }
  func.func @transform_5(%arg0: i32) -> (i32, i32) {
    %c0_i32 = arith.constant 0 : i32
    %c0_i32_0 = arith.constant 0 : i32
    %c0_i32_1 = arith.constant 0 : i32
    return %c0_i32, %c0_i32_0 : i32, i32
  }
  func.func @transform_6(%arg0: i32) -> (i32, i32) {
    %c0_i32 = arith.constant 0 : i32
    %c0_i32_0 = arith.constant 0 : i32
    %c0_i32_1 = arith.constant 0 : i32
    return %c0_i32, %c0_i32_0 : i32, i32
  }
  func.func @transform_7(%arg0: i32) -> (i32, i32, i32, i32) {
    %c0_i32 = arith.constant 0 : i32
    %c0_i32_0 = arith.constant 0 : i32
    %c0_i32_1 = arith.constant 0 : i32
    %c0_i32_2 = arith.constant 0 : i32
    return %arg0, %c0_i32, %c0_i32_0, %c0_i32_1 : i32, i32, i32, i32
  }
}

</mosaic_0001>

<llo_original>
// kernel: tpu_custom_call.1
$region0: #{tpu_custom_call.1}
  #allocation0 [shape = 'u32[]', space=smem, size = 0x4, offset = 0x4, fixed_abs, tag = 'smem constant byte address 0x4 - core index']
  #allocation1 [shape = 'u32[72,128]{1,0:T(1,128)}', space=vmem, size = 0x9000, scoped, tag = 'internal scratch']
  #allocation2 [shape = 'bf16[326,4]{1,0:T(8,128)(2,1)}', space=vmem, size = 0x14800, scoped, tag = 'scratch operand']
  #allocation3 [shape = 'bf16[326,8]{1,0:T(8,128)(2,1)}', space=vmem, size = 0x14800, scoped, tag = 'scratch operand']
  %s0 = inlined_call_operand.vmem [shape: f32[2,16,16,4], index: 0, kind: input, shape index: {}]
  %s1 = inlined_call_operand.vmem [shape: f32[1,4], index: 1, kind: input, shape index: {}]
  %s2 = inlined_call_operand.vmem [shape: f32[1,4], index: 2, kind: input, shape index: {}]
  %s3 = inlined_call_operand.vmem [shape: bf16[36,8], index: 3, kind: input, shape index: {}]
  %s4 = inlined_call_operand.vmem [shape: f32[1,8], index: 4, kind: input, shape index: {}]
  %s5 = inlined_call_operand.vmem [shape: f32[1,8], index: 5, kind: input, shape index: {}]
  %s6 = inlined_call_operand.vmem [shape: bf16[76,8], index: 6, kind: input, shape index: {}]
  %s7 = inlined_call_operand.vmem [shape: f32[2,16,16,8], index: 7, kind: output, shape index: {}]
  %s8 = sld [smem:[#allocation0]]
  $region38: #{tpu_custom_call.1} parent=0
    _
  %s10 = ssub.s32 1, %s8
  %s11 = scalar_select 0, %s10, %s8
  // Predicated region
  $region2: #{tpu_custom_call.1} parent=0 // pred_check
    _
  $region3: #{tpu_custom_call.1} parent=0 // pred_check_branch
    %13 = sbr.rel (0) target = $region5
  $region4: #{tpu_custom_call.1} parent=0 // pred_region
    _
  $region5: #{tpu_custom_call.1} parent=0 // pred_fallthru
    _
  // Predicated region
  $region6: #{tpu_custom_call.1} parent=0 // pred_check
    _
  $region7: #{tpu_custom_call.1} parent=0 // pred_check_branch
    %15 = sbr.rel (0) target = $region9
  $region8: #{tpu_custom_call.1} parent=0 // pred_region
    _
  $region9: #{tpu_custom_call.1} parent=0 // pred_fallthru
    _
  // Predicated region
  $region10: #{tpu_custom_call.1} parent=0 // pred_check
    _
  $region11: #{tpu_custom_call.1} parent=0 // pred_check_branch
    %17 = sbr.rel (0) target = $region13
  $region12: #{tpu_custom_call.1} parent=0 // pred_region
    _
  $region13: #{tpu_custom_call.1} parent=0 // pred_fallthru
    _
  // Predicated region
  $region14: #{tpu_custom_call.1} parent=0 // pred_check
    _
  $region15: #{tpu_custom_call.1} parent=0 // pred_check_branch
    %19 = sbr.rel (0) target = $region17
  $region16: #{tpu_custom_call.1} parent=0 // pred_region
    _
  $region17: #{tpu_custom_call.1} parent=0 // pred_fallthru
    _
  // Predicated region
  $region18: #{tpu_custom_call.1} parent=0 // pred_check
    _
  $region19: #{tpu_custom_call.1} parent=0 // pred_check_branch
    %21 = sbr.rel (0) target = $region21
  $region20: #{tpu_custom_call.1} parent=0 // pred_region
    _
  $region21: #{tpu_custom_call.1} parent=0 // pred_fallthru
    _
  // Predicated region
  $region22: #{tpu_custom_call.1} parent=0 // pred_check
    _
  $region23: #{tpu_custom_call.1} parent=0 // pred_check_branch
    %23 = sbr.rel (0) target = $region25
  $region24: #{tpu_custom_call.1} parent=0 // pred_region
    _
  $region25: #{tpu_custom_call.1} parent=0 // pred_fallthru
    _
  // Predicated region
  $region26: #{tpu_custom_call.1} parent=0 // pred_check
    _
  $region27: #{tpu_custom_call.1} parent=0 // pred_check_branch
    %25 = sbr.rel (0) target = $region29
  $region28: #{tpu_custom_call.1} parent=0 // pred_region
    _
  $region29: #{tpu_custom_call.1} parent=0 // pred_fallthru
    _
  %v27 = vld [vmem:[%s1] sm:$0x1]
  %v28 = vld [vmem:[%s2] sm:$0x1]
  %v29 = vld [vmem:[%s4] sm:$0x1]
  %v30 = vld [vmem:[%s5] sm:$0x1]
  %v31 = vld [vmem:[%s3] sm:$0xf]
  %v32 = vld [vmem:[%s3 + $0x4] sm:$0xf]
  %v33 = vld [vmem:[%s3 + $0x8] sm:$0xf]
  %v34 = vld [vmem:[%s3 + $0xc] sm:$0xf]
  %v35 = vld [vmem:[%s3 + $0x10] sm:$0x3]
  %v36 = vld [vmem:[%s6] sm:$0xf]
  %v37 = vld [vmem:[%s6 + $0x4] sm:$0xf]
  %v38 = vld [vmem:[%s6 + $0x8] sm:$0xf]
  %v39 = vld [vmem:[%s6 + $0xc] sm:$0xf]
  %v40 = vld [vmem:[%s6 + $0x10] sm:$0xf]
  %v41 = vld [vmem:[%s6 + $0x14] sm:$0xf]
  %v42 = vld [vmem:[%s6 + $0x18] sm:$0xf]
  %v43 = vld [vmem:[%s6 + $0x1c] sm:$0xf]
  %v44 = vld [vmem:[%s6 + $0x20] sm:$0xf]
  %v45 = vld [vmem:[%s6 + $0x24] sm:$0x3]
  %vm46 = vcmask 27648
  %47 = vst.msk [vmem:[#allocation2] sm:$0xf] %vm46, 0
  %48 = vst.msk [vmem:[#allocation2 + $0x4] sm:$0xf] %vm46, 0
  %vm49 = vcmask 24576
  %50 = vst.msk [vmem:[#allocation2 + $0x8] sm:$0x1] %vm49, 0
  %vm51 = vcmask 27649
  %52 = vst.msk [vmem:[#allocation2 + $0x98] sm:$0xe] %vm51, 0
  %53 = vst.msk [vmem:[#allocation2 + $0x9c] sm:$0xf] %vm46, 0
  %vm54 = vcmask 26624
  %55 = vst.msk [vmem:[#allocation2 + $0xa0] sm:$0x7] %vm54, 0
  %vm56 = vcmask 60416
  %57 = vst.msk [vmem:[#allocation3] sm:$0xf] %vm56, 0
  %58 = vst.msk [vmem:[#allocation3 + $0x4] sm:$0xf] %vm56, 0
  %vm59 = vcmask 57344
  %60 = vst.msk [vmem:[#allocation3 + $0x8] sm:$0x1] %vm59, 0
  %vm61 = vcmask 60417
  %62 = vst.msk [vmem:[#allocation3 + $0x98] sm:$0xe] %vm61, 0
  %63 = vst.msk [vmem:[#allocation3 + $0x9c] sm:$0xf] %vm56, 0
  %vm64 = vcmask 59392
  %65 = vst.msk [vmem:[#allocation3 + $0xa0] sm:$0x7] %vm64, 0
  %v66 = vld [vmem:[%s0] sm:$0xff]
  %v67 = vld [vmem:[%s0 + $0x8] sm:$0xff]
  %v68 = vld [vmem:[%s0 + $0x10] sm:$0xff]
  %v69 = vld [vmem:[%s0 + $0x18] sm:$0xff]
  %v70 = vld [vmem:[%s0 + $0x20] sm:$0xff]
  %v71 = vld [vmem:[%s0 + $0x28] sm:$0xff]
  %v72 = vld [vmem:[%s0 + $0x30] sm:$0xff]
  %v73 = vld [vmem:[%s0 + $0x38] sm:$0xff]
  %v74 = vld [vmem:[%s0 + $0x40] sm:$0xff]
  %v75 = vld [vmem:[%s0 + $0x48] sm:$0xff]
  %v76 = vld [vmem:[%s0 + $0x50] sm:$0xff]
  %v77 = vld [vmem:[%s0 + $0x58] sm:$0xff]
  %v78 = vld [vmem:[%s0 + $0x60] sm:$0xff]
  %v79 = vld [vmem:[%s0 + $0x68] sm:$0xff]
  %v80 = vld [vmem:[%s0 + $0x70] sm:$0xff]
  %v81 = vld [vmem:[%s0 + $0x78] sm:$0xff]
  %v82 = vld [vmem:[%s0 + $0x80] sm:$0xff]
  %v83 = vld [vmem:[%s0 + $0x88] sm:$0xff]
  %v84 = vld [vmem:[%s0 + $0x90] sm:$0xff]
  %v85 = vld [vmem:[%s0 + $0x98] sm:$0xff]
  %v86 = vld [vmem:[%s0 + $0xa0] sm:$0xff]
  %v87 = vld [vmem:[%s0 + $0xa8] sm:$0xff]
  %v88 = vld [vmem:[%s0 + $0xb0] sm:$0xff]
  %v89 = vld [vmem:[%s0 + $0xb8] sm:$0xff]
  %v90 = vld [vmem:[%s0 + $0xc0] sm:$0xff]
  %v91 = vld [vmem:[%s0 + $0xc8] sm:$0xff]
  %v92 = vld [vmem:[%s0 + $0xd0] sm:$0xff]
  %v93 = vld [vmem:[%s0 + $0xd8] sm:$0xff]
  %v94 = vld [vmem:[%s0 + $0xe0] sm:$0xff]
  %v95 = vld [vmem:[%s0 + $0xe8] sm:$0xff]
  %v96 = vld [vmem:[%s0 + $0xf0] sm:$0xff]
  %v97 = vld [vmem:[%s0 + $0xf8] sm:$0xff]
  %v99 = vperm.slane %v27, 0
  %v101 = vmul.f32 %v66, %v99
  %v102 = vmul.f32 %v67, %v99
  %v103 = vmul.f32 %v68, %v99
  %v104 = vmul.f32 %v69, %v99
  %v105 = vmul.f32 %v70, %v99
  %v106 = vmul.f32 %v71, %v99
  %v107 = vmul.f32 %v72, %v99
  %v108 = vmul.f32 %v73, %v99
  %v109 = vmul.f32 %v74, %v99
  %v110 = vmul.f32 %v75, %v99
  %v111 = vmul.f32 %v76, %v99
  %v112 = vmul.f32 %v77, %v99
  %v113 = vmul.f32 %v78, %v99
  %v114 = vmul.f32 %v79, %v99
  %v115 = vmul.f32 %v80, %v99
  %v116 = vmul.f32 %v81, %v99
  %v117 = vmul.f32 %v82, %v99
  %v118 = vmul.f32 %v83, %v99
  %v119 = vmul.f32 %v84, %v99
  %v120 = vmul.f32 %v85, %v99
  %v121 = vmul.f32 %v86, %v99
  %v122 = vmul.f32 %v87, %v99
  %v123 = vmul.f32 %v88, %v99
  %v124 = vmul.f32 %v89, %v99
  %v125 = vmul.f32 %v90, %v99
  %v126 = vmul.f32 %v91, %v99
  %v127 = vmul.f32 %v92, %v99
  %v128 = vmul.f32 %v93, %v99
  %v129 = vmul.f32 %v94, %v99
  %v130 = vmul.f32 %v95, %v99
  %v131 = vmul.f32 %v96, %v99
  %v132 = vmul.f32 %v97, %v99
  %v134 = vperm.slane %v28, 0
  %v136 = vadd.f32 %v101, %v134
  %v137 = vadd.f32 %v102, %v134
  %v138 = vadd.f32 %v103, %v134
  %v139 = vadd.f32 %v104, %v134
  %v140 = vadd.f32 %v105, %v134
  %v141 = vadd.f32 %v106, %v134
  %v142 = vadd.f32 %v107, %v134
  %v143 = vadd.f32 %v108, %v134
  %v144 = vadd.f32 %v109, %v134
  %v145 = vadd.f32 %v110, %v134
  %v146 = vadd.f32 %v111, %v134
  %v147 = vadd.f32 %v112, %v134
  %v148 = vadd.f32 %v113, %v134
  %v149 = vadd.f32 %v114, %v134
  %v150 = vadd.f32 %v115, %v134
  %v151 = vadd.f32 %v116, %v134
  %v152 = vadd.f32 %v117, %v134
  %v153 = vadd.f32 %v118, %v134
  %v154 = vadd.f32 %v119, %v134
  %v155 = vadd.f32 %v120, %v134
  %v156 = vadd.f32 %v121, %v134
  %v157 = vadd.f32 %v122, %v134
  %v158 = vadd.f32 %v123, %v134
  %v159 = vadd.f32 %v124, %v134
  %v160 = vadd.f32 %v125, %v134
  %v161 = vadd.f32 %v126, %v134
  %v162 = vadd.f32 %v127, %v134
  %v163 = vadd.f32 %v128, %v134
  %v164 = vadd.f32 %v129, %v134
  %v165 = vadd.f32 %v130, %v134
  %v166 = vadd.f32 %v131, %v134
  %v167 = vadd.f32 %v132, %v134
  %v168 = vmax.f32 %v136, 0.0
  %v169 = vmax.f32 %v137, 0.0
  %v170 = vmax.f32 %v138, 0.0
  %v171 = vmax.f32 %v139, 0.0
  %v172 = vmax.f32 %v140, 0.0
  %v173 = vmax.f32 %v141, 0.0
  %v174 = vmax.f32 %v142, 0.0
  %v175 = vmax.f32 %v143, 0.0
  %v176 = vmax.f32 %v144, 0.0
  %v177 = vmax.f32 %v145, 0.0
  %v178 = vmax.f32 %v146, 0.0
  %v179 = vmax.f32 %v147, 0.0
  %v180 = vmax.f32 %v148, 0.0
  %v181 = vmax.f32 %v149, 0.0
  %v182 = vmax.f32 %v150, 0.0
  %v183 = vmax.f32 %v151, 0.0
  %v184 = vmax.f32 %v152, 0.0
  %v185 = vmax.f32 %v153, 0.0
  %v186 = vmax.f32 %v154, 0.0
  %v187 = vmax.f32 %v155, 0.0
  %v188 = vmax.f32 %v156, 0.0
  %v189 = vmax.f32 %v157, 0.0
  %v190 = vmax.f32 %v158, 0.0
  %v191 = vmax.f32 %v159, 0.0
  %v192 = vmax.f32 %v160, 0.0
  %v193 = vmax.f32 %v161, 0.0
  %v194 = vmax.f32 %v162, 0.0
  %v195 = vmax.f32 %v163, 0.0
  %v196 = vmax.f32 %v164, 0.0
  %v197 = vmax.f32 %v165, 0.0
  %v198 = vmax.f32 %v166, 0.0
  %v199 = vmax.f32 %v167, 0.0
  %v200 = vpack.c.bf16 %v168, %v168
  %v201 = vpack.c.bf16 %v169, %v169
  %v202 = vpack.c.bf16 %v170, %v170
  %v203 = vpack.c.bf16 %v171, %v171
  %v204 = vpack.c.bf16 %v172, %v172
  %v205 = vpack.c.bf16 %v173, %v173
  %v206 = vpack.c.bf16 %v174, %v174
  %v207 = vpack.c.bf16 %v175, %v175
  %v208 = vpack.c.bf16 %v176, %v176
  %v209 = vpack.c.bf16 %v177, %v177
  %v210 = vpack.c.bf16 %v178, %v178
  %v211 = vpack.c.bf16 %v179, %v179
  %v212 = vpack.c.bf16 %v180, %v180
  %v213 = vpack.c.bf16 %v181, %v181
  %v214 = vpack.c.bf16 %v182, %v182
  %v215 = vpack.c.bf16 %v183, %v183
  %v216 = vpack.c.bf16 %v184, %v184
  %v217 = vpack.c.bf16 %v185, %v185
  %v218 = vpack.c.bf16 %v186, %v186
  %v219 = vpack.c.bf16 %v187, %v187
  %v220 = vpack.c.bf16 %v188, %v188
  %v221 = vpack.c.bf16 %v189, %v189
  %v222 = vpack.c.bf16 %v190, %v190
  %v223 = vpack.c.bf16 %v191, %v191
  %v224 = vpack.c.bf16 %v192, %v192
  %v225 = vpack.c.bf16 %v193, %v193
  %v226 = vpack.c.bf16 %v194, %v194
  %v227 = vpack.c.bf16 %v195, %v195
  %v228 = vpack.c.bf16 %v196, %v196
  %v229 = vpack.c.bf16 %v197, %v197
  %v230 = vpack.c.bf16 %v198, %v198
  %v231 = vpack.c.bf16 %v199, %v199
  %v234 = vunpack.c.l.b16 %v200
  %v235 = vunpack.c.l.b16 %v201
  %v236 = vpack.c.b16 %v235, %v234
  %v238 = vshrl.u32 %v236, 16
  %v240 = vrot.slane %v238, 7
  %v241 = vshll.u32 %v236, 16
  %v243 = vor.u32 %v240, %v241
  %vm246 = vcmask 1040384
  %vm247 = vsmask.f32 256
  %vm248 = vmand %vm246, %vm247
  %v249 = vsel %vm248, 0, %v243
  %v250 = vsel %vm248, %v240, 0
  %v253 = vunpack.c.l.b16 %v249
  %v254 = vunpack.c.h.b16 %v249
  %v255 = vunpack.c.l.b16 %v250
  %v256 = vpack.c.b16 %v253, %v253
  %v257 = vpack.c.b16 %v254, %v254
  %v258 = vpack.c.b16 %v255, %v255
  %vm259 = vcmask 1044484
  %vm260 = vmor %vm246, %vm259
  %v261 = vrot.slane %v256, 7
  %v262 = vrot.slane %v261, 4
  %v263 = vrot.slane %v257, 7
  %v264 = vsel %vm260, %v262, %v263
  %v265 = vrot.slane %v263, 4
  %v266 = vrot.slane %v258, 7
  %v267 = vsel %vm260, %v265, %v266
  %271 = vst.msk [vmem:[#allocation2 + $0x8] sm:$0xe] %vm51, %v261
  %272 = vst.msk [vmem:[#allocation2 + $0xc] sm:$0xf] %vm46, %v264
  %vm273 = vcmask 25600
  %274 = vst.msk [vmem:[#allocation2 + $0x10] sm:$0x3] %vm273, %v267
  %v277 = vunpack.c.l.b16 %v202
  %v278 = vunpack.c.l.b16 %v203
  %v279 = vpack.c.b16 %v278, %v277
  %v281 = vshrl.u32 %v279, 16
  %v283 = vrot.slane %v281, 7
  %v284 = vshll.u32 %v279, 16
  %v286 = vor.u32 %v283, %v284
  %v289 = vsel %vm248, 0, %v286
  %v290 = vsel %vm248, %v283, 0
  %v293 = vunpack.c.l.b16 %v289
  %v294 = vunpack.c.h.b16 %v289
  %v295 = vunpack.c.l.b16 %v290
  %v296 = vpack.c.b16 %v293, %v293
  %v297 = vpack.c.b16 %v294, %v294
  %v298 = vpack.c.b16 %v295, %v295
  %vm299 = vcmask 1041408
  %vm300 = vcmask 1045508
  %vm301 = vmor %vm299, %vm300
  %v302 = vrot.slane %v296, 6
  %v303 = vrot.slane %v302, 4
  %v304 = vrot.slane %v297, 6
  %v305 = vsel %vm301, %v303, %v304
  %v306 = vrot.slane %v304, 4
  %v307 = vrot.slane %v298, 6
  %v308 = vsel %vm301, %v306, %v307
  %vm312 = vcmask 27650
  %313 = vst.msk [vmem:[#allocation2 + $0x10] sm:$0xc] %vm312, %v302
  %314 = vst.msk [vmem:[#allocation2 + $0x14] sm:$0xf] %vm46, %v305
  %315 = vst.msk [vmem:[#allocation2 + $0x18] sm:$0x7] %vm54, %v308
  %v318 = vunpack.c.l.b16 %v204
  %v319 = vunpack.c.l.b16 %v205
  %v320 = vpack.c.b16 %v319, %v318
  %v322 = vshrl.u32 %v320, 16
  %v324 = vrot.slane %v322, 7
  %v325 = vshll.u32 %v320, 16
  %v327 = vor.u32 %v324, %v325
  %v330 = vsel %vm248, 0, %v327
  %v331 = vsel %vm248, %v324, 0
  %v334 = vunpack.c.l.b16 %v330
  %v335 = vunpack.c.h.b16 %v330
  %v336 = vunpack.c.l.b16 %v331
  %v337 = vpack.c.b16 %v334, %v334
  %v338 = vpack.c.b16 %v335, %v335
  %v339 = vpack.c.b16 %v336, %v336
  %vm340 = vcmask 1042432
  %vm341 = vcmask 1046532
  %vm342 = vmor %vm340, %vm341
  %v343 = vrot.slane %v337, 5
  %v344 = vrot.slane %v343, 4
  %v345 = vrot.slane %v338, 5
  %v346 = vsel %vm342, %v344, %v345
  %v347 = vrot.slane %v345, 4
  %v348 = vrot.slane %v339, 5
  %v349 = vsel %vm342, %v347, %v348
  %vm353 = vcmask 27651
  %354 = vst.msk [vmem:[#allocation2 + $0x18] sm:$0x8] %vm353, %v343
  %355 = vst.msk [vmem:[#allocation2 + $0x1c] sm:$0xf] %vm46, %v346
  %356 = vst.msk [vmem:[#allocation2 + $0x20] sm:$0xf] %vm46, %v349
  %v359 = vunpack.c.l.b16 %v206
  %v360 = vunpack.c.l.b16 %v207
  %v361 = vpack.c.b16 %v360, %v359
  %v363 = vshrl.u32 %v361, 16
  %v365 = vrot.slane %v363, 7
  %v366 = vshll.u32 %v361, 16
  %v368 = vor.u32 %v365, %v366
  %v371 = vsel %vm248, 0, %v368
  %v372 = vsel %vm248, %v365, 0
  %v375 = vunpack.c.l.b16 %v371
  %v376 = vunpack.c.h.b16 %v371
  %v377 = vunpack.c.l.b16 %v372
  %v378 = vpack.c.b16 %v375, %v375
  %v379 = vpack.c.b16 %v376, %v376
  %v380 = vpack.c.b16 %v377, %v377
  %384 = vst.msk [vmem:[#allocation2 + $0x24] sm:$0xf] %vm46, %v378
  %385 = vst.msk [vmem:[#allocation2 + $0x28] sm:$0xf] %vm46, %v379
  %386 = vst.msk [vmem:[#allocation2 + $0x2c] sm:$0x1] %vm49, %v380
  %v389 = vunpack.c.l.b16 %v208
  %v390 = vunpack.c.l.b16 %v209
  %v391 = vpack.c.b16 %v390, %v389
  %v393 = vshrl.u32 %v391, 16
  %v395 = vrot.slane %v393, 7
  %v396 = vshll.u32 %v391, 16
  %v398 = vor.u32 %v395, %v396
  %v401 = vsel %vm248, 0, %v398
  %v402 = vsel %vm248, %v395, 0
  %v405 = vunpack.c.l.b16 %v401
  %v406 = vunpack.c.h.b16 %v401
  %v407 = vunpack.c.l.b16 %v402
  %v408 = vpack.c.b16 %v405, %v405
  %v409 = vpack.c.b16 %v406, %v406
  %v410 = vpack.c.b16 %v407, %v407
  %v411 = vrot.slane %v408, 7
  %v412 = vrot.slane %v411, 4
  %v413 = vrot.slane %v409, 7
  %v414 = vsel %vm260, %v412, %v413
  %v415 = vrot.slane %v413, 4
  %v416 = vrot.slane %v410, 7
  %v417 = vsel %vm260, %v415, %v416
  %421 = vst.msk [vmem:[#allocation2 + $0x2c] sm:$0xe] %vm51, %v411
  %422 = vst.msk [vmem:[#allocation2 + $0x30] sm:$0xf] %vm46, %v414
  %423 = vst.msk [vmem:[#allocation2 + $0x34] sm:$0x3] %vm273, %v417
  %v426 = vunpack.c.l.b16 %v210
  %v427 = vunpack.c.l.b16 %v211
  %v428 = vpack.c.b16 %v427, %v426
  %v430 = vshrl.u32 %v428, 16
  %v432 = vrot.slane %v430, 7
  %v433 = vshll.u32 %v428, 16
  %v435 = vor.u32 %v432, %v433
  %v438 = vsel %vm248, 0, %v435
  %v439 = vsel %vm248, %v432, 0
  %v442 = vunpack.c.l.b16 %v438
  %v443 = vunpack.c.h.b16 %v438
  %v444 = vunpack.c.l.b16 %v439
  %v445 = vpack.c.b16 %v442, %v442
  %v446 = vpack.c.b16 %v443, %v443
  %v447 = vpack.c.b16 %v444, %v444
  %v448 = vrot.slane %v445, 6
  %v449 = vrot.slane %v448, 4
  %v450 = vrot.slane %v446, 6
  %v451 = vsel %vm301, %v449, %v450
  %v452 = vrot.slane %v450, 4
  %v453 = vrot.slane %v447, 6
  %v454 = vsel %vm301, %v452, %v453
  %458 = vst.msk [vmem:[#allocation2 + $0x34] sm:$0xc] %vm312, %v448
  %459 = vst.msk [vmem:[#allocation2 + $0x38] sm:$0xf] %vm46, %v451
  %460 = vst.msk [vmem:[#allocation2 + $0x3c] sm:$0x7] %vm54, %v454
  %v463 = vunpack.c.l.b16 %v212
  %v464 = vunpack.c.l.b16 %v213
  %v465 = vpack.c.b16 %v464, %v463
  %v467 = vshrl.u32 %v465, 16
  %v469 = vrot.slane %v467, 7
  %v470 = vshll.u32 %v465, 16
  %v472 = vor.u32 %v469, %v470
  %v475 = vsel %vm248, 0, %v472
  %v476 = vsel %vm248, %v469, 0
  %v479 = vunpack.c.l.b16 %v475
  %v480 = vunpack.c.h.b16 %v475
  %v481 = vunpack.c.l.b16 %v476
  %v482 = vpack.c.b16 %v479, %v479
  %v483 = vpack.c.b16 %v480, %v480
  %v484 = vpack.c.b16 %v481, %v481
  %v485 = vrot.slane %v482, 5
  %v486 = vrot.slane %v485, 4
  %v487 = vrot.slane %v483, 5
  %v488 = vsel %vm342, %v486, %v487
  %v489 = vrot.slane %v487, 4
  %v490 = vrot.slane %v484, 5
  %v491 = vsel %vm342, %v489, %v490
  %495 = vst.msk [vmem:[#allocation2 + $0x3c] sm:$0x8] %vm353, %v485
  %496 = vst.msk [vmem:[#allocation2 + $0x40] sm:$0xf] %vm46, %v488
  %497 = vst.msk [vmem:[#allocation2 + $0x44] sm:$0xf] %vm46, %v491
  %v500 = vunpack.c.l.b16 %v214
  %v501 = vunpack.c.l.b16 %v215
  %v502 = vpack.c.b16 %v501, %v500
  %v504 = vshrl.u32 %v502, 16
  %v506 = vrot.slane %v504, 7
  %v507 = vshll.u32 %v502, 16
  %v509 = vor.u32 %v506, %v507
  %v512 = vsel %vm248, 0, %v509
  %v513 = vsel %vm248, %v506, 0
  %v516 = vunpack.c.l.b16 %v512
  %v517 = vunpack.c.h.b16 %v512
  %v518 = vunpack.c.l.b16 %v513
  %v519 = vpack.c.b16 %v516, %v516
  %v520 = vpack.c.b16 %v517, %v517
  %v521 = vpack.c.b16 %v518, %v518
  %525 = vst.msk [vmem:[#allocation2 + $0x48] sm:$0xf] %vm46, %v519
  %526 = vst.msk [vmem:[#allocation2 + $0x4c] sm:$0xf] %vm46, %v520
  %527 = vst.msk [vmem:[#allocation2 + $0x50] sm:$0x1] %vm49, %v521
  %v530 = vunpack.c.l.b16 %v216
  %v531 = vunpack.c.l.b16 %v217
  %v532 = vpack.c.b16 %v531, %v530
  %v534 = vshrl.u32 %v532, 16
  %v536 = vrot.slane %v534, 7
  %v537 = vshll.u32 %v532, 16
  %v539 = vor.u32 %v536, %v537
  %v542 = vsel %vm248, 0, %v539
  %v543 = vsel %vm248, %v536, 0
  %v546 = vunpack.c.l.b16 %v542
  %v547 = vunpack.c.h.b16 %v542
  %v548 = vunpack.c.l.b16 %v543
  %v549 = vpack.c.b16 %v546, %v546
  %v550 = vpack.c.b16 %v547, %v547
  %v551 = vpack.c.b16 %v548, %v548
  %v552 = vrot.slane %v549, 7
  %v553 = vrot.slane %v552, 4
  %v554 = vrot.slane %v550, 7
  %v555 = vsel %vm260, %v553, %v554
  %v556 = vrot.slane %v554, 4
  %v557 = vrot.slane %v551, 7
  %v558 = vsel %vm260, %v556, %v557
  %562 = vst.msk [vmem:[#allocation2 + $0x50] sm:$0xe] %vm51, %v552
  %563 = vst.msk [vmem:[#allocation2 + $0x54] sm:$0xf] %vm46, %v555
  %564 = vst.msk [vmem:[#allocation2 + $0x58] sm:$0x3] %vm273, %v558
  %v567 = vunpack.c.l.b16 %v218
  %v568 = vunpack.c.l.b16 %v219
  %v569 = vpack.c.b16 %v568, %v567
  %v571 = vshrl.u32 %v569, 16
  %v573 = vrot.slane %v571, 7
  %v574 = vshll.u32 %v569, 16
  %v576 = vor.u32 %v573, %v574
  %v579 = vsel %vm248, 0, %v576
  %v580 = vsel %vm248, %v573, 0
  %v583 = vunpack.c.l.b16 %v579
  %v584 = vunpack.c.h.b16 %v579
  %v585 = vunpack.c.l.b16 %v580
  %v586 = vpack.c.b16 %v583, %v583
  %v587 = vpack.c.b16 %v584, %v584
  %v588 = vpack.c.b16 %v585, %v585
  %v589 = vrot.slane %v586, 6
  %v590 = vrot.slane %v589, 4
  %v591 = vrot.slane %v587, 6
  %v592 = vsel %vm301, %v590, %v591
  %v593 = vrot.slane %v591, 4
  %v594 = vrot.slane %v588, 6
  %v595 = vsel %vm301, %v593, %v594
  %599 = vst.msk [vmem:[#allocation2 + $0x58] sm:$0xc] %vm312, %v589
  %600 = vst.msk [vmem:[#allocation2 + $0x5c] sm:$0xf] %vm46, %v592
  %601 = vst.msk [vmem:[#allocation2 + $0x60] sm:$0x7] %vm54, %v595
  %v604 = vunpack.c.l.b16 %v220
  %v605 = vunpack.c.l.b16 %v221
  %v606 = vpack.c.b16 %v605, %v604
  %v608 = vshrl.u32 %v606, 16
  %v610 = vrot.slane %v608, 7
  %v611 = vshll.u32 %v606, 16
  %v613 = vor.u32 %v610, %v611
  %v616 = vsel %vm248, 0, %v613
  %v617 = vsel %vm248, %v610, 0
  %v620 = vunpack.c.l.b16 %v616
  %v621 = vunpack.c.h.b16 %v616
  %v622 = vunpack.c.l.b16 %v617
  %v623 = vpack.c.b16 %v620, %v620
  %v624 = vpack.c.b16 %v621, %v621
  %v625 = vpack.c.b16 %v622, %v622
  %v626 = vrot.slane %v623, 5
  %v627 = vrot.slane %v626, 4
  %v628 = vrot.slane %v624, 5
  %v629 = vsel %vm342, %v627, %v628
  %v630 = vrot.slane %v628, 4
  %v631 = vrot.slane %v625, 5
  %v632 = vsel %vm342, %v630, %v631
  %636 = vst.msk [vmem:[#allocation2 + $0x60] sm:$0x8] %vm353, %v626
  %637 = vst.msk [vmem:[#allocation2 + $0x64] sm:$0xf] %vm46, %v629
  %638 = vst.msk [vmem:[#allocation2 + $0x68] sm:$0xf] %vm46, %v632
  %v641 = vunpack.c.l.b16 %v222
  %v642 = vunpack.c.l.b16 %v223
  %v643 = vpack.c.b16 %v642, %v641
  %v645 = vshrl.u32 %v643, 16
  %v647 = vrot.slane %v645, 7
  %v648 = vshll.u32 %v643, 16
  %v650 = vor.u32 %v647, %v648
  %v653 = vsel %vm248, 0, %v650
  %v654 = vsel %vm248, %v647, 0
  %v657 = vunpack.c.l.b16 %v653
  %v658 = vunpack.c.h.b16 %v653
  %v659 = vunpack.c.l.b16 %v654
  %v660 = vpack.c.b16 %v657, %v657
  %v661 = vpack.c.b16 %v658, %v658
  %v662 = vpack.c.b16 %v659, %v659
  %666 = vst.msk [vmem:[#allocation2 + $0x6c] sm:$0xf] %vm46, %v660
  %667 = vst.msk [vmem:[#allocation2 + $0x70] sm:$0xf] %vm46, %v661
  %668 = vst.msk [vmem:[#allocation2 + $0x74] sm:$0x1] %vm49, %v662
  %v671 = vunpack.c.l.b16 %v224
  %v672 = vunpack.c.l.b16 %v225
  %v673 = vpack.c.b16 %v672, %v671
  %v675 = vshrl.u32 %v673, 16
  %v677 = vrot.slane %v675, 7
  %v678 = vshll.u32 %v673, 16
  %v680 = vor.u32 %v677, %v678
  %v683 = vsel %vm248, 0, %v680
  %v684 = vsel %vm248, %v677, 0
  %v687 = vunpack.c.l.b16 %v683
  %v688 = vunpack.c.h.b16 %v683
  %v689 = vunpack.c.l.b16 %v684
  %v690 = vpack.c.b16 %v687, %v687
  %v691 = vpack.c.b16 %v688, %v688
  %v692 = vpack.c.b16 %v689, %v689
  %v693 = vrot.slane %v690, 7
  %v694 = vrot.slane %v693, 4
  %v695 = vrot.slane %v691, 7
  %v696 = vsel %vm260, %v694, %v695
  %v697 = vrot.slane %v695, 4
  %v698 = vrot.slane %v692, 7
  %v699 = vsel %vm260, %v697, %v698
  %703 = vst.msk [vmem:[#allocation2 + $0x74] sm:$0xe] %vm51, %v693
  %704 = vst.msk [vmem:[#allocation2 + $0x78] sm:$0xf] %vm46, %v696
  %705 = vst.msk [vmem:[#allocation2 + $0x7c] sm:$0x3] %vm273, %v699
  %v708 = vunpack.c.l.b16 %v226
  %v709 = vunpack.c.l.b16 %v227
  %v710 = vpack.c.b16 %v709, %v708
  %v712 = vshrl.u32 %v710, 16
  %v714 = vrot.slane %v712, 7
  %v715 = vshll.u32 %v710, 16
  %v717 = vor.u32 %v714, %v715
  %v720 = vsel %vm248, 0, %v717
  %v721 = vsel %vm248, %v714, 0
  %v724 = vunpack.c.l.b16 %v720
  %v725 = vunpack.c.h.b16 %v720
  %v726 = vunpack.c.l.b16 %v721
  %v727 = vpack.c.b16 %v724, %v724
  %v728 = vpack.c.b16 %v725, %v725
  %v729 = vpack.c.b16 %v726, %v726
  %v730 = vrot.slane %v727, 6
  %v731 = vrot.slane %v730, 4
  %v732 = vrot.slane %v728, 6
  %v733 = vsel %vm301, %v731, %v732
  %v734 = vrot.slane %v732, 4
  %v735 = vrot.slane %v729, 6
  %v736 = vsel %vm301, %v734, %v735
  %740 = vst.msk [vmem:[#allocation2 + $0x7c] sm:$0xc] %vm312, %v730
  %741 = vst.msk [vmem:[#allocation2 + $0x80] sm:$0xf] %vm46, %v733
  %742 = vst.msk [vmem:[#allocation2 + $0x84] sm:$0x7] %vm54, %v736
  %v745 = vunpack.c.l.b16 %v228
  %v746 = vunpack.c.l.b16 %v229
  %v747 = vpack.c.b16 %v746, %v745
  %v749 = vshrl.u32 %v747, 16
  %v751 = vrot.slane %v749, 7
  %v752 = vshll.u32 %v747, 16
  %v754 = vor.u32 %v751, %v752
  %v757 = vsel %vm248, 0, %v754
  %v758 = vsel %vm248, %v751, 0
  %v761 = vunpack.c.l.b16 %v757
  %v762 = vunpack.c.h.b16 %v757
  %v763 = vunpack.c.l.b16 %v758
  %v764 = vpack.c.b16 %v761, %v761
  %v765 = vpack.c.b16 %v762, %v762
  %v766 = vpack.c.b16 %v763, %v763
  %v767 = vrot.slane %v764, 5
  %v768 = vrot.slane %v767, 4
  %v769 = vrot.slane %v765, 5
  %v770 = vsel %vm342, %v768, %v769
  %v771 = vrot.slane %v769, 4
  %v772 = vrot.slane %v766, 5
  %v773 = vsel %vm342, %v771, %v772
  %777 = vst.msk [vmem:[#allocation2 + $0x84] sm:$0x8] %vm353, %v767
  %778 = vst.msk [vmem:[#allocation2 + $0x88] sm:$0xf] %vm46, %v770
  %779 = vst.msk [vmem:[#allocation2 + $0x8c] sm:$0xf] %vm46, %v773
  %v782 = vunpack.c.l.b16 %v230
  %v783 = vunpack.c.l.b16 %v231
  %v784 = vpack.c.b16 %v783, %v782
  %v786 = vshrl.u32 %v784, 16
  %v788 = vrot.slane %v786, 7
  %v789 = vshll.u32 %v784, 16
  %v791 = vor.u32 %v788, %v789
  %v794 = vsel %vm248, 0, %v791
  %v795 = vsel %vm248, %v788, 0
  %v798 = vunpack.c.l.b16 %v794
  %v799 = vunpack.c.h.b16 %v794
  %v800 = vunpack.c.l.b16 %v795
  %v801 = vpack.c.b16 %v798, %v798
  %v802 = vpack.c.b16 %v799, %v799
  %v803 = vpack.c.b16 %v800, %v800
  %807 = vst.msk [vmem:[#allocation2 + $0x90] sm:$0xf] %vm46, %v801
  %808 = vst.msk [vmem:[#allocation2 + $0x94] sm:$0xf] %vm46, %v802
  %809 = vst.msk [vmem:[#allocation2 + $0x98] sm:$0x1] %vm49, %v803
  %v810 = vld [vmem:[#allocation2] sm:$0xf]
  %v811 = vld [vmem:[#allocation2 + $0x4] sm:$0xf]
  %v812 = vld [vmem:[#allocation2 + $0x8] sm:$0xf]
  %v813 = vld [vmem:[#allocation2 + $0xc] sm:$0xf]
  %v814 = vld [vmem:[#allocation2 + $0x10] sm:$0xf]
  %v815 = vld [vmem:[#allocation2 + $0x14] sm:$0xf]
  %v816 = vld [vmem:[#allocation2 + $0x18] sm:$0xf]
  %v817 = vld [vmem:[#allocation2 + $0x1c] sm:$0xf]
  %v818 = vld [vmem:[#allocation2 + $0x20] sm:$0xf]
  %v819 = vld [vmem:[#allocation2 + $0x24] sm:$0xf]
  %v820 = vld [vmem:[#allocation2 + $0x28] sm:$0xf]
  %v821 = vld [vmem:[#allocation2 + $0x2c] sm:$0xf]
  %v822 = vld [vmem:[#allocation2 + $0x30] sm:$0xf]
  %v823 = vld [vmem:[#allocation2 + $0x34] sm:$0xf]
  %v824 = vld [vmem:[#allocation2 + $0x38] sm:$0xf]
  %v825 = vld [vmem:[#allocation2 + $0x3c] sm:$0xf]
  %v826 = vld [vmem:[#allocation2 + $0x40] sm:$0xf]
  %v827 = vld [vmem:[#allocation2 + $0x44] sm:$0xf]
  %v828 = vld [vmem:[#allocation2 + $0x48] sm:$0xf]
  %v829 = vld [vmem:[#allocation2 + $0x4c] sm:$0xf]
  %v830 = vld [vmem:[#allocation2 + $0x50] sm:$0xf]
  %v831 = vld [vmem:[#allocation2 + $0x54] sm:$0xf]
  %v832 = vld [vmem:[#allocation2 + $0x58] sm:$0xf]
  %v833 = vld [vmem:[#allocation2 + $0x5c] sm:$0xf]
  %v834 = vld [vmem:[#allocation2 + $0x60] sm:$0xf]
  %v835 = vld [vmem:[#allocation2 + $0x64] sm:$0xf]
  %v836 = vld [vmem:[#allocation2 + $0x68] sm:$0xf]
  %v837 = vld [vmem:[#allocation2 + $0x6c] sm:$0xf]
  %v838 = vld [vmem:[#allocation2 + $0x70] sm:$0xf]
  %v839 = vld [vmem:[#allocation2 + $0x74] sm:$0xf]
  %v840 = vld [vmem:[#allocation2 + $0x78] sm:$0xf]
  %v841 = vld [vmem:[#allocation2 + $0x7c] sm:$0xf]
  %v842 = vld [vmem:[#allocation2 + $0x80] sm:$0xf]
  %v843 = vld [vmem:[#allocation2 + $0x84] sm:$0xf]
  %v844 = vld [vmem:[#allocation2 + $0x88] sm:$0xf]
  %v845 = vld [vmem:[#allocation2 + $0x8c] sm:$0xf]
  %v846 = vld [vmem:[#allocation2 + $0x90] sm:$0x1]
  %v847 = vld [vmem:[#allocation2] sm:$0xe]
  %v848 = vld [vmem:[#allocation2 + $0x8] sm:$0xe]
  %v849 = vld [vmem:[#allocation2 + $0x90] sm:$0xf]
  %v850 = vld [vmem:[#allocation2 + $0x94] sm:$0xf]
  %v851 = vld [vmem:[#allocation2 + $0x98] sm:$0x1]
  %v852 = vld [vmem:[#allocation2 + $0x98] sm:$0x3]
  %v853 = vld [vmem:[#allocation2 + $0x8] sm:$0xc]
  %v854 = vld [vmem:[#allocation2 + $0x10] sm:$0xc]
  %v855 = vld [vmem:[#allocation2 + $0x98] sm:$0xf]
  %v856 = vld [vmem:[#allocation2 + $0x9c] sm:$0xf]
  %v857 = vld [vmem:[#allocation2 + $0xa0] sm:$0x3]
  %v858 = vld [vmem:[#allocation2 + $0xa0] sm:$0x7]
  %v859 = vld [vmem:[#allocation2 + $0x10] sm:$0x8]
  %v896 = vunpack.c.l.b16 %v810
  %v897 = vunpack.c.l.b16 %v811
  %v898 = vunpack.c.l.b16 %v812
  %v899 = vunpack.c.l.b16 %v813
  %v900 = vunpack.c.l.b16 %v814
  %v901 = vunpack.c.l.b16 %v815
  %v902 = vunpack.c.l.b16 %v816
  %v903 = vunpack.c.l.b16 %v817
  %v904 = vunpack.c.l.b16 %v818
  %v905 = vunpack.c.l.b16 %v819
  %v906 = vunpack.c.l.b16 %v820
  %v907 = vunpack.c.l.b16 %v821
  %v908 = vunpack.c.l.b16 %v822
  %v909 = vunpack.c.l.b16 %v823
  %v910 = vunpack.c.l.b16 %v824
  %v911 = vunpack.c.l.b16 %v825
  %v912 = vunpack.c.l.b16 %v826
  %v913 = vunpack.c.l.b16 %v827
  %v914 = vunpack.c.l.b16 %v828
  %v915 = vunpack.c.l.b16 %v829
  %v916 = vunpack.c.l.b16 %v830
  %v917 = vunpack.c.l.b16 %v831
  %v918 = vunpack.c.l.b16 %v832
  %v919 = vunpack.c.l.b16 %v833
  %v920 = vunpack.c.l.b16 %v834
  %v921 = vunpack.c.l.b16 %v835
  %v922 = vunpack.c.l.b16 %v836
  %v923 = vunpack.c.l.b16 %v837
  %v924 = vunpack.c.l.b16 %v838
  %v925 = vunpack.c.l.b16 %v839
  %v926 = vunpack.c.l.b16 %v840
  %v927 = vunpack.c.l.b16 %v841
  %v928 = vunpack.c.l.b16 %v842
  %v929 = vunpack.c.l.b16 %v843
  %v930 = vunpack.c.l.b16 %v844
  %v931 = vunpack.c.l.b16 %v845
  %v932 = vpack.c.b16 %v897, %v896
  %v933 = vpack.c.b16 %v899, %v898
  %v934 = vpack.c.b16 %v901, %v900
  %v935 = vpack.c.b16 %v903, %v902
  %v936 = vpack.c.b16 %v905, %v904
  %v937 = vpack.c.b16 %v907, %v906
  %v938 = vpack.c.b16 %v909, %v908
  %v939 = vpack.c.b16 %v911, %v910
  %v940 = vpack.c.b16 %v913, %v912
  %v941 = vpack.c.b16 %v915, %v914
  %v942 = vpack.c.b16 %v917, %v916
  %v943 = vpack.c.b16 %v919, %v918
  %v944 = vpack.c.b16 %v921, %v920
  %v945 = vpack.c.b16 %v923, %v922
  %v946 = vpack.c.b16 %v925, %v924
  %v947 = vpack.c.b16 %v927, %v926
  %v948 = vpack.c.b16 %v929, %v928
  %v949 = vpack.c.b16 %v931, %v930
  %v951 = vunpack.c.l.b16 %v846
  %v952 = vpack.c.b16 %v951, %v951
  %vm953 = vsmask.f32 7424
  %v955 = vshrl.u32 %v932, 16
  %v957 = vshll.u32 %v932, 16
  %v959 = vrot.slane %v957, 1
  %v960 = vor.u32 %v955, %v959
  %v962 = vshll.u32 %v933, 16
  %v964 = vrot.slane %v962, 1
  %v965 = vsel %vm953, %v960, %v964
  %v966 = vshrl.u32 %v933, 16
  %v968 = vor.u32 %v966, %v964
  %v970 = vshll.u32 %v934, 16
  %v972 = vrot.slane %v970, 1
  %v973 = vsel %vm953, %v968, %v972
  %v974 = vshrl.u32 %v934, 16
  %v976 = vor.u32 %v974, %v972
  %v978 = vshll.u32 %v935, 16
  %v980 = vrot.slane %v978, 1
  %v981 = vsel %vm953, %v976, %v980
  %v982 = vshrl.u32 %v935, 16
  %v984 = vor.u32 %v982, %v980
  %v986 = vshll.u32 %v936, 16
  %v988 = vrot.slane %v986, 1
  %v989 = vsel %vm953, %v984, %v988
  %v990 = vshrl.u32 %v936, 16
  %v992 = vor.u32 %v990, %v988
  %v994 = vshll.u32 %v937, 16
  %v996 = vrot.slane %v994, 1
  %v997 = vsel %vm953, %v992, %v996
  %v998 = vshrl.u32 %v937, 16
  %v1000 = vor.u32 %v998, %v996
  %v1002 = vshll.u32 %v938, 16
  %v1004 = vrot.slane %v1002, 1
  %v1005 = vsel %vm953, %v1000, %v1004
  %v1006 = vshrl.u32 %v938, 16
  %v1008 = vor.u32 %v1006, %v1004
  %v1010 = vshll.u32 %v939, 16
  %v1012 = vrot.slane %v1010, 1
  %v1013 = vsel %vm953, %v1008, %v1012
  %v1014 = vshrl.u32 %v939, 16
  %v1016 = vor.u32 %v1014, %v1012
  %v1018 = vshll.u32 %v940, 16
  %v1020 = vrot.slane %v1018, 1
  %v1021 = vsel %vm953, %v1016, %v1020
  %v1022 = vshrl.u32 %v940, 16
  %v1024 = vor.u32 %v1022, %v1020
  %v1026 = vshll.u32 %v941, 16
  %v1028 = vrot.slane %v1026, 1
  %v1029 = vsel %vm953, %v1024, %v1028
  %v1030 = vshrl.u32 %v941, 16
  %v1032 = vor.u32 %v1030, %v1028
  %v1034 = vshll.u32 %v942, 16
  %v1036 = vrot.slane %v1034, 1
  %v1037 = vsel %vm953, %v1032, %v1036
  %v1038 = vshrl.u32 %v942, 16
  %v1040 = vor.u32 %v1038, %v1036
  %v1042 = vshll.u32 %v943, 16
  %v1044 = vrot.slane %v1042, 1
  %v1045 = vsel %vm953, %v1040, %v1044
  %v1046 = vshrl.u32 %v943, 16
  %v1048 = vor.u32 %v1046, %v1044
  %v1050 = vshll.u32 %v944, 16
  %v1052 = vrot.slane %v1050, 1
  %v1053 = vsel %vm953, %v1048, %v1052
  %v1054 = vshrl.u32 %v944, 16
  %v1056 = vor.u32 %v1054, %v1052
  %v1058 = vshll.u32 %v945, 16
  %v1060 = vrot.slane %v1058, 1
  %v1061 = vsel %vm953, %v1056, %v1060
  %v1062 = vshrl.u32 %v945, 16
  %v1064 = vor.u32 %v1062, %v1060
  %v1066 = vshll.u32 %v946, 16
  %v1068 = vrot.slane %v1066, 1
  %v1069 = vsel %vm953, %v1064, %v1068
  %v1070 = vshrl.u32 %v946, 16
  %v1072 = vor.u32 %v1070, %v1068
  %v1074 = vshll.u32 %v947, 16
  %v1076 = vrot.slane %v1074, 1
  %v1077 = vsel %vm953, %v1072, %v1076
  %v1078 = vshrl.u32 %v947, 16
  %v1080 = vor.u32 %v1078, %v1076
  %v1082 = vshll.u32 %v948, 16
  %v1084 = vrot.slane %v1082, 1
  %v1085 = vsel %vm953, %v1080, %v1084
  %v1086 = vshrl.u32 %v948, 16
  %v1088 = vor.u32 %v1086, %v1084
  %v1090 = vshll.u32 %v949, 16
  %v1092 = vrot.slane %v1090, 1
  %v1093 = vsel %vm953, %v1088, %v1092
  %v1094 = vshrl.u32 %v949, 16
  %v1096 = vor.u32 %v1094, %v1092
  %v1098 = vshll.u32 %v952, 16
  %v1100 = vrot.slane %v1098, 1
  %v1101 = vsel %vm953, %v1096, %v1100
  %1102 = vrot.lane.b32.xlu0 %v965, 4
  %v1103 = vpop.permute.xlu0 %1102
  %1104 = vrot.lane.b32.xlu0 %v973, 4
  %v1105 = vpop.permute.xlu0 %1104
  %1106 = vrot.lane.b32.xlu0 %v981, 4
  %v1107 = vpop.permute.xlu0 %1106
  %1108 = vrot.lane.b32.xlu0 %v989, 4
  %v1109 = vpop.permute.xlu0 %1108
  %1110 = vrot.lane.b32.xlu0 %v997, 4
  %v1111 = vpop.permute.xlu0 %1110
  %1112 = vrot.lane.b32.xlu0 %v1005, 4
  %v1113 = vpop.permute.xlu0 %1112
  %1114 = vrot.lane.b32.xlu0 %v1013, 4
  %v1115 = vpop.permute.xlu0 %1114
  %1116 = vrot.lane.b32.xlu0 %v1021, 4
  %v1117 = vpop.permute.xlu0 %1116
  %1118 = vrot.lane.b32.xlu0 %v1029, 4
  %v1119 = vpop.permute.xlu0 %1118
  %1120 = vrot.lane.b32.xlu0 %v1037, 4
  %v1121 = vpop.permute.xlu0 %1120
  %1122 = vrot.lane.b32.xlu0 %v1045, 4
  %v1123 = vpop.permute.xlu0 %1122
  %1124 = vrot.lane.b32.xlu0 %v1053, 4
  %v1125 = vpop.permute.xlu0 %1124
  %1126 = vrot.lane.b32.xlu0 %v1061, 4
  %v1127 = vpop.permute.xlu0 %1126
  %1128 = vrot.lane.b32.xlu0 %v1069, 4
  %v1129 = vpop.permute.xlu0 %1128
  %1130 = vrot.lane.b32.xlu0 %v1077, 4
  %v1131 = vpop.permute.xlu0 %1130
  %1132 = vrot.lane.b32.xlu0 %v1085, 4
  %v1133 = vpop.permute.xlu0 %1132
  %1134 = vrot.lane.b32.xlu0 %v1093, 4
  %v1135 = vpop.permute.xlu0 %1134
  %1136 = vrot.lane.b32.xlu0 %v1101, 4
  %v1137 = vpop.permute.xlu0 %1136
  %v1139 = vunpack.c.l.b16 %v847
  %v1140 = vpack.c.b16 %v897, %v1139
  %vm1141 = vcmask 1046528
  %v1142 = vrot.slane %v1140, 1
  %v1143 = vrot.slane %v933, 1
  %v1144 = vsel %vm1141, %v1142, %v1143
  %v1145 = vrot.slane %v934, 1
  %v1146 = vsel %vm1141, %v1143, %v1145
  %v1147 = vrot.slane %v935, 1
  %v1148 = vsel %vm1141, %v1145, %v1147
  %v1149 = vrot.slane %v936, 1
  %v1150 = vsel %vm1141, %v1147, %v1149
  %v1151 = vrot.slane %v937, 1
  %v1152 = vsel %vm1141, %v1149, %v1151
  %v1153 = vrot.slane %v938, 1
  %v1154 = vsel %vm1141, %v1151, %v1153
  %v1155 = vrot.slane %v939, 1
  %v1156 = vsel %vm1141, %v1153, %v1155
  %v1157 = vrot.slane %v940, 1
  %v1158 = vsel %vm1141, %v1155, %v1157
  %v1159 = vrot.slane %v941, 1
  %v1160 = vsel %vm1141, %v1157, %v1159
  %v1161 = vrot.slane %v942, 1
  %v1162 = vsel %vm1141, %v1159, %v1161
  %v1163 = vrot.slane %v943, 1
  %v1164 = vsel %vm1141, %v1161, %v1163
  %v1165 = vrot.slane %v944, 1
  %v1166 = vsel %vm1141, %v1163, %v1165
  %v1167 = vrot.slane %v945, 1
  %v1168 = vsel %vm1141, %v1165, %v1167
  %v1169 = vrot.slane %v946, 1
  %v1170 = vsel %vm1141, %v1167, %v1169
  %v1171 = vrot.slane %v947, 1
  %v1172 = vsel %vm1141, %v1169, %v1171
  %v1173 = vrot.slane %v948, 1
  %v1174 = vsel %vm1141, %v1171, %v1173
  %v1175 = vrot.slane %v949, 1
  %v1176 = vsel %vm1141, %v1173, %v1175
  %v1177 = vrot.slane %v952, 1
  %v1178 = vsel %vm1141, %v1175, %v1177
  %1179 = vrot.lane.b32.xlu0 %v1144, 8
  %v1180 = vpop.permute.xlu0 %1179
  %1181 = vrot.lane.b32.xlu0 %v1146, 8
  %v1182 = vpop.permute.xlu0 %1181
  %1183 = vrot.lane.b32.xlu0 %v1148, 8
  %v1184 = vpop.permute.xlu0 %1183
  %1185 = vrot.lane.b32.xlu0 %v1150, 8
  %v1186 = vpop.permute.xlu0 %1185
  %1187 = vrot.lane.b32.xlu0 %v1152, 8
  %v1188 = vpop.permute.xlu0 %1187
  %1189 = vrot.lane.b32.xlu0 %v1154, 8
  %v1190 = vpop.permute.xlu0 %1189
  %1191 = vrot.lane.b32.xlu0 %v1156, 8
  %v1192 = vpop.permute.xlu0 %1191
  %1193 = vrot.lane.b32.xlu0 %v1158, 8
  %v1194 = vpop.permute.xlu0 %1193
  %1195 = vrot.lane.b32.xlu0 %v1160, 8
  %v1196 = vpop.permute.xlu0 %1195
  %1197 = vrot.lane.b32.xlu0 %v1162, 8
  %v1198 = vpop.permute.xlu0 %1197
  %1199 = vrot.lane.b32.xlu0 %v1164, 8
  %v1200 = vpop.permute.xlu0 %1199
  %1201 = vrot.lane.b32.xlu0 %v1166, 8
  %v1202 = vpop.permute.xlu0 %1201
  %1203 = vrot.lane.b32.xlu0 %v1168, 8
  %v1204 = vpop.permute.xlu0 %1203
  %1205 = vrot.lane.b32.xlu0 %v1170, 8
  %v1206 = vpop.permute.xlu0 %1205
  %1207 = vrot.lane.b32.xlu0 %v1172, 8
  %v1208 = vpop.permute.xlu0 %1207
  %1209 = vrot.lane.b32.xlu0 %v1174, 8
  %v1210 = vpop.permute.xlu0 %1209
  %1211 = vrot.lane.b32.xlu0 %v1176, 8
  %v1212 = vpop.permute.xlu0 %1211
  %1213 = vrot.lane.b32.xlu0 %v1178, 8
  %v1214 = vpop.permute.xlu0 %1213
  %v1219 = vunpack.c.l.b16 %v848
  %v1220 = vunpack.c.l.b16 %v849
  %v1221 = vunpack.c.l.b16 %v850
  %v1222 = vunpack.c.l.b16 %v851
  %v1223 = vpack.c.b16 %v899, %v1219
  %v1224 = vpack.c.b16 %v1221, %v1220
  %v1225 = vpack.c.b16 %v1222, %v1222
  %v1226 = vrot.slane %v1223, 1
  %v1227 = vsel %vm1141, %v1226, %v1145
  %v1228 = vrot.slane %v1224, 1
  %v1229 = vsel %vm1141, %v1175, %v1228
  %v1230 = vrot.slane %v1225, 1
  %v1231 = vsel %vm1141, %v1228, %v1230
  %1232 = vrot.lane.b32.xlu0 %v1227, 12
  %v1233 = vpop.permute.xlu0 %1232
  %1234 = vrot.lane.b32.xlu0 %v1148, 12
  %v1235 = vpop.permute.xlu0 %1234
  %1236 = vrot.lane.b32.xlu0 %v1150, 12
  %v1237 = vpop.permute.xlu0 %1236
  %1238 = vrot.lane.b32.xlu0 %v1152, 12
  %v1239 = vpop.permute.xlu0 %1238
  %1240 = vrot.lane.b32.xlu0 %v1154, 12
  %v1241 = vpop.permute.xlu0 %1240
  %1242 = vrot.lane.b32.xlu0 %v1156, 12
  %v1243 = vpop.permute.xlu0 %1242
  %1244 = vrot.lane.b32.xlu0 %v1158, 12
  %v1245 = vpop.permute.xlu0 %1244
  %1246 = vrot.lane.b32.xlu0 %v1160, 12
  %v1247 = vpop.permute.xlu0 %1246
  %1248 = vrot.lane.b32.xlu0 %v1162, 12
  %v1249 = vpop.permute.xlu0 %1248
  %1250 = vrot.lane.b32.xlu0 %v1164, 12
  %v1251 = vpop.permute.xlu0 %1250
  %1252 = vrot.lane.b32.xlu0 %v1166, 12
  %v1253 = vpop.permute.xlu0 %1252
  %1254 = vrot.lane.b32.xlu0 %v1168, 12
  %v1255 = vpop.permute.xlu0 %1254
  %1256 = vrot.lane.b32.xlu0 %v1170, 12
  %v1257 = vpop.permute.xlu0 %1256
  %1258 = vrot.lane.b32.xlu0 %v1172, 12
  %v1259 = vpop.permute.xlu0 %1258
  %1260 = vrot.lane.b32.xlu0 %v1174, 12
  %v1261 = vpop.permute.xlu0 %1260
  %1262 = vrot.lane.b32.xlu0 %v1176, 12
  %v1263 = vpop.permute.xlu0 %1262
  %1264 = vrot.lane.b32.xlu0 %v1229, 12
  %v1265 = vpop.permute.xlu0 %1264
  %1266 = vrot.lane.b32.xlu0 %v1231, 12
  %v1267 = vpop.permute.xlu0 %1266
  %v1269 = vunpack.c.l.b16 %v852
  %v1270 = vpack.c.b16 %v1269, %v1269
  %vm1271 = vsmask.f32 6400
  %v1273 = vshrl.u32 %v1223, 16
  %v1275 = vrot.slane %v1273, 1
  %v1276 = vshll.u32 %v1223, 16
  %v1278 = vrot.slane %v1276, 2
  %v1279 = vor.u32 %v1275, %v1278
  %v1280 = vrot.slane %v974, 1
  %v1281 = vrot.slane %v970, 2
  %v1282 = vor.u32 %v1280, %v1281
  %v1283 = vsel %vm1271, %v1279, %v1282
  %v1284 = vrot.slane %v982, 1
  %v1285 = vrot.slane %v978, 2
  %v1286 = vor.u32 %v1284, %v1285
  %v1287 = vsel %vm1271, %v1282, %v1286
  %v1288 = vrot.slane %v990, 1
  %v1289 = vrot.slane %v986, 2
  %v1290 = vor.u32 %v1288, %v1289
  %v1291 = vsel %vm1271, %v1286, %v1290
  %v1292 = vrot.slane %v998, 1
  %v1293 = vrot.slane %v994, 2
  %v1294 = vor.u32 %v1292, %v1293
  %v1295 = vsel %vm1271, %v1290, %v1294
  %v1296 = vrot.slane %v1006, 1
  %v1297 = vrot.slane %v1002, 2
  %v1298 = vor.u32 %v1296, %v1297
  %v1299 = vsel %vm1271, %v1294, %v1298
  %v1300 = vrot.slane %v1014, 1
  %v1301 = vrot.slane %v1010, 2
  %v1302 = vor.u32 %v1300, %v1301
  %v1303 = vsel %vm1271, %v1298, %v1302
  %v1304 = vrot.slane %v1022, 1
  %v1305 = vrot.slane %v1018, 2
  %v1306 = vor.u32 %v1304, %v1305
  %v1307 = vsel %vm1271, %v1302, %v1306
  %v1308 = vrot.slane %v1030, 1
  %v1309 = vrot.slane %v1026, 2
  %v1310 = vor.u32 %v1308, %v1309
  %v1311 = vsel %vm1271, %v1306, %v1310
  %v1312 = vrot.slane %v1038, 1
  %v1313 = vrot.slane %v1034, 2
  %v1314 = vor.u32 %v1312, %v1313
  %v1315 = vsel %vm1271, %v1310, %v1314
  %v1316 = vrot.slane %v1046, 1
  %v1317 = vrot.slane %v1042, 2
  %v1318 = vor.u32 %v1316, %v1317
  %v1319 = vsel %vm1271, %v1314, %v1318
  %v1320 = vrot.slane %v1054, 1
  %v1321 = vrot.slane %v1050, 2
  %v1322 = vor.u32 %v1320, %v1321
  %v1323 = vsel %vm1271, %v1318, %v1322
  %v1324 = vrot.slane %v1062, 1
  %v1325 = vrot.slane %v1058, 2
  %v1326 = vor.u32 %v1324, %v1325
  %v1327 = vsel %vm1271, %v1322, %v1326
  %v1328 = vrot.slane %v1070, 1
  %v1329 = vrot.slane %v1066, 2
  %v1330 = vor.u32 %v1328, %v1329
  %v1331 = vsel %vm1271, %v1326, %v1330
  %v1332 = vrot.slane %v1078, 1
  %v1333 = vrot.slane %v1074, 2
  %v1334 = vor.u32 %v1332, %v1333
  %v1335 = vsel %vm1271, %v1330, %v1334
  %v1336 = vrot.slane %v1086, 1
  %v1337 = vrot.slane %v1082, 2
  %v1338 = vor.u32 %v1336, %v1337
  %v1339 = vsel %vm1271, %v1334, %v1338
  %v1340 = vrot.slane %v1094, 1
  %v1341 = vrot.slane %v1090, 2
  %v1342 = vor.u32 %v1340, %v1341
  %v1343 = vsel %vm1271, %v1338, %v1342
  %v1345 = vshrl.u32 %v1224, 16
  %v1347 = vrot.slane %v1345, 1
  %v1348 = vshll.u32 %v1224, 16
  %v1350 = vrot.slane %v1348, 2
  %v1351 = vor.u32 %v1347, %v1350
  %v1352 = vsel %vm1271, %v1342, %v1351
  %v1354 = vshrl.u32 %v1270, 16
  %v1356 = vrot.slane %v1354, 1
  %v1357 = vshll.u32 %v1270, 16
  %v1359 = vrot.slane %v1357, 2
  %v1360 = vor.u32 %v1356, %v1359
  %v1361 = vsel %vm1271, %v1351, %v1360
  %1362 = vrot.lane.b32.xlu0 %v1283, 16
  %v1363 = vpop.permute.xlu0 %1362
  %1364 = vrot.lane.b32.xlu0 %v1287, 16
  %v1365 = vpop.permute.xlu0 %1364
  %1366 = vrot.lane.b32.xlu0 %v1291, 16
  %v1367 = vpop.permute.xlu0 %1366
  %1368 = vrot.lane.b32.xlu0 %v1295, 16
  %v1369 = vpop.permute.xlu0 %1368
  %1370 = vrot.lane.b32.xlu0 %v1299, 16
  %v1371 = vpop.permute.xlu0 %1370
  %1372 = vrot.lane.b32.xlu0 %v1303, 16
  %v1373 = vpop.permute.xlu0 %1372
  %1374 = vrot.lane.b32.xlu0 %v1307, 16
  %v1375 = vpop.permute.xlu0 %1374
  %1376 = vrot.lane.b32.xlu0 %v1311, 16
  %v1377 = vpop.permute.xlu0 %1376
  %1378 = vrot.lane.b32.xlu0 %v1315, 16
  %v1379 = vpop.permute.xlu0 %1378
  %1380 = vrot.lane.b32.xlu0 %v1319, 16
  %v1381 = vpop.permute.xlu0 %1380
  %1382 = vrot.lane.b32.xlu0 %v1323, 16
  %v1383 = vpop.permute.xlu0 %1382
  %1384 = vrot.lane.b32.xlu0 %v1327, 16
  %v1385 = vpop.permute.xlu0 %1384
  %1386 = vrot.lane.b32.xlu0 %v1331, 16
  %v1387 = vpop.permute.xlu0 %1386
  %1388 = vrot.lane.b32.xlu0 %v1335, 16
  %v1389 = vpop.permute.xlu0 %1388
  %1390 = vrot.lane.b32.xlu0 %v1339, 16
  %v1391 = vpop.permute.xlu0 %1390
  %1392 = vrot.lane.b32.xlu0 %v1343, 16
  %v1393 = vpop.permute.xlu0 %1392
  %1394 = vrot.lane.b32.xlu0 %v1352, 16
  %v1395 = vpop.permute.xlu0 %1394
  %1396 = vrot.lane.b32.xlu0 %v1361, 16
  %v1397 = vpop.permute.xlu0 %1396
  %v1399 = vunpack.c.l.b16 %v853
  %v1400 = vpack.c.b16 %v899, %v1399
  %vm1401 = vcmask 1045504
  %v1402 = vrot.slane %v1400, 2
  %v1403 = vrot.slane %v934, 2
  %v1404 = vsel %vm1401, %v1402, %v1403
  %v1405 = vrot.slane %v935, 2
  %v1406 = vsel %vm1401, %v1403, %v1405
  %v1407 = vrot.slane %v936, 2
  %v1408 = vsel %vm1401, %v1405, %v1407
  %v1409 = vrot.slane %v937, 2
  %v1410 = vsel %vm1401, %v1407, %v1409
  %v1411 = vrot.slane %v938, 2
  %v1412 = vsel %vm1401, %v1409, %v1411
  %v1413 = vrot.slane %v939, 2
  %v1414 = vsel %vm1401, %v1411, %v1413
  %v1415 = vrot.slane %v940, 2
  %v1416 = vsel %vm1401, %v1413, %v1415
  %v1417 = vrot.slane %v941, 2
  %v1418 = vsel %vm1401, %v1415, %v1417
  %v1419 = vrot.slane %v942, 2
  %v1420 = vsel %vm1401, %v1417, %v1419
  %v1421 = vrot.slane %v943, 2
  %v1422 = vsel %vm1401, %v1419, %v1421
  %v1423 = vrot.slane %v944, 2
  %v1424 = vsel %vm1401, %v1421, %v1423
  %v1425 = vrot.slane %v945, 2
  %v1426 = vsel %vm1401, %v1423, %v1425
  %v1427 = vrot.slane %v946, 2
  %v1428 = vsel %vm1401, %v1425, %v1427
  %v1429 = vrot.slane %v947, 2
  %v1430 = vsel %vm1401, %v1427, %v1429
  %v1431 = vrot.slane %v948, 2
  %v1432 = vsel %vm1401, %v1429, %v1431
  %v1433 = vrot.slane %v949, 2
  %v1434 = vsel %vm1401, %v1431, %v1433
  %v1435 = vrot.slane %v1224, 2
  %v1436 = vsel %vm1401, %v1433, %v1435
  %v1437 = vrot.slane %v1270, 2
  %v1438 = vsel %vm1401, %v1435, %v1437
  %1439 = vrot.lane.b32.xlu0 %v1404, 20
  %v1440 = vpop.permute.xlu0 %1439
  %1441 = vrot.lane.b32.xlu0 %v1406, 20
  %v1442 = vpop.permute.xlu0 %1441
  %1443 = vrot.lane.b32.xlu0 %v1408, 20
  %v1444 = vpop.permute.xlu0 %1443
  %1445 = vrot.lane.b32.xlu0 %v1410, 20
  %v1446 = vpop.permute.xlu0 %1445
  %1447 = vrot.lane.b32.xlu0 %v1412, 20
  %v1448 = vpop.permute.xlu0 %1447
  %1449 = vrot.lane.b32.xlu0 %v1414, 20
  %v1450 = vpop.permute.xlu0 %1449
  %1451 = vrot.lane.b32.xlu0 %v1416, 20
  %v1452 = vpop.permute.xlu0 %1451
  %1453 = vrot.lane.b32.xlu0 %v1418, 20
  %v1454 = vpop.permute.xlu0 %1453
  %1455 = vrot.lane.b32.xlu0 %v1420, 20
  %v1456 = vpop.permute.xlu0 %1455
  %1457 = vrot.lane.b32.xlu0 %v1422, 20
  %v1458 = vpop.permute.xlu0 %1457
  %1459 = vrot.lane.b32.xlu0 %v1424, 20
  %v1460 = vpop.permute.xlu0 %1459
  %1461 = vrot.lane.b32.xlu0 %v1426, 20
  %v1462 = vpop.permute.xlu0 %1461
  %1463 = vrot.lane.b32.xlu0 %v1428, 20
  %v1464 = vpop.permute.xlu0 %1463
  %1465 = vrot.lane.b32.xlu0 %v1430, 20
  %v1466 = vpop.permute.xlu0 %1465
  %1467 = vrot.lane.b32.xlu0 %v1432, 20
  %v1468 = vpop.permute.xlu0 %1467
  %1469 = vrot.lane.b32.xlu0 %v1434, 20
  %v1470 = vpop.permute.xlu0 %1469
  %1471 = vrot.lane.b32.xlu0 %v1436, 20
  %v1472 = vpop.permute.xlu0 %1471
  %1473 = vrot.lane.b32.xlu0 %v1438, 20
  %v1474 = vpop.permute.xlu0 %1473
  %v1479 = vunpack.c.l.b16 %v854
  %v1480 = vunpack.c.l.b16 %v855
  %v1481 = vunpack.c.l.b16 %v856
  %v1482 = vunpack.c.l.b16 %v857
  %v1483 = vpack.c.b16 %v901, %v1479
  %v1484 = vpack.c.b16 %v1481, %v1480
  %v1485 = vpack.c.b16 %v1482, %v1482
  %v1486 = vrot.slane %v1483, 2
  %v1487 = vsel %vm1401, %v1486, %v1405
  %v1488 = vrot.slane %v1484, 2
  %v1489 = vsel %vm1401, %v1435, %v1488
  %v1490 = vrot.slane %v1485, 2
  %v1491 = vsel %vm1401, %v1488, %v1490
  %1492 = vrot.lane.b32.xlu0 %v1487, 24
  %v1493 = vpop.permute.xlu0 %1492
  %1494 = vrot.lane.b32.xlu0 %v1408, 24
  %v1495 = vpop.permute.xlu0 %1494
  %1496 = vrot.lane.b32.xlu0 %v1410, 24
  %v1497 = vpop.permute.xlu0 %1496
  %1498 = vrot.lane.b32.xlu0 %v1412, 24
  %v1499 = vpop.permute.xlu0 %1498
  %1500 = vrot.lane.b32.xlu0 %v1414, 24
  %v1501 = vpop.permute.xlu0 %1500
  %1502 = vrot.lane.b32.xlu0 %v1416, 24
  %v1503 = vpop.permute.xlu0 %1502
  %1504 = vrot.lane.b32.xlu0 %v1418, 24
  %v1505 = vpop.permute.xlu0 %1504
  %1506 = vrot.lane.b32.xlu0 %v1420, 24
  %v1507 = vpop.permute.xlu0 %1506
  %1508 = vrot.lane.b32.xlu0 %v1422, 24
  %v1509 = vpop.permute.xlu0 %1508
  %1510 = vrot.lane.b32.xlu0 %v1424, 24
  %v1511 = vpop.permute.xlu0 %1510
  %1512 = vrot.lane.b32.xlu0 %v1426, 24
  %v1513 = vpop.permute.xlu0 %1512
  %1514 = vrot.lane.b32.xlu0 %v1428, 24
  %v1515 = vpop.permute.xlu0 %1514
  %1516 = vrot.lane.b32.xlu0 %v1430, 24
  %v1517 = vpop.permute.xlu0 %1516
  %1518 = vrot.lane.b32.xlu0 %v1432, 24
  %v1519 = vpop.permute.xlu0 %1518
  %1520 = vrot.lane.b32.xlu0 %v1434, 24
  %v1521 = vpop.permute.xlu0 %1520
  %1522 = vrot.lane.b32.xlu0 %v1436, 24
  %v1523 = vpop.permute.xlu0 %1522
  %1524 = vrot.lane.b32.xlu0 %v1489, 24
  %v1525 = vpop.permute.xlu0 %1524
  %1526 = vrot.lane.b32.xlu0 %v1491, 24
  %v1527 = vpop.permute.xlu0 %1526
  %v1529 = vunpack.c.l.b16 %v858
  %v1530 = vpack.c.b16 %v1529, %v1529
  %vm1531 = vsmask.f32 5376
  %v1533 = vshrl.u32 %v1483, 16
  %v1535 = vrot.slane %v1533, 2
  %v1536 = vshll.u32 %v1483, 16
  %v1538 = vrot.slane %v1536, 3
  %v1539 = vor.u32 %v1535, %v1538
  %v1540 = vrot.slane %v982, 2
  %v1541 = vrot.slane %v978, 3
  %v1542 = vor.u32 %v1540, %v1541
  %v1543 = vsel %vm1531, %v1539, %v1542
  %v1544 = vrot.slane %v990, 2
  %v1545 = vrot.slane %v986, 3
  %v1546 = vor.u32 %v1544, %v1545
  %v1547 = vsel %vm1531, %v1542, %v1546
  %v1548 = vrot.slane %v998, 2
  %v1549 = vrot.slane %v994, 3
  %v1550 = vor.u32 %v1548, %v1549
  %v1551 = vsel %vm1531, %v1546, %v1550
  %v1552 = vrot.slane %v1006, 2
  %v1553 = vrot.slane %v1002, 3
  %v1554 = vor.u32 %v1552, %v1553
  %v1555 = vsel %vm1531, %v1550, %v1554
  %v1556 = vrot.slane %v1014, 2
  %v1557 = vrot.slane %v1010, 3
  %v1558 = vor.u32 %v1556, %v1557
  %v1559 = vsel %vm1531, %v1554, %v1558
  %v1560 = vrot.slane %v1022, 2
  %v1561 = vrot.slane %v1018, 3
  %v1562 = vor.u32 %v1560, %v1561
  %v1563 = vsel %vm1531, %v1558, %v1562
  %v1564 = vrot.slane %v1030, 2
  %v1565 = vrot.slane %v1026, 3
  %v1566 = vor.u32 %v1564, %v1565
  %v1567 = vsel %vm1531, %v1562, %v1566
  %v1568 = vrot.slane %v1038, 2
  %v1569 = vrot.slane %v1034, 3
  %v1570 = vor.u32 %v1568, %v1569
  %v1571 = vsel %vm1531, %v1566, %v1570
  %v1572 = vrot.slane %v1046, 2
  %v1573 = vrot.slane %v1042, 3
  %v1574 = vor.u32 %v1572, %v1573
  %v1575 = vsel %vm1531, %v1570, %v1574
  %v1576 = vrot.slane %v1054, 2
  %v1577 = vrot.slane %v1050, 3
  %v1578 = vor.u32 %v1576, %v1577
  %v1579 = vsel %vm1531, %v1574, %v1578
  %v1580 = vrot.slane %v1062, 2
  %v1581 = vrot.slane %v1058, 3
  %v1582 = vor.u32 %v1580, %v1581
  %v1583 = vsel %vm1531, %v1578, %v1582
  %v1584 = vrot.slane %v1070, 2
  %v1585 = vrot.slane %v1066, 3
  %v1586 = vor.u32 %v1584, %v1585
  %v1587 = vsel %vm1531, %v1582, %v1586
  %v1588 = vrot.slane %v1078, 2
  %v1589 = vrot.slane %v1074, 3
  %v1590 = vor.u32 %v1588, %v1589
  %v1591 = vsel %vm1531, %v1586, %v1590
  %v1592 = vrot.slane %v1086, 2
  %v1593 = vrot.slane %v1082, 3
  %v1594 = vor.u32 %v1592, %v1593
  %v1595 = vsel %vm1531, %v1590, %v1594
  %v1596 = vrot.slane %v1094, 2
  %v1597 = vrot.slane %v1090, 3
  %v1598 = vor.u32 %v1596, %v1597
  %v1599 = vsel %vm1531, %v1594, %v1598
  %v1600 = vrot.slane %v1345, 2
  %v1601 = vrot.slane %v1348, 3
  %v1602 = vor.u32 %v1600, %v1601
  %v1603 = vsel %vm1531, %v1598, %v1602
  %v1605 = vshrl.u32 %v1484, 16
  %v1607 = vrot.slane %v1605, 2
  %v1608 = vshll.u32 %v1484, 16
  %v1610 = vrot.slane %v1608, 3
  %v1611 = vor.u32 %v1607, %v1610
  %v1612 = vsel %vm1531, %v1602, %v1611
  %v1614 = vshrl.u32 %v1530, 16
  %v1616 = vrot.slane %v1614, 2
  %v1617 = vshll.u32 %v1530, 16
  %v1619 = vrot.slane %v1617, 3
  %v1620 = vor.u32 %v1616, %v1619
  %v1621 = vsel %vm1531, %v1611, %v1620
  %1622 = vrot.lane.b32.xlu0 %v1543, 28
  %v1623 = vpop.permute.xlu0 %1622
  %1624 = vrot.lane.b32.xlu0 %v1547, 28
  %v1625 = vpop.permute.xlu0 %1624
  %1626 = vrot.lane.b32.xlu0 %v1551, 28
  %v1627 = vpop.permute.xlu0 %1626
  %1628 = vrot.lane.b32.xlu0 %v1555, 28
  %v1629 = vpop.permute.xlu0 %1628
  %1630 = vrot.lane.b32.xlu0 %v1559, 28
  %v1631 = vpop.permute.xlu0 %1630
  %1632 = vrot.lane.b32.xlu0 %v1563, 28
  %v1633 = vpop.permute.xlu0 %1632
  %1634 = vrot.lane.b32.xlu0 %v1567, 28
  %v1635 = vpop.permute.xlu0 %1634
  %1636 = vrot.lane.b32.xlu0 %v1571, 28
  %v1637 = vpop.permute.xlu0 %1636
  %1638 = vrot.lane.b32.xlu0 %v1575, 28
  %v1639 = vpop.permute.xlu0 %1638
  %1640 = vrot.lane.b32.xlu0 %v1579, 28
  %v1641 = vpop.permute.xlu0 %1640
  %1642 = vrot.lane.b32.xlu0 %v1583, 28
  %v1643 = vpop.permute.xlu0 %1642
  %1644 = vrot.lane.b32.xlu0 %v1587, 28
  %v1645 = vpop.permute.xlu0 %1644
  %1646 = vrot.lane.b32.xlu0 %v1591, 28
  %v1647 = vpop.permute.xlu0 %1646
  %1648 = vrot.lane.b32.xlu0 %v1595, 28
  %v1649 = vpop.permute.xlu0 %1648
  %1650 = vrot.lane.b32.xlu0 %v1599, 28
  %v1651 = vpop.permute.xlu0 %1650
  %1652 = vrot.lane.b32.xlu0 %v1603, 28
  %v1653 = vpop.permute.xlu0 %1652
  %1654 = vrot.lane.b32.xlu0 %v1612, 28
  %v1655 = vpop.permute.xlu0 %1654
  %1656 = vrot.lane.b32.xlu0 %v1621, 28
  %v1657 = vpop.permute.xlu0 %1656
  %v1659 = vunpack.c.l.b16 %v859
  %v1660 = vpack.c.b16 %v901, %v1659
  %vm1661 = vcmask 1044480
  %v1662 = vrot.slane %v1660, 3
  %v1663 = vrot.slane %v935, 3
  %v1664 = vsel %vm1661, %v1662, %v1663
  %v1665 = vrot.slane %v936, 3
  %v1666 = vsel %vm1661, %v1663, %v1665
  %v1667 = vrot.slane %v937, 3
  %v1668 = vsel %vm1661, %v1665, %v1667
  %v1669 = vrot.slane %v938, 3
  %v1670 = vsel %vm1661, %v1667, %v1669
  %v1671 = vrot.slane %v939, 3
  %v1672 = vsel %vm1661, %v1669, %v1671
  %v1673 = vrot.slane %v940, 3
  %v1674 = vsel %vm1661, %v1671, %v1673
  %v1675 = vrot.slane %v941, 3
  %v1676 = vsel %vm1661, %v1673, %v1675
  %v1677 = vrot.slane %v942, 3
  %v1678 = vsel %vm1661, %v1675, %v1677
  %v1679 = vrot.slane %v943, 3
  %v1680 = vsel %vm1661, %v1677, %v1679
  %v1681 = vrot.slane %v944, 3
  %v1682 = vsel %vm1661, %v1679, %v1681
  %v1683 = vrot.slane %v945, 3
  %v1684 = vsel %vm1661, %v1681, %v1683
  %v1685 = vrot.slane %v946, 3
  %v1686 = vsel %vm1661, %v1683, %v1685
  %v1687 = vrot.slane %v947, 3
  %v1688 = vsel %vm1661, %v1685, %v1687
  %v1689 = vrot.slane %v948, 3
  %v1690 = vsel %vm1661, %v1687, %v1689
  %v1691 = vrot.slane %v949, 3
  %v1692 = vsel %vm1661, %v1689, %v1691
  %v1693 = vrot.slane %v1224, 3
  %v1694 = vsel %vm1661, %v1691, %v1693
  %v1695 = vrot.slane %v1484, 3
  %v1696 = vsel %vm1661, %v1693, %v1695
  %v1697 = vrot.slane %v1530, 3
  %v1698 = vsel %vm1661, %v1695, %v1697
  %1699 = vrot.lane.b32.xlu0 %v1664, 32
  %v1700 = vpop.permute.xlu0 %1699
  %1701 = vrot.lane.b32.xlu0 %v1666, 32
  %v1702 = vpop.permute.xlu0 %1701
  %1703 = vrot.lane.b32.xlu0 %v1668, 32
  %v1704 = vpop.permute.xlu0 %1703
  %1705 = vrot.lane.b32.xlu0 %v1670, 32
  %v1706 = vpop.permute.xlu0 %1705
  %1707 = vrot.lane.b32.xlu0 %v1672, 32
  %v1708 = vpop.permute.xlu0 %1707
  %1709 = vrot.lane.b32.xlu0 %v1674, 32
  %v1710 = vpop.permute.xlu0 %1709
  %1711 = vrot.lane.b32.xlu0 %v1676, 32
  %v1712 = vpop.permute.xlu0 %1711
  %1713 = vrot.lane.b32.xlu0 %v1678, 32
  %v1714 = vpop.permute.xlu0 %1713
  %1715 = vrot.lane.b32.xlu0 %v1680, 32
  %v1716 = vpop.permute.xlu0 %1715
  %1717 = vrot.lane.b32.xlu0 %v1682, 32
  %v1718 = vpop.permute.xlu0 %1717
  %1719 = vrot.lane.b32.xlu0 %v1684, 32
  %v1720 = vpop.permute.xlu0 %1719
  %1721 = vrot.lane.b32.xlu0 %v1686, 32
  %v1722 = vpop.permute.xlu0 %1721
  %1723 = vrot.lane.b32.xlu0 %v1688, 32
  %v1724 = vpop.permute.xlu0 %1723
  %1725 = vrot.lane.b32.xlu0 %v1690, 32
  %v1726 = vpop.permute.xlu0 %1725
  %1727 = vrot.lane.b32.xlu0 %v1692, 32
  %v1728 = vpop.permute.xlu0 %1727
  %1729 = vrot.lane.b32.xlu0 %v1694, 32
  %v1730 = vpop.permute.xlu0 %1729
  %1731 = vrot.lane.b32.xlu0 %v1696, 32
  %v1732 = vpop.permute.xlu0 %1731
  %1733 = vrot.lane.b32.xlu0 %v1698, 32
  %v1734 = vpop.permute.xlu0 %1733
  %vm1735 = vcmask 31744
  %v1737 = vsel %vm1735, %v932, %v1103
  %v1739 = vsel %vm1735, %v933, %v1105
  %v1741 = vsel %vm1735, %v934, %v1107
  %v1743 = vsel %vm1735, %v935, %v1109
  %v1745 = vsel %vm1735, %v936, %v1111
  %v1747 = vsel %vm1735, %v937, %v1113
  %v1749 = vsel %vm1735, %v938, %v1115
  %v1751 = vsel %vm1735, %v939, %v1117
  %v1753 = vsel %vm1735, %v940, %v1119
  %v1755 = vsel %vm1735, %v941, %v1121
  %v1757 = vsel %vm1735, %v942, %v1123
  %v1759 = vsel %vm1735, %v943, %v1125
  %v1761 = vsel %vm1735, %v944, %v1127
  %v1763 = vsel %vm1735, %v945, %v1129
  %v1765 = vsel %vm1735, %v946, %v1131
  %v1767 = vsel %vm1735, %v947, %v1133
  %v1769 = vsel %vm1735, %v948, %v1135
  %v1771 = vsel %vm1735, %v949, %v1137
  %vm1772 = vcmask 64512
  %v1774 = vsel %vm1772, %v1737, %v1180
  %v1776 = vsel %vm1772, %v1739, %v1182
  %v1778 = vsel %vm1772, %v1741, %v1184
  %v1780 = vsel %vm1772, %v1743, %v1186
  %v1782 = vsel %vm1772, %v1745, %v1188
  %v1784 = vsel %vm1772, %v1747, %v1190
  %v1786 = vsel %vm1772, %v1749, %v1192
  %v1788 = vsel %vm1772, %v1751, %v1194
  %v1790 = vsel %vm1772, %v1753, %v1196
  %v1792 = vsel %vm1772, %v1755, %v1198
  %v1794 = vsel %vm1772, %v1757, %v1200
  %v1796 = vsel %vm1772, %v1759, %v1202
  %v1798 = vsel %vm1772, %v1761, %v1204
  %v1800 = vsel %vm1772, %v1763, %v1206
  %v1802 = vsel %vm1772, %v1765, %v1208
  %v1804 = vsel %vm1772, %v1767, %v1210
  %v1806 = vsel %vm1772, %v1769, %v1212
  %v1808 = vsel %vm1772, %v1771, %v1214
  %vm1809 = vcmask 97280
  %v1811 = vsel %vm1809, %v1774, %v1233
  %v1813 = vsel %vm1809, %v1776, %v1235
  %v1815 = vsel %vm1809, %v1778, %v1237
  %v1817 = vsel %vm1809, %v1780, %v1239
  %v1819 = vsel %vm1809, %v1782, %v1241
  %v1821 = vsel %vm1809, %v1784, %v1243
  %v1823 = vsel %vm1809, %v1786, %v1245
  %v1825 = vsel %vm1809, %v1788, %v1247
  %v1827 = vsel %vm1809, %v1790, %v1249
  %v1829 = vsel %vm1809, %v1792, %v1251
  %v1831 = vsel %vm1809, %v1794, %v1253
  %v1833 = vsel %vm1809, %v1796, %v1255
  %v1835 = vsel %vm1809, %v1798, %v1257
  %v1837 = vsel %vm1809, %v1800, %v1259
  %v1839 = vsel %vm1809, %v1802, %v1261
  %v1841 = vsel %vm1809, %v1804, %v1263
  %v1843 = vsel %vm1809, %v1806, %v1265
  %v1845 = vsel %vm1809, %v1808, %v1267
  %vm1846 = vcmask 130048
  %v1848 = vsel %vm1846, %v1811, %v1363
  %v1850 = vsel %vm1846, %v1813, %v1365
  %v1852 = vsel %vm1846, %v1815, %v1367
  %v1854 = vsel %vm1846, %v1817, %v1369
  %v1856 = vsel %vm1846, %v1819, %v1371
  %v1858 = vsel %vm1846, %v1821, %v1373
  %v1860 = vsel %vm1846, %v1823, %v1375
  %v1862 = vsel %vm1846, %v1825, %v1377
  %v1864 = vsel %vm1846, %v1827, %v1379
  %v1866 = vsel %vm1846, %v1829, %v1381
  %v1868 = vsel %vm1846, %v1831, %v1383
  %v1870 = vsel %vm1846, %v1833, %v1385
  %v1872 = vsel %vm1846, %v1835, %v1387
  %v1874 = vsel %vm1846, %v1837, %v1389
  %v1876 = vsel %vm1846, %v1839, %v1391
  %v1878 = vsel %vm1846, %v1841, %v1393
  %v1880 = vsel %vm1846, %v1843, %v1395
  %v1882 = vsel %vm1846, %v1845, %v1397
  %vm1883 = vcmask 162816
  %v1885 = vsel %vm1883, %v1848, %v1440
  %v1887 = vsel %vm1883, %v1850, %v1442
  %v1889 = vsel %vm1883, %v1852, %v1444
  %v1891 = vsel %vm1883, %v1854, %v1446
  %v1893 = vsel %vm1883, %v1856, %v1448
  %v1895 = vsel %vm1883, %v1858, %v1450
  %v1897 = vsel %vm1883, %v1860, %v1452
  %v1899 = vsel %vm1883, %v1862, %v1454
  %v1901 = vsel %vm1883, %v1864, %v1456
  %v1903 = vsel %vm1883, %v1866, %v1458
  %v1905 = vsel %vm1883, %v1868, %v1460
  %v1907 = vsel %vm1883, %v1870, %v1462
  %v1909 = vsel %vm1883, %v1872, %v1464
  %v1911 = vsel %vm1883, %v1874, %v1466
  %v1913 = vsel %vm1883, %v1876, %v1468
  %v1915 = vsel %vm1883, %v1878, %v1470
  %v1917 = vsel %vm1883, %v1880, %v1472
  %v1919 = vsel %vm1883, %v1882, %v1474
  %vm1920 = vcmask 195584
  %v1922 = vsel %vm1920, %v1885, %v1493
  %v1924 = vsel %vm1920, %v1887, %v1495
  %v1926 = vsel %vm1920, %v1889, %v1497
  %v1928 = vsel %vm1920, %v1891, %v1499
  %v1930 = vsel %vm1920, %v1893, %v1501
  %v1932 = vsel %vm1920, %v1895, %v1503
  %v1934 = vsel %vm1920, %v1897, %v1505
  %v1936 = vsel %vm1920, %v1899, %v1507
  %v1938 = vsel %vm1920, %v1901, %v1509
  %v1940 = vsel %vm1920, %v1903, %v1511
  %v1942 = vsel %vm1920, %v1905, %v1513
  %v1944 = vsel %vm1920, %v1907, %v1515
  %v1946 = vsel %vm1920, %v1909, %v1517
  %v1948 = vsel %vm1920, %v1911, %v1519
  %v1950 = vsel %vm1920, %v1913, %v1521
  %v1952 = vsel %vm1920, %v1915, %v1523
  %v1954 = vsel %vm1920, %v1917, %v1525
  %v1956 = vsel %vm1920, %v1919, %v1527
  %vm1957 = vcmask 228352
  %v1959 = vsel %vm1957, %v1922, %v1623
  %v1961 = vsel %vm1957, %v1924, %v1625
  %v1963 = vsel %vm1957, %v1926, %v1627
  %v1965 = vsel %vm1957, %v1928, %v1629
  %v1967 = vsel %vm1957, %v1930, %v1631
  %v1969 = vsel %vm1957, %v1932, %v1633
  %v1971 = vsel %vm1957, %v1934, %v1635
  %v1973 = vsel %vm1957, %v1936, %v1637
  %v1975 = vsel %vm1957, %v1938, %v1639
  %v1977 = vsel %vm1957, %v1940, %v1641
  %v1979 = vsel %vm1957, %v1942, %v1643
  %v1981 = vsel %vm1957, %v1944, %v1645
  %v1983 = vsel %vm1957, %v1946, %v1647
  %v1985 = vsel %vm1957, %v1948, %v1649
  %v1987 = vsel %vm1957, %v1950, %v1651
  %v1989 = vsel %vm1957, %v1952, %v1653
  %v1991 = vsel %vm1957, %v1954, %v1655
  %v1993 = vsel %vm1957, %v1956, %v1657
  %vm1994 = vcmask 261120
  %v1996 = vsel %vm1994, %v1959, %v1700
  %v1998 = vsel %vm1994, %v1961, %v1702
  %v2000 = vsel %vm1994, %v1963, %v1704
  %v2002 = vsel %vm1994, %v1965, %v1706
  %v2004 = vsel %vm1994, %v1967, %v1708
  %v2006 = vsel %vm1994, %v1969, %v1710
  %v2008 = vsel %vm1994, %v1971, %v1712
  %v2010 = vsel %vm1994, %v1973, %v1714
  %v2012 = vsel %vm1994, %v1975, %v1716
  %v2014 = vsel %vm1994, %v1977, %v1718
  %v2016 = vsel %vm1994, %v1979, %v1720
  %v2018 = vsel %vm1994, %v1981, %v1722
  %v2020 = vsel %vm1994, %v1983, %v1724
  %v2022 = vsel %vm1994, %v1985, %v1726
  %v2024 = vsel %vm1994, %v1987, %v1728
  %v2026 = vsel %vm1994, %v1989, %v1730
  %v2028 = vsel %vm1994, %v1991, %v1732
  %v2030 = vsel %vm1994, %v1993, %v1734
  %v2036 = vunpack.c.l.b16 %v31
  %v2037 = vunpack.c.l.b16 %v32
  %v2038 = vunpack.c.l.b16 %v33
  %v2039 = vunpack.c.l.b16 %v34
  %v2040 = vunpack.c.l.b16 %v35
  %v2041 = vpack.c.b16 %v2037, %v2036
  %v2042 = vpack.c.b16 %v2039, %v2038
  %v2043 = vpack.c.b16 %v2040, %v2040
  %vm2046 = vcmask 293888
  %v2047 = vsel %vm2046, %v1996, 0
  %v2049 = vsel %vm2046, %v1998, 0
  %v2051 = vsel %vm2046, %v2000, 0
  %v2053 = vsel %vm2046, %v2002, 0
  %v2055 = vsel %vm2046, %v2004, 0
  %v2057 = vsel %vm2046, %v2006, 0
  %v2059 = vsel %vm2046, %v2008, 0
  %v2061 = vsel %vm2046, %v2010, 0
  %v2063 = vsel %vm2046, %v2012, 0
  %v2065 = vsel %vm2046, %v2014, 0
  %v2067 = vsel %vm2046, %v2016, 0
  %v2069 = vsel %vm2046, %v2018, 0
  %v2071 = vsel %vm2046, %v2020, 0
  %v2073 = vsel %vm2046, %v2022, 0
  %v2075 = vsel %vm2046, %v2024, 0
  %v2077 = vsel %vm2046, %v2026, 0
  %v2079 = vsel %vm2046, %v2028, 0
  %v2081 = vsel %vm2046, %v2030, 0
  %vm2083 = vcmask 1041408
  %v2085 = vsel %vm2083, %v2043, 0
  %2087 = vmatpush.bf16.msra.mxu0 0
  %2088 = vmatpush.bf16.msra.mxu0 0
  %2089 = vmatpush.bf16.msra.mxu0 0
  %2090 = vmatpush.bf16.msra.mxu0 0
  %2091 = vmatpush.bf16.msra.mxu0 0
  %2092 = vmatpush.bf16.msra.mxu0 %v2085
  %2093 = vmatpush.bf16.msra.mxu0 %v2042
  %2094 = vmatpush.bf16.msra.mxu0 %v2041
  %2095 = vmatmul.bf16.gmra.mxu0 %v2047
  %v2096 = vpop.f32.mrf.mxu0
  %v2097 = vadd.f32 0.0, %v2096
  %v2098 = vpop.f32.mrf.mxu0
  %v2099 = vadd.f32 0.0, %v2098
  %2100 = vmatmul.bf16.gmra.mxu0 %v2049
  %v2101 = vpop.f32.mrf.mxu0
  %v2102 = vadd.f32 0.0, %v2101
  %v2103 = vpop.f32.mrf.mxu0
  %v2104 = vadd.f32 0.0, %v2103
  %2105 = vmatmul.bf16.gmra.mxu0 %v2051
  %v2106 = vpop.f32.mrf.mxu0
  %v2107 = vadd.f32 0.0, %v2106
  %v2108 = vpop.f32.mrf.mxu0
  %v2109 = vadd.f32 0.0, %v2108
  %2110 = vmatmul.bf16.gmra.mxu0 %v2053
  %v2111 = vpop.f32.mrf.mxu0
  %v2112 = vadd.f32 0.0, %v2111
  %v2113 = vpop.f32.mrf.mxu0
  %v2114 = vadd.f32 0.0, %v2113
  %2115 = vmatmul.bf16.gmra.mxu0 %v2055
  %v2116 = vpop.f32.mrf.mxu0
  %v2117 = vadd.f32 0.0, %v2116
  %v2118 = vpop.f32.mrf.mxu0
  %v2119 = vadd.f32 0.0, %v2118
  %2120 = vmatmul.bf16.gmra.mxu0 %v2057
  %v2121 = vpop.f32.mrf.mxu0
  %v2122 = vadd.f32 0.0, %v2121
  %v2123 = vpop.f32.mrf.mxu0
  %v2124 = vadd.f32 0.0, %v2123
  %2125 = vmatmul.bf16.gmra.mxu0 %v2059
  %v2126 = vpop.f32.mrf.mxu0
  %v2127 = vadd.f32 0.0, %v2126
  %v2128 = vpop.f32.mrf.mxu0
  %v2129 = vadd.f32 0.0, %v2128
  %2130 = vmatmul.bf16.gmra.mxu0 %v2061
  %v2131 = vpop.f32.mrf.mxu0
  %v2132 = vadd.f32 0.0, %v2131
  %v2133 = vpop.f32.mrf.mxu0
  %v2134 = vadd.f32 0.0, %v2133
  %2135 = vmatmul.bf16.gmra.mxu0 %v2063
  %v2136 = vpop.f32.mrf.mxu0
  %v2137 = vadd.f32 0.0, %v2136
  %v2138 = vpop.f32.mrf.mxu0
  %v2139 = vadd.f32 0.0, %v2138
  %2140 = vmatmul.bf16.gmra.mxu0 %v2065
  %v2141 = vpop.f32.mrf.mxu0
  %v2142 = vadd.f32 0.0, %v2141
  %v2143 = vpop.f32.mrf.mxu0
  %v2144 = vadd.f32 0.0, %v2143
  %2145 = vmatmul.bf16.gmra.mxu0 %v2067
  %v2146 = vpop.f32.mrf.mxu0
  %v2147 = vadd.f32 0.0, %v2146
  %v2148 = vpop.f32.mrf.mxu0
  %v2149 = vadd.f32 0.0, %v2148
  %2150 = vmatmul.bf16.gmra.mxu0 %v2069
  %v2151 = vpop.f32.mrf.mxu0
  %v2152 = vadd.f32 0.0, %v2151
  %v2153 = vpop.f32.mrf.mxu0
  %v2154 = vadd.f32 0.0, %v2153
  %2155 = vmatmul.bf16.gmra.mxu0 %v2071
  %v2156 = vpop.f32.mrf.mxu0
  %v2157 = vadd.f32 0.0, %v2156
  %v2158 = vpop.f32.mrf.mxu0
  %v2159 = vadd.f32 0.0, %v2158
  %2160 = vmatmul.bf16.gmra.mxu0 %v2073
  %v2161 = vpop.f32.mrf.mxu0
  %v2162 = vadd.f32 0.0, %v2161
  %v2163 = vpop.f32.mrf.mxu0
  %v2164 = vadd.f32 0.0, %v2163
  %2165 = vmatmul.bf16.gmra.mxu0 %v2075
  %v2166 = vpop.f32.mrf.mxu0
  %v2167 = vadd.f32 0.0, %v2166
  %v2168 = vpop.f32.mrf.mxu0
  %v2169 = vadd.f32 0.0, %v2168
  %2170 = vmatmul.bf16.gmra.mxu0 %v2077
  %v2171 = vpop.f32.mrf.mxu0
  %v2172 = vadd.f32 0.0, %v2171
  %v2173 = vpop.f32.mrf.mxu0
  %v2174 = vadd.f32 0.0, %v2173
  %2175 = vmatmul.bf16.gmra.mxu0 %v2079
  %v2176 = vpop.f32.mrf.mxu0
  %v2177 = vadd.f32 0.0, %v2176
  %v2178 = vpop.f32.mrf.mxu0
  %v2179 = vadd.f32 0.0, %v2178
  %2180 = vmatmul.bf16.gmra.mxu0 %v2081
  %v2181 = vpop.f32.mrf.mxu0
  %v2182 = vadd.f32 0.0, %v2181
  %v2183 = vpop.f32.mrf.mxu0
  %v2184 = vadd.f32 0.0, %v2183
  %2185 = vdwg.mxu0
  %v2187 = vperm.slane %v29, 0
  %v2189 = vmul.f32 %v2097, %v2187
  %v2190 = vmul.f32 %v2099, %v2187
  %v2191 = vmul.f32 %v2102, %v2187
  %v2192 = vmul.f32 %v2104, %v2187
  %v2193 = vmul.f32 %v2107, %v2187
  %v2194 = vmul.f32 %v2109, %v2187
  %v2195 = vmul.f32 %v2112, %v2187
  %v2196 = vmul.f32 %v2114, %v2187
  %v2197 = vmul.f32 %v2117, %v2187
  %v2198 = vmul.f32 %v2119, %v2187
  %v2199 = vmul.f32 %v2122, %v2187
  %v2200 = vmul.f32 %v2124, %v2187
  %v2201 = vmul.f32 %v2127, %v2187
  %v2202 = vmul.f32 %v2129, %v2187
  %v2203 = vmul.f32 %v2132, %v2187
  %v2204 = vmul.f32 %v2134, %v2187
  %v2205 = vmul.f32 %v2137, %v2187
  %v2206 = vmul.f32 %v2139, %v2187
  %v2207 = vmul.f32 %v2142, %v2187
  %v2208 = vmul.f32 %v2144, %v2187
  %v2209 = vmul.f32 %v2147, %v2187
  %v2210 = vmul.f32 %v2149, %v2187
  %v2211 = vmul.f32 %v2152, %v2187
  %v2212 = vmul.f32 %v2154, %v2187
  %v2213 = vmul.f32 %v2157, %v2187
  %v2214 = vmul.f32 %v2159, %v2187
  %v2215 = vmul.f32 %v2162, %v2187
  %v2216 = vmul.f32 %v2164, %v2187
  %v2217 = vmul.f32 %v2167, %v2187
  %v2218 = vmul.f32 %v2169, %v2187
  %v2219 = vmul.f32 %v2172, %v2187
  %v2220 = vmul.f32 %v2174, %v2187
  %v2221 = vmul.f32 %v2177, %v2187
  %v2222 = vmul.f32 %v2179, %v2187
  %v2223 = vmul.f32 %v2182, %v2187
  %v2224 = vmul.f32 %v2184, %v2187
  %v2226 = vperm.slane %v30, 0
  %v2228 = vadd.f32 %v2189, %v2226
  %v2229 = vadd.f32 %v2190, %v2226
  %v2230 = vadd.f32 %v2191, %v2226
  %v2231 = vadd.f32 %v2192, %v2226
  %v2232 = vadd.f32 %v2193, %v2226
  %v2233 = vadd.f32 %v2194, %v2226
  %v2234 = vadd.f32 %v2195, %v2226
  %v2235 = vadd.f32 %v2196, %v2226
  %v2236 = vadd.f32 %v2197, %v2226
  %v2237 = vadd.f32 %v2198, %v2226
  %v2238 = vadd.f32 %v2199, %v2226
  %v2239 = vadd.f32 %v2200, %v2226
  %v2240 = vadd.f32 %v2201, %v2226
  %v2241 = vadd.f32 %v2202, %v2226
  %v2242 = vadd.f32 %v2203, %v2226
  %v2243 = vadd.f32 %v2204, %v2226
  %v2244 = vadd.f32 %v2205, %v2226
  %v2245 = vadd.f32 %v2206, %v2226
  %v2246 = vadd.f32 %v2207, %v2226
  %v2247 = vadd.f32 %v2208, %v2226
  %v2248 = vadd.f32 %v2209, %v2226
  %v2249 = vadd.f32 %v2210, %v2226
  %v2250 = vadd.f32 %v2211, %v2226
  %v2251 = vadd.f32 %v2212, %v2226
  %v2252 = vadd.f32 %v2213, %v2226
  %v2253 = vadd.f32 %v2214, %v2226
  %v2254 = vadd.f32 %v2215, %v2226
  %v2255 = vadd.f32 %v2216, %v2226
  %v2256 = vadd.f32 %v2217, %v2226
  %v2257 = vadd.f32 %v2218, %v2226
  %v2258 = vadd.f32 %v2219, %v2226
  %v2259 = vadd.f32 %v2220, %v2226
  %v2260 = vadd.f32 %v2221, %v2226
  %v2261 = vadd.f32 %v2222, %v2226
  %v2262 = vadd.f32 %v2223, %v2226
  %v2263 = vadd.f32 %v2224, %v2226
  %v2264 = vmax.f32 %v2228, 0.0
  %v2265 = vmax.f32 %v2229, 0.0
  %v2266 = vmax.f32 %v2230, 0.0
  %v2267 = vmax.f32 %v2231, 0.0
  %v2268 = vmax.f32 %v2232, 0.0
  %v2269 = vmax.f32 %v2233, 0.0
  %v2270 = vmax.f32 %v2234, 0.0
  %v2271 = vmax.f32 %v2235, 0.0
  %v2272 = vmax.f32 %v2236, 0.0
  %v2273 = vmax.f32 %v2237, 0.0
  %v2274 = vmax.f32 %v2238, 0.0
  %v2275 = vmax.f32 %v2239, 0.0
  %v2276 = vmax.f32 %v2240, 0.0
  %v2277 = vmax.f32 %v2241, 0.0
  %v2278 = vmax.f32 %v2242, 0.0
  %v2279 = vmax.f32 %v2243, 0.0
  %v2280 = vmax.f32 %v2244, 0.0
  %v2281 = vmax.f32 %v2245, 0.0
  %v2282 = vmax.f32 %v2246, 0.0
  %v2283 = vmax.f32 %v2247, 0.0
  %v2284 = vmax.f32 %v2248, 0.0
  %v2285 = vmax.f32 %v2249, 0.0
  %v2286 = vmax.f32 %v2250, 0.0
  %v2287 = vmax.f32 %v2251, 0.0
  %v2288 = vmax.f32 %v2252, 0.0
  %v2289 = vmax.f32 %v2253, 0.0
  %v2290 = vmax.f32 %v2254, 0.0
  %v2291 = vmax.f32 %v2255, 0.0
  %v2292 = vmax.f32 %v2256, 0.0
  %v2293 = vmax.f32 %v2257, 0.0
  %v2294 = vmax.f32 %v2258, 0.0
  %v2295 = vmax.f32 %v2259, 0.0
  %v2296 = vmax.f32 %v2260, 0.0
  %v2297 = vmax.f32 %v2261, 0.0
  %v2298 = vmax.f32 %v2262, 0.0
  %v2299 = vmax.f32 %v2263, 0.0
  %v2300 = vpack.c.bf16 %v2264, %v2264
  %v2301 = vpack.c.bf16 %v2265, %v2265
  %v2302 = vpack.c.bf16 %v2266, %v2266
  %v2303 = vpack.c.bf16 %v2267, %v2267
  %v2304 = vpack.c.bf16 %v2268, %v2268
  %v2305 = vpack.c.bf16 %v2269, %v2269
  %v2306 = vpack.c.bf16 %v2270, %v2270
  %v2307 = vpack.c.bf16 %v2271, %v2271
  %v2308 = vpack.c.bf16 %v2272, %v2272
  %v2309 = vpack.c.bf16 %v2273, %v2273
  %v2310 = vpack.c.bf16 %v2274, %v2274
  %v2311 = vpack.c.bf16 %v2275, %v2275
  %v2312 = vpack.c.bf16 %v2276, %v2276
  %v2313 = vpack.c.bf16 %v2277, %v2277
  %v2314 = vpack.c.bf16 %v2278, %v2278
  %v2315 = vpack.c.bf16 %v2279, %v2279
  %v2316 = vpack.c.bf16 %v2280, %v2280
  %v2317 = vpack.c.bf16 %v2281, %v2281
  %v2318 = vpack.c.bf16 %v2282, %v2282
  %v2319 = vpack.c.bf16 %v2283, %v2283
  %v2320 = vpack.c.bf16 %v2284, %v2284
  %v2321 = vpack.c.bf16 %v2285, %v2285
  %v2322 = vpack.c.bf16 %v2286, %v2286
  %v2323 = vpack.c.bf16 %v2287, %v2287
  %v2324 = vpack.c.bf16 %v2288, %v2288
  %v2325 = vpack.c.bf16 %v2289, %v2289
  %v2326 = vpack.c.bf16 %v2290, %v2290
  %v2327 = vpack.c.bf16 %v2291, %v2291
  %v2328 = vpack.c.bf16 %v2292, %v2292
  %v2329 = vpack.c.bf16 %v2293, %v2293
  %v2330 = vpack.c.bf16 %v2294, %v2294
  %v2331 = vpack.c.bf16 %v2295, %v2295
  %v2332 = vpack.c.bf16 %v2296, %v2296
  %v2333 = vpack.c.bf16 %v2297, %v2297
  %v2334 = vpack.c.bf16 %v2298, %v2298
  %v2335 = vpack.c.bf16 %v2299, %v2299
  %v2338 = vunpack.c.l.b16 %v2300
  %v2339 = vunpack.c.l.b16 %v2301
  %v2340 = vpack.c.b16 %v2339, %v2338
  %v2342 = vshrl.u32 %v2340, 16
  %v2344 = vrot.slane %v2342, 7
  %v2345 = vshll.u32 %v2340, 16
  %v2347 = vor.u32 %v2344, %v2345
  %v2350 = vsel %vm248, 0, %v2347
  %v2351 = vsel %vm248, %v2344, 0
  %v2354 = vunpack.c.l.b16 %v2350
  %v2355 = vunpack.c.h.b16 %v2350
  %v2356 = vunpack.c.l.b16 %v2351
  %v2357 = vpack.c.b16 %v2354, %v2354
  %v2358 = vpack.c.b16 %v2355, %v2355
  %v2359 = vpack.c.b16 %v2356, %v2356
  %v2360 = vrot.slane %v2357, 7
  %v2361 = vrot.slane %v2360, 4
  %v2362 = vrot.slane %v2358, 7
  %v2363 = vsel %vm260, %v2361, %v2362
  %v2364 = vrot.slane %v2362, 4
  %v2365 = vrot.slane %v2359, 7
  %v2366 = vsel %vm260, %v2364, %v2365
  %2370 = vst.msk [vmem:[#allocation3 + $0x8] sm:$0xe] %vm61, %v2360
  %2371 = vst.msk [vmem:[#allocation3 + $0xc] sm:$0xf] %vm56, %v2363
  %vm2372 = vcmask 58368
  %2373 = vst.msk [vmem:[#allocation3 + $0x10] sm:$0x3] %vm2372, %v2366
  %v2377 = vunpack.c.l.b16 %v2302
  %v2378 = vunpack.c.l.b16 %v2303
  %v2379 = vunpack.c.l.b16 %v2304
  %v2380 = vpack.c.b16 %v2378, %v2377
  %v2381 = vpack.c.b16 %v2379, %v2379
  %v2383 = vshrl.u32 %v2380, 16
  %v2385 = vshll.u32 %v2380, 16
  %v2387 = vrot.slane %v2385, 1
  %v2388 = vor.u32 %v2383, %v2387
  %v2390 = vshll.u32 %v2381, 16
  %v2392 = vrot.slane %v2390, 1
  %v2393 = vsel %vm953, %v2388, %v2392
  %v2394 = vshrl.u32 %v2381, 16
  %v2398 = vsel %vm248, 0, %v2393
  %v2399 = vsel %vm248, %v2394, 0
  %v2402 = vunpack.c.l.b16 %v2398
  %v2403 = vunpack.c.h.b16 %v2398
  %v2404 = vunpack.c.l.b16 %v2399
  %v2405 = vpack.c.b16 %v2402, %v2402
  %v2406 = vpack.c.b16 %v2403, %v2403
  %v2407 = vpack.c.b16 %v2404, %v2404
  %v2408 = vrot.slane %v2405, 6
  %v2409 = vrot.slane %v2408, 4
  %v2410 = vrot.slane %v2406, 6
  %v2411 = vsel %vm301, %v2409, %v2410
  %v2412 = vrot.slane %v2410, 4
  %v2413 = vrot.slane %v2407, 6
  %v2414 = vsel %vm301, %v2412, %v2413
  %vm2418 = vcmask 60418
  %2419 = vst.msk [vmem:[#allocation3 + $0x10] sm:$0xc] %vm2418, %v2408
  %2420 = vst.msk [vmem:[#allocation3 + $0x14] sm:$0xf] %vm56, %v2411
  %2421 = vst.msk [vmem:[#allocation3 + $0x18] sm:$0x7] %vm64, %v2414
  %v2424 = vunpack.c.l.b16 %v2305
  %v2425 = vunpack.c.l.b16 %v2306
  %v2426 = vpack.c.b16 %v2424, %v2379
  %v2427 = vpack.c.b16 %v2425, %v2425
  %v2429 = vshrl.u32 %v2426, 16
  %v2431 = vrot.slane %v2429, 1
  %v2432 = vshll.u32 %v2426, 16
  %v2434 = vrot.slane %v2432, 2
  %v2435 = vor.u32 %v2431, %v2434
  %v2437 = vshrl.u32 %v2427, 16
  %v2439 = vrot.slane %v2437, 1
  %v2440 = vshll.u32 %v2427, 16
  %v2442 = vrot.slane %v2440, 2
  %v2443 = vor.u32 %v2439, %v2442
  %v2444 = vsel %vm1271, %v2435, %v2443
  %v2447 = vsel %vm248, 0, %v2444
  %v2448 = vsel %vm248, %v2439, 0
  %v2451 = vunpack.c.l.b16 %v2447
  %v2452 = vunpack.c.h.b16 %v2447
  %v2453 = vunpack.c.l.b16 %v2448
  %v2454 = vpack.c.b16 %v2451, %v2451
  %v2455 = vpack.c.b16 %v2452, %v2452
  %v2456 = vpack.c.b16 %v2453, %v2453
  %v2457 = vrot.slane %v2454, 5
  %v2458 = vrot.slane %v2457, 4
  %v2459 = vrot.slane %v2455, 5
  %v2460 = vsel %vm342, %v2458, %v2459
  %v2461 = vrot.slane %v2459, 4
  %v2462 = vrot.slane %v2456, 5
  %v2463 = vsel %vm342, %v2461, %v2462
  %vm2467 = vcmask 60419
  %2468 = vst.msk [vmem:[#allocation3 + $0x18] sm:$0x8] %vm2467, %v2457
  %2469 = vst.msk [vmem:[#allocation3 + $0x1c] sm:$0xf] %vm56, %v2460
  %2470 = vst.msk [vmem:[#allocation3 + $0x20] sm:$0xf] %vm56, %v2463
  %v2473 = vunpack.c.l.b16 %v2307
  %v2474 = vunpack.c.l.b16 %v2308
  %v2475 = vpack.c.b16 %v2473, %v2425
  %v2476 = vpack.c.b16 %v2474, %v2474
  %v2478 = vshrl.u32 %v2475, 16
  %v2480 = vrot.slane %v2478, 2
  %v2481 = vshll.u32 %v2475, 16
  %v2483 = vrot.slane %v2481, 3
  %v2484 = vor.u32 %v2480, %v2483
  %v2486 = vshrl.u32 %v2476, 16
  %v2488 = vrot.slane %v2486, 2
  %v2489 = vshll.u32 %v2476, 16
  %v2491 = vrot.slane %v2489, 3
  %v2492 = vor.u32 %v2488, %v2491
  %v2493 = vsel %vm1531, %v2484, %v2492
  %v2496 = vsel %vm248, 0, %v2493
  %v2497 = vsel %vm248, %v2488, 0
  %v2500 = vunpack.c.l.b16 %v2496
  %v2501 = vunpack.c.h.b16 %v2496
  %v2502 = vunpack.c.l.b16 %v2497
  %v2503 = vpack.c.b16 %v2500, %v2500
  %v2504 = vpack.c.b16 %v2501, %v2501
  %v2505 = vpack.c.b16 %v2502, %v2502
  %2509 = vst.msk [vmem:[#allocation3 + $0x24] sm:$0xf] %vm56, %v2503
  %2510 = vst.msk [vmem:[#allocation3 + $0x28] sm:$0xf] %vm56, %v2504
  %2511 = vst.msk [vmem:[#allocation3 + $0x2c] sm:$0x1] %vm59, %v2505
  %v2514 = vunpack.c.l.b16 %v2309
  %v2515 = vunpack.c.l.b16 %v2310
  %v2516 = vpack.c.b16 %v2515, %v2514
  %v2518 = vshrl.u32 %v2516, 16
  %v2520 = vrot.slane %v2518, 7
  %v2521 = vshll.u32 %v2516, 16
  %v2523 = vor.u32 %v2520, %v2521
  %v2526 = vsel %vm248, 0, %v2523
  %v2527 = vsel %vm248, %v2520, 0
  %v2530 = vunpack.c.l.b16 %v2526
  %v2531 = vunpack.c.h.b16 %v2526
  %v2532 = vunpack.c.l.b16 %v2527
  %v2533 = vpack.c.b16 %v2530, %v2530
  %v2534 = vpack.c.b16 %v2531, %v2531
  %v2535 = vpack.c.b16 %v2532, %v2532
  %v2536 = vrot.slane %v2533, 7
  %v2537 = vrot.slane %v2536, 4
  %v2538 = vrot.slane %v2534, 7
  %v2539 = vsel %vm260, %v2537, %v2538
  %v2540 = vrot.slane %v2538, 4
  %v2541 = vrot.slane %v2535, 7
  %v2542 = vsel %vm260, %v2540, %v2541
  %2546 = vst.msk [vmem:[#allocation3 + $0x2c] sm:$0xe] %vm61, %v2536
  %2547 = vst.msk [vmem:[#allocation3 + $0x30] sm:$0xf] %vm56, %v2539
  %2548 = vst.msk [vmem:[#allocation3 + $0x34] sm:$0x3] %vm2372, %v2542
  %v2552 = vunpack.c.l.b16 %v2311
  %v2553 = vunpack.c.l.b16 %v2312
  %v2554 = vunpack.c.l.b16 %v2313
  %v2555 = vpack.c.b16 %v2553, %v2552
  %v2556 = vpack.c.b16 %v2554, %v2554
  %v2558 = vshrl.u32 %v2555, 16
  %v2560 = vshll.u32 %v2555, 16
  %v2562 = vrot.slane %v2560, 1
  %v2563 = vor.u32 %v2558, %v2562
  %v2565 = vshll.u32 %v2556, 16
  %v2567 = vrot.slane %v2565, 1
  %v2568 = vsel %vm953, %v2563, %v2567
  %v2569 = vshrl.u32 %v2556, 16
  %v2573 = vsel %vm248, 0, %v2568
  %v2574 = vsel %vm248, %v2569, 0
  %v2577 = vunpack.c.l.b16 %v2573
  %v2578 = vunpack.c.h.b16 %v2573
  %v2579 = vunpack.c.l.b16 %v2574
  %v2580 = vpack.c.b16 %v2577, %v2577
  %v2581 = vpack.c.b16 %v2578, %v2578
  %v2582 = vpack.c.b16 %v2579, %v2579
  %v2583 = vrot.slane %v2580, 6
  %v2584 = vrot.slane %v2583, 4
  %v2585 = vrot.slane %v2581, 6
  %v2586 = vsel %vm301, %v2584, %v2585
  %v2587 = vrot.slane %v2585, 4
  %v2588 = vrot.slane %v2582, 6
  %v2589 = vsel %vm301, %v2587, %v2588
  %2593 = vst.msk [vmem:[#allocation3 + $0x34] sm:$0xc] %vm2418, %v2583
  %2594 = vst.msk [vmem:[#allocation3 + $0x38] sm:$0xf] %vm56, %v2586
  %2595 = vst.msk [vmem:[#allocation3 + $0x3c] sm:$0x7] %vm64, %v2589
  %v2598 = vunpack.c.l.b16 %v2314
  %v2599 = vunpack.c.l.b16 %v2315
  %v2600 = vpack.c.b16 %v2598, %v2554
  %v2601 = vpack.c.b16 %v2599, %v2599
  %v2603 = vshrl.u32 %v2600, 16
  %v2605 = vrot.slane %v2603, 1
  %v2606 = vshll.u32 %v2600, 16
  %v2608 = vrot.slane %v2606, 2
  %v2609 = vor.u32 %v2605, %v2608
  %v2611 = vshrl.u32 %v2601, 16
  %v2613 = vrot.slane %v2611, 1
  %v2614 = vshll.u32 %v2601, 16
  %v2616 = vrot.slane %v2614, 2
  %v2617 = vor.u32 %v2613, %v2616
  %v2618 = vsel %vm1271, %v2609, %v2617
  %v2621 = vsel %vm248, 0, %v2618
  %v2622 = vsel %vm248, %v2613, 0
  %v2625 = vunpack.c.l.b16 %v2621
  %v2626 = vunpack.c.h.b16 %v2621
  %v2627 = vunpack.c.l.b16 %v2622
  %v2628 = vpack.c.b16 %v2625, %v2625
  %v2629 = vpack.c.b16 %v2626, %v2626
  %v2630 = vpack.c.b16 %v2627, %v2627
  %v2631 = vrot.slane %v2628, 5
  %v2632 = vrot.slane %v2631, 4
  %v2633 = vrot.slane %v2629, 5
  %v2634 = vsel %vm342, %v2632, %v2633
  %v2635 = vrot.slane %v2633, 4
  %v2636 = vrot.slane %v2630, 5
  %v2637 = vsel %vm342, %v2635, %v2636
  %2641 = vst.msk [vmem:[#allocation3 + $0x3c] sm:$0x8] %vm2467, %v2631
  %2642 = vst.msk [vmem:[#allocation3 + $0x40] sm:$0xf] %vm56, %v2634
  %2643 = vst.msk [vmem:[#allocation3 + $0x44] sm:$0xf] %vm56, %v2637
  %v2646 = vunpack.c.l.b16 %v2316
  %v2647 = vunpack.c.l.b16 %v2317
  %v2648 = vpack.c.b16 %v2646, %v2599
  %v2649 = vpack.c.b16 %v2647, %v2647
  %v2651 = vshrl.u32 %v2648, 16
  %v2653 = vrot.slane %v2651, 2
  %v2654 = vshll.u32 %v2648, 16
  %v2656 = vrot.slane %v2654, 3
  %v2657 = vor.u32 %v2653, %v2656
  %v2659 = vshrl.u32 %v2649, 16
  %v2661 = vrot.slane %v2659, 2
  %v2662 = vshll.u32 %v2649, 16
  %v2664 = vrot.slane %v2662, 3
  %v2665 = vor.u32 %v2661, %v2664
  %v2666 = vsel %vm1531, %v2657, %v2665
  %v2669 = vsel %vm248, 0, %v2666
  %v2670 = vsel %vm248, %v2661, 0
  %v2673 = vunpack.c.l.b16 %v2669
  %v2674 = vunpack.c.h.b16 %v2669
  %v2675 = vunpack.c.l.b16 %v2670
  %v2676 = vpack.c.b16 %v2673, %v2673
  %v2677 = vpack.c.b16 %v2674, %v2674
  %v2678 = vpack.c.b16 %v2675, %v2675
  %2682 = vst.msk [vmem:[#allocation3 + $0x48] sm:$0xf] %vm56, %v2676
  %2683 = vst.msk [vmem:[#allocation3 + $0x4c] sm:$0xf] %vm56, %v2677
  %2684 = vst.msk [vmem:[#allocation3 + $0x50] sm:$0x1] %vm59, %v2678
  %v2687 = vunpack.c.l.b16 %v2318
  %v2688 = vunpack.c.l.b16 %v2319
  %v2689 = vpack.c.b16 %v2688, %v2687
  %v2691 = vshrl.u32 %v2689, 16
  %v2693 = vrot.slane %v2691, 7
  %v2694 = vshll.u32 %v2689, 16
  %v2696 = vor.u32 %v2693, %v2694
  %v2699 = vsel %vm248, 0, %v2696
  %v2700 = vsel %vm248, %v2693, 0
  %v2703 = vunpack.c.l.b16 %v2699
  %v2704 = vunpack.c.h.b16 %v2699
  %v2705 = vunpack.c.l.b16 %v2700
  %v2706 = vpack.c.b16 %v2703, %v2703
  %v2707 = vpack.c.b16 %v2704, %v2704
  %v2708 = vpack.c.b16 %v2705, %v2705
  %v2709 = vrot.slane %v2706, 7
  %v2710 = vrot.slane %v2709, 4
  %v2711 = vrot.slane %v2707, 7
  %v2712 = vsel %vm260, %v2710, %v2711
  %v2713 = vrot.slane %v2711, 4
  %v2714 = vrot.slane %v2708, 7
  %v2715 = vsel %vm260, %v2713, %v2714
  %2719 = vst.msk [vmem:[#allocation3 + $0x50] sm:$0xe] %vm61, %v2709
  %2720 = vst.msk [vmem:[#allocation3 + $0x54] sm:$0xf] %vm56, %v2712
  %2721 = vst.msk [vmem:[#allocation3 + $0x58] sm:$0x3] %vm2372, %v2715
  %v2725 = vunpack.c.l.b16 %v2320
  %v2726 = vunpack.c.l.b16 %v2321
  %v2727 = vunpack.c.l.b16 %v2322
  %v2728 = vpack.c.b16 %v2726, %v2725
  %v2729 = vpack.c.b16 %v2727, %v2727
  %v2731 = vshrl.u32 %v2728, 16
  %v2733 = vshll.u32 %v2728, 16
  %v2735 = vrot.slane %v2733, 1
  %v2736 = vor.u32 %v2731, %v2735
  %v2738 = vshll.u32 %v2729, 16
  %v2740 = vrot.slane %v2738, 1
  %v2741 = vsel %vm953, %v2736, %v2740
  %v2742 = vshrl.u32 %v2729, 16
  %v2746 = vsel %vm248, 0, %v2741
  %v2747 = vsel %vm248, %v2742, 0
  %v2750 = vunpack.c.l.b16 %v2746
  %v2751 = vunpack.c.h.b16 %v2746
  %v2752 = vunpack.c.l.b16 %v2747
  %v2753 = vpack.c.b16 %v2750, %v2750
  %v2754 = vpack.c.b16 %v2751, %v2751
  %v2755 = vpack.c.b16 %v2752, %v2752
  %v2756 = vrot.slane %v2753, 6
  %v2757 = vrot.slane %v2756, 4
  %v2758 = vrot.slane %v2754, 6
  %v2759 = vsel %vm301, %v2757, %v2758
  %v2760 = vrot.slane %v2758, 4
  %v2761 = vrot.slane %v2755, 6
  %v2762 = vsel %vm301, %v2760, %v2761
  %2766 = vst.msk [vmem:[#allocation3 + $0x58] sm:$0xc] %vm2418, %v2756
  %2767 = vst.msk [vmem:[#allocation3 + $0x5c] sm:$0xf] %vm56, %v2759
  %2768 = vst.msk [vmem:[#allocation3 + $0x60] sm:$0x7] %vm64, %v2762
  %v2771 = vunpack.c.l.b16 %v2323
  %v2772 = vunpack.c.l.b16 %v2324
  %v2773 = vpack.c.b16 %v2771, %v2727
  %v2774 = vpack.c.b16 %v2772, %v2772
  %v2776 = vshrl.u32 %v2773, 16
  %v2778 = vrot.slane %v2776, 1
  %v2779 = vshll.u32 %v2773, 16
  %v2781 = vrot.slane %v2779, 2
  %v2782 = vor.u32 %v2778, %v2781
  %v2784 = vshrl.u32 %v2774, 16
  %v2786 = vrot.slane %v2784, 1
  %v2787 = vshll.u32 %v2774, 16
  %v2789 = vrot.slane %v2787, 2
  %v2790 = vor.u32 %v2786, %v2789
  %v2791 = vsel %vm1271, %v2782, %v2790
  %v2794 = vsel %vm248, 0, %v2791
  %v2795 = vsel %vm248, %v2786, 0
  %v2798 = vunpack.c.l.b16 %v2794
  %v2799 = vunpack.c.h.b16 %v2794
  %v2800 = vunpack.c.l.b16 %v2795
  %v2801 = vpack.c.b16 %v2798, %v2798
  %v2802 = vpack.c.b16 %v2799, %v2799
  %v2803 = vpack.c.b16 %v2800, %v2800
  %v2804 = vrot.slane %v2801, 5
  %v2805 = vrot.slane %v2804, 4
  %v2806 = vrot.slane %v2802, 5
  %v2807 = vsel %vm342, %v2805, %v2806
  %v2808 = vrot.slane %v2806, 4
  %v2809 = vrot.slane %v2803, 5
  %v2810 = vsel %vm342, %v2808, %v2809
  %2814 = vst.msk [vmem:[#allocation3 + $0x60] sm:$0x8] %vm2467, %v2804
  %2815 = vst.msk [vmem:[#allocation3 + $0x64] sm:$0xf] %vm56, %v2807
  %2816 = vst.msk [vmem:[#allocation3 + $0x68] sm:$0xf] %vm56, %v2810
  %v2819 = vunpack.c.l.b16 %v2325
  %v2820 = vunpack.c.l.b16 %v2326
  %v2821 = vpack.c.b16 %v2819, %v2772
  %v2822 = vpack.c.b16 %v2820, %v2820
  %v2824 = vshrl.u32 %v2821, 16
  %v2826 = vrot.slane %v2824, 2
  %v2827 = vshll.u32 %v2821, 16
  %v2829 = vrot.slane %v2827, 3
  %v2830 = vor.u32 %v2826, %v2829
  %v2832 = vshrl.u32 %v2822, 16
  %v2834 = vrot.slane %v2832, 2
  %v2835 = vshll.u32 %v2822, 16
  %v2837 = vrot.slane %v2835, 3
  %v2838 = vor.u32 %v2834, %v2837
  %v2839 = vsel %vm1531, %v2830, %v2838
  %v2842 = vsel %vm248, 0, %v2839
  %v2843 = vsel %vm248, %v2834, 0
  %v2846 = vunpack.c.l.b16 %v2842
  %v2847 = vunpack.c.h.b16 %v2842
  %v2848 = vunpack.c.l.b16 %v2843
  %v2849 = vpack.c.b16 %v2846, %v2846
  %v2850 = vpack.c.b16 %v2847, %v2847
  %v2851 = vpack.c.b16 %v2848, %v2848
  %2855 = vst.msk [vmem:[#allocation3 + $0x6c] sm:$0xf] %vm56, %v2849
  %2856 = vst.msk [vmem:[#allocation3 + $0x70] sm:$0xf] %vm56, %v2850
  %2857 = vst.msk [vmem:[#allocation3 + $0x74] sm:$0x1] %vm59, %v2851
  %v2860 = vunpack.c.l.b16 %v2327
  %v2861 = vunpack.c.l.b16 %v2328
  %v2862 = vpack.c.b16 %v2861, %v2860
  %v2864 = vshrl.u32 %v2862, 16
  %v2866 = vrot.slane %v2864, 7
  %v2867 = vshll.u32 %v2862, 16
  %v2869 = vor.u32 %v2866, %v2867
  %v2872 = vsel %vm248, 0, %v2869
  %v2873 = vsel %vm248, %v2866, 0
  %v2876 = vunpack.c.l.b16 %v2872
  %v2877 = vunpack.c.h.b16 %v2872
  %v2878 = vunpack.c.l.b16 %v2873
  %v2879 = vpack.c.b16 %v2876, %v2876
  %v2880 = vpack.c.b16 %v2877, %v2877
  %v2881 = vpack.c.b16 %v2878, %v2878
  %v2882 = vrot.slane %v2879, 7
  %v2883 = vrot.slane %v2882, 4
  %v2884 = vrot.slane %v2880, 7
  %v2885 = vsel %vm260, %v2883, %v2884
  %v2886 = vrot.slane %v2884, 4
  %v2887 = vrot.slane %v2881, 7
  %v2888 = vsel %vm260, %v2886, %v2887
  %2892 = vst.msk [vmem:[#allocation3 + $0x74] sm:$0xe] %vm61, %v2882
  %2893 = vst.msk [vmem:[#allocation3 + $0x78] sm:$0xf] %vm56, %v2885
  %2894 = vst.msk [vmem:[#allocation3 + $0x7c] sm:$0x3] %vm2372, %v2888
  %v2898 = vunpack.c.l.b16 %v2329
  %v2899 = vunpack.c.l.b16 %v2330
  %v2900 = vunpack.c.l.b16 %v2331
  %v2901 = vpack.c.b16 %v2899, %v2898
  %v2902 = vpack.c.b16 %v2900, %v2900
  %v2904 = vshrl.u32 %v2901, 16
  %v2906 = vshll.u32 %v2901, 16
  %v2908 = vrot.slane %v2906, 1
  %v2909 = vor.u32 %v2904, %v2908
  %v2911 = vshll.u32 %v2902, 16
  %v2913 = vrot.slane %v2911, 1
  %v2914 = vsel %vm953, %v2909, %v2913
  %v2915 = vshrl.u32 %v2902, 16
  %v2919 = vsel %vm248, 0, %v2914
  %v2920 = vsel %vm248, %v2915, 0
  %v2923 = vunpack.c.l.b16 %v2919
  %v2924 = vunpack.c.h.b16 %v2919
  %v2925 = vunpack.c.l.b16 %v2920
  %v2926 = vpack.c.b16 %v2923, %v2923
  %v2927 = vpack.c.b16 %v2924, %v2924
  %v2928 = vpack.c.b16 %v2925, %v2925
  %v2929 = vrot.slane %v2926, 6
  %v2930 = vrot.slane %v2929, 4
  %v2931 = vrot.slane %v2927, 6
  %v2932 = vsel %vm301, %v2930, %v2931
  %v2933 = vrot.slane %v2931, 4
  %v2934 = vrot.slane %v2928, 6
  %v2935 = vsel %vm301, %v2933, %v2934
  %2939 = vst.msk [vmem:[#allocation3 + $0x7c] sm:$0xc] %vm2418, %v2929
  %2940 = vst.msk [vmem:[#allocation3 + $0x80] sm:$0xf] %vm56, %v2932
  %2941 = vst.msk [vmem:[#allocation3 + $0x84] sm:$0x7] %vm64, %v2935
  %v2944 = vunpack.c.l.b16 %v2332
  %v2945 = vunpack.c.l.b16 %v2333
  %v2946 = vpack.c.b16 %v2944, %v2900
  %v2947 = vpack.c.b16 %v2945, %v2945
  %v2949 = vshrl.u32 %v2946, 16
  %v2951 = vrot.slane %v2949, 1
  %v2952 = vshll.u32 %v2946, 16
  %v2954 = vrot.slane %v2952, 2
  %v2955 = vor.u32 %v2951, %v2954
  %v2957 = vshrl.u32 %v2947, 16
  %v2959 = vrot.slane %v2957, 1
  %v2960 = vshll.u32 %v2947, 16
  %v2962 = vrot.slane %v2960, 2
  %v2963 = vor.u32 %v2959, %v2962
  %v2964 = vsel %vm1271, %v2955, %v2963
  %v2967 = vsel %vm248, 0, %v2964
  %v2968 = vsel %vm248, %v2959, 0
  %v2971 = vunpack.c.l.b16 %v2967
  %v2972 = vunpack.c.h.b16 %v2967
  %v2973 = vunpack.c.l.b16 %v2968
  %v2974 = vpack.c.b16 %v2971, %v2971
  %v2975 = vpack.c.b16 %v2972, %v2972
  %v2976 = vpack.c.b16 %v2973, %v2973
  %v2977 = vrot.slane %v2974, 5
  %v2978 = vrot.slane %v2977, 4
  %v2979 = vrot.slane %v2975, 5
  %v2980 = vsel %vm342, %v2978, %v2979
  %v2981 = vrot.slane %v2979, 4
  %v2982 = vrot.slane %v2976, 5
  %v2983 = vsel %vm342, %v2981, %v2982
  %2987 = vst.msk [vmem:[#allocation3 + $0x84] sm:$0x8] %vm2467, %v2977
  %2988 = vst.msk [vmem:[#allocation3 + $0x88] sm:$0xf] %vm56, %v2980
  %2989 = vst.msk [vmem:[#allocation3 + $0x8c] sm:$0xf] %vm56, %v2983
  %v2992 = vunpack.c.l.b16 %v2334
  %v2993 = vunpack.c.l.b16 %v2335
  %v2994 = vpack.c.b16 %v2992, %v2945
  %v2995 = vpack.c.b16 %v2993, %v2993
  %v2997 = vshrl.u32 %v2994, 16
  %v2999 = vrot.slane %v2997, 2
  %v3000 = vshll.u32 %v2994, 16
  %v3002 = vrot.slane %v3000, 3
  %v3003 = vor.u32 %v2999, %v3002
  %v3005 = vshrl.u32 %v2995, 16
  %v3007 = vrot.slane %v3005, 2
  %v3008 = vshll.u32 %v2995, 16
  %v3010 = vrot.slane %v3008, 3
  %v3011 = vor.u32 %v3007, %v3010
  %v3012 = vsel %vm1531, %v3003, %v3011
  %v3015 = vsel %vm248, 0, %v3012
  %v3016 = vsel %vm248, %v3007, 0
  %v3019 = vunpack.c.l.b16 %v3015
  %v3020 = vunpack.c.h.b16 %v3015
  %v3021 = vunpack.c.l.b16 %v3016
  %v3022 = vpack.c.b16 %v3019, %v3019
  %v3023 = vpack.c.b16 %v3020, %v3020
  %v3024 = vpack.c.b16 %v3021, %v3021
  %3028 = vst.msk [vmem:[#allocation3 + $0x90] sm:$0xf] %vm56, %v3022
  %3029 = vst.msk [vmem:[#allocation3 + $0x94] sm:$0xf] %vm56, %v3023
  %3030 = vst.msk [vmem:[#allocation3 + $0x98] sm:$0x1] %vm59, %v3024
  %v3031 = vld [vmem:[#allocation3] sm:$0xf]
  %v3032 = vld [vmem:[#allocation3 + $0x4] sm:$0xf]
  %v3033 = vld [vmem:[#allocation3 + $0x8] sm:$0xf]
  %v3034 = vld [vmem:[#allocation3 + $0xc] sm:$0xf]
  %v3035 = vld [vmem:[#allocation3 + $0x10] sm:$0xf]
  %v3036 = vld [vmem:[#allocation3 + $0x14] sm:$0xf]
  %v3037 = vld [vmem:[#allocation3 + $0x18] sm:$0xf]
  %v3038 = vld [vmem:[#allocation3 + $0x1c] sm:$0xf]
  %v3039 = vld [vmem:[#allocation3 + $0x20] sm:$0xf]
  %v3040 = vld [vmem:[#allocation3 + $0x24] sm:$0xf]
  %v3041 = vld [vmem:[#allocation3 + $0x28] sm:$0xf]
  %v3042 = vld [vmem:[#allocation3 + $0x2c] sm:$0xf]
  %v3043 = vld [vmem:[#allocation3 + $0x30] sm:$0xf]
  %v3044 = vld [vmem:[#allocation3 + $0x34] sm:$0xf]
  %v3045 = vld [vmem:[#allocation3 + $0x38] sm:$0xf]
  %v3046 = vld [vmem:[#allocation3 + $0x3c] sm:$0xf]
  %v3047 = vld [vmem:[#allocation3 + $0x40] sm:$0xf]
  %v3048 = vld [vmem:[#allocation3 + $0x44] sm:$0xf]
  %v3049 = vld [vmem:[#allocation3 + $0x48] sm:$0xf]
  %v3050 = vld [vmem:[#allocation3 + $0x4c] sm:$0xf]
  %v3051 = vld [vmem:[#allocation3 + $0x50] sm:$0xf]
  %v3052 = vld [vmem:[#allocation3 + $0x54] sm:$0xf]
  %v3053 = vld [vmem:[#allocation3 + $0x58] sm:$0xf]
  %v3054 = vld [vmem:[#allocation3 + $0x5c] sm:$0xf]
  %v3055 = vld [vmem:[#allocation3 + $0x60] sm:$0xf]
  %v3056 = vld [vmem:[#allocation3 + $0x64] sm:$0xf]
  %v3057 = vld [vmem:[#allocation3 + $0x68] sm:$0xf]
  %v3058 = vld [vmem:[#allocation3 + $0x6c] sm:$0xf]
  %v3059 = vld [vmem:[#allocation3 + $0x70] sm:$0xf]
  %v3060 = vld [vmem:[#allocation3 + $0x74] sm:$0xf]
  %v3061 = vld [vmem:[#allocation3 + $0x78] sm:$0xf]
  %v3062 = vld [vmem:[#allocation3 + $0x7c] sm:$0xf]
  %v3063 = vld [vmem:[#allocation3 + $0x80] sm:$0xf]
  %v3064 = vld [vmem:[#allocation3 + $0x84] sm:$0xf]
  %v3065 = vld [vmem:[#allocation3 + $0x88] sm:$0xf]
  %v3066 = vld [vmem:[#allocation3 + $0x8c] sm:$0xf]
  %v3067 = vld [vmem:[#allocation3 + $0x90] sm:$0x1]
  %v3068 = vld [vmem:[#allocation3] sm:$0xe]
  %v3069 = vld [vmem:[#allocation3 + $0x8] sm:$0xe]
  %v3070 = vld [vmem:[#allocation3 + $0x90] sm:$0xf]
  %v3071 = vld [vmem:[#allocation3 + $0x94] sm:$0xf]
  %v3072 = vld [vmem:[#allocation3 + $0x98] sm:$0x1]
  %v3073 = vld [vmem:[#allocation3 + $0x98] sm:$0x3]
  %v3074 = vld [vmem:[#allocation3 + $0x8] sm:$0xc]
  %v3075 = vld [vmem:[#allocation3 + $0x10] sm:$0xc]
  %v3076 = vld [vmem:[#allocation3 + $0x98] sm:$0xf]
  %v3077 = vld [vmem:[#allocation3 + $0x9c] sm:$0xf]
  %v3078 = vld [vmem:[#allocation3 + $0xa0] sm:$0x3]
  %v3079 = vld [vmem:[#allocation3 + $0xa0] sm:$0x7]
  %v3080 = vld [vmem:[#allocation3 + $0x10] sm:$0x8]
  %v3081 = vld [vmem:[#allocation2 + $0x8] sm:$0xe]
  %v3082 = vld [vmem:[#allocation2 + $0xc] sm:$0xf]
  %v3083 = vld [vmem:[#allocation2 + $0x10] sm:$0xf]
  %v3084 = vld [vmem:[#allocation2 + $0x14] sm:$0xf]
  %v3085 = vld [vmem:[#allocation2 + $0x18] sm:$0xf]
  %v3086 = vld [vmem:[#allocation2 + $0x1c] sm:$0xf]
  %v3087 = vld [vmem:[#allocation2 + $0x20] sm:$0xf]
  %v3088 = vld [vmem:[#allocation2 + $0x24] sm:$0xf]
  %v3089 = vld [vmem:[#allocation2 + $0x28] sm:$0xf]
  %v3090 = vld [vmem:[#allocation2 + $0x2c] sm:$0xf]
  %v3091 = vld [vmem:[#allocation2 + $0x30] sm:$0xf]
  %v3092 = vld [vmem:[#allocation2 + $0x34] sm:$0xf]
  %v3093 = vld [vmem:[#allocation2 + $0x38] sm:$0xf]
  %v3094 = vld [vmem:[#allocation2 + $0x3c] sm:$0xf]
  %v3095 = vld [vmem:[#allocation2 + $0x40] sm:$0xf]
  %v3096 = vld [vmem:[#allocation2 + $0x44] sm:$0xf]
  %v3097 = vld [vmem:[#allocation2 + $0x48] sm:$0xf]
  %v3098 = vld [vmem:[#allocation2 + $0x4c] sm:$0xf]
  %v3099 = vld [vmem:[#allocation2 + $0x50] sm:$0xf]
  %v3100 = vld [vmem:[#allocation2 + $0x54] sm:$0xf]
  %v3101 = vld [vmem:[#allocation2 + $0x58] sm:$0xf]
  %v3102 = vld [vmem:[#allocation2 + $0x5c] sm:$0xf]
  %v3103 = vld [vmem:[#allocation2 + $0x60] sm:$0xf]
  %v3104 = vld [vmem:[#allocation2 + $0x64] sm:$0xf]
  %v3105 = vld [vmem:[#allocation2 + $0x68] sm:$0xf]
  %v3106 = vld [vmem:[#allocation2 + $0x6c] sm:$0xf]
  %v3107 = vld [vmem:[#allocation2 + $0x70] sm:$0xf]
  %v3108 = vld [vmem:[#allocation2 + $0x74] sm:$0xf]
  %v3109 = vld [vmem:[#allocation2 + $0x78] sm:$0xf]
  %v3110 = vld [vmem:[#allocation2 + $0x7c] sm:$0xf]
  %v3111 = vld [vmem:[#allocation2 + $0x80] sm:$0xf]
  %v3112 = vld [vmem:[#allocation2 + $0x84] sm:$0xf]
  %v3113 = vld [vmem:[#allocation2 + $0x88] sm:$0xf]
  %v3114 = vld [vmem:[#allocation2 + $0x8c] sm:$0xf]
  %v3115 = vld [vmem:[#allocation2 + $0x90] sm:$0xf]
  %v3116 = vld [vmem:[#allocation2 + $0x94] sm:$0xf]
  %v3117 = vld [vmem:[#allocation2 + $0x98] sm:$0x3]
  %v3154 = vunpack.c.l.b16 %v3031
  %v3155 = vunpack.c.l.b16 %v3032
  %v3156 = vunpack.c.l.b16 %v3033
  %v3157 = vunpack.c.l.b16 %v3034
  %v3158 = vunpack.c.l.b16 %v3035
  %v3159 = vunpack.c.l.b16 %v3036
  %v3160 = vunpack.c.l.b16 %v3037
  %v3161 = vunpack.c.l.b16 %v3038
  %v3162 = vunpack.c.l.b16 %v3039
  %v3163 = vunpack.c.l.b16 %v3040
  %v3164 = vunpack.c.l.b16 %v3041
  %v3165 = vunpack.c.l.b16 %v3042
  %v3166 = vunpack.c.l.b16 %v3043
  %v3167 = vunpack.c.l.b16 %v3044
  %v3168 = vunpack.c.l.b16 %v3045
  %v3169 = vunpack.c.l.b16 %v3046
  %v3170 = vunpack.c.l.b16 %v3047
  %v3171 = vunpack.c.l.b16 %v3048
  %v3172 = vunpack.c.l.b16 %v3049
  %v3173 = vunpack.c.l.b16 %v3050
  %v3174 = vunpack.c.l.b16 %v3051
  %v3175 = vunpack.c.l.b16 %v3052
  %v3176 = vunpack.c.l.b16 %v3053
  %v3177 = vunpack.c.l.b16 %v3054
  %v3178 = vunpack.c.l.b16 %v3055
  %v3179 = vunpack.c.l.b16 %v3056
  %v3180 = vunpack.c.l.b16 %v3057
  %v3181 = vunpack.c.l.b16 %v3058
  %v3182 = vunpack.c.l.b16 %v3059
  %v3183 = vunpack.c.l.b16 %v3060
  %v3184 = vunpack.c.l.b16 %v3061
  %v3185 = vunpack.c.l.b16 %v3062
  %v3186 = vunpack.c.l.b16 %v3063
  %v3187 = vunpack.c.l.b16 %v3064
  %v3188 = vunpack.c.l.b16 %v3065
  %v3189 = vunpack.c.l.b16 %v3066
  %v3190 = vpack.c.b16 %v3155, %v3154
  %v3191 = vpack.c.b16 %v3157, %v3156
  %v3192 = vpack.c.b16 %v3159, %v3158
  %v3193 = vpack.c.b16 %v3161, %v3160
  %v3194 = vpack.c.b16 %v3163, %v3162
  %v3195 = vpack.c.b16 %v3165, %v3164
  %v3196 = vpack.c.b16 %v3167, %v3166
  %v3197 = vpack.c.b16 %v3169, %v3168
  %v3198 = vpack.c.b16 %v3171, %v3170
  %v3199 = vpack.c.b16 %v3173, %v3172
  %v3200 = vpack.c.b16 %v3175, %v3174
  %v3201 = vpack.c.b16 %v3177, %v3176
  %v3202 = vpack.c.b16 %v3179, %v3178
  %v3203 = vpack.c.b16 %v3181, %v3180
  %v3204 = vpack.c.b16 %v3183, %v3182
  %v3205 = vpack.c.b16 %v3185, %v3184
  %v3206 = vpack.c.b16 %v3187, %v3186
  %v3207 = vpack.c.b16 %v3189, %v3188
  %v3209 = vunpack.c.l.b16 %v3067
  %v3210 = vpack.c.b16 %v3209, %v3209
  %v3212 = vshrl.u32 %v3190, 16
  %v3214 = vshll.u32 %v3190, 16
  %v3216 = vrot.slane %v3214, 1
  %v3217 = vor.u32 %v3212, %v3216
  %v3219 = vshll.u32 %v3191, 16
  %v3221 = vrot.slane %v3219, 1
  %v3222 = vsel %vm953, %v3217, %v3221
  %v3223 = vshrl.u32 %v3191, 16
  %v3225 = vor.u32 %v3223, %v3221
  %v3227 = vshll.u32 %v3192, 16
  %v3229 = vrot.slane %v3227, 1
  %v3230 = vsel %vm953, %v3225, %v3229
  %v3231 = vshrl.u32 %v3192, 16
  %v3233 = vor.u32 %v3231, %v3229
  %v3235 = vshll.u32 %v3193, 16
  %v3237 = vrot.slane %v3235, 1
  %v3238 = vsel %vm953, %v3233, %v3237
  %v3239 = vshrl.u32 %v3193, 16
  %v3241 = vor.u32 %v3239, %v3237
  %v3243 = vshll.u32 %v3194, 16
  %v3245 = vrot.slane %v3243, 1
  %v3246 = vsel %vm953, %v3241, %v3245
  %v3247 = vshrl.u32 %v3194, 16
  %v3249 = vor.u32 %v3247, %v3245
  %v3251 = vshll.u32 %v3195, 16
  %v3253 = vrot.slane %v3251, 1
  %v3254 = vsel %vm953, %v3249, %v3253
  %v3255 = vshrl.u32 %v3195, 16
  %v3257 = vor.u32 %v3255, %v3253
  %v3259 = vshll.u32 %v3196, 16
  %v3261 = vrot.slane %v3259, 1
  %v3262 = vsel %vm953, %v3257, %v3261
  %v3263 = vshrl.u32 %v3196, 16
  %v3265 = vor.u32 %v3263, %v3261
  %v3267 = vshll.u32 %v3197, 16
  %v3269 = vrot.slane %v3267, 1
  %v3270 = vsel %vm953, %v3265, %v3269
  %v3271 = vshrl.u32 %v3197, 16
  %v3273 = vor.u32 %v3271, %v3269
  %v3275 = vshll.u32 %v3198, 16
  %v3277 = vrot.slane %v3275, 1
  %v3278 = vsel %vm953, %v3273, %v3277
  %v3279 = vshrl.u32 %v3198, 16
  %v3281 = vor.u32 %v3279, %v3277
  %v3283 = vshll.u32 %v3199, 16
  %v3285 = vrot.slane %v3283, 1
  %v3286 = vsel %vm953, %v3281, %v3285
  %v3287 = vshrl.u32 %v3199, 16
  %v3289 = vor.u32 %v3287, %v3285
  %v3291 = vshll.u32 %v3200, 16
  %v3293 = vrot.slane %v3291, 1
  %v3294 = vsel %vm953, %v3289, %v3293
  %v3295 = vshrl.u32 %v3200, 16
  %v3297 = vor.u32 %v3295, %v3293
  %v3299 = vshll.u32 %v3201, 16
  %v3301 = vrot.slane %v3299, 1
  %v3302 = vsel %vm953, %v3297, %v3301
  %v3303 = vshrl.u32 %v3201, 16
  %v3305 = vor.u32 %v3303, %v3301
  %v3307 = vshll.u32 %v3202, 16
  %v3309 = vrot.slane %v3307, 1
  %v3310 = vsel %vm953, %v3305, %v3309
  %v3311 = vshrl.u32 %v3202, 16
  %v3313 = vor.u32 %v3311, %v3309
  %v3315 = vshll.u32 %v3203, 16
  %v3317 = vrot.slane %v3315, 1
  %v3318 = vsel %vm953, %v3313, %v3317
  %v3319 = vshrl.u32 %v3203, 16
  %v3321 = vor.u32 %v3319, %v3317
  %v3323 = vshll.u32 %v3204, 16
  %v3325 = vrot.slane %v3323, 1
  %v3326 = vsel %vm953, %v3321, %v3325
  %v3327 = vshrl.u32 %v3204, 16
  %v3329 = vor.u32 %v3327, %v3325
  %v3331 = vshll.u32 %v3205, 16
  %v3333 = vrot.slane %v3331, 1
  %v3334 = vsel %vm953, %v3329, %v3333
  %v3335 = vshrl.u32 %v3205, 16
  %v3337 = vor.u32 %v3335, %v3333
  %v3339 = vshll.u32 %v3206, 16
  %v3341 = vrot.slane %v3339, 1
  %v3342 = vsel %vm953, %v3337, %v3341
  %v3343 = vshrl.u32 %v3206, 16
  %v3345 = vor.u32 %v3343, %v3341
  %v3347 = vshll.u32 %v3207, 16
  %v3349 = vrot.slane %v3347, 1
  %v3350 = vsel %vm953, %v3345, %v3349
  %v3351 = vshrl.u32 %v3207, 16
  %v3353 = vor.u32 %v3351, %v3349
  %v3355 = vshll.u32 %v3210, 16
  %v3357 = vrot.slane %v3355, 1
  %v3358 = vsel %vm953, %v3353, %v3357
  %3359 = vrot.lane.b32.xlu0 %v3222, 8
  %v3360 = vpop.permute.xlu0 %3359
  %3361 = vrot.lane.b32.xlu0 %v3230, 8
  %v3362 = vpop.permute.xlu0 %3361
  %3363 = vrot.lane.b32.xlu0 %v3238, 8
  %v3364 = vpop.permute.xlu0 %3363
  %3365 = vrot.lane.b32.xlu0 %v3246, 8
  %v3366 = vpop.permute.xlu0 %3365
  %3367 = vrot.lane.b32.xlu0 %v3254, 8
  %v3368 = vpop.permute.xlu0 %3367
  %3369 = vrot.lane.b32.xlu0 %v3262, 8
  %v3370 = vpop.permute.xlu0 %3369
  %3371 = vrot.lane.b32.xlu0 %v3270, 8
  %v3372 = vpop.permute.xlu0 %3371
  %3373 = vrot.lane.b32.xlu0 %v3278, 8
  %v3374 = vpop.permute.xlu0 %3373
  %3375 = vrot.lane.b32.xlu0 %v3286, 8
  %v3376 = vpop.permute.xlu0 %3375
  %3377 = vrot.lane.b32.xlu0 %v3294, 8
  %v3378 = vpop.permute.xlu0 %3377
  %3379 = vrot.lane.b32.xlu0 %v3302, 8
  %v3380 = vpop.permute.xlu0 %3379
  %3381 = vrot.lane.b32.xlu0 %v3310, 8
  %v3382 = vpop.permute.xlu0 %3381
  %3383 = vrot.lane.b32.xlu0 %v3318, 8
  %v3384 = vpop.permute.xlu0 %3383
  %3385 = vrot.lane.b32.xlu0 %v3326, 8
  %v3386 = vpop.permute.xlu0 %3385
  %3387 = vrot.lane.b32.xlu0 %v3334, 8
  %v3388 = vpop.permute.xlu0 %3387
  %3389 = vrot.lane.b32.xlu0 %v3342, 8
  %v3390 = vpop.permute.xlu0 %3389
  %3391 = vrot.lane.b32.xlu0 %v3350, 8
  %v3392 = vpop.permute.xlu0 %3391
  %3393 = vrot.lane.b32.xlu0 %v3358, 8
  %v3394 = vpop.permute.xlu0 %3393
  %v3396 = vunpack.c.l.b16 %v3068
  %v3397 = vpack.c.b16 %v3155, %v3396
  %v3398 = vrot.slane %v3397, 1
  %v3399 = vrot.slane %v3191, 1
  %v3400 = vsel %vm1141, %v3398, %v3399
  %v3401 = vrot.slane %v3192, 1
  %v3402 = vsel %vm1141, %v3399, %v3401
  %v3403 = vrot.slane %v3193, 1
  %v3404 = vsel %vm1141, %v3401, %v3403
  %v3405 = vrot.slane %v3194, 1
  %v3406 = vsel %vm1141, %v3403, %v3405
  %v3407 = vrot.slane %v3195, 1
  %v3408 = vsel %vm1141, %v3405, %v3407
  %v3409 = vrot.slane %v3196, 1
  %v3410 = vsel %vm1141, %v3407, %v3409
  %v3411 = vrot.slane %v3197, 1
  %v3412 = vsel %vm1141, %v3409, %v3411
  %v3413 = vrot.slane %v3198, 1
  %v3414 = vsel %vm1141, %v3411, %v3413
  %v3415 = vrot.slane %v3199, 1
  %v3416 = vsel %vm1141, %v3413, %v3415
  %v3417 = vrot.slane %v3200, 1
  %v3418 = vsel %vm1141, %v3415, %v3417
  %v3419 = vrot.slane %v3201, 1
  %v3420 = vsel %vm1141, %v3417, %v3419
  %v3421 = vrot.slane %v3202, 1
  %v3422 = vsel %vm1141, %v3419, %v3421
  %v3423 = vrot.slane %v3203, 1
  %v3424 = vsel %vm1141, %v3421, %v3423
  %v3425 = vrot.slane %v3204, 1
  %v3426 = vsel %vm1141, %v3423, %v3425
  %v3427 = vrot.slane %v3205, 1
  %v3428 = vsel %vm1141, %v3425, %v3427
  %v3429 = vrot.slane %v3206, 1
  %v3430 = vsel %vm1141, %v3427, %v3429
  %v3431 = vrot.slane %v3207, 1
  %v3432 = vsel %vm1141, %v3429, %v3431
  %v3433 = vrot.slane %v3210, 1
  %v3434 = vsel %vm1141, %v3431, %v3433
  %3435 = vrot.lane.b32.xlu0 %v3400, 16
  %v3436 = vpop.permute.xlu0 %3435
  %3437 = vrot.lane.b32.xlu0 %v3402, 16
  %v3438 = vpop.permute.xlu0 %3437
  %3439 = vrot.lane.b32.xlu0 %v3404, 16
  %v3440 = vpop.permute.xlu0 %3439
  %3441 = vrot.lane.b32.xlu0 %v3406, 16
  %v3442 = vpop.permute.xlu0 %3441
  %3443 = vrot.lane.b32.xlu0 %v3408, 16
  %v3444 = vpop.permute.xlu0 %3443
  %3445 = vrot.lane.b32.xlu0 %v3410, 16
  %v3446 = vpop.permute.xlu0 %3445
  %3447 = vrot.lane.b32.xlu0 %v3412, 16
  %v3448 = vpop.permute.xlu0 %3447
  %3449 = vrot.lane.b32.xlu0 %v3414, 16
  %v3450 = vpop.permute.xlu0 %3449
  %3451 = vrot.lane.b32.xlu0 %v3416, 16
  %v3452 = vpop.permute.xlu0 %3451
  %3453 = vrot.lane.b32.xlu0 %v3418, 16
  %v3454 = vpop.permute.xlu0 %3453
  %3455 = vrot.lane.b32.xlu0 %v3420, 16
  %v3456 = vpop.permute.xlu0 %3455
  %3457 = vrot.lane.b32.xlu0 %v3422, 16
  %v3458 = vpop.permute.xlu0 %3457
  %3459 = vrot.lane.b32.xlu0 %v3424, 16
  %v3460 = vpop.permute.xlu0 %3459
  %3461 = vrot.lane.b32.xlu0 %v3426, 16
  %v3462 = vpop.permute.xlu0 %3461
  %3463 = vrot.lane.b32.xlu0 %v3428, 16
  %v3464 = vpop.permute.xlu0 %3463
  %3465 = vrot.lane.b32.xlu0 %v3430, 16
  %v3466 = vpop.permute.xlu0 %3465
  %3467 = vrot.lane.b32.xlu0 %v3432, 16
  %v3468 = vpop.permute.xlu0 %3467
  %3469 = vrot.lane.b32.xlu0 %v3434, 16
  %v3470 = vpop.permute.xlu0 %3469
  %v3475 = vunpack.c.l.b16 %v3069
  %v3476 = vunpack.c.l.b16 %v3070
  %v3477 = vunpack.c.l.b16 %v3071
  %v3478 = vunpack.c.l.b16 %v3072
  %v3479 = vpack.c.b16 %v3157, %v3475
  %v3480 = vpack.c.b16 %v3477, %v3476
  %v3481 = vpack.c.b16 %v3478, %v3478
  %v3482 = vrot.slane %v3479, 1
  %v3483 = vsel %vm1141, %v3482, %v3401
  %v3484 = vrot.slane %v3480, 1
  %v3485 = vsel %vm1141, %v3431, %v3484
  %v3486 = vrot.slane %v3481, 1
  %v3487 = vsel %vm1141, %v3484, %v3486
  %3488 = vrot.lane.b32.xlu0 %v3483, 24
  %v3489 = vpop.permute.xlu0 %3488
  %3490 = vrot.lane.b32.xlu0 %v3404, 24
  %v3491 = vpop.permute.xlu0 %3490
  %3492 = vrot.lane.b32.xlu0 %v3406, 24
  %v3493 = vpop.permute.xlu0 %3492
  %3494 = vrot.lane.b32.xlu0 %v3408, 24
  %v3495 = vpop.permute.xlu0 %3494
  %3496 = vrot.lane.b32.xlu0 %v3410, 24
  %v3497 = vpop.permute.xlu0 %3496
  %3498 = vrot.lane.b32.xlu0 %v3412, 24
  %v3499 = vpop.permute.xlu0 %3498
  %3500 = vrot.lane.b32.xlu0 %v3414, 24
  %v3501 = vpop.permute.xlu0 %3500
  %3502 = vrot.lane.b32.xlu0 %v3416, 24
  %v3503 = vpop.permute.xlu0 %3502
  %3504 = vrot.lane.b32.xlu0 %v3418, 24
  %v3505 = vpop.permute.xlu0 %3504
  %3506 = vrot.lane.b32.xlu0 %v3420, 24
  %v3507 = vpop.permute.xlu0 %3506
  %3508 = vrot.lane.b32.xlu0 %v3422, 24
  %v3509 = vpop.permute.xlu0 %3508
  %3510 = vrot.lane.b32.xlu0 %v3424, 24
  %v3511 = vpop.permute.xlu0 %3510
  %3512 = vrot.lane.b32.xlu0 %v3426, 24
  %v3513 = vpop.permute.xlu0 %3512
  %3514 = vrot.lane.b32.xlu0 %v3428, 24
  %v3515 = vpop.permute.xlu0 %3514
  %3516 = vrot.lane.b32.xlu0 %v3430, 24
  %v3517 = vpop.permute.xlu0 %3516
  %3518 = vrot.lane.b32.xlu0 %v3432, 24
  %v3519 = vpop.permute.xlu0 %3518
  %3520 = vrot.lane.b32.xlu0 %v3485, 24
  %v3521 = vpop.permute.xlu0 %3520
  %3522 = vrot.lane.b32.xlu0 %v3487, 24
  %v3523 = vpop.permute.xlu0 %3522
  %v3525 = vunpack.c.l.b16 %v3073
  %v3526 = vpack.c.b16 %v3525, %v3525
  %v3528 = vshrl.u32 %v3479, 16
  %v3530 = vrot.slane %v3528, 1
  %v3531 = vshll.u32 %v3479, 16
  %v3533 = vrot.slane %v3531, 2
  %v3534 = vor.u32 %v3530, %v3533
  %v3535 = vrot.slane %v3231, 1
  %v3536 = vrot.slane %v3227, 2
  %v3537 = vor.u32 %v3535, %v3536
  %v3538 = vsel %vm1271, %v3534, %v3537
  %v3539 = vrot.slane %v3239, 1
  %v3540 = vrot.slane %v3235, 2
  %v3541 = vor.u32 %v3539, %v3540
  %v3542 = vsel %vm1271, %v3537, %v3541
  %v3543 = vrot.slane %v3247, 1
  %v3544 = vrot.slane %v3243, 2
  %v3545 = vor.u32 %v3543, %v3544
  %v3546 = vsel %vm1271, %v3541, %v3545
  %v3547 = vrot.slane %v3255, 1
  %v3548 = vrot.slane %v3251, 2
  %v3549 = vor.u32 %v3547, %v3548
  %v3550 = vsel %vm1271, %v3545, %v3549
  %v3551 = vrot.slane %v3263, 1
  %v3552 = vrot.slane %v3259, 2
  %v3553 = vor.u32 %v3551, %v3552
  %v3554 = vsel %vm1271, %v3549, %v3553
  %v3555 = vrot.slane %v3271, 1
  %v3556 = vrot.slane %v3267, 2
  %v3557 = vor.u32 %v3555, %v3556
  %v3558 = vsel %vm1271, %v3553, %v3557
  %v3559 = vrot.slane %v3279, 1
  %v3560 = vrot.slane %v3275, 2
  %v3561 = vor.u32 %v3559, %v3560
  %v3562 = vsel %vm1271, %v3557, %v3561
  %v3563 = vrot.slane %v3287, 1
  %v3564 = vrot.slane %v3283, 2
  %v3565 = vor.u32 %v3563, %v3564
  %v3566 = vsel %vm1271, %v3561, %v3565
  %v3567 = vrot.slane %v3295, 1
  %v3568 = vrot.slane %v3291, 2
  %v3569 = vor.u32 %v3567, %v3568
  %v3570 = vsel %vm1271, %v3565, %v3569
  %v3571 = vrot.slane %v3303, 1
  %v3572 = vrot.slane %v3299, 2
  %v3573 = vor.u32 %v3571, %v3572
  %v3574 = vsel %vm1271, %v3569, %v3573
  %v3575 = vrot.slane %v3311, 1
  %v3576 = vrot.slane %v3307, 2
  %v3577 = vor.u32 %v3575, %v3576
  %v3578 = vsel %vm1271, %v3573, %v3577
  %v3579 = vrot.slane %v3319, 1
  %v3580 = vrot.slane %v3315, 2
  %v3581 = vor.u32 %v3579, %v3580
  %v3582 = vsel %vm1271, %v3577, %v3581
  %v3583 = vrot.slane %v3327, 1
  %v3584 = vrot.slane %v3323, 2
  %v3585 = vor.u32 %v3583, %v3584
  %v3586 = vsel %vm1271, %v3581, %v3585
  %v3587 = vrot.slane %v3335, 1
  %v3588 = vrot.slane %v3331, 2
  %v3589 = vor.u32 %v3587, %v3588
  %v3590 = vsel %vm1271, %v3585, %v3589
  %v3591 = vrot.slane %v3343, 1
  %v3592 = vrot.slane %v3339, 2
  %v3593 = vor.u32 %v3591, %v3592
  %v3594 = vsel %vm1271, %v3589, %v3593
  %v3595 = vrot.slane %v3351, 1
  %v3596 = vrot.slane %v3347, 2
  %v3597 = vor.u32 %v3595, %v3596
  %v3598 = vsel %vm1271, %v3593, %v3597
  %v3600 = vshrl.u32 %v3480, 16
  %v3602 = vrot.slane %v3600, 1
  %v3603 = vshll.u32 %v3480, 16
  %v3605 = vrot.slane %v3603, 2
  %v3606 = vor.u32 %v3602, %v3605
  %v3607 = vsel %vm1271, %v3597, %v3606
  %v3609 = vshrl.u32 %v3526, 16
  %v3611 = vrot.slane %v3609, 1
  %v3612 = vshll.u32 %v3526, 16
  %v3614 = vrot.slane %v3612, 2
  %v3615 = vor.u32 %v3611, %v3614
  %v3616 = vsel %vm1271, %v3606, %v3615
  %3617 = vrot.lane.b32.xlu0 %v3538, 32
  %v3618 = vpop.permute.xlu0 %3617
  %3619 = vrot.lane.b32.xlu0 %v3542, 32
  %v3620 = vpop.permute.xlu0 %3619
  %3621 = vrot.lane.b32.xlu0 %v3546, 32
  %v3622 = vpop.permute.xlu0 %3621
  %3623 = vrot.lane.b32.xlu0 %v3550, 32
  %v3624 = vpop.permute.xlu0 %3623
  %3625 = vrot.lane.b32.xlu0 %v3554, 32
  %v3626 = vpop.permute.xlu0 %3625
  %3627 = vrot.lane.b32.xlu0 %v3558, 32
  %v3628 = vpop.permute.xlu0 %3627
  %3629 = vrot.lane.b32.xlu0 %v3562, 32
  %v3630 = vpop.permute.xlu0 %3629
  %3631 = vrot.lane.b32.xlu0 %v3566, 32
  %v3632 = vpop.permute.xlu0 %3631
  %3633 = vrot.lane.b32.xlu0 %v3570, 32
  %v3634 = vpop.permute.xlu0 %3633
  %3635 = vrot.lane.b32.xlu0 %v3574, 32
  %v3636 = vpop.permute.xlu0 %3635
  %3637 = vrot.lane.b32.xlu0 %v3578, 32
  %v3638 = vpop.permute.xlu0 %3637
  %3639 = vrot.lane.b32.xlu0 %v3582, 32
  %v3640 = vpop.permute.xlu0 %3639
  %3641 = vrot.lane.b32.xlu0 %v3586, 32
  %v3642 = vpop.permute.xlu0 %3641
  %3643 = vrot.lane.b32.xlu0 %v3590, 32
  %v3644 = vpop.permute.xlu0 %3643
  %3645 = vrot.lane.b32.xlu0 %v3594, 32
  %v3646 = vpop.permute.xlu0 %3645
  %3647 = vrot.lane.b32.xlu0 %v3598, 32
  %v3648 = vpop.permute.xlu0 %3647
  %3649 = vrot.lane.b32.xlu0 %v3607, 32
  %v3650 = vpop.permute.xlu0 %3649
  %3651 = vrot.lane.b32.xlu0 %v3616, 32
  %v3652 = vpop.permute.xlu0 %3651
  %v3654 = vunpack.c.l.b16 %v3074
  %v3655 = vpack.c.b16 %v3157, %v3654
  %v3656 = vrot.slane %v3655, 2
  %v3657 = vrot.slane %v3192, 2
  %v3658 = vsel %vm1401, %v3656, %v3657
  %v3659 = vrot.slane %v3193, 2
  %v3660 = vsel %vm1401, %v3657, %v3659
  %v3661 = vrot.slane %v3194, 2
  %v3662 = vsel %vm1401, %v3659, %v3661
  %v3663 = vrot.slane %v3195, 2
  %v3664 = vsel %vm1401, %v3661, %v3663
  %v3665 = vrot.slane %v3196, 2
  %v3666 = vsel %vm1401, %v3663, %v3665
  %v3667 = vrot.slane %v3197, 2
  %v3668 = vsel %vm1401, %v3665, %v3667
  %v3669 = vrot.slane %v3198, 2
  %v3670 = vsel %vm1401, %v3667, %v3669
  %v3671 = vrot.slane %v3199, 2
  %v3672 = vsel %vm1401, %v3669, %v3671
  %v3673 = vrot.slane %v3200, 2
  %v3674 = vsel %vm1401, %v3671, %v3673
  %v3675 = vrot.slane %v3201, 2
  %v3676 = vsel %vm1401, %v3673, %v3675
  %v3677 = vrot.slane %v3202, 2
  %v3678 = vsel %vm1401, %v3675, %v3677
  %v3679 = vrot.slane %v3203, 2
  %v3680 = vsel %vm1401, %v3677, %v3679
  %v3681 = vrot.slane %v3204, 2
  %v3682 = vsel %vm1401, %v3679, %v3681
  %v3683 = vrot.slane %v3205, 2
  %v3684 = vsel %vm1401, %v3681, %v3683
  %v3685 = vrot.slane %v3206, 2
  %v3686 = vsel %vm1401, %v3683, %v3685
  %v3687 = vrot.slane %v3207, 2
  %v3688 = vsel %vm1401, %v3685, %v3687
  %v3689 = vrot.slane %v3480, 2
  %v3690 = vsel %vm1401, %v3687, %v3689
  %v3691 = vrot.slane %v3526, 2
  %v3692 = vsel %vm1401, %v3689, %v3691
  %3693 = vrot.lane.b32.xlu0 %v3658, 40
  %v3694 = vpop.permute.xlu0 %3693
  %3695 = vrot.lane.b32.xlu0 %v3660, 40
  %v3696 = vpop.permute.xlu0 %3695
  %3697 = vrot.lane.b32.xlu0 %v3662, 40
  %v3698 = vpop.permute.xlu0 %3697
  %3699 = vrot.lane.b32.xlu0 %v3664, 40
  %v3700 = vpop.permute.xlu0 %3699
  %3701 = vrot.lane.b32.xlu0 %v3666, 40
  %v3702 = vpop.permute.xlu0 %3701
  %3703 = vrot.lane.b32.xlu0 %v3668, 40
  %v3704 = vpop.permute.xlu0 %3703
  %3705 = vrot.lane.b32.xlu0 %v3670, 40
  %v3706 = vpop.permute.xlu0 %3705
  %3707 = vrot.lane.b32.xlu0 %v3672, 40
  %v3708 = vpop.permute.xlu0 %3707
  %3709 = vrot.lane.b32.xlu0 %v3674, 40
  %v3710 = vpop.permute.xlu0 %3709
  %3711 = vrot.lane.b32.xlu0 %v3676, 40
  %v3712 = vpop.permute.xlu0 %3711
  %3713 = vrot.lane.b32.xlu0 %v3678, 40
  %v3714 = vpop.permute.xlu0 %3713
  %3715 = vrot.lane.b32.xlu0 %v3680, 40
  %v3716 = vpop.permute.xlu0 %3715
  %3717 = vrot.lane.b32.xlu0 %v3682, 40
  %v3718 = vpop.permute.xlu0 %3717
  %3719 = vrot.lane.b32.xlu0 %v3684, 40
  %v3720 = vpop.permute.xlu0 %3719
  %3721 = vrot.lane.b32.xlu0 %v3686, 40
  %v3722 = vpop.permute.xlu0 %3721
  %3723 = vrot.lane.b32.xlu0 %v3688, 40
  %v3724 = vpop.permute.xlu0 %3723
  %3725 = vrot.lane.b32.xlu0 %v3690, 40
  %v3726 = vpop.permute.xlu0 %3725
  %3727 = vrot.lane.b32.xlu0 %v3692, 40
  %v3728 = vpop.permute.xlu0 %3727
  %v3733 = vunpack.c.l.b16 %v3075
  %v3734 = vunpack.c.l.b16 %v3076
  %v3735 = vunpack.c.l.b16 %v3077
  %v3736 = vunpack.c.l.b16 %v3078
  %v3737 = vpack.c.b16 %v3159, %v3733
  %v3738 = vpack.c.b16 %v3735, %v3734
  %v3739 = vpack.c.b16 %v3736, %v3736
  %v3740 = vrot.slane %v3737, 2
  %v3741 = vsel %vm1401, %v3740, %v3659
  %v3742 = vrot.slane %v3738, 2
  %v3743 = vsel %vm1401, %v3689, %v3742
  %v3744 = vrot.slane %v3739, 2
  %v3745 = vsel %vm1401, %v3742, %v3744
  %3746 = vrot.lane.b32.xlu0 %v3741, 48
  %v3747 = vpop.permute.xlu0 %3746
  %3748 = vrot.lane.b32.xlu0 %v3662, 48
  %v3749 = vpop.permute.xlu0 %3748
  %3750 = vrot.lane.b32.xlu0 %v3664, 48
  %v3751 = vpop.permute.xlu0 %3750
  %3752 = vrot.lane.b32.xlu0 %v3666, 48
  %v3753 = vpop.permute.xlu0 %3752
  %3754 = vrot.lane.b32.xlu0 %v3668, 48
  %v3755 = vpop.permute.xlu0 %3754
  %3756 = vrot.lane.b32.xlu0 %v3670, 48
  %v3757 = vpop.permute.xlu0 %3756
  %3758 = vrot.lane.b32.xlu0 %v3672, 48
  %v3759 = vpop.permute.xlu0 %3758
  %3760 = vrot.lane.b32.xlu0 %v3674, 48
  %v3761 = vpop.permute.xlu0 %3760
  %3762 = vrot.lane.b32.xlu0 %v3676, 48
  %v3763 = vpop.permute.xlu0 %3762
  %3764 = vrot.lane.b32.xlu0 %v3678, 48
  %v3765 = vpop.permute.xlu0 %3764
  %3766 = vrot.lane.b32.xlu0 %v3680, 48
  %v3767 = vpop.permute.xlu0 %3766
  %3768 = vrot.lane.b32.xlu0 %v3682, 48
  %v3769 = vpop.permute.xlu0 %3768
  %3770 = vrot.lane.b32.xlu0 %v3684, 48
  %v3771 = vpop.permute.xlu0 %3770
  %3772 = vrot.lane.b32.xlu0 %v3686, 48
  %v3773 = vpop.permute.xlu0 %3772
  %3774 = vrot.lane.b32.xlu0 %v3688, 48
  %v3775 = vpop.permute.xlu0 %3774
  %3776 = vrot.lane.b32.xlu0 %v3690, 48
  %v3777 = vpop.permute.xlu0 %3776
  %3778 = vrot.lane.b32.xlu0 %v3743, 48
  %v3779 = vpop.permute.xlu0 %3778
  %3780 = vrot.lane.b32.xlu0 %v3745, 48
  %v3781 = vpop.permute.xlu0 %3780
  %v3783 = vunpack.c.l.b16 %v3079
  %v3784 = vpack.c.b16 %v3783, %v3783
  %v3786 = vshrl.u32 %v3737, 16
  %v3788 = vrot.slane %v3786, 2
  %v3789 = vshll.u32 %v3737, 16
  %v3791 = vrot.slane %v3789, 3
  %v3792 = vor.u32 %v3788, %v3791
  %v3793 = vrot.slane %v3239, 2
  %v3794 = vrot.slane %v3235, 3
  %v3795 = vor.u32 %v3793, %v3794
  %v3796 = vsel %vm1531, %v3792, %v3795
  %v3797 = vrot.slane %v3247, 2
  %v3798 = vrot.slane %v3243, 3
  %v3799 = vor.u32 %v3797, %v3798
  %v3800 = vsel %vm1531, %v3795, %v3799
  %v3801 = vrot.slane %v3255, 2
  %v3802 = vrot.slane %v3251, 3
  %v3803 = vor.u32 %v3801, %v3802
  %v3804 = vsel %vm1531, %v3799, %v3803
  %v3805 = vrot.slane %v3263, 2
  %v3806 = vrot.slane %v3259, 3
  %v3807 = vor.u32 %v3805, %v3806
  %v3808 = vsel %vm1531, %v3803, %v3807
  %v3809 = vrot.slane %v3271, 2
  %v3810 = vrot.slane %v3267, 3
  %v3811 = vor.u32 %v3809, %v3810
  %v3812 = vsel %vm1531, %v3807, %v3811
  %v3813 = vrot.slane %v3279, 2
  %v3814 = vrot.slane %v3275, 3
  %v3815 = vor.u32 %v3813, %v3814
  %v3816 = vsel %vm1531, %v3811, %v3815
  %v3817 = vrot.slane %v3287, 2
  %v3818 = vrot.slane %v3283, 3
  %v3819 = vor.u32 %v3817, %v3818
  %v3820 = vsel %vm1531, %v3815, %v3819
  %v3821 = vrot.slane %v3295, 2
  %v3822 = vrot.slane %v3291, 3
  %v3823 = vor.u32 %v3821, %v3822
  %v3824 = vsel %vm1531, %v3819, %v3823
  %v3825 = vrot.slane %v3303, 2
  %v3826 = vrot.slane %v3299, 3
  %v3827 = vor.u32 %v3825, %v3826
  %v3828 = vsel %vm1531, %v3823, %v3827
  %v3829 = vrot.slane %v3311, 2
  %v3830 = vrot.slane %v3307, 3
  %v3831 = vor.u32 %v3829, %v3830
  %v3832 = vsel %vm1531, %v3827, %v3831
  %v3833 = vrot.slane %v3319, 2
  %v3834 = vrot.slane %v3315, 3
  %v3835 = vor.u32 %v3833, %v3834
  %v3836 = vsel %vm1531, %v3831, %v3835
  %v3837 = vrot.slane %v3327, 2
  %v3838 = vrot.slane %v3323, 3
  %v3839 = vor.u32 %v3837, %v3838
  %v3840 = vsel %vm1531, %v3835, %v3839
  %v3841 = vrot.slane %v3335, 2
  %v3842 = vrot.slane %v3331, 3
  %v3843 = vor.u32 %v3841, %v3842
  %v3844 = vsel %vm1531, %v3839, %v3843
  %v3845 = vrot.slane %v3343, 2
  %v3846 = vrot.slane %v3339, 3
  %v3847 = vor.u32 %v3845, %v3846
  %v3848 = vsel %vm1531, %v3843, %v3847
  %v3849 = vrot.slane %v3351, 2
  %v3850 = vrot.slane %v3347, 3
  %v3851 = vor.u32 %v3849, %v3850
  %v3852 = vsel %vm1531, %v3847, %v3851
  %v3853 = vrot.slane %v3600, 2
  %v3854 = vrot.slane %v3603, 3
  %v3855 = vor.u32 %v3853, %v3854
  %v3856 = vsel %vm1531, %v3851, %v3855
  %v3858 = vshrl.u32 %v3738, 16
  %v3860 = vrot.slane %v3858, 2
  %v3861 = vshll.u32 %v3738, 16
  %v3863 = vrot.slane %v3861, 3
  %v3864 = vor.u32 %v3860, %v3863
  %v3865 = vsel %vm1531, %v3855, %v3864
  %v3867 = vshrl.u32 %v3784, 16
  %v3869 = vrot.slane %v3867, 2
  %v3870 = vshll.u32 %v3784, 16
  %v3872 = vrot.slane %v3870, 3
  %v3873 = vor.u32 %v3869, %v3872
  %v3874 = vsel %vm1531, %v3864, %v3873
  %3875 = vrot.lane.b32.xlu0 %v3796, 56
  %v3876 = vpop.permute.xlu0 %3875
  %3877 = vrot.lane.b32.xlu0 %v3800, 56
  %v3878 = vpop.permute.xlu0 %3877
  %3879 = vrot.lane.b32.xlu0 %v3804, 56
  %v3880 = vpop.permute.xlu0 %3879
  %3881 = vrot.lane.b32.xlu0 %v3808, 56
  %v3882 = vpop.permute.xlu0 %3881
  %3883 = vrot.lane.b32.xlu0 %v3812, 56
  %v3884 = vpop.permute.xlu0 %3883
  %3885 = vrot.lane.b32.xlu0 %v3816, 56
  %v3886 = vpop.permute.xlu0 %3885
  %3887 = vrot.lane.b32.xlu0 %v3820, 56
  %v3888 = vpop.permute.xlu0 %3887
  %3889 = vrot.lane.b32.xlu0 %v3824, 56
  %v3890 = vpop.permute.xlu0 %3889
  %3891 = vrot.lane.b32.xlu0 %v3828, 56
  %v3892 = vpop.permute.xlu0 %3891
  %3893 = vrot.lane.b32.xlu0 %v3832, 56
  %v3894 = vpop.permute.xlu0 %3893
  %3895 = vrot.lane.b32.xlu0 %v3836, 56
  %v3896 = vpop.permute.xlu0 %3895
  %3897 = vrot.lane.b32.xlu0 %v3840, 56
  %v3898 = vpop.permute.xlu0 %3897
  %3899 = vrot.lane.b32.xlu0 %v3844, 56
  %v3900 = vpop.permute.xlu0 %3899
  %3901 = vrot.lane.b32.xlu0 %v3848, 56
  %v3902 = vpop.permute.xlu0 %3901
  %3903 = vrot.lane.b32.xlu0 %v3852, 56
  %v3904 = vpop.permute.xlu0 %3903
  %3905 = vrot.lane.b32.xlu0 %v3856, 56
  %v3906 = vpop.permute.xlu0 %3905
  %3907 = vrot.lane.b32.xlu0 %v3865, 56
  %v3908 = vpop.permute.xlu0 %3907
  %3909 = vrot.lane.b32.xlu0 %v3874, 56
  %v3910 = vpop.permute.xlu0 %3909
  %v3912 = vunpack.c.l.b16 %v3080
  %v3913 = vpack.c.b16 %v3159, %v3912
  %v3914 = vrot.slane %v3913, 3
  %v3915 = vrot.slane %v3193, 3
  %v3916 = vsel %vm1661, %v3914, %v3915
  %v3917 = vrot.slane %v3194, 3
  %v3918 = vsel %vm1661, %v3915, %v3917
  %v3919 = vrot.slane %v3195, 3
  %v3920 = vsel %vm1661, %v3917, %v3919
  %v3921 = vrot.slane %v3196, 3
  %v3922 = vsel %vm1661, %v3919, %v3921
  %v3923 = vrot.slane %v3197, 3
  %v3924 = vsel %vm1661, %v3921, %v3923
  %v3925 = vrot.slane %v3198, 3
  %v3926 = vsel %vm1661, %v3923, %v3925
  %v3927 = vrot.slane %v3199, 3
  %v3928 = vsel %vm1661, %v3925, %v3927
  %v3929 = vrot.slane %v3200, 3
  %v3930 = vsel %vm1661, %v3927, %v3929
  %v3931 = vrot.slane %v3201, 3
  %v3932 = vsel %vm1661, %v3929, %v3931
  %v3933 = vrot.slane %v3202, 3
  %v3934 = vsel %vm1661, %v3931, %v3933
  %v3935 = vrot.slane %v3203, 3
  %v3936 = vsel %vm1661, %v3933, %v3935
  %v3937 = vrot.slane %v3204, 3
  %v3938 = vsel %vm1661, %v3935, %v3937
  %v3939 = vrot.slane %v3205, 3
  %v3940 = vsel %vm1661, %v3937, %v3939
  %v3941 = vrot.slane %v3206, 3
  %v3942 = vsel %vm1661, %v3939, %v3941
  %v3943 = vrot.slane %v3207, 3
  %v3944 = vsel %vm1661, %v3941, %v3943
  %v3945 = vrot.slane %v3480, 3
  %v3946 = vsel %vm1661, %v3943, %v3945
  %v3947 = vrot.slane %v3738, 3
  %v3948 = vsel %vm1661, %v3945, %v3947
  %v3949 = vrot.slane %v3784, 3
  %v3950 = vsel %vm1661, %v3947, %v3949
  %3951 = vrot.lane.b32.xlu0 %v3916, 64
  %v3952 = vpop.permute.xlu0 %3951
  %3953 = vrot.lane.b32.xlu0 %v3918, 64
  %v3954 = vpop.permute.xlu0 %3953
  %3955 = vrot.lane.b32.xlu0 %v3920, 64
  %v3956 = vpop.permute.xlu0 %3955
  %3957 = vrot.lane.b32.xlu0 %v3922, 64
  %v3958 = vpop.permute.xlu0 %3957
  %3959 = vrot.lane.b32.xlu0 %v3924, 64
  %v3960 = vpop.permute.xlu0 %3959
  %3961 = vrot.lane.b32.xlu0 %v3926, 64
  %v3962 = vpop.permute.xlu0 %3961
  %3963 = vrot.lane.b32.xlu0 %v3928, 64
  %v3964 = vpop.permute.xlu0 %3963
  %3965 = vrot.lane.b32.xlu0 %v3930, 64
  %v3966 = vpop.permute.xlu0 %3965
  %3967 = vrot.lane.b32.xlu0 %v3932, 64
  %v3968 = vpop.permute.xlu0 %3967
  %3969 = vrot.lane.b32.xlu0 %v3934, 64
  %v3970 = vpop.permute.xlu0 %3969
  %3971 = vrot.lane.b32.xlu0 %v3936, 64
  %v3972 = vpop.permute.xlu0 %3971
  %3973 = vrot.lane.b32.xlu0 %v3938, 64
  %v3974 = vpop.permute.xlu0 %3973
  %3975 = vrot.lane.b32.xlu0 %v3940, 64
  %v3976 = vpop.permute.xlu0 %3975
  %3977 = vrot.lane.b32.xlu0 %v3942, 64
  %v3978 = vpop.permute.xlu0 %3977
  %3979 = vrot.lane.b32.xlu0 %v3944, 64
  %v3980 = vpop.permute.xlu0 %3979
  %3981 = vrot.lane.b32.xlu0 %v3946, 64
  %v3982 = vpop.permute.xlu0 %3981
  %3983 = vrot.lane.b32.xlu0 %v3948, 64
  %v3984 = vpop.permute.xlu0 %3983
  %3985 = vrot.lane.b32.xlu0 %v3950, 64
  %v3986 = vpop.permute.xlu0 %3985
  %v4024 = vunpack.c.l.b16 %v3081
  %v4025 = vunpack.c.l.b16 %v3082
  %v4026 = vunpack.c.l.b16 %v3083
  %v4027 = vunpack.c.l.b16 %v3084
  %v4028 = vunpack.c.l.b16 %v3085
  %v4029 = vunpack.c.l.b16 %v3086
  %v4030 = vunpack.c.l.b16 %v3087
  %v4031 = vunpack.c.l.b16 %v3088
  %v4032 = vunpack.c.l.b16 %v3089
  %v4033 = vunpack.c.l.b16 %v3090
  %v4034 = vunpack.c.l.b16 %v3091
  %v4035 = vunpack.c.l.b16 %v3092
  %v4036 = vunpack.c.l.b16 %v3093
  %v4037 = vunpack.c.l.b16 %v3094
  %v4038 = vunpack.c.l.b16 %v3095
  %v4039 = vunpack.c.l.b16 %v3096
  %v4040 = vunpack.c.l.b16 %v3097
  %v4041 = vunpack.c.l.b16 %v3098
  %v4042 = vunpack.c.l.b16 %v3099
  %v4043 = vunpack.c.l.b16 %v3100
  %v4044 = vunpack.c.l.b16 %v3101
  %v4045 = vunpack.c.l.b16 %v3102
  %v4046 = vunpack.c.l.b16 %v3103
  %v4047 = vunpack.c.l.b16 %v3104
  %v4048 = vunpack.c.l.b16 %v3105
  %v4049 = vunpack.c.l.b16 %v3106
  %v4050 = vunpack.c.l.b16 %v3107
  %v4051 = vunpack.c.l.b16 %v3108
  %v4052 = vunpack.c.l.b16 %v3109
  %v4053 = vunpack.c.l.b16 %v3110
  %v4054 = vunpack.c.l.b16 %v3111
  %v4055 = vunpack.c.l.b16 %v3112
  %v4056 = vunpack.c.l.b16 %v3113
  %v4057 = vunpack.c.l.b16 %v3114
  %v4058 = vunpack.c.l.b16 %v3115
  %v4059 = vunpack.c.l.b16 %v3116
  %v4060 = vunpack.c.l.b16 %v3117
  %v4061 = vpack.c.b16 %v4025, %v4024
  %v4062 = vpack.c.b16 %v4027, %v4026
  %v4063 = vpack.c.b16 %v4029, %v4028
  %v4064 = vpack.c.b16 %v4031, %v4030
  %v4065 = vpack.c.b16 %v4033, %v4032
  %v4066 = vpack.c.b16 %v4035, %v4034
  %v4067 = vpack.c.b16 %v4037, %v4036
  %v4068 = vpack.c.b16 %v4039, %v4038
  %v4069 = vpack.c.b16 %v4041, %v4040
  %v4070 = vpack.c.b16 %v4043, %v4042
  %v4071 = vpack.c.b16 %v4045, %v4044
  %v4072 = vpack.c.b16 %v4047, %v4046
  %v4073 = vpack.c.b16 %v4049, %v4048
  %v4074 = vpack.c.b16 %v4051, %v4050
  %v4075 = vpack.c.b16 %v4053, %v4052
  %v4076 = vpack.c.b16 %v4055, %v4054
  %v4077 = vpack.c.b16 %v4057, %v4056
  %v4078 = vpack.c.b16 %v4059, %v4058
  %v4079 = vpack.c.b16 %v4060, %v4060
  %v4081 = vshrl.u32 %v4061, 16
  %v4083 = vrot.slane %v4081, 1
  %v4084 = vshll.u32 %v4061, 16
  %v4086 = vrot.slane %v4084, 2
  %v4087 = vor.u32 %v4083, %v4086
  %v4089 = vshrl.u32 %v4062, 16
  %v4091 = vrot.slane %v4089, 1
  %v4092 = vshll.u32 %v4062, 16
  %v4094 = vrot.slane %v4092, 2
  %v4095 = vor.u32 %v4091, %v4094
  %v4096 = vsel %vm1271, %v4087, %v4095
  %v4098 = vshrl.u32 %v4063, 16
  %v4100 = vrot.slane %v4098, 1
  %v4101 = vshll.u32 %v4063, 16
  %v4103 = vrot.slane %v4101, 2
  %v4104 = vor.u32 %v4100, %v4103
  %v4105 = vsel %vm1271, %v4095, %v4104
  %v4107 = vshrl.u32 %v4064, 16
  %v4109 = vrot.slane %v4107, 1
  %v4110 = vshll.u32 %v4064, 16
  %v4112 = vrot.slane %v4110, 2
  %v4113 = vor.u32 %v4109, %v4112
  %v4114 = vsel %vm1271, %v4104, %v4113
  %v4116 = vshrl.u32 %v4065, 16
  %v4118 = vrot.slane %v4116, 1
  %v4119 = vshll.u32 %v4065, 16
  %v4121 = vrot.slane %v4119, 2
  %v4122 = vor.u32 %v4118, %v4121
  %v4123 = vsel %vm1271, %v4113, %v4122
  %v4125 = vshrl.u32 %v4066, 16
  %v4127 = vrot.slane %v4125, 1
  %v4128 = vshll.u32 %v4066, 16
  %v4130 = vrot.slane %v4128, 2
  %v4131 = vor.u32 %v4127, %v4130
  %v4132 = vsel %vm1271, %v4122, %v4131
  %v4134 = vshrl.u32 %v4067, 16
  %v4136 = vrot.slane %v4134, 1
  %v4137 = vshll.u32 %v4067, 16
  %v4139 = vrot.slane %v4137, 2
  %v4140 = vor.u32 %v4136, %v4139
  %v4141 = vsel %vm1271, %v4131, %v4140
  %v4143 = vshrl.u32 %v4068, 16
  %v4145 = vrot.slane %v4143, 1
  %v4146 = vshll.u32 %v4068, 16
  %v4148 = vrot.slane %v4146, 2
  %v4149 = vor.u32 %v4145, %v4148
  %v4150 = vsel %vm1271, %v4140, %v4149
  %v4152 = vshrl.u32 %v4069, 16
  %v4154 = vrot.slane %v4152, 1
  %v4155 = vshll.u32 %v4069, 16
  %v4157 = vrot.slane %v4155, 2
  %v4158 = vor.u32 %v4154, %v4157
  %v4159 = vsel %vm1271, %v4149, %v4158
  %v4161 = vshrl.u32 %v4070, 16
  %v4163 = vrot.slane %v4161, 1
  %v4164 = vshll.u32 %v4070, 16
  %v4166 = vrot.slane %v4164, 2
  %v4167 = vor.u32 %v4163, %v4166
  %v4168 = vsel %vm1271, %v4158, %v4167
  %v4170 = vshrl.u32 %v4071, 16
  %v4172 = vrot.slane %v4170, 1
  %v4173 = vshll.u32 %v4071, 16
  %v4175 = vrot.slane %v4173, 2
  %v4176 = vor.u32 %v4172, %v4175
  %v4177 = vsel %vm1271, %v4167, %v4176
  %v4179 = vshrl.u32 %v4072, 16
  %v4181 = vrot.slane %v4179, 1
  %v4182 = vshll.u32 %v4072, 16
  %v4184 = vrot.slane %v4182, 2
  %v4185 = vor.u32 %v4181, %v4184
  %v4186 = vsel %vm1271, %v4176, %v4185
  %v4188 = vshrl.u32 %v4073, 16
  %v4190 = vrot.slane %v4188, 1
  %v4191 = vshll.u32 %v4073, 16
  %v4193 = vrot.slane %v4191, 2
  %v4194 = vor.u32 %v4190, %v4193
  %v4195 = vsel %vm1271, %v4185, %v4194
  %v4197 = vshrl.u32 %v4074, 16
  %v4199 = vrot.slane %v4197, 1
  %v4200 = vshll.u32 %v4074, 16
  %v4202 = vrot.slane %v4200, 2
  %v4203 = vor.u32 %v4199, %v4202
  %v4204 = vsel %vm1271, %v4194, %v4203
  %v4206 = vshrl.u32 %v4075, 16
  %v4208 = vrot.slane %v4206, 1
  %v4209 = vshll.u32 %v4075, 16
  %v4211 = vrot.slane %v4209, 2
  %v4212 = vor.u32 %v4208, %v4211
  %v4213 = vsel %vm1271, %v4203, %v4212
  %v4215 = vshrl.u32 %v4076, 16
  %v4217 = vrot.slane %v4215, 1
  %v4218 = vshll.u32 %v4076, 16
  %v4220 = vrot.slane %v4218, 2
  %v4221 = vor.u32 %v4217, %v4220
  %v4222 = vsel %vm1271, %v4212, %v4221
  %v4224 = vshrl.u32 %v4077, 16
  %v4226 = vrot.slane %v4224, 1
  %v4227 = vshll.u32 %v4077, 16
  %v4229 = vrot.slane %v4227, 2
  %v4230 = vor.u32 %v4226, %v4229
  %v4231 = vsel %vm1271, %v4221, %v4230
  %v4233 = vshrl.u32 %v4078, 16
  %v4235 = vrot.slane %v4233, 1
  %v4236 = vshll.u32 %v4078, 16
  %v4238 = vrot.slane %v4236, 2
  %v4239 = vor.u32 %v4235, %v4238
  %v4240 = vsel %vm1271, %v4230, %v4239
  %v4242 = vshrl.u32 %v4079, 16
  %v4244 = vrot.slane %v4242, 1
  %v4245 = vshll.u32 %v4079, 16
  %v4247 = vrot.slane %v4245, 2
  %v4248 = vor.u32 %v4244, %v4247
  %v4249 = vsel %vm1271, %v4239, %v4248
  %4250 = vrot.lane.b32.xlu0 %v4096, 72
  %v4251 = vpop.permute.xlu0 %4250
  %4252 = vrot.lane.b32.xlu0 %v4105, 72
  %v4253 = vpop.permute.xlu0 %4252
  %4254 = vrot.lane.b32.xlu0 %v4114, 72
  %v4255 = vpop.permute.xlu0 %4254
  %4256 = vrot.lane.b32.xlu0 %v4123, 72
  %v4257 = vpop.permute.xlu0 %4256
  %4258 = vrot.lane.b32.xlu0 %v4132, 72
  %v4259 = vpop.permute.xlu0 %4258
  %4260 = vrot.lane.b32.xlu0 %v4141, 72
  %v4261 = vpop.permute.xlu0 %4260
  %4262 = vrot.lane.b32.xlu0 %v4150, 72
  %v4263 = vpop.permute.xlu0 %4262
  %4264 = vrot.lane.b32.xlu0 %v4159, 72
  %v4265 = vpop.permute.xlu0 %4264
  %4266 = vrot.lane.b32.xlu0 %v4168, 72
  %v4267 = vpop.permute.xlu0 %4266
  %4268 = vrot.lane.b32.xlu0 %v4177, 72
  %v4269 = vpop.permute.xlu0 %4268
  %4270 = vrot.lane.b32.xlu0 %v4186, 72
  %v4271 = vpop.permute.xlu0 %4270
  %4272 = vrot.lane.b32.xlu0 %v4195, 72
  %v4273 = vpop.permute.xlu0 %4272
  %4274 = vrot.lane.b32.xlu0 %v4204, 72
  %v4275 = vpop.permute.xlu0 %4274
  %4276 = vrot.lane.b32.xlu0 %v4213, 72
  %v4277 = vpop.permute.xlu0 %4276
  %4278 = vrot.lane.b32.xlu0 %v4222, 72
  %v4279 = vpop.permute.xlu0 %4278
  %4280 = vrot.lane.b32.xlu0 %v4231, 72
  %v4281 = vpop.permute.xlu0 %4280
  %4282 = vrot.lane.b32.xlu0 %v4240, 72
  %v4283 = vpop.permute.xlu0 %4282
  %4284 = vrot.lane.b32.xlu0 %v4249, 72
  %v4285 = vpop.permute.xlu0 %4284
  %v4287 = vsel %vm1772, %v3190, %v3360
  %v4289 = vsel %vm1772, %v3191, %v3362
  %v4291 = vsel %vm1772, %v3192, %v3364
  %v4293 = vsel %vm1772, %v3193, %v3366
  %v4295 = vsel %vm1772, %v3194, %v3368
  %v4297 = vsel %vm1772, %v3195, %v3370
  %v4299 = vsel %vm1772, %v3196, %v3372
  %v4301 = vsel %vm1772, %v3197, %v3374
  %v4303 = vsel %vm1772, %v3198, %v3376
  %v4305 = vsel %vm1772, %v3199, %v3378
  %v4307 = vsel %vm1772, %v3200, %v3380
  %v4309 = vsel %vm1772, %v3201, %v3382
  %v4311 = vsel %vm1772, %v3202, %v3384
  %v4313 = vsel %vm1772, %v3203, %v3386
  %v4315 = vsel %vm1772, %v3204, %v3388
  %v4317 = vsel %vm1772, %v3205, %v3390
  %v4319 = vsel %vm1772, %v3206, %v3392
  %v4321 = vsel %vm1772, %v3207, %v3394
  %v4323 = vsel %vm1846, %v4287, %v3436
  %v4325 = vsel %vm1846, %v4289, %v3438
  %v4327 = vsel %vm1846, %v4291, %v3440
  %v4329 = vsel %vm1846, %v4293, %v3442
  %v4331 = vsel %vm1846, %v4295, %v3444
  %v4333 = vsel %vm1846, %v4297, %v3446
  %v4335 = vsel %vm1846, %v4299, %v3448
  %v4337 = vsel %vm1846, %v4301, %v3450
  %v4339 = vsel %vm1846, %v4303, %v3452
  %v4341 = vsel %vm1846, %v4305, %v3454
  %v4343 = vsel %vm1846, %v4307, %v3456
  %v4345 = vsel %vm1846, %v4309, %v3458
  %v4347 = vsel %vm1846, %v4311, %v3460
  %v4349 = vsel %vm1846, %v4313, %v3462
  %v4351 = vsel %vm1846, %v4315, %v3464
  %v4353 = vsel %vm1846, %v4317, %v3466
  %v4355 = vsel %vm1846, %v4319, %v3468
  %v4357 = vsel %vm1846, %v4321, %v3470
  %v4359 = vsel %vm1920, %v4323, %v3489
  %v4361 = vsel %vm1920, %v4325, %v3491
  %v4363 = vsel %vm1920, %v4327, %v3493
  %v4365 = vsel %vm1920, %v4329, %v3495
  %v4367 = vsel %vm1920, %v4331, %v3497
  %v4369 = vsel %vm1920, %v4333, %v3499
  %v4371 = vsel %vm1920, %v4335, %v3501
  %v4373 = vsel %vm1920, %v4337, %v3503
  %v4375 = vsel %vm1920, %v4339, %v3505
  %v4377 = vsel %vm1920, %v4341, %v3507
  %v4379 = vsel %vm1920, %v4343, %v3509
  %v4381 = vsel %vm1920, %v4345, %v3511
  %v4383 = vsel %vm1920, %v4347, %v3513
  %v4385 = vsel %vm1920, %v4349, %v3515
  %v4387 = vsel %vm1920, %v4351, %v3517
  %v4389 = vsel %vm1920, %v4353, %v3519
  %v4391 = vsel %vm1920, %v4355, %v3521
  %v4393 = vsel %vm1920, %v4357, %v3523
  %v4395 = vsel %vm1994, %v4359, %v3618
  %v4397 = vsel %vm1994, %v4361, %v3620
  %v4399 = vsel %vm1994, %v4363, %v3622
  %v4401 = vsel %vm1994, %v4365, %v3624
  %v4403 = vsel %vm1994, %v4367, %v3626
  %v4405 = vsel %vm1994, %v4369, %v3628
  %v4407 = vsel %vm1994, %v4371, %v3630
  %v4409 = vsel %vm1994, %v4373, %v3632
  %v4411 = vsel %vm1994, %v4375, %v3634
  %v4413 = vsel %vm1994, %v4377, %v3636
  %v4415 = vsel %vm1994, %v4379, %v3638
  %v4417 = vsel %vm1994, %v4381, %v3640
  %v4419 = vsel %vm1994, %v4383, %v3642
  %v4421 = vsel %vm1994, %v4385, %v3644
  %v4423 = vsel %vm1994, %v4387, %v3646
  %v4425 = vsel %vm1994, %v4389, %v3648
  %v4427 = vsel %vm1994, %v4391, %v3650
  %v4429 = vsel %vm1994, %v4393, %v3652
  %vm4430 = vcmask 326656
  %v4432 = vsel %vm4430, %v4395, %v3694
  %v4434 = vsel %vm4430, %v4397, %v3696
  %v4436 = vsel %vm4430, %v4399, %v3698
  %v4438 = vsel %vm4430, %v4401, %v3700
  %v4440 = vsel %vm4430, %v4403, %v3702
  %v4442 = vsel %vm4430, %v4405, %v3704
  %v4444 = vsel %vm4430, %v4407, %v3706
  %v4446 = vsel %vm4430, %v4409, %v3708
  %v4448 = vsel %vm4430, %v4411, %v3710
  %v4450 = vsel %vm4430, %v4413, %v3712
  %v4452 = vsel %vm4430, %v4415, %v3714
  %v4454 = vsel %vm4430, %v4417, %v3716
  %v4456 = vsel %vm4430, %v4419, %v3718
  %v4458 = vsel %vm4430, %v4421, %v3720
  %v4460 = vsel %vm4430, %v4423, %v3722
  %v4462 = vsel %vm4430, %v4425, %v3724
  %v4464 = vsel %vm4430, %v4427, %v3726
  %v4466 = vsel %vm4430, %v4429, %v3728
  %vm4467 = vcmask 392192
  %v4469 = vsel %vm4467, %v4432, %v3747
  %v4471 = vsel %vm4467, %v4434, %v3749
  %v4473 = vsel %vm4467, %v4436, %v3751
  %v4475 = vsel %vm4467, %v4438, %v3753
  %v4477 = vsel %vm4467, %v4440, %v3755
  %v4479 = vsel %vm4467, %v4442, %v3757
  %v4481 = vsel %vm4467, %v4444, %v3759
  %v4483 = vsel %vm4467, %v4446, %v3761
  %v4485 = vsel %vm4467, %v4448, %v3763
  %v4487 = vsel %vm4467, %v4450, %v3765
  %v4489 = vsel %vm4467, %v4452, %v3767
  %v4491 = vsel %vm4467, %v4454, %v3769
  %v4493 = vsel %vm4467, %v4456, %v3771
  %v4495 = vsel %vm4467, %v4458, %v3773
  %v4497 = vsel %vm4467, %v4460, %v3775
  %v4499 = vsel %vm4467, %v4462, %v3777
  %v4501 = vsel %vm4467, %v4464, %v3779
  %v4503 = vsel %vm4467, %v4466, %v3781
  %vm4504 = vcmask 457728
  %v4506 = vsel %vm4504, %v4469, %v3876
  %v4508 = vsel %vm4504, %v4471, %v3878
  %v4510 = vsel %vm4504, %v4473, %v3880
  %v4512 = vsel %vm4504, %v4475, %v3882
  %v4514 = vsel %vm4504, %v4477, %v3884
  %v4516 = vsel %vm4504, %v4479, %v3886
  %v4518 = vsel %vm4504, %v4481, %v3888
  %v4520 = vsel %vm4504, %v4483, %v3890
  %v4522 = vsel %vm4504, %v4485, %v3892
  %v4524 = vsel %vm4504, %v4487, %v3894
  %v4526 = vsel %vm4504, %v4489, %v3896
  %v4528 = vsel %vm4504, %v4491, %v3898
  %v4530 = vsel %vm4504, %v4493, %v3900
  %v4532 = vsel %vm4504, %v4495, %v3902
  %v4534 = vsel %vm4504, %v4497, %v3904
  %v4536 = vsel %vm4504, %v4499, %v3906
  %v4538 = vsel %vm4504, %v4501, %v3908
  %v4540 = vsel %vm4504, %v4503, %v3910
  %vm4541 = vcmask 523264
  %v4543 = vsel %vm4541, %v4506, %v3952
  %v4545 = vsel %vm4541, %v4508, %v3954
  %v4547 = vsel %vm4541, %v4510, %v3956
  %v4549 = vsel %vm4541, %v4512, %v3958
  %v4551 = vsel %vm4541, %v4514, %v3960
  %v4553 = vsel %vm4541, %v4516, %v3962
  %v4555 = vsel %vm4541, %v4518, %v3964
  %v4557 = vsel %vm4541, %v4520, %v3966
  %v4559 = vsel %vm4541, %v4522, %v3968
  %v4561 = vsel %vm4541, %v4524, %v3970
  %v4563 = vsel %vm4541, %v4526, %v3972
  %v4565 = vsel %vm4541, %v4528, %v3974
  %v4567 = vsel %vm4541, %v4530, %v3976
  %v4569 = vsel %vm4541, %v4532, %v3978
  %v4571 = vsel %vm4541, %v4534, %v3980
  %v4573 = vsel %vm4541, %v4536, %v3982
  %v4575 = vsel %vm4541, %v4538, %v3984
  %v4577 = vsel %vm4541, %v4540, %v3986
  %vm4578 = vcmask 588800
  %v4580 = vsel %vm4578, %v4543, %v4251
  %v4582 = vsel %vm4578, %v4545, %v4253
  %v4584 = vsel %vm4578, %v4547, %v4255
  %v4586 = vsel %vm4578, %v4549, %v4257
  %v4588 = vsel %vm4578, %v4551, %v4259
  %v4590 = vsel %vm4578, %v4553, %v4261
  %v4592 = vsel %vm4578, %v4555, %v4263
  %v4594 = vsel %vm4578, %v4557, %v4265
  %v4596 = vsel %vm4578, %v4559, %v4267
  %v4598 = vsel %vm4578, %v4561, %v4269
  %v4600 = vsel %vm4578, %v4563, %v4271
  %v4602 = vsel %vm4578, %v4565, %v4273
  %v4604 = vsel %vm4578, %v4567, %v4275
  %v4606 = vsel %vm4578, %v4569, %v4277
  %v4608 = vsel %vm4578, %v4571, %v4279
  %v4610 = vsel %vm4578, %v4573, %v4281
  %v4612 = vsel %vm4578, %v4575, %v4283
  %v4614 = vsel %vm4578, %v4577, %v4285
  %v4625 = vunpack.c.l.b16 %v36
  %v4626 = vunpack.c.l.b16 %v37
  %v4627 = vunpack.c.l.b16 %v38
  %v4628 = vunpack.c.l.b16 %v39
  %v4629 = vunpack.c.l.b16 %v40
  %v4630 = vunpack.c.l.b16 %v41
  %v4631 = vunpack.c.l.b16 %v42
  %v4632 = vunpack.c.l.b16 %v43
  %v4633 = vunpack.c.l.b16 %v44
  %v4634 = vunpack.c.l.b16 %v45
  %v4635 = vpack.c.b16 %v4626, %v4625
  %v4636 = vpack.c.b16 %v4628, %v4627
  %v4637 = vpack.c.b16 %v4630, %v4629
  %v4638 = vpack.c.b16 %v4632, %v4631
  %v4639 = vpack.c.b16 %v4634, %v4633
  %vm4644 = vcmask 621568
  %v4645 = vsel %vm4644, %v4580, 0
  %v4647 = vsel %vm4644, %v4582, 0
  %v4649 = vsel %vm4644, %v4584, 0
  %v4651 = vsel %vm4644, %v4586, 0
  %v4653 = vsel %vm4644, %v4588, 0
  %v4655 = vsel %vm4644, %v4590, 0
  %v4657 = vsel %vm4644, %v4592, 0
  %v4659 = vsel %vm4644, %v4594, 0
  %v4661 = vsel %vm4644, %v4596, 0
  %v4663 = vsel %vm4644, %v4598, 0
  %v4665 = vsel %vm4644, %v4600, 0
  %v4667 = vsel %vm4644, %v4602, 0
  %v4669 = vsel %vm4644, %v4604, 0
  %v4671 = vsel %vm4644, %v4606, 0
  %v4673 = vsel %vm4644, %v4608, 0
  %v4675 = vsel %vm4644, %v4610, 0
  %v4677 = vsel %vm4644, %v4612, 0
  %v4679 = vsel %vm4644, %v4614, 0
  %vm4681 = vcmask 1045504
  %v4683 = vsel %vm4681, %v4639, 0
  %4685 = vmatpush.bf16.msra.mxu0 0
  %4686 = vmatpush.bf16.msra.mxu0 0
  %4687 = vmatpush.bf16.msra.mxu0 0
  %4688 = vmatpush.bf16.msra.mxu0 %v4683
  %4689 = vmatpush.bf16.msra.mxu0 %v4638
  %4690 = vmatpush.bf16.msra.mxu0 %v4637
  %4691 = vmatpush.bf16.msra.mxu0 %v4636
  %4692 = vmatpush.bf16.msra.mxu0 %v4635
  %4693 = vmatmul.bf16.gmra.mxu0 %v4645
  %v4694 = vpop.f32.mrf.mxu0
  %v4695 = vadd.f32 0.0, %v4694
  %v4696 = vpop.f32.mrf.mxu0
  %v4697 = vadd.f32 0.0, %v4696
  %4698 = vmatmul.bf16.gmra.mxu0 %v4647
  %v4699 = vpop.f32.mrf.mxu0
  %v4700 = vadd.f32 0.0, %v4699
  %v4701 = vpop.f32.mrf.mxu0
  %v4702 = vadd.f32 0.0, %v4701
  %4703 = vmatmul.bf16.gmra.mxu0 %v4649
  %v4704 = vpop.f32.mrf.mxu0
  %v4705 = vadd.f32 0.0, %v4704
  %v4706 = vpop.f32.mrf.mxu0
  %v4707 = vadd.f32 0.0, %v4706
  %4708 = vmatmul.bf16.gmra.mxu0 %v4651
  %v4709 = vpop.f32.mrf.mxu0
  %v4710 = vadd.f32 0.0, %v4709
  %v4711 = vpop.f32.mrf.mxu0
  %v4712 = vadd.f32 0.0, %v4711
  %4713 = vmatmul.bf16.gmra.mxu0 %v4653
  %v4714 = vpop.f32.mrf.mxu0
  %v4715 = vadd.f32 0.0, %v4714
  %v4716 = vpop.f32.mrf.mxu0
  %v4717 = vadd.f32 0.0, %v4716
  %4718 = vmatmul.bf16.gmra.mxu0 %v4655
  %v4719 = vpop.f32.mrf.mxu0
  %v4720 = vadd.f32 0.0, %v4719
  %v4721 = vpop.f32.mrf.mxu0
  %v4722 = vadd.f32 0.0, %v4721
  %4723 = vmatmul.bf16.gmra.mxu0 %v4657
  %v4724 = vpop.f32.mrf.mxu0
  %v4725 = vadd.f32 0.0, %v4724
  %v4726 = vpop.f32.mrf.mxu0
  %v4727 = vadd.f32 0.0, %v4726
  %4728 = vmatmul.bf16.gmra.mxu0 %v4659
  %v4729 = vpop.f32.mrf.mxu0
  %v4730 = vadd.f32 0.0, %v4729
  %v4731 = vpop.f32.mrf.mxu0
  %v4732 = vadd.f32 0.0, %v4731
  %4733 = vmatmul.bf16.gmra.mxu0 %v4661
  %v4734 = vpop.f32.mrf.mxu0
  %v4735 = vadd.f32 0.0, %v4734
  %v4736 = vpop.f32.mrf.mxu0
  %v4737 = vadd.f32 0.0, %v4736
  %4738 = vmatmul.bf16.gmra.mxu0 %v4663
  %v4739 = vpop.f32.mrf.mxu0
  %v4740 = vadd.f32 0.0, %v4739
  %v4741 = vpop.f32.mrf.mxu0
  %v4742 = vadd.f32 0.0, %v4741
  %4743 = vmatmul.bf16.gmra.mxu0 %v4665
  %v4744 = vpop.f32.mrf.mxu0
  %v4745 = vadd.f32 0.0, %v4744
  %v4746 = vpop.f32.mrf.mxu0
  %v4747 = vadd.f32 0.0, %v4746
  %4748 = vmatmul.bf16.gmra.mxu0 %v4667
  %v4749 = vpop.f32.mrf.mxu0
  %v4750 = vadd.f32 0.0, %v4749
  %v4751 = vpop.f32.mrf.mxu0
  %v4752 = vadd.f32 0.0, %v4751
  %4753 = vmatmul.bf16.gmra.mxu0 %v4669
  %v4754 = vpop.f32.mrf.mxu0
  %v4755 = vadd.f32 0.0, %v4754
  %v4756 = vpop.f32.mrf.mxu0
  %v4757 = vadd.f32 0.0, %v4756
  %4758 = vmatmul.bf16.gmra.mxu0 %v4671
  %v4759 = vpop.f32.mrf.mxu0
  %v4760 = vadd.f32 0.0, %v4759
  %v4761 = vpop.f32.mrf.mxu0
  %v4762 = vadd.f32 0.0, %v4761
  %4763 = vmatmul.bf16.gmra.mxu0 %v4673
  %v4764 = vpop.f32.mrf.mxu0
  %v4765 = vadd.f32 0.0, %v4764
  %v4766 = vpop.f32.mrf.mxu0
  %v4767 = vadd.f32 0.0, %v4766
  %4768 = vmatmul.bf16.gmra.mxu0 %v4675
  %v4769 = vpop.f32.mrf.mxu0
  %v4770 = vadd.f32 0.0, %v4769
  %v4771 = vpop.f32.mrf.mxu0
  %v4772 = vadd.f32 0.0, %v4771
  %4773 = vmatmul.bf16.gmra.mxu0 %v4677
  %v4774 = vpop.f32.mrf.mxu0
  %v4775 = vadd.f32 0.0, %v4774
  %v4776 = vpop.f32.mrf.mxu0
  %v4777 = vadd.f32 0.0, %v4776
  %4778 = vmatmul.bf16.gmra.mxu0 %v4679
  %v4779 = vpop.f32.mrf.mxu0
  %v4780 = vadd.f32 0.0, %v4779
  %v4781 = vpop.f32.mrf.mxu0
  %v4782 = vadd.f32 0.0, %v4781
  %4783 = vdwg.mxu0
  %4784 = vst.msk [vmem:[%s7] sm:$0xff] %vm1772, %v4695
  %4785 = vst.msk [vmem:[%s7 + $0x8] sm:$0xff] %vm1772, %v4697
  %s4786 = scalar_lea.vmem %s7, 16
  %vm4787 = vcmask 64514
  %4788 = vst.msk [vmem:[%s4786 - $0x2] sm:$0xfc] %vm4787, %v4700
  %4789 = vst.msk [vmem:[%s4786 + $0x6] sm:$0xff] %vm1772, %v4702
  %4790 = vst.msk [vmem:[%s4786 + $0xe] sm:$0x3] %vm2372, %v4705
  %s4791 = scalar_lea.vmem %s7, 32
  %vm4792 = vcmask 64516
  %4793 = vst.msk [vmem:[%s4791 - $0x4] sm:$0xf0] %vm4792, %v4705
  %4794 = vst.msk [vmem:[%s4791 + $0x4] sm:$0xff] %vm1772, %v4707
  %4795 = vst.msk [vmem:[%s4791 + $0xc] sm:$0xf] %vm56, %v4710
  %s4796 = scalar_lea.vmem %s7, 48
  %vm4797 = vcmask 64518
  %4798 = vst.msk [vmem:[%s4796 - $0x6] sm:$0xc0] %vm4797, %v4710
  %4799 = vst.msk [vmem:[%s4796 + $0x2] sm:$0xff] %vm1772, %v4712
  %vm4800 = vcmask 62464
  %4801 = vst.msk [vmem:[%s4796 + $0xa] sm:$0x3f] %vm4800, %v4715
  %s4802 = scalar_lea.vmem %s7, 64
  %4803 = vst.msk [vmem:[%s4802] sm:$0xff] %vm1772, %v4717
  %4804 = vst.msk [vmem:[%s4802 + $0x8] sm:$0xff] %vm1772, %v4720
  %s4805 = scalar_lea.vmem %s7, 80
  %4806 = vst.msk [vmem:[%s4805 - $0x2] sm:$0xfc] %vm4787, %v4722
  %4807 = vst.msk [vmem:[%s4805 + $0x6] sm:$0xff] %vm1772, %v4725
  %4808 = vst.msk [vmem:[%s4805 + $0xe] sm:$0x3] %vm2372, %v4727
  %s4809 = scalar_lea.vmem %s7, 96
  %4810 = vst.msk [vmem:[%s4809 - $0x4] sm:$0xf0] %vm4792, %v4727
  %4811 = vst.msk [vmem:[%s4809 + $0x4] sm:$0xff] %vm1772, %v4730
  %4812 = vst.msk [vmem:[%s4809 + $0xc] sm:$0xf] %vm56, %v4732
  %s4813 = scalar_lea.vmem %s7, 112
  %4814 = vst.msk [vmem:[%s4813 - $0x6] sm:$0xc0] %vm4797, %v4732
  %4815 = vst.msk [vmem:[%s4813 + $0x2] sm:$0xff] %vm1772, %v4735
  %4816 = vst.msk [vmem:[%s4813 + $0xa] sm:$0x3f] %vm4800, %v4737
  %s4817 = scalar_lea.vmem %s7, 128
  %4818 = vst.msk [vmem:[%s4817] sm:$0xff] %vm1772, %v4740
  %4819 = vst.msk [vmem:[%s4817 + $0x8] sm:$0xff] %vm1772, %v4742
  %s4820 = scalar_lea.vmem %s7, 144
  %4821 = vst.msk [vmem:[%s4820 - $0x2] sm:$0xfc] %vm4787, %v4745
  %4822 = vst.msk [vmem:[%s4820 + $0x6] sm:$0xff] %vm1772, %v4747
  %4823 = vst.msk [vmem:[%s4820 + $0xe] sm:$0x3] %vm2372, %v4750
  %s4824 = scalar_lea.vmem %s7, 160
  %4825 = vst.msk [vmem:[%s4824 - $0x4] sm:$0xf0] %vm4792, %v4750
  %4826 = vst.msk [vmem:[%s4824 + $0x4] sm:$0xff] %vm1772, %v4752
  %4827 = vst.msk [vmem:[%s4824 + $0xc] sm:$0xf] %vm56, %v4755
  %s4828 = scalar_lea.vmem %s7, 176
  %4829 = vst.msk [vmem:[%s4828 - $0x6] sm:$0xc0] %vm4797, %v4755
  %4830 = vst.msk [vmem:[%s4828 + $0x2] sm:$0xff] %vm1772, %v4757
  %4831 = vst.msk [vmem:[%s4828 + $0xa] sm:$0x3f] %vm4800, %v4760
  %s4832 = scalar_lea.vmem %s7, 192
  %4833 = vst.msk [vmem:[%s4832] sm:$0xff] %vm1772, %v4762
  %4834 = vst.msk [vmem:[%s4832 + $0x8] sm:$0xff] %vm1772, %v4765
  %s4835 = scalar_lea.vmem %s7, 208
  %4836 = vst.msk [vmem:[%s4835 - $0x2] sm:$0xfc] %vm4787, %v4767
  %4837 = vst.msk [vmem:[%s4835 + $0x6] sm:$0xff] %vm1772, %v4770
  %4838 = vst.msk [vmem:[%s4835 + $0xe] sm:$0x3] %vm2372, %v4772
  %s4839 = scalar_lea.vmem %s7, 224
  %4840 = vst.msk [vmem:[%s4839 - $0x4] sm:$0xf0] %vm4792, %v4772
  %4841 = vst.msk [vmem:[%s4839 + $0x4] sm:$0xff] %vm1772, %v4775
  %4842 = vst.msk [vmem:[%s4839 + $0xc] sm:$0xf] %vm56, %v4777
  %s4843 = scalar_lea.vmem %s7, 240
  %4844 = vst.msk [vmem:[%s4843 - $0x6] sm:$0xc0] %vm4797, %v4777
  %4845 = vst.msk [vmem:[%s4843 + $0x2] sm:$0xff] %vm1772, %v4780
  %4846 = vst.msk [vmem:[%s4843 + $0xa] sm:$0x3f] %vm4800, %v4782
  %s4847 = scalar_lea.vmem %s0, 256
  %v4848 = vld [vmem:[%s4847] sm:$0xff]
  %v4849 = vld [vmem:[%s4847 + $0x8] sm:$0xff]
  %v4850 = vld [vmem:[%s4847 + $0x10] sm:$0xff]
  %v4851 = vld [vmem:[%s4847 + $0x18] sm:$0xff]
  %v4852 = vld [vmem:[%s4847 + $0x20] sm:$0xff]
  %v4853 = vld [vmem:[%s4847 + $0x28] sm:$0xff]
  %v4854 = vld [vmem:[%s4847 + $0x30] sm:$0xff]
  %v4855 = vld [vmem:[%s4847 + $0x38] sm:$0xff]
  %v4856 = vld [vmem:[%s4847 + $0x40] sm:$0xff]
  %v4857 = vld [vmem:[%s4847 + $0x48] sm:$0xff]
  %v4858 = vld [vmem:[%s4847 + $0x50] sm:$0xff]
  %v4859 = vld [vmem:[%s4847 + $0x58] sm:$0xff]
  %v4860 = vld [vmem:[%s4847 + $0x60] sm:$0xff]
  %v4861 = vld [vmem:[%s4847 + $0x68] sm:$0xff]
  %v4862 = vld [vmem:[%s4847 + $0x70] sm:$0xff]
  %v4863 = vld [vmem:[%s4847 + $0x78] sm:$0xff]
  %v4864 = vld [vmem:[%s4847 + $0x80] sm:$0xff]
  %v4865 = vld [vmem:[%s4847 + $0x88] sm:$0xff]
  %v4866 = vld [vmem:[%s4847 + $0x90] sm:$0xff]
  %v4867 = vld [vmem:[%s4847 + $0x98] sm:$0xff]
  %v4868 = vld [vmem:[%s4847 + $0xa0] sm:$0xff]
  %v4869 = vld [vmem:[%s4847 + $0xa8] sm:$0xff]
  %v4870 = vld [vmem:[%s4847 + $0xb0] sm:$0xff]
  %v4871 = vld [vmem:[%s4847 + $0xb8] sm:$0xff]
  %v4872 = vld [vmem:[%s4847 + $0xc0] sm:$0xff]
  %v4873 = vld [vmem:[%s4847 + $0xc8] sm:$0xff]
  %v4874 = vld [vmem:[%s4847 + $0xd0] sm:$0xff]
  %v4875 = vld [vmem:[%s4847 + $0xd8] sm:$0xff]
  %v4876 = vld [vmem:[%s4847 + $0xe0] sm:$0xff]
  %v4877 = vld [vmem:[%s4847 + $0xe8] sm:$0xff]
  %v4878 = vld [vmem:[%s4847 + $0xf0] sm:$0xff]
  %v4879 = vld [vmem:[%s4847 + $0xf8] sm:$0xff]
  %v4880 = vmul.f32 %v4848, %v99
  %v4881 = vmul.f32 %v4849, %v99
  %v4882 = vmul.f32 %v4850, %v99
  %v4883 = vmul.f32 %v4851, %v99
  %v4884 = vmul.f32 %v4852, %v99
  %v4885 = vmul.f32 %v4853, %v99
  %v4886 = vmul.f32 %v4854, %v99
  %v4887 = vmul.f32 %v4855, %v99
  %v4888 = vmul.f32 %v4856, %v99
  %v4889 = vmul.f32 %v4857, %v99
  %v4890 = vmul.f32 %v4858, %v99
  %v4891 = vmul.f32 %v4859, %v99
  %v4892 = vmul.f32 %v4860, %v99
  %v4893 = vmul.f32 %v4861, %v99
  %v4894 = vmul.f32 %v4862, %v99
  %v4895 = vmul.f32 %v4863, %v99
  %v4896 = vmul.f32 %v4864, %v99
  %v4897 = vmul.f32 %v4865, %v99
  %v4898 = vmul.f32 %v4866, %v99
  %v4899 = vmul.f32 %v4867, %v99
  %v4900 = vmul.f32 %v4868, %v99
  %v4901 = vmul.f32 %v4869, %v99
  %v4902 = vmul.f32 %v4870, %v99
  %v4903 = vmul.f32 %v4871, %v99
  %v4904 = vmul.f32 %v4872, %v99
  %v4905 = vmul.f32 %v4873, %v99
  %v4906 = vmul.f32 %v4874, %v99
  %v4907 = vmul.f32 %v4875, %v99
  %v4908 = vmul.f32 %v4876, %v99
  %v4909 = vmul.f32 %v4877, %v99
  %v4910 = vmul.f32 %v4878, %v99
  %v4911 = vmul.f32 %v4879, %v99
  %v4912 = vadd.f32 %v4880, %v134
  %v4913 = vadd.f32 %v4881, %v134
  %v4914 = vadd.f32 %v4882, %v134
  %v4915 = vadd.f32 %v4883, %v134
  %v4916 = vadd.f32 %v4884, %v134
  %v4917 = vadd.f32 %v4885, %v134
  %v4918 = vadd.f32 %v4886, %v134
  %v4919 = vadd.f32 %v4887, %v134
  %v4920 = vadd.f32 %v4888, %v134
  %v4921 = vadd.f32 %v4889, %v134
  %v4922 = vadd.f32 %v4890, %v134
  %v4923 = vadd.f32 %v4891, %v134
  %v4924 = vadd.f32 %v4892, %v134
  %v4925 = vadd.f32 %v4893, %v134
  %v4926 = vadd.f32 %v4894, %v134
  %v4927 = vadd.f32 %v4895, %v134
  %v4928 = vadd.f32 %v4896, %v134
  %v4929 = vadd.f32 %v4897, %v134
  %v4930 = vadd.f32 %v4898, %v134
  %v4931 = vadd.f32 %v4899, %v134
  %v4932 = vadd.f32 %v4900, %v134
  %v4933 = vadd.f32 %v4901, %v134
  %v4934 = vadd.f32 %v4902, %v134
  %v4935 = vadd.f32 %v4903, %v134
  %v4936 = vadd.f32 %v4904, %v134
  %v4937 = vadd.f32 %v4905, %v134
  %v4938 = vadd.f32 %v4906, %v134
  %v4939 = vadd.f32 %v4907, %v134
  %v4940 = vadd.f32 %v4908, %v134
  %v4941 = vadd.f32 %v4909, %v134
  %v4942 = vadd.f32 %v4910, %v134
  %v4943 = vadd.f32 %v4911, %v134
  %v4944 = vmax.f32 %v4912, 0.0
  %v4945 = vmax.f32 %v4913, 0.0
  %v4946 = vmax.f32 %v4914, 0.0
  %v4947 = vmax.f32 %v4915, 0.0
  %v4948 = vmax.f32 %v4916, 0.0
  %v4949 = vmax.f32 %v4917, 0.0
  %v4950 = vmax.f32 %v4918, 0.0
  %v4951 = vmax.f32 %v4919, 0.0
  %v4952 = vmax.f32 %v4920, 0.0
  %v4953 = vmax.f32 %v4921, 0.0
  %v4954 = vmax.f32 %v4922, 0.0
  %v4955 = vmax.f32 %v4923, 0.0
  %v4956 = vmax.f32 %v4924, 0.0
  %v4957 = vmax.f32 %v4925, 0.0
  %v4958 = vmax.f32 %v4926, 0.0
  %v4959 = vmax.f32 %v4927, 0.0
  %v4960 = vmax.f32 %v4928, 0.0
  %v4961 = vmax.f32 %v4929, 0.0
  %v4962 = vmax.f32 %v4930, 0.0
  %v4963 = vmax.f32 %v4931, 0.0
  %v4964 = vmax.f32 %v4932, 0.0
  %v4965 = vmax.f32 %v4933, 0.0
  %v4966 = vmax.f32 %v4934, 0.0
  %v4967 = vmax.f32 %v4935, 0.0
  %v4968 = vmax.f32 %v4936, 0.0
  %v4969 = vmax.f32 %v4937, 0.0
  %v4970 = vmax.f32 %v4938, 0.0
  %v4971 = vmax.f32 %v4939, 0.0
  %v4972 = vmax.f32 %v4940, 0.0
  %v4973 = vmax.f32 %v4941, 0.0
  %v4974 = vmax.f32 %v4942, 0.0
  %v4975 = vmax.f32 %v4943, 0.0
  %v4976 = vpack.c.bf16 %v4944, %v4944
  %v4977 = vpack.c.bf16 %v4945, %v4945
  %v4978 = vpack.c.bf16 %v4946, %v4946
  %v4979 = vpack.c.bf16 %v4947, %v4947
  %v4980 = vpack.c.bf16 %v4948, %v4948
  %v4981 = vpack.c.bf16 %v4949, %v4949
  %v4982 = vpack.c.bf16 %v4950, %v4950
  %v4983 = vpack.c.bf16 %v4951, %v4951
  %v4984 = vpack.c.bf16 %v4952, %v4952
  %v4985 = vpack.c.bf16 %v4953, %v4953
  %v4986 = vpack.c.bf16 %v4954, %v4954
  %v4987 = vpack.c.bf16 %v4955, %v4955
  %v4988 = vpack.c.bf16 %v4956, %v4956
  %v4989 = vpack.c.bf16 %v4957, %v4957
  %v4990 = vpack.c.bf16 %v4958, %v4958
  %v4991 = vpack.c.bf16 %v4959, %v4959
  %v4992 = vpack.c.bf16 %v4960, %v4960
  %v4993 = vpack.c.bf16 %v4961, %v4961
  %v4994 = vpack.c.bf16 %v4962, %v4962
  %v4995 = vpack.c.bf16 %v4963, %v4963
  %v4996 = vpack.c.bf16 %v4964, %v4964
  %v4997 = vpack.c.bf16 %v4965, %v4965
  %v4998 = vpack.c.bf16 %v4966, %v4966
  %v4999 = vpack.c.bf16 %v4967, %v4967
  %v5000 = vpack.c.bf16 %v4968, %v4968
  %v5001 = vpack.c.bf16 %v4969, %v4969
  %v5002 = vpack.c.bf16 %v4970, %v4970
  %v5003 = vpack.c.bf16 %v4971, %v4971
  %v5004 = vpack.c.bf16 %v4972, %v4972
  %v5005 = vpack.c.bf16 %v4973, %v4973
  %v5006 = vpack.c.bf16 %v4974, %v4974
  %v5007 = vpack.c.bf16 %v4975, %v4975
  %v5010 = vunpack.c.l.b16 %v4976
  %v5011 = vunpack.c.l.b16 %v4977
  %v5012 = vpack.c.b16 %v5011, %v5010
  %v5014 = vshrl.u32 %v5012, 16
  %v5016 = vrot.slane %v5014, 7
  %v5017 = vshll.u32 %v5012, 16
  %v5019 = vor.u32 %v5016, %v5017
  %v5022 = vsel %vm248, 0, %v5019
  %v5023 = vsel %vm248, %v5016, 0
  %v5026 = vunpack.c.l.b16 %v5022
  %v5027 = vunpack.c.h.b16 %v5022
  %v5028 = vunpack.c.l.b16 %v5023
  %v5029 = vpack.c.b16 %v5026, %v5026
  %v5030 = vpack.c.b16 %v5027, %v5027
  %v5031 = vpack.c.b16 %v5028, %v5028
  %v5032 = vrot.slane %v5029, 7
  %v5033 = vrot.slane %v5032, 4
  %v5034 = vrot.slane %v5030, 7
  %v5035 = vsel %vm260, %v5033, %v5034
  %v5036 = vrot.slane %v5034, 4
  %v5037 = vrot.slane %v5031, 7
  %v5038 = vsel %vm260, %v5036, %v5037
  %5042 = vst.msk [vmem:[#allocation2 + $0x8] sm:$0xe] %vm51, %v5032
  %5043 = vst.msk [vmem:[#allocation2 + $0xc] sm:$0xf] %vm46, %v5035
  %5044 = vst.msk [vmem:[#allocation2 + $0x10] sm:$0x3] %vm273, %v5038
  %v5047 = vunpack.c.l.b16 %v4978
  %v5048 = vunpack.c.l.b16 %v4979
  %v5049 = vpack.c.b16 %v5048, %v5047
  %v5051 = vshrl.u32 %v5049, 16
  %v5053 = vrot.slane %v5051, 7
  %v5054 = vshll.u32 %v5049, 16
  %v5056 = vor.u32 %v5053, %v5054
  %v5059 = vsel %vm248, 0, %v5056
  %v5060 = vsel %vm248, %v5053, 0
  %v5063 = vunpack.c.l.b16 %v5059
  %v5064 = vunpack.c.h.b16 %v5059
  %v5065 = vunpack.c.l.b16 %v5060
  %v5066 = vpack.c.b16 %v5063, %v5063
  %v5067 = vpack.c.b16 %v5064, %v5064
  %v5068 = vpack.c.b16 %v5065, %v5065
  %v5069 = vrot.slane %v5066, 6
  %v5070 = vrot.slane %v5069, 4
  %v5071 = vrot.slane %v5067, 6
  %v5072 = vsel %vm301, %v5070, %v5071
  %v5073 = vrot.slane %v5071, 4
  %v5074 = vrot.slane %v5068, 6
  %v5075 = vsel %vm301, %v5073, %v5074
  %5079 = vst.msk [vmem:[#allocation2 + $0x10] sm:$0xc] %vm312, %v5069
  %5080 = vst.msk [vmem:[#allocation2 + $0x14] sm:$0xf] %vm46, %v5072
  %5081 = vst.msk [vmem:[#allocation2 + $0x18] sm:$0x7] %vm54, %v5075
  %v5084 = vunpack.c.l.b16 %v4980
  %v5085 = vunpack.c.l.b16 %v4981
  %v5086 = vpack.c.b16 %v5085, %v5084
  %v5088 = vshrl.u32 %v5086, 16
  %v5090 = vrot.slane %v5088, 7
  %v5091 = vshll.u32 %v5086, 16
  %v5093 = vor.u32 %v5090, %v5091
  %v5096 = vsel %vm248, 0, %v5093
  %v5097 = vsel %vm248, %v5090, 0
  %v5100 = vunpack.c.l.b16 %v5096
  %v5101 = vunpack.c.h.b16 %v5096
  %v5102 = vunpack.c.l.b16 %v5097
  %v5103 = vpack.c.b16 %v5100, %v5100
  %v5104 = vpack.c.b16 %v5101, %v5101
  %v5105 = vpack.c.b16 %v5102, %v5102
  %v5106 = vrot.slane %v5103, 5
  %v5107 = vrot.slane %v5106, 4
  %v5108 = vrot.slane %v5104, 5
  %v5109 = vsel %vm342, %v5107, %v5108
  %v5110 = vrot.slane %v5108, 4
  %v5111 = vrot.slane %v5105, 5
  %v5112 = vsel %vm342, %v5110, %v5111
  %5116 = vst.msk [vmem:[#allocation2 + $0x18] sm:$0x8] %vm353, %v5106
  %5117 = vst.msk [vmem:[#allocation2 + $0x1c] sm:$0xf] %vm46, %v5109
  %5118 = vst.msk [vmem:[#allocation2 + $0x20] sm:$0xf] %vm46, %v5112
  %v5121 = vunpack.c.l.b16 %v4982
  %v5122 = vunpack.c.l.b16 %v4983
  %v5123 = vpack.c.b16 %v5122, %v5121
  %v5125 = vshrl.u32 %v5123, 16
  %v5127 = vrot.slane %v5125, 7
  %v5128 = vshll.u32 %v5123, 16
  %v5130 = vor.u32 %v5127, %v5128
  %v5133 = vsel %vm248, 0, %v5130
  %v5134 = vsel %vm248, %v5127, 0
  %v5137 = vunpack.c.l.b16 %v5133
  %v5138 = vunpack.c.h.b16 %v5133
  %v5139 = vunpack.c.l.b16 %v5134
  %v5140 = vpack.c.b16 %v5137, %v5137
  %v5141 = vpack.c.b16 %v5138, %v5138
  %v5142 = vpack.c.b16 %v5139, %v5139
  %5146 = vst.msk [vmem:[#allocation2 + $0x24] sm:$0xf] %vm46, %v5140
  %5147 = vst.msk [vmem:[#allocation2 + $0x28] sm:$0xf] %vm46, %v5141
  %5148 = vst.msk [vmem:[#allocation2 + $0x2c] sm:$0x1] %vm49, %v5142
  %v5151 = vunpack.c.l.b16 %v4984
  %v5152 = vunpack.c.l.b16 %v4985
  %v5153 = vpack.c.b16 %v5152, %v5151
  %v5155 = vshrl.u32 %v5153, 16
  %v5157 = vrot.slane %v5155, 7
  %v5158 = vshll.u32 %v5153, 16
  %v5160 = vor.u32 %v5157, %v5158
  %v5163 = vsel %vm248, 0, %v5160
  %v5164 = vsel %vm248, %v5157, 0
  %v5167 = vunpack.c.l.b16 %v5163
  %v5168 = vunpack.c.h.b16 %v5163
  %v5169 = vunpack.c.l.b16 %v5164
  %v5170 = vpack.c.b16 %v5167, %v5167
  %v5171 = vpack.c.b16 %v5168, %v5168
  %v5172 = vpack.c.b16 %v5169, %v5169
  %v5173 = vrot.slane %v5170, 7
  %v5174 = vrot.slane %v5173, 4
  %v5175 = vrot.slane %v5171, 7
  %v5176 = vsel %vm260, %v5174, %v5175
  %v5177 = vrot.slane %v5175, 4
  %v5178 = vrot.slane %v5172, 7
  %v5179 = vsel %vm260, %v5177, %v5178
  %5183 = vst.msk [vmem:[#allocation2 + $0x2c] sm:$0xe] %vm51, %v5173
  %5184 = vst.msk [vmem:[#allocation2 + $0x30] sm:$0xf] %vm46, %v5176
  %5185 = vst.msk [vmem:[#allocation2 + $0x34] sm:$0x3] %vm273, %v5179
  %v5188 = vunpack.c.l.b16 %v4986
  %v5189 = vunpack.c.l.b16 %v4987
  %v5190 = vpack.c.b16 %v5189, %v5188
  %v5192 = vshrl.u32 %v5190, 16
  %v5194 = vrot.slane %v5192, 7
  %v5195 = vshll.u32 %v5190, 16
  %v5197 = vor.u32 %v5194, %v5195
  %v5200 = vsel %vm248, 0, %v5197
  %v5201 = vsel %vm248, %v5194, 0
  %v5204 = vunpack.c.l.b16 %v5200
  %v5205 = vunpack.c.h.b16 %v5200
  %v5206 = vunpack.c.l.b16 %v5201
  %v5207 = vpack.c.b16 %v5204, %v5204
  %v5208 = vpack.c.b16 %v5205, %v5205
  %v5209 = vpack.c.b16 %v5206, %v5206
  %v5210 = vrot.slane %v5207, 6
  %v5211 = vrot.slane %v5210, 4
  %v5212 = vrot.slane %v5208, 6
  %v5213 = vsel %vm301, %v5211, %v5212
  %v5214 = vrot.slane %v5212, 4
  %v5215 = vrot.slane %v5209, 6
  %v5216 = vsel %vm301, %v5214, %v5215
  %5220 = vst.msk [vmem:[#allocation2 + $0x34] sm:$0xc] %vm312, %v5210
  %5221 = vst.msk [vmem:[#allocation2 + $0x38] sm:$0xf] %vm46, %v5213
  %5222 = vst.msk [vmem:[#allocation2 + $0x3c] sm:$0x7] %vm54, %v5216
  %v5225 = vunpack.c.l.b16 %v4988
  %v5226 = vunpack.c.l.b16 %v4989
  %v5227 = vpack.c.b16 %v5226, %v5225
  %v5229 = vshrl.u32 %v5227, 16
  %v5231 = vrot.slane %v5229, 7
  %v5232 = vshll.u32 %v5227, 16
  %v5234 = vor.u32 %v5231, %v5232
  %v5237 = vsel %vm248, 0, %v5234
  %v5238 = vsel %vm248, %v5231, 0
  %v5241 = vunpack.c.l.b16 %v5237
  %v5242 = vunpack.c.h.b16 %v5237
  %v5243 = vunpack.c.l.b16 %v5238
  %v5244 = vpack.c.b16 %v5241, %v5241
  %v5245 = vpack.c.b16 %v5242, %v5242
  %v5246 = vpack.c.b16 %v5243, %v5243
  %v5247 = vrot.slane %v5244, 5
  %v5248 = vrot.slane %v5247, 4
  %v5249 = vrot.slane %v5245, 5
  %v5250 = vsel %vm342, %v5248, %v5249
  %v5251 = vrot.slane %v5249, 4
  %v5252 = vrot.slane %v5246, 5
  %v5253 = vsel %vm342, %v5251, %v5252
  %5257 = vst.msk [vmem:[#allocation2 + $0x3c] sm:$0x8] %vm353, %v5247
  %5258 = vst.msk [vmem:[#allocation2 + $0x40] sm:$0xf] %vm46, %v5250
  %5259 = vst.msk [vmem:[#allocation2 + $0x44] sm:$0xf] %vm46, %v5253
  %v5262 = vunpack.c.l.b16 %v4990
  %v5263 = vunpack.c.l.b16 %v4991
  %v5264 = vpack.c.b16 %v5263, %v5262
  %v5266 = vshrl.u32 %v5264, 16
  %v5268 = vrot.slane %v5266, 7
  %v5269 = vshll.u32 %v5264, 16
  %v5271 = vor.u32 %v5268, %v5269
  %v5274 = vsel %vm248, 0, %v5271
  %v5275 = vsel %vm248, %v5268, 0
  %v5278 = vunpack.c.l.b16 %v5274
  %v5279 = vunpack.c.h.b16 %v5274
  %v5280 = vunpack.c.l.b16 %v5275
  %v5281 = vpack.c.b16 %v5278, %v5278
  %v5282 = vpack.c.b16 %v5279, %v5279
  %v5283 = vpack.c.b16 %v5280, %v5280
  %5287 = vst.msk [vmem:[#allocation2 + $0x48] sm:$0xf] %vm46, %v5281
  %5288 = vst.msk [vmem:[#allocation2 + $0x4c] sm:$0xf] %vm46, %v5282
  %5289 = vst.msk [vmem:[#allocation2 + $0x50] sm:$0x1] %vm49, %v5283
  %v5292 = vunpack.c.l.b16 %v4992
  %v5293 = vunpack.c.l.b16 %v4993
  %v5294 = vpack.c.b16 %v5293, %v5292
  %v5296 = vshrl.u32 %v5294, 16
  %v5298 = vrot.slane %v5296, 7
  %v5299 = vshll.u32 %v5294, 16
  %v5301 = vor.u32 %v5298, %v5299
  %v5304 = vsel %vm248, 0, %v5301
  %v5305 = vsel %vm248, %v5298, 0
  %v5308 = vunpack.c.l.b16 %v5304
  %v5309 = vunpack.c.h.b16 %v5304
  %v5310 = vunpack.c.l.b16 %v5305
  %v5311 = vpack.c.b16 %v5308, %v5308
  %v5312 = vpack.c.b16 %v5309, %v5309
  %v5313 = vpack.c.b16 %v5310, %v5310
  %v5314 = vrot.slane %v5311, 7
  %v5315 = vrot.slane %v5314, 4
  %v5316 = vrot.slane %v5312, 7
  %v5317 = vsel %vm260, %v5315, %v5316
  %v5318 = vrot.slane %v5316, 4
  %v5319 = vrot.slane %v5313, 7
  %v5320 = vsel %vm260, %v5318, %v5319
  %5324 = vst.msk [vmem:[#allocation2 + $0x50] sm:$0xe] %vm51, %v5314
  %5325 = vst.msk [vmem:[#allocation2 + $0x54] sm:$0xf] %vm46, %v5317
  %5326 = vst.msk [vmem:[#allocation2 + $0x58] sm:$0x3] %vm273, %v5320
  %v5329 = vunpack.c.l.b16 %v4994
  %v5330 = vunpack.c.l.b16 %v4995
  %v5331 = vpack.c.b16 %v5330, %v5329
  %v5333 = vshrl.u32 %v5331, 16
  %v5335 = vrot.slane %v5333, 7
  %v5336 = vshll.u32 %v5331, 16
  %v5338 = vor.u32 %v5335, %v5336
  %v5341 = vsel %vm248, 0, %v5338
  %v5342 = vsel %vm248, %v5335, 0
  %v5345 = vunpack.c.l.b16 %v5341
  %v5346 = vunpack.c.h.b16 %v5341
  %v5347 = vunpack.c.l.b16 %v5342
  %v5348 = vpack.c.b16 %v5345, %v5345
  %v5349 = vpack.c.b16 %v5346, %v5346
  %v5350 = vpack.c.b16 %v5347, %v5347
  %v5351 = vrot.slane %v5348, 6
  %v5352 = vrot.slane %v5351, 4
  %v5353 = vrot.slane %v5349, 6
  %v5354 = vsel %vm301, %v5352, %v5353
  %v5355 = vrot.slane %v5353, 4
  %v5356 = vrot.slane %v5350, 6
  %v5357 = vsel %vm301, %v5355, %v5356
  %5361 = vst.msk [vmem:[#allocation2 + $0x58] sm:$0xc] %vm312, %v5351
  %5362 = vst.msk [vmem:[#allocation2 + $0x5c] sm:$0xf] %vm46, %v5354
  %5363 = vst.msk [vmem:[#allocation2 + $0x60] sm:$0x7] %vm54, %v5357
  %v5366 = vunpack.c.l.b16 %v4996
  %v5367 = vunpack.c.l.b16 %v4997
  %v5368 = vpack.c.b16 %v5367, %v5366
  %v5370 = vshrl.u32 %v5368, 16
  %v5372 = vrot.slane %v5370, 7
  %v5373 = vshll.u32 %v5368, 16
  %v5375 = vor.u32 %v5372, %v5373
  %v5378 = vsel %vm248, 0, %v5375
  %v5379 = vsel %vm248, %v5372, 0
  %v5382 = vunpack.c.l.b16 %v5378
  %v5383 = vunpack.c.h.b16 %v5378
  %v5384 = vunpack.c.l.b16 %v5379
  %v5385 = vpack.c.b16 %v5382, %v5382
  %v5386 = vpack.c.b16 %v5383, %v5383
  %v5387 = vpack.c.b16 %v5384, %v5384
  %v5388 = vrot.slane %v5385, 5
  %v5389 = vrot.slane %v5388, 4
  %v5390 = vrot.slane %v5386, 5
  %v5391 = vsel %vm342, %v5389, %v5390
  %v5392 = vrot.slane %v5390, 4
  %v5393 = vrot.slane %v5387, 5
  %v5394 = vsel %vm342, %v5392, %v5393
  %5398 = vst.msk [vmem:[#allocation2 + $0x60] sm:$0x8] %vm353, %v5388
  %5399 = vst.msk [vmem:[#allocation2 + $0x64] sm:$0xf] %vm46, %v5391
  %5400 = vst.msk [vmem:[#allocation2 + $0x68] sm:$0xf] %vm46, %v5394
  %v5403 = vunpack.c.l.b16 %v4998
  %v5404 = vunpack.c.l.b16 %v4999
  %v5405 = vpack.c.b16 %v5404, %v5403
  %v5407 = vshrl.u32 %v5405, 16
  %v5409 = vrot.slane %v5407, 7
  %v5410 = vshll.u32 %v5405, 16
  %v5412 = vor.u32 %v5409, %v5410
  %v5415 = vsel %vm248, 0, %v5412
  %v5416 = vsel %vm248, %v5409, 0
  %v5419 = vunpack.c.l.b16 %v5415
  %v5420 = vunpack.c.h.b16 %v5415
  %v5421 = vunpack.c.l.b16 %v5416
  %v5422 = vpack.c.b16 %v5419, %v5419
  %v5423 = vpack.c.b16 %v5420, %v5420
  %v5424 = vpack.c.b16 %v5421, %v5421
  %5428 = vst.msk [vmem:[#allocation2 + $0x6c] sm:$0xf] %vm46, %v5422
  %5429 = vst.msk [vmem:[#allocation2 + $0x70] sm:$0xf] %vm46, %v5423
  %5430 = vst.msk [vmem:[#allocation2 + $0x74] sm:$0x1] %vm49, %v5424
  %v5433 = vunpack.c.l.b16 %v5000
  %v5434 = vunpack.c.l.b16 %v5001
  %v5435 = vpack.c.b16 %v5434, %v5433
  %v5437 = vshrl.u32 %v5435, 16
  %v5439 = vrot.slane %v5437, 7
  %v5440 = vshll.u32 %v5435, 16
  %v5442 = vor.u32 %v5439, %v5440
  %v5445 = vsel %vm248, 0, %v5442
  %v5446 = vsel %vm248, %v5439, 0
  %v5449 = vunpack.c.l.b16 %v5445
  %v5450 = vunpack.c.h.b16 %v5445
  %v5451 = vunpack.c.l.b16 %v5446
  %v5452 = vpack.c.b16 %v5449, %v5449
  %v5453 = vpack.c.b16 %v5450, %v5450
  %v5454 = vpack.c.b16 %v5451, %v5451
  %v5455 = vrot.slane %v5452, 7
  %v5456 = vrot.slane %v5455, 4
  %v5457 = vrot.slane %v5453, 7
  %v5458 = vsel %vm260, %v5456, %v5457
  %v5459 = vrot.slane %v5457, 4
  %v5460 = vrot.slane %v5454, 7
  %v5461 = vsel %vm260, %v5459, %v5460
  %5465 = vst.msk [vmem:[#allocation2 + $0x74] sm:$0xe] %vm51, %v5455
  %5466 = vst.msk [vmem:[#allocation2 + $0x78] sm:$0xf] %vm46, %v5458
  %5467 = vst.msk [vmem:[#allocation2 + $0x7c] sm:$0x3] %vm273, %v5461
  %v5470 = vunpack.c.l.b16 %v5002
  %v5471 = vunpack.c.l.b16 %v5003
  %v5472 = vpack.c.b16 %v5471, %v5470
  %v5474 = vshrl.u32 %v5472, 16
  %v5476 = vrot.slane %v5474, 7
  %v5477 = vshll.u32 %v5472, 16
  %v5479 = vor.u32 %v5476, %v5477
  %v5482 = vsel %vm248, 0, %v5479
  %v5483 = vsel %vm248, %v5476, 0
  %v5486 = vunpack.c.l.b16 %v5482
  %v5487 = vunpack.c.h.b16 %v5482
  %v5488 = vunpack.c.l.b16 %v5483
  %v5489 = vpack.c.b16 %v5486, %v5486
  %v5490 = vpack.c.b16 %v5487, %v5487
  %v5491 = vpack.c.b16 %v5488, %v5488
  %v5492 = vrot.slane %v5489, 6
  %v5493 = vrot.slane %v5492, 4
  %v5494 = vrot.slane %v5490, 6
  %v5495 = vsel %vm301, %v5493, %v5494
  %v5496 = vrot.slane %v5494, 4
  %v5497 = vrot.slane %v5491, 6
  %v5498 = vsel %vm301, %v5496, %v5497
  %5502 = vst.msk [vmem:[#allocation2 + $0x7c] sm:$0xc] %vm312, %v5492
  %5503 = vst.msk [vmem:[#allocation2 + $0x80] sm:$0xf] %vm46, %v5495
  %5504 = vst.msk [vmem:[#allocation2 + $0x84] sm:$0x7] %vm54, %v5498
  %v5507 = vunpack.c.l.b16 %v5004
  %v5508 = vunpack.c.l.b16 %v5005
  %v5509 = vpack.c.b16 %v5508, %v5507
  %v5511 = vshrl.u32 %v5509, 16
  %v5513 = vrot.slane %v5511, 7
  %v5514 = vshll.u32 %v5509, 16
  %v5516 = vor.u32 %v5513, %v5514
  %v5519 = vsel %vm248, 0, %v5516
  %v5520 = vsel %vm248, %v5513, 0
  %v5523 = vunpack.c.l.b16 %v5519
  %v5524 = vunpack.c.h.b16 %v5519
  %v5525 = vunpack.c.l.b16 %v5520
  %v5526 = vpack.c.b16 %v5523, %v5523
  %v5527 = vpack.c.b16 %v5524, %v5524
  %v5528 = vpack.c.b16 %v5525, %v5525
  %v5529 = vrot.slane %v5526, 5
  %v5530 = vrot.slane %v5529, 4
  %v5531 = vrot.slane %v5527, 5
  %v5532 = vsel %vm342, %v5530, %v5531
  %v5533 = vrot.slane %v5531, 4
  %v5534 = vrot.slane %v5528, 5
  %v5535 = vsel %vm342, %v5533, %v5534
  %5539 = vst.msk [vmem:[#allocation2 + $0x84] sm:$0x8] %vm353, %v5529
  %5540 = vst.msk [vmem:[#allocation2 + $0x88] sm:$0xf] %vm46, %v5532
  %5541 = vst.msk [vmem:[#allocation2 + $0x8c] sm:$0xf] %vm46, %v5535
  %v5544 = vunpack.c.l.b16 %v5006
  %v5545 = vunpack.c.l.b16 %v5007
  %v5546 = vpack.c.b16 %v5545, %v5544
  %v5548 = vshrl.u32 %v5546, 16
  %v5550 = vrot.slane %v5548, 7
  %v5551 = vshll.u32 %v5546, 16
  %v5553 = vor.u32 %v5550, %v5551
  %v5556 = vsel %vm248, 0, %v5553
  %v5557 = vsel %vm248, %v5550, 0
  %v5560 = vunpack.c.l.b16 %v5556
  %v5561 = vunpack.c.h.b16 %v5556
  %v5562 = vunpack.c.l.b16 %v5557
  %v5563 = vpack.c.b16 %v5560, %v5560
  %v5564 = vpack.c.b16 %v5561, %v5561
  %v5565 = vpack.c.b16 %v5562, %v5562
  %5569 = vst.msk [vmem:[#allocation2 + $0x90] sm:$0xf] %vm46, %v5563
  %5570 = vst.msk [vmem:[#allocation2 + $0x94] sm:$0xf] %vm46, %v5564
  %5571 = vst.msk [vmem:[#allocation2 + $0x98] sm:$0x1] %vm49, %v5565
  %v5572 = vld [vmem:[#allocation2] sm:$0xf]
  %v5573 = vld [vmem:[#allocation2 + $0x4] sm:$0xf]
  %v5574 = vld [vmem:[#allocation2 + $0x8] sm:$0xf]
  %v5575 = vld [vmem:[#allocation2 + $0xc] sm:$0xf]
  %v5576 = vld [vmem:[#allocation2 + $0x10] sm:$0xf]
  %v5577 = vld [vmem:[#allocation2 + $0x14] sm:$0xf]
  %v5578 = vld [vmem:[#allocation2 + $0x18] sm:$0xf]
  %v5579 = vld [vmem:[#allocation2 + $0x1c] sm:$0xf]
  %v5580 = vld [vmem:[#allocation2 + $0x20] sm:$0xf]
  %v5581 = vld [vmem:[#allocation2 + $0x24] sm:$0xf]
  %v5582 = vld [vmem:[#allocation2 + $0x28] sm:$0xf]
  %v5583 = vld [vmem:[#allocation2 + $0x2c] sm:$0xf]
  %v5584 = vld [vmem:[#allocation2 + $0x30] sm:$0xf]
  %v5585 = vld [vmem:[#allocation2 + $0x34] sm:$0xf]
  %v5586 = vld [vmem:[#allocation2 + $0x38] sm:$0xf]
  %v5587 = vld [vmem:[#allocation2 + $0x3c] sm:$0xf]
  %v5588 = vld [vmem:[#allocation2 + $0x40] sm:$0xf]
  %v5589 = vld [vmem:[#allocation2 + $0x44] sm:$0xf]
  %v5590 = vld [vmem:[#allocation2 + $0x48] sm:$0xf]
  %v5591 = vld [vmem:[#allocation2 + $0x4c] sm:$0xf]
  %v5592 = vld [vmem:[#allocation2 + $0x50] sm:$0xf]
  %v5593 = vld [vmem:[#allocation2 + $0x54] sm:$0xf]
  %v5594 = vld [vmem:[#allocation2 + $0x58] sm:$0xf]
  %v5595 = vld [vmem:[#allocation2 + $0x5c] sm:$0xf]
  %v5596 = vld [vmem:[#allocation2 + $0x60] sm:$0xf]
  %v5597 = vld [vmem:[#allocation2 + $0x64] sm:$0xf]
  %v5598 = vld [vmem:[#allocation2 + $0x68] sm:$0xf]
  %v5599 = vld [vmem:[#allocation2 + $0x6c] sm:$0xf]
  %v5600 = vld [vmem:[#allocation2 + $0x70] sm:$0xf]
  %v5601 = vld [vmem:[#allocation2 + $0x74] sm:$0xf]
  %v5602 = vld [vmem:[#allocation2 + $0x78] sm:$0xf]
  %v5603 = vld [vmem:[#allocation2 + $0x7c] sm:$0xf]
  %v5604 = vld [vmem:[#allocation2 + $0x80] sm:$0xf]
  %v5605 = vld [vmem:[#allocation2 + $0x84] sm:$0xf]
  %v5606 = vld [vmem:[#allocation2 + $0x88] sm:$0xf]
  %v5607 = vld [vmem:[#allocation2 + $0x8c] sm:$0xf]
  %v5608 = vld [vmem:[#allocation2 + $0x90] sm:$0x1]
  %v5609 = vld [vmem:[#allocation2] sm:$0xe]
  %v5610 = vld [vmem:[#allocation2 + $0x8] sm:$0xe]
  %v5611 = vld [vmem:[#allocation2 + $0x90] sm:$0xf]
  %v5612 = vld [vmem:[#allocation2 + $0x94] sm:$0xf]
  %v5613 = vld [vmem:[#allocation2 + $0x98] sm:$0x1]
  %v5614 = vld [vmem:[#allocation2 + $0x98] sm:$0x3]
  %v5615 = vld [vmem:[#allocation2 + $0x8] sm:$0xc]
  %v5616 = vld [vmem:[#allocation2 + $0x10] sm:$0xc]
  %v5617 = vld [vmem:[#allocation2 + $0x98] sm:$0xf]
  %v5618 = vld [vmem:[#allocation2 + $0x9c] sm:$0xf]
  %v5619 = vld [vmem:[#allocation2 + $0xa0] sm:$0x3]
  %v5620 = vld [vmem:[#allocation2 + $0xa0] sm:$0x7]
  %v5621 = vld [vmem:[#allocation2 + $0x10] sm:$0x8]
  %v5658 = vunpack.c.l.b16 %v5572
  %v5659 = vunpack.c.l.b16 %v5573
  %v5660 = vunpack.c.l.b16 %v5574
  %v5661 = vunpack.c.l.b16 %v5575
  %v5662 = vunpack.c.l.b16 %v5576
  %v5663 = vunpack.c.l.b16 %v5577
  %v5664 = vunpack.c.l.b16 %v5578
  %v5665 = vunpack.c.l.b16 %v5579
  %v5666 = vunpack.c.l.b16 %v5580
  %v5667 = vunpack.c.l.b16 %v5581
  %v5668 = vunpack.c.l.b16 %v5582
  %v5669 = vunpack.c.l.b16 %v5583
  %v5670 = vunpack.c.l.b16 %v5584
  %v5671 = vunpack.c.l.b16 %v5585
  %v5672 = vunpack.c.l.b16 %v5586
  %v5673 = vunpack.c.l.b16 %v5587
  %v5674 = vunpack.c.l.b16 %v5588
  %v5675 = vunpack.c.l.b16 %v5589
  %v5676 = vunpack.c.l.b16 %v5590
  %v5677 = vunpack.c.l.b16 %v5591
  %v5678 = vunpack.c.l.b16 %v5592
  %v5679 = vunpack.c.l.b16 %v5593
  %v5680 = vunpack.c.l.b16 %v5594
  %v5681 = vunpack.c.l.b16 %v5595
  %v5682 = vunpack.c.l.b16 %v5596
  %v5683 = vunpack.c.l.b16 %v5597
  %v5684 = vunpack.c.l.b16 %v5598
  %v5685 = vunpack.c.l.b16 %v5599
  %v5686 = vunpack.c.l.b16 %v5600
  %v5687 = vunpack.c.l.b16 %v5601
  %v5688 = vunpack.c.l.b16 %v5602
  %v5689 = vunpack.c.l.b16 %v5603
  %v5690 = vunpack.c.l.b16 %v5604
  %v5691 = vunpack.c.l.b16 %v5605
  %v5692 = vunpack.c.l.b16 %v5606
  %v5693 = vunpack.c.l.b16 %v5607
  %v5694 = vpack.c.b16 %v5659, %v5658
  %v5695 = vpack.c.b16 %v5661, %v5660
  %v5696 = vpack.c.b16 %v5663, %v5662
  %v5697 = vpack.c.b16 %v5665, %v5664
  %v5698 = vpack.c.b16 %v5667, %v5666
  %v5699 = vpack.c.b16 %v5669, %v5668
  %v5700 = vpack.c.b16 %v5671, %v5670
  %v5701 = vpack.c.b16 %v5673, %v5672
  %v5702 = vpack.c.b16 %v5675, %v5674
  %v5703 = vpack.c.b16 %v5677, %v5676
  %v5704 = vpack.c.b16 %v5679, %v5678
  %v5705 = vpack.c.b16 %v5681, %v5680
  %v5706 = vpack.c.b16 %v5683, %v5682
  %v5707 = vpack.c.b16 %v5685, %v5684
  %v5708 = vpack.c.b16 %v5687, %v5686
  %v5709 = vpack.c.b16 %v5689, %v5688
  %v5710 = vpack.c.b16 %v5691, %v5690
  %v5711 = vpack.c.b16 %v5693, %v5692
  %v5713 = vunpack.c.l.b16 %v5608
  %v5714 = vpack.c.b16 %v5713, %v5713
  %v5716 = vshrl.u32 %v5694, 16
  %v5718 = vshll.u32 %v5694, 16
  %v5720 = vrot.slane %v5718, 1
  %v5721 = vor.u32 %v5716, %v5720
  %v5723 = vshll.u32 %v5695, 16
  %v5725 = vrot.slane %v5723, 1
  %v5726 = vsel %vm953, %v5721, %v5725
  %v5727 = vshrl.u32 %v5695, 16
  %v5729 = vor.u32 %v5727, %v5725
  %v5731 = vshll.u32 %v5696, 16
  %v5733 = vrot.slane %v5731, 1
  %v5734 = vsel %vm953, %v5729, %v5733
  %v5735 = vshrl.u32 %v5696, 16
  %v5737 = vor.u32 %v5735, %v5733
  %v5739 = vshll.u32 %v5697, 16
  %v5741 = vrot.slane %v5739, 1
  %v5742 = vsel %vm953, %v5737, %v5741
  %v5743 = vshrl.u32 %v5697, 16
  %v5745 = vor.u32 %v5743, %v5741
  %v5747 = vshll.u32 %v5698, 16
  %v5749 = vrot.slane %v5747, 1
  %v5750 = vsel %vm953, %v5745, %v5749
  %v5751 = vshrl.u32 %v5698, 16
  %v5753 = vor.u32 %v5751, %v5749
  %v5755 = vshll.u32 %v5699, 16
  %v5757 = vrot.slane %v5755, 1
  %v5758 = vsel %vm953, %v5753, %v5757
  %v5759 = vshrl.u32 %v5699, 16
  %v5761 = vor.u32 %v5759, %v5757
  %v5763 = vshll.u32 %v5700, 16
  %v5765 = vrot.slane %v5763, 1
  %v5766 = vsel %vm953, %v5761, %v5765
  %v5767 = vshrl.u32 %v5700, 16
  %v5769 = vor.u32 %v5767, %v5765
  %v5771 = vshll.u32 %v5701, 16
  %v5773 = vrot.slane %v5771, 1
  %v5774 = vsel %vm953, %v5769, %v5773
  %v5775 = vshrl.u32 %v5701, 16
  %v5777 = vor.u32 %v5775, %v5773
  %v5779 = vshll.u32 %v5702, 16
  %v5781 = vrot.slane %v5779, 1
  %v5782 = vsel %vm953, %v5777, %v5781
  %v5783 = vshrl.u32 %v5702, 16
  %v5785 = vor.u32 %v5783, %v5781
  %v5787 = vshll.u32 %v5703, 16
  %v5789 = vrot.slane %v5787, 1
  %v5790 = vsel %vm953, %v5785, %v5789
  %v5791 = vshrl.u32 %v5703, 16
  %v5793 = vor.u32 %v5791, %v5789
  %v5795 = vshll.u32 %v5704, 16
  %v5797 = vrot.slane %v5795, 1
  %v5798 = vsel %vm953, %v5793, %v5797
  %v5799 = vshrl.u32 %v5704, 16
  %v5801 = vor.u32 %v5799, %v5797
  %v5803 = vshll.u32 %v5705, 16
  %v5805 = vrot.slane %v5803, 1
  %v5806 = vsel %vm953, %v5801, %v5805
  %v5807 = vshrl.u32 %v5705, 16
  %v5809 = vor.u32 %v5807, %v5805
  %v5811 = vshll.u32 %v5706, 16
  %v5813 = vrot.slane %v5811, 1
  %v5814 = vsel %vm953, %v5809, %v5813
  %v5815 = vshrl.u32 %v5706, 16
  %v5817 = vor.u32 %v5815, %v5813
  %v5819 = vshll.u32 %v5707, 16
  %v5821 = vrot.slane %v5819, 1
  %v5822 = vsel %vm953, %v5817, %v5821
  %v5823 = vshrl.u32 %v5707, 16
  %v5825 = vor.u32 %v5823, %v5821
  %v5827 = vshll.u32 %v5708, 16
  %v5829 = vrot.slane %v5827, 1
  %v5830 = vsel %vm953, %v5825, %v5829
  %v5831 = vshrl.u32 %v5708, 16
  %v5833 = vor.u32 %v5831, %v5829
  %v5835 = vshll.u32 %v5709, 16
  %v5837 = vrot.slane %v5835, 1
  %v5838 = vsel %vm953, %v5833, %v5837
  %v5839 = vshrl.u32 %v5709, 16
  %v5841 = vor.u32 %v5839, %v5837
  %v5843 = vshll.u32 %v5710, 16
  %v5845 = vrot.slane %v5843, 1
  %v5846 = vsel %vm953, %v5841, %v5845
  %v5847 = vshrl.u32 %v5710, 16
  %v5849 = vor.u32 %v5847, %v5845
  %v5851 = vshll.u32 %v5711, 16
  %v5853 = vrot.slane %v5851, 1
  %v5854 = vsel %vm953, %v5849, %v5853
  %v5855 = vshrl.u32 %v5711, 16
  %v5857 = vor.u32 %v5855, %v5853
  %v5859 = vshll.u32 %v5714, 16
  %v5861 = vrot.slane %v5859, 1
  %v5862 = vsel %vm953, %v5857, %v5861
  %5863 = vrot.lane.b32.xlu0 %v5726, 4
  %v5864 = vpop.permute.xlu0 %5863
  %5865 = vrot.lane.b32.xlu0 %v5734, 4
  %v5866 = vpop.permute.xlu0 %5865
  %5867 = vrot.lane.b32.xlu0 %v5742, 4
  %v5868 = vpop.permute.xlu0 %5867
  %5869 = vrot.lane.b32.xlu0 %v5750, 4
  %v5870 = vpop.permute.xlu0 %5869
  %5871 = vrot.lane.b32.xlu0 %v5758, 4
  %v5872 = vpop.permute.xlu0 %5871
  %5873 = vrot.lane.b32.xlu0 %v5766, 4
  %v5874 = vpop.permute.xlu0 %5873
  %5875 = vrot.lane.b32.xlu0 %v5774, 4
  %v5876 = vpop.permute.xlu0 %5875
  %5877 = vrot.lane.b32.xlu0 %v5782, 4
  %v5878 = vpop.permute.xlu0 %5877
  %5879 = vrot.lane.b32.xlu0 %v5790, 4
  %v5880 = vpop.permute.xlu0 %5879
  %5881 = vrot.lane.b32.xlu0 %v5798, 4
  %v5882 = vpop.permute.xlu0 %5881
  %5883 = vrot.lane.b32.xlu0 %v5806, 4
  %v5884 = vpop.permute.xlu0 %5883
  %5885 = vrot.lane.b32.xlu0 %v5814, 4
  %v5886 = vpop.permute.xlu0 %5885
  %5887 = vrot.lane.b32.xlu0 %v5822, 4
  %v5888 = vpop.permute.xlu0 %5887
  %5889 = vrot.lane.b32.xlu0 %v5830, 4
  %v5890 = vpop.permute.xlu0 %5889
  %5891 = vrot.lane.b32.xlu0 %v5838, 4
  %v5892 = vpop.permute.xlu0 %5891
  %5893 = vrot.lane.b32.xlu0 %v5846, 4
  %v5894 = vpop.permute.xlu0 %5893
  %5895 = vrot.lane.b32.xlu0 %v5854, 4
  %v5896 = vpop.permute.xlu0 %5895
  %5897 = vrot.lane.b32.xlu0 %v5862, 4
  %v5898 = vpop.permute.xlu0 %5897
  %v5900 = vunpack.c.l.b16 %v5609
  %v5901 = vpack.c.b16 %v5659, %v5900
  %v5902 = vrot.slane %v5901, 1
  %v5903 = vrot.slane %v5695, 1
  %v5904 = vsel %vm1141, %v5902, %v5903
  %v5905 = vrot.slane %v5696, 1
  %v5906 = vsel %vm1141, %v5903, %v5905
  %v5907 = vrot.slane %v5697, 1
  %v5908 = vsel %vm1141, %v5905, %v5907
  %v5909 = vrot.slane %v5698, 1
  %v5910 = vsel %vm1141, %v5907, %v5909
  %v5911 = vrot.slane %v5699, 1
  %v5912 = vsel %vm1141, %v5909, %v5911
  %v5913 = vrot.slane %v5700, 1
  %v5914 = vsel %vm1141, %v5911, %v5913
  %v5915 = vrot.slane %v5701, 1
  %v5916 = vsel %vm1141, %v5913, %v5915
  %v5917 = vrot.slane %v5702, 1
  %v5918 = vsel %vm1141, %v5915, %v5917
  %v5919 = vrot.slane %v5703, 1
  %v5920 = vsel %vm1141, %v5917, %v5919
  %v5921 = vrot.slane %v5704, 1
  %v5922 = vsel %vm1141, %v5919, %v5921
  %v5923 = vrot.slane %v5705, 1
  %v5924 = vsel %vm1141, %v5921, %v5923
  %v5925 = vrot.slane %v5706, 1
  %v5926 = vsel %vm1141, %v5923, %v5925
  %v5927 = vrot.slane %v5707, 1
  %v5928 = vsel %vm1141, %v5925, %v5927
  %v5929 = vrot.slane %v5708, 1
  %v5930 = vsel %vm1141, %v5927, %v5929
  %v5931 = vrot.slane %v5709, 1
  %v5932 = vsel %vm1141, %v5929, %v5931
  %v5933 = vrot.slane %v5710, 1
  %v5934 = vsel %vm1141, %v5931, %v5933
  %v5935 = vrot.slane %v5711, 1
  %v5936 = vsel %vm1141, %v5933, %v5935
  %v5937 = vrot.slane %v5714, 1
  %v5938 = vsel %vm1141, %v5935, %v5937
  %5939 = vrot.lane.b32.xlu0 %v5904, 8
  %v5940 = vpop.permute.xlu0 %5939
  %5941 = vrot.lane.b32.xlu0 %v5906, 8
  %v5942 = vpop.permute.xlu0 %5941
  %5943 = vrot.lane.b32.xlu0 %v5908, 8
  %v5944 = vpop.permute.xlu0 %5943
  %5945 = vrot.lane.b32.xlu0 %v5910, 8
  %v5946 = vpop.permute.xlu0 %5945
  %5947 = vrot.lane.b32.xlu0 %v5912, 8
  %v5948 = vpop.permute.xlu0 %5947
  %5949 = vrot.lane.b32.xlu0 %v5914, 8
  %v5950 = vpop.permute.xlu0 %5949
  %5951 = vrot.lane.b32.xlu0 %v5916, 8
  %v5952 = vpop.permute.xlu0 %5951
  %5953 = vrot.lane.b32.xlu0 %v5918, 8
  %v5954 = vpop.permute.xlu0 %5953
  %5955 = vrot.lane.b32.xlu0 %v5920, 8
  %v5956 = vpop.permute.xlu0 %5955
  %5957 = vrot.lane.b32.xlu0 %v5922, 8
  %v5958 = vpop.permute.xlu0 %5957
  %5959 = vrot.lane.b32.xlu0 %v5924, 8
  %v5960 = vpop.permute.xlu0 %5959
  %5961 = vrot.lane.b32.xlu0 %v5926, 8
  %v5962 = vpop.permute.xlu0 %5961
  %5963 = vrot.lane.b32.xlu0 %v5928, 8
  %v5964 = vpop.permute.xlu0 %5963
  %5965 = vrot.lane.b32.xlu0 %v5930, 8
  %v5966 = vpop.permute.xlu0 %5965
  %5967 = vrot.lane.b32.xlu0 %v5932, 8
  %v5968 = vpop.permute.xlu0 %5967
  %5969 = vrot.lane.b32.xlu0 %v5934, 8
  %v5970 = vpop.permute.xlu0 %5969
  %5971 = vrot.lane.b32.xlu0 %v5936, 8
  %v5972 = vpop.permute.xlu0 %5971
  %5973 = vrot.lane.b32.xlu0 %v5938, 8
  %v5974 = vpop.permute.xlu0 %5973
  %v5979 = vunpack.c.l.b16 %v5610
  %v5980 = vunpack.c.l.b16 %v5611
  %v5981 = vunpack.c.l.b16 %v5612
  %v5982 = vunpack.c.l.b16 %v5613
  %v5983 = vpack.c.b16 %v5661, %v5979
  %v5984 = vpack.c.b16 %v5981, %v5980
  %v5985 = vpack.c.b16 %v5982, %v5982
  %v5986 = vrot.slane %v5983, 1
  %v5987 = vsel %vm1141, %v5986, %v5905
  %v5988 = vrot.slane %v5984, 1
  %v5989 = vsel %vm1141, %v5935, %v5988
  %v5990 = vrot.slane %v5985, 1
  %v5991 = vsel %vm1141, %v5988, %v5990
  %5992 = vrot.lane.b32.xlu0 %v5987, 12
  %v5993 = vpop.permute.xlu0 %5992
  %5994 = vrot.lane.b32.xlu0 %v5908, 12
  %v5995 = vpop.permute.xlu0 %5994
  %5996 = vrot.lane.b32.xlu0 %v5910, 12
  %v5997 = vpop.permute.xlu0 %5996
  %5998 = vrot.lane.b32.xlu0 %v5912, 12
  %v5999 = vpop.permute.xlu0 %5998
  %6000 = vrot.lane.b32.xlu0 %v5914, 12
  %v6001 = vpop.permute.xlu0 %6000
  %6002 = vrot.lane.b32.xlu0 %v5916, 12
  %v6003 = vpop.permute.xlu0 %6002
  %6004 = vrot.lane.b32.xlu0 %v5918, 12
  %v6005 = vpop.permute.xlu0 %6004
  %6006 = vrot.lane.b32.xlu0 %v5920, 12
  %v6007 = vpop.permute.xlu0 %6006
  %6008 = vrot.lane.b32.xlu0 %v5922, 12
  %v6009 = vpop.permute.xlu0 %6008
  %6010 = vrot.lane.b32.xlu0 %v5924, 12
  %v6011 = vpop.permute.xlu0 %6010
  %6012 = vrot.lane.b32.xlu0 %v5926, 12
  %v6013 = vpop.permute.xlu0 %6012
  %6014 = vrot.lane.b32.xlu0 %v5928, 12
  %v6015 = vpop.permute.xlu0 %6014
  %6016 = vrot.lane.b32.xlu0 %v5930, 12
  %v6017 = vpop.permute.xlu0 %6016
  %6018 = vrot.lane.b32.xlu0 %v5932, 12
  %v6019 = vpop.permute.xlu0 %6018
  %6020 = vrot.lane.b32.xlu0 %v5934, 12
  %v6021 = vpop.permute.xlu0 %6020
  %6022 = vrot.lane.b32.xlu0 %v5936, 12
  %v6023 = vpop.permute.xlu0 %6022
  %6024 = vrot.lane.b32.xlu0 %v5989, 12
  %v6025 = vpop.permute.xlu0 %6024
  %6026 = vrot.lane.b32.xlu0 %v5991, 12
  %v6027 = vpop.permute.xlu0 %6026
  %v6029 = vunpack.c.l.b16 %v5614
  %v6030 = vpack.c.b16 %v6029, %v6029
  %v6032 = vshrl.u32 %v5983, 16
  %v6034 = vrot.slane %v6032, 1
  %v6035 = vshll.u32 %v5983, 16
  %v6037 = vrot.slane %v6035, 2
  %v6038 = vor.u32 %v6034, %v6037
  %v6039 = vrot.slane %v5735, 1
  %v6040 = vrot.slane %v5731, 2
  %v6041 = vor.u32 %v6039, %v6040
  %v6042 = vsel %vm1271, %v6038, %v6041
  %v6043 = vrot.slane %v5743, 1
  %v6044 = vrot.slane %v5739, 2
  %v6045 = vor.u32 %v6043, %v6044
  %v6046 = vsel %vm1271, %v6041, %v6045
  %v6047 = vrot.slane %v5751, 1
  %v6048 = vrot.slane %v5747, 2
  %v6049 = vor.u32 %v6047, %v6048
  %v6050 = vsel %vm1271, %v6045, %v6049
  %v6051 = vrot.slane %v5759, 1
  %v6052 = vrot.slane %v5755, 2
  %v6053 = vor.u32 %v6051, %v6052
  %v6054 = vsel %vm1271, %v6049, %v6053
  %v6055 = vrot.slane %v5767, 1
  %v6056 = vrot.slane %v5763, 2
  %v6057 = vor.u32 %v6055, %v6056
  %v6058 = vsel %vm1271, %v6053, %v6057
  %v6059 = vrot.slane %v5775, 1
  %v6060 = vrot.slane %v5771, 2
  %v6061 = vor.u32 %v6059, %v6060
  %v6062 = vsel %vm1271, %v6057, %v6061
  %v6063 = vrot.slane %v5783, 1
  %v6064 = vrot.slane %v5779, 2
  %v6065 = vor.u32 %v6063, %v6064
  %v6066 = vsel %vm1271, %v6061, %v6065
  %v6067 = vrot.slane %v5791, 1
  %v6068 = vrot.slane %v5787, 2
  %v6069 = vor.u32 %v6067, %v6068
  %v6070 = vsel %vm1271, %v6065, %v6069
  %v6071 = vrot.slane %v5799, 1
  %v6072 = vrot.slane %v5795, 2
  %v6073 = vor.u32 %v6071, %v6072
  %v6074 = vsel %vm1271, %v6069, %v6073
  %v6075 = vrot.slane %v5807, 1
  %v6076 = vrot.slane %v5803, 2
  %v6077 = vor.u32 %v6075, %v6076
  %v6078 = vsel %vm1271, %v6073, %v6077
  %v6079 = vrot.slane %v5815, 1
  %v6080 = vrot.slane %v5811, 2
  %v6081 = vor.u32 %v6079, %v6080
  %v6082 = vsel %vm1271, %v6077, %v6081
  %v6083 = vrot.slane %v5823, 1
  %v6084 = vrot.slane %v5819, 2
  %v6085 = vor.u32 %v6083, %v6084
  %v6086 = vsel %vm1271, %v6081, %v6085
  %v6087 = vrot.slane %v5831, 1
  %v6088 = vrot.slane %v5827, 2
  %v6089 = vor.u32 %v6087, %v6088
  %v6090 = vsel %vm1271, %v6085, %v6089
  %v6091 = vrot.slane %v5839, 1
  %v6092 = vrot.slane %v5835, 2
  %v6093 = vor.u32 %v6091, %v6092
  %v6094 = vsel %vm1271, %v6089, %v6093
  %v6095 = vrot.slane %v5847, 1
  %v6096 = vrot.slane %v5843, 2
  %v6097 = vor.u32 %v6095, %v6096
  %v6098 = vsel %vm1271, %v6093, %v6097
  %v6099 = vrot.slane %v5855, 1
  %v6100 = vrot.slane %v5851, 2
  %v6101 = vor.u32 %v6099, %v6100
  %v6102 = vsel %vm1271, %v6097, %v6101
  %v6104 = vshrl.u32 %v5984, 16
  %v6106 = vrot.slane %v6104, 1
  %v6107 = vshll.u32 %v5984, 16
  %v6109 = vrot.slane %v6107, 2
  %v6110 = vor.u32 %v6106, %v6109
  %v6111 = vsel %vm1271, %v6101, %v6110
  %v6113 = vshrl.u32 %v6030, 16
  %v6115 = vrot.slane %v6113, 1
  %v6116 = vshll.u32 %v6030, 16
  %v6118 = vrot.slane %v6116, 2
  %v6119 = vor.u32 %v6115, %v6118
  %v6120 = vsel %vm1271, %v6110, %v6119
  %6121 = vrot.lane.b32.xlu0 %v6042, 16
  %v6122 = vpop.permute.xlu0 %6121
  %6123 = vrot.lane.b32.xlu0 %v6046, 16
  %v6124 = vpop.permute.xlu0 %6123
  %6125 = vrot.lane.b32.xlu0 %v6050, 16
  %v6126 = vpop.permute.xlu0 %6125
  %6127 = vrot.lane.b32.xlu0 %v6054, 16
  %v6128 = vpop.permute.xlu0 %6127
  %6129 = vrot.lane.b32.xlu0 %v6058, 16
  %v6130 = vpop.permute.xlu0 %6129
  %6131 = vrot.lane.b32.xlu0 %v6062, 16
  %v6132 = vpop.permute.xlu0 %6131
  %6133 = vrot.lane.b32.xlu0 %v6066, 16
  %v6134 = vpop.permute.xlu0 %6133
  %6135 = vrot.lane.b32.xlu0 %v6070, 16
  %v6136 = vpop.permute.xlu0 %6135
  %6137 = vrot.lane.b32.xlu0 %v6074, 16
  %v6138 = vpop.permute.xlu0 %6137
  %6139 = vrot.lane.b32.xlu0 %v6078, 16
  %v6140 = vpop.permute.xlu0 %6139
  %6141 = vrot.lane.b32.xlu0 %v6082, 16
  %v6142 = vpop.permute.xlu0 %6141
  %6143 = vrot.lane.b32.xlu0 %v6086, 16
  %v6144 = vpop.permute.xlu0 %6143
  %6145 = vrot.lane.b32.xlu0 %v6090, 16
  %v6146 = vpop.permute.xlu0 %6145
  %6147 = vrot.lane.b32.xlu0 %v6094, 16
  %v6148 = vpop.permute.xlu0 %6147
  %6149 = vrot.lane.b32.xlu0 %v6098, 16
  %v6150 = vpop.permute.xlu0 %6149
  %6151 = vrot.lane.b32.xlu0 %v6102, 16
  %v6152 = vpop.permute.xlu0 %6151
  %6153 = vrot.lane.b32.xlu0 %v6111, 16
  %v6154 = vpop.permute.xlu0 %6153
  %6155 = vrot.lane.b32.xlu0 %v6120, 16
  %v6156 = vpop.permute.xlu0 %6155
  %v6158 = vunpack.c.l.b16 %v5615
  %v6159 = vpack.c.b16 %v5661, %v6158
  %v6160 = vrot.slane %v6159, 2
  %v6161 = vrot.slane %v5696, 2
  %v6162 = vsel %vm1401, %v6160, %v6161
  %v6163 = vrot.slane %v5697, 2
  %v6164 = vsel %vm1401, %v6161, %v6163
  %v6165 = vrot.slane %v5698, 2
  %v6166 = vsel %vm1401, %v6163, %v6165
  %v6167 = vrot.slane %v5699, 2
  %v6168 = vsel %vm1401, %v6165, %v6167
  %v6169 = vrot.slane %v5700, 2
  %v6170 = vsel %vm1401, %v6167, %v6169
  %v6171 = vrot.slane %v5701, 2
  %v6172 = vsel %vm1401, %v6169, %v6171
  %v6173 = vrot.slane %v5702, 2
  %v6174 = vsel %vm1401, %v6171, %v6173
  %v6175 = vrot.slane %v5703, 2
  %v6176 = vsel %vm1401, %v6173, %v6175
  %v6177 = vrot.slane %v5704, 2
  %v6178 = vsel %vm1401, %v6175, %v6177
  %v6179 = vrot.slane %v5705, 2
  %v6180 = vsel %vm1401, %v6177, %v6179
  %v6181 = vrot.slane %v5706, 2
  %v6182 = vsel %vm1401, %v6179, %v6181
  %v6183 = vrot.slane %v5707, 2
  %v6184 = vsel %vm1401, %v6181, %v6183
  %v6185 = vrot.slane %v5708, 2
  %v6186 = vsel %vm1401, %v6183, %v6185
  %v6187 = vrot.slane %v5709, 2
  %v6188 = vsel %vm1401, %v6185, %v6187
  %v6189 = vrot.slane %v5710, 2
  %v6190 = vsel %vm1401, %v6187, %v6189
  %v6191 = vrot.slane %v5711, 2
  %v6192 = vsel %vm1401, %v6189, %v6191
  %v6193 = vrot.slane %v5984, 2
  %v6194 = vsel %vm1401, %v6191, %v6193
  %v6195 = vrot.slane %v6030, 2
  %v6196 = vsel %vm1401, %v6193, %v6195
  %6197 = vrot.lane.b32.xlu0 %v6162, 20
  %v6198 = vpop.permute.xlu0 %6197
  %6199 = vrot.lane.b32.xlu0 %v6164, 20
  %v6200 = vpop.permute.xlu0 %6199
  %6201 = vrot.lane.b32.xlu0 %v6166, 20
  %v6202 = vpop.permute.xlu0 %6201
  %6203 = vrot.lane.b32.xlu0 %v6168, 20
  %v6204 = vpop.permute.xlu0 %6203
  %6205 = vrot.lane.b32.xlu0 %v6170, 20
  %v6206 = vpop.permute.xlu0 %6205
  %6207 = vrot.lane.b32.xlu0 %v6172, 20
  %v6208 = vpop.permute.xlu0 %6207
  %6209 = vrot.lane.b32.xlu0 %v6174, 20
  %v6210 = vpop.permute.xlu0 %6209
  %6211 = vrot.lane.b32.xlu0 %v6176, 20
  %v6212 = vpop.permute.xlu0 %6211
  %6213 = vrot.lane.b32.xlu0 %v6178, 20
  %v6214 = vpop.permute.xlu0 %6213
  %6215 = vrot.lane.b32.xlu0 %v6180, 20
  %v6216 = vpop.permute.xlu0 %6215
  %6217 = vrot.lane.b32.xlu0 %v6182, 20
  %v6218 = vpop.permute.xlu0 %6217
  %6219 = vrot.lane.b32.xlu0 %v6184, 20
  %v6220 = vpop.permute.xlu0 %6219
  %6221 = vrot.lane.b32.xlu0 %v6186, 20
  %v6222 = vpop.permute.xlu0 %6221
  %6223 = vrot.lane.b32.xlu0 %v6188, 20
  %v6224 = vpop.permute.xlu0 %6223
  %6225 = vrot.lane.b32.xlu0 %v6190, 20
  %v6226 = vpop.permute.xlu0 %6225
  %6227 = vrot.lane.b32.xlu0 %v6192, 20
  %v6228 = vpop.permute.xlu0 %6227
  %6229 = vrot.lane.b32.xlu0 %v6194, 20
  %v6230 = vpop.permute.xlu0 %6229
  %6231 = vrot.lane.b32.xlu0 %v6196, 20
  %v6232 = vpop.permute.xlu0 %6231
  %v6237 = vunpack.c.l.b16 %v5616
  %v6238 = vunpack.c.l.b16 %v5617
  %v6239 = vunpack.c.l.b16 %v5618
  %v6240 = vunpack.c.l.b16 %v5619
  %v6241 = vpack.c.b16 %v5663, %v6237
  %v6242 = vpack.c.b16 %v6239, %v6238
  %v6243 = vpack.c.b16 %v6240, %v6240
  %v6244 = vrot.slane %v6241, 2
  %v6245 = vsel %vm1401, %v6244, %v6163
  %v6246 = vrot.slane %v6242, 2
  %v6247 = vsel %vm1401, %v6193, %v6246
  %v6248 = vrot.slane %v6243, 2
  %v6249 = vsel %vm1401, %v6246, %v6248
  %6250 = vrot.lane.b32.xlu0 %v6245, 24
  %v6251 = vpop.permute.xlu0 %6250
  %6252 = vrot.lane.b32.xlu0 %v6166, 24
  %v6253 = vpop.permute.xlu0 %6252
  %6254 = vrot.lane.b32.xlu0 %v6168, 24
  %v6255 = vpop.permute.xlu0 %6254
  %6256 = vrot.lane.b32.xlu0 %v6170, 24
  %v6257 = vpop.permute.xlu0 %6256
  %6258 = vrot.lane.b32.xlu0 %v6172, 24
  %v6259 = vpop.permute.xlu0 %6258
  %6260 = vrot.lane.b32.xlu0 %v6174, 24
  %v6261 = vpop.permute.xlu0 %6260
  %6262 = vrot.lane.b32.xlu0 %v6176, 24
  %v6263 = vpop.permute.xlu0 %6262
  %6264 = vrot.lane.b32.xlu0 %v6178, 24
  %v6265 = vpop.permute.xlu0 %6264
  %6266 = vrot.lane.b32.xlu0 %v6180, 24
  %v6267 = vpop.permute.xlu0 %6266
  %6268 = vrot.lane.b32.xlu0 %v6182, 24
  %v6269 = vpop.permute.xlu0 %6268
  %6270 = vrot.lane.b32.xlu0 %v6184, 24
  %v6271 = vpop.permute.xlu0 %6270
  %6272 = vrot.lane.b32.xlu0 %v6186, 24
  %v6273 = vpop.permute.xlu0 %6272
  %6274 = vrot.lane.b32.xlu0 %v6188, 24
  %v6275 = vpop.permute.xlu0 %6274
  %6276 = vrot.lane.b32.xlu0 %v6190, 24
  %v6277 = vpop.permute.xlu0 %6276
  %6278 = vrot.lane.b32.xlu0 %v6192, 24
  %v6279 = vpop.permute.xlu0 %6278
  %6280 = vrot.lane.b32.xlu0 %v6194, 24
  %v6281 = vpop.permute.xlu0 %6280
  %6282 = vrot.lane.b32.xlu0 %v6247, 24
  %v6283 = vpop.permute.xlu0 %6282
  %6284 = vrot.lane.b32.xlu0 %v6249, 24
  %v6285 = vpop.permute.xlu0 %6284
  %v6287 = vunpack.c.l.b16 %v5620
  %v6288 = vpack.c.b16 %v6287, %v6287
  %v6290 = vshrl.u32 %v6241, 16
  %v6292 = vrot.slane %v6290, 2
  %v6293 = vshll.u32 %v6241, 16
  %v6295 = vrot.slane %v6293, 3
  %v6296 = vor.u32 %v6292, %v6295
  %v6297 = vrot.slane %v5743, 2
  %v6298 = vrot.slane %v5739, 3
  %v6299 = vor.u32 %v6297, %v6298
  %v6300 = vsel %vm1531, %v6296, %v6299
  %v6301 = vrot.slane %v5751, 2
  %v6302 = vrot.slane %v5747, 3
  %v6303 = vor.u32 %v6301, %v6302
  %v6304 = vsel %vm1531, %v6299, %v6303
  %v6305 = vrot.slane %v5759, 2
  %v6306 = vrot.slane %v5755, 3
  %v6307 = vor.u32 %v6305, %v6306
  %v6308 = vsel %vm1531, %v6303, %v6307
  %v6309 = vrot.slane %v5767, 2
  %v6310 = vrot.slane %v5763, 3
  %v6311 = vor.u32 %v6309, %v6310
  %v6312 = vsel %vm1531, %v6307, %v6311
  %v6313 = vrot.slane %v5775, 2
  %v6314 = vrot.slane %v5771, 3
  %v6315 = vor.u32 %v6313, %v6314
  %v6316 = vsel %vm1531, %v6311, %v6315
  %v6317 = vrot.slane %v5783, 2
  %v6318 = vrot.slane %v5779, 3
  %v6319 = vor.u32 %v6317, %v6318
  %v6320 = vsel %vm1531, %v6315, %v6319
  %v6321 = vrot.slane %v5791, 2
  %v6322 = vrot.slane %v5787, 3
  %v6323 = vor.u32 %v6321, %v6322
  %v6324 = vsel %vm1531, %v6319, %v6323
  %v6325 = vrot.slane %v5799, 2
  %v6326 = vrot.slane %v5795, 3
  %v6327 = vor.u32 %v6325, %v6326
  %v6328 = vsel %vm1531, %v6323, %v6327
  %v6329 = vrot.slane %v5807, 2
  %v6330 = vrot.slane %v5803, 3
  %v6331 = vor.u32 %v6329, %v6330
  %v6332 = vsel %vm1531, %v6327, %v6331
  %v6333 = vrot.slane %v5815, 2
  %v6334 = vrot.slane %v5811, 3
  %v6335 = vor.u32 %v6333, %v6334
  %v6336 = vsel %vm1531, %v6331, %v6335
  %v6337 = vrot.slane %v5823, 2
  %v6338 = vrot.slane %v5819, 3
  %v6339 = vor.u32 %v6337, %v6338
  %v6340 = vsel %vm1531, %v6335, %v6339
  %v6341 = vrot.slane %v5831, 2
  %v6342 = vrot.slane %v5827, 3
  %v6343 = vor.u32 %v6341, %v6342
  %v6344 = vsel %vm1531, %v6339, %v6343
  %v6345 = vrot.slane %v5839, 2
  %v6346 = vrot.slane %v5835, 3
  %v6347 = vor.u32 %v6345, %v6346
  %v6348 = vsel %vm1531, %v6343, %v6347
  %v6349 = vrot.slane %v5847, 2
  %v6350 = vrot.slane %v5843, 3
  %v6351 = vor.u32 %v6349, %v6350
  %v6352 = vsel %vm1531, %v6347, %v6351
  %v6353 = vrot.slane %v5855, 2
  %v6354 = vrot.slane %v5851, 3
  %v6355 = vor.u32 %v6353, %v6354
  %v6356 = vsel %vm1531, %v6351, %v6355
  %v6357 = vrot.slane %v6104, 2
  %v6358 = vrot.slane %v6107, 3
  %v6359 = vor.u32 %v6357, %v6358
  %v6360 = vsel %vm1531, %v6355, %v6359
  %v6362 = vshrl.u32 %v6242, 16
  %v6364 = vrot.slane %v6362, 2
  %v6365 = vshll.u32 %v6242, 16
  %v6367 = vrot.slane %v6365, 3
  %v6368 = vor.u32 %v6364, %v6367
  %v6369 = vsel %vm1531, %v6359, %v6368
  %v6371 = vshrl.u32 %v6288, 16
  %v6373 = vrot.slane %v6371, 2
  %v6374 = vshll.u32 %v6288, 16
  %v6376 = vrot.slane %v6374, 3
  %v6377 = vor.u32 %v6373, %v6376
  %v6378 = vsel %vm1531, %v6368, %v6377
  %6379 = vrot.lane.b32.xlu0 %v6300, 28
  %v6380 = vpop.permute.xlu0 %6379
  %6381 = vrot.lane.b32.xlu0 %v6304, 28
  %v6382 = vpop.permute.xlu0 %6381
  %6383 = vrot.lane.b32.xlu0 %v6308, 28
  %v6384 = vpop.permute.xlu0 %6383
  %6385 = vrot.lane.b32.xlu0 %v6312, 28
  %v6386 = vpop.permute.xlu0 %6385
  %6387 = vrot.lane.b32.xlu0 %v6316, 28
  %v6388 = vpop.permute.xlu0 %6387
  %6389 = vrot.lane.b32.xlu0 %v6320, 28
  %v6390 = vpop.permute.xlu0 %6389
  %6391 = vrot.lane.b32.xlu0 %v6324, 28
  %v6392 = vpop.permute.xlu0 %6391
  %6393 = vrot.lane.b32.xlu0 %v6328, 28
  %v6394 = vpop.permute.xlu0 %6393
  %6395 = vrot.lane.b32.xlu0 %v6332, 28
  %v6396 = vpop.permute.xlu0 %6395
  %6397 = vrot.lane.b32.xlu0 %v6336, 28
  %v6398 = vpop.permute.xlu0 %6397
  %6399 = vrot.lane.b32.xlu0 %v6340, 28
  %v6400 = vpop.permute.xlu0 %6399
  %6401 = vrot.lane.b32.xlu0 %v6344, 28
  %v6402 = vpop.permute.xlu0 %6401
  %6403 = vrot.lane.b32.xlu0 %v6348, 28
  %v6404 = vpop.permute.xlu0 %6403
  %6405 = vrot.lane.b32.xlu0 %v6352, 28
  %v6406 = vpop.permute.xlu0 %6405
  %6407 = vrot.lane.b32.xlu0 %v6356, 28
  %v6408 = vpop.permute.xlu0 %6407
  %6409 = vrot.lane.b32.xlu0 %v6360, 28
  %v6410 = vpop.permute.xlu0 %6409
  %6411 = vrot.lane.b32.xlu0 %v6369, 28
  %v6412 = vpop.permute.xlu0 %6411
  %6413 = vrot.lane.b32.xlu0 %v6378, 28
  %v6414 = vpop.permute.xlu0 %6413
  %v6416 = vunpack.c.l.b16 %v5621
  %v6417 = vpack.c.b16 %v5663, %v6416
  %v6418 = vrot.slane %v6417, 3
  %v6419 = vrot.slane %v5697, 3
  %v6420 = vsel %vm1661, %v6418, %v6419
  %v6421 = vrot.slane %v5698, 3
  %v6422 = vsel %vm1661, %v6419, %v6421
  %v6423 = vrot.slane %v5699, 3
  %v6424 = vsel %vm1661, %v6421, %v6423
  %v6425 = vrot.slane %v5700, 3
  %v6426 = vsel %vm1661, %v6423, %v6425
  %v6427 = vrot.slane %v5701, 3
  %v6428 = vsel %vm1661, %v6425, %v6427
  %v6429 = vrot.slane %v5702, 3
  %v6430 = vsel %vm1661, %v6427, %v6429
  %v6431 = vrot.slane %v5703, 3
  %v6432 = vsel %vm1661, %v6429, %v6431
  %v6433 = vrot.slane %v5704, 3
  %v6434 = vsel %vm1661, %v6431, %v6433
  %v6435 = vrot.slane %v5705, 3
  %v6436 = vsel %vm1661, %v6433, %v6435
  %v6437 = vrot.slane %v5706, 3
  %v6438 = vsel %vm1661, %v6435, %v6437
  %v6439 = vrot.slane %v5707, 3
  %v6440 = vsel %vm1661, %v6437, %v6439
  %v6441 = vrot.slane %v5708, 3
  %v6442 = vsel %vm1661, %v6439, %v6441
  %v6443 = vrot.slane %v5709, 3
  %v6444 = vsel %vm1661, %v6441, %v6443
  %v6445 = vrot.slane %v5710, 3
  %v6446 = vsel %vm1661, %v6443, %v6445
  %v6447 = vrot.slane %v5711, 3
  %v6448 = vsel %vm1661, %v6445, %v6447
  %v6449 = vrot.slane %v5984, 3
  %v6450 = vsel %vm1661, %v6447, %v6449
  %v6451 = vrot.slane %v6242, 3
  %v6452 = vsel %vm1661, %v6449, %v6451
  %v6453 = vrot.slane %v6288, 3
  %v6454 = vsel %vm1661, %v6451, %v6453
  %6455 = vrot.lane.b32.xlu0 %v6420, 32
  %v6456 = vpop.permute.xlu0 %6455
  %6457 = vrot.lane.b32.xlu0 %v6422, 32
  %v6458 = vpop.permute.xlu0 %6457
  %6459 = vrot.lane.b32.xlu0 %v6424, 32
  %v6460 = vpop.permute.xlu0 %6459
  %6461 = vrot.lane.b32.xlu0 %v6426, 32
  %v6462 = vpop.permute.xlu0 %6461
  %6463 = vrot.lane.b32.xlu0 %v6428, 32
  %v6464 = vpop.permute.xlu0 %6463
  %6465 = vrot.lane.b32.xlu0 %v6430, 32
  %v6466 = vpop.permute.xlu0 %6465
  %6467 = vrot.lane.b32.xlu0 %v6432, 32
  %v6468 = vpop.permute.xlu0 %6467
  %6469 = vrot.lane.b32.xlu0 %v6434, 32
  %v6470 = vpop.permute.xlu0 %6469
  %6471 = vrot.lane.b32.xlu0 %v6436, 32
  %v6472 = vpop.permute.xlu0 %6471
  %6473 = vrot.lane.b32.xlu0 %v6438, 32
  %v6474 = vpop.permute.xlu0 %6473
  %6475 = vrot.lane.b32.xlu0 %v6440, 32
  %v6476 = vpop.permute.xlu0 %6475
  %6477 = vrot.lane.b32.xlu0 %v6442, 32
  %v6478 = vpop.permute.xlu0 %6477
  %6479 = vrot.lane.b32.xlu0 %v6444, 32
  %v6480 = vpop.permute.xlu0 %6479
  %6481 = vrot.lane.b32.xlu0 %v6446, 32
  %v6482 = vpop.permute.xlu0 %6481
  %6483 = vrot.lane.b32.xlu0 %v6448, 32
  %v6484 = vpop.permute.xlu0 %6483
  %6485 = vrot.lane.b32.xlu0 %v6450, 32
  %v6486 = vpop.permute.xlu0 %6485
  %6487 = vrot.lane.b32.xlu0 %v6452, 32
  %v6488 = vpop.permute.xlu0 %6487
  %6489 = vrot.lane.b32.xlu0 %v6454, 32
  %v6490 = vpop.permute.xlu0 %6489
  %v6492 = vsel %vm1735, %v5694, %v5864
  %v6494 = vsel %vm1735, %v5695, %v5866
  %v6496 = vsel %vm1735, %v5696, %v5868
  %v6498 = vsel %vm1735, %v5697, %v5870
  %v6500 = vsel %vm1735, %v5698, %v5872
  %v6502 = vsel %vm1735, %v5699, %v5874
  %v6504 = vsel %vm1735, %v5700, %v5876
  %v6506 = vsel %vm1735, %v5701, %v5878
  %v6508 = vsel %vm1735, %v5702, %v5880
  %v6510 = vsel %vm1735, %v5703, %v5882
  %v6512 = vsel %vm1735, %v5704, %v5884
  %v6514 = vsel %vm1735, %v5705, %v5886
  %v6516 = vsel %vm1735, %v5706, %v5888
  %v6518 = vsel %vm1735, %v5707, %v5890
  %v6520 = vsel %vm1735, %v5708, %v5892
  %v6522 = vsel %vm1735, %v5709, %v5894
  %v6524 = vsel %vm1735, %v5710, %v5896
  %v6526 = vsel %vm1735, %v5711, %v5898
  %v6528 = vsel %vm1772, %v6492, %v5940
  %v6530 = vsel %vm1772, %v6494, %v5942
  %v6532 = vsel %vm1772, %v6496, %v5944
  %v6534 = vsel %vm1772, %v6498, %v5946
  %v6536 = vsel %vm1772, %v6500, %v5948
  %v6538 = vsel %vm1772, %v6502, %v5950
  %v6540 = vsel %vm1772, %v6504, %v5952
  %v6542 = vsel %vm1772, %v6506, %v5954
  %v6544 = vsel %vm1772, %v6508, %v5956
  %v6546 = vsel %vm1772, %v6510, %v5958
  %v6548 = vsel %vm1772, %v6512, %v5960
  %v6550 = vsel %vm1772, %v6514, %v5962
  %v6552 = vsel %vm1772, %v6516, %v5964
  %v6554 = vsel %vm1772, %v6518, %v5966
  %v6556 = vsel %vm1772, %v6520, %v5968
  %v6558 = vsel %vm1772, %v6522, %v5970
  %v6560 = vsel %vm1772, %v6524, %v5972
  %v6562 = vsel %vm1772, %v6526, %v5974
  %v6564 = vsel %vm1809, %v6528, %v5993
  %v6566 = vsel %vm1809, %v6530, %v5995
  %v6568 = vsel %vm1809, %v6532, %v5997
  %v6570 = vsel %vm1809, %v6534, %v5999
  %v6572 = vsel %vm1809, %v6536, %v6001
  %v6574 = vsel %vm1809, %v6538, %v6003
  %v6576 = vsel %vm1809, %v6540, %v6005
  %v6578 = vsel %vm1809, %v6542, %v6007
  %v6580 = vsel %vm1809, %v6544, %v6009
  %v6582 = vsel %vm1809, %v6546, %v6011
  %v6584 = vsel %vm1809, %v6548, %v6013
  %v6586 = vsel %vm1809, %v6550, %v6015
  %v6588 = vsel %vm1809, %v6552, %v6017
  %v6590 = vsel %vm1809, %v6554, %v6019
  %v6592 = vsel %vm1809, %v6556, %v6021
  %v6594 = vsel %vm1809, %v6558, %v6023
  %v6596 = vsel %vm1809, %v6560, %v6025
  %v6598 = vsel %vm1809, %v6562, %v6027
  %v6600 = vsel %vm1846, %v6564, %v6122
  %v6602 = vsel %vm1846, %v6566, %v6124
  %v6604 = vsel %vm1846, %v6568, %v6126
  %v6606 = vsel %vm1846, %v6570, %v6128
  %v6608 = vsel %vm1846, %v6572, %v6130
  %v6610 = vsel %vm1846, %v6574, %v6132
  %v6612 = vsel %vm1846, %v6576, %v6134
  %v6614 = vsel %vm1846, %v6578, %v6136
  %v6616 = vsel %vm1846, %v6580, %v6138
  %v6618 = vsel %vm1846, %v6582, %v6140
  %v6620 = vsel %vm1846, %v6584, %v6142
  %v6622 = vsel %vm1846, %v6586, %v6144
  %v6624 = vsel %vm1846, %v6588, %v6146
  %v6626 = vsel %vm1846, %v6590, %v6148
  %v6628 = vsel %vm1846, %v6592, %v6150
  %v6630 = vsel %vm1846, %v6594, %v6152
  %v6632 = vsel %vm1846, %v6596, %v6154
  %v6634 = vsel %vm1846, %v6598, %v6156
  %v6636 = vsel %vm1883, %v6600, %v6198
  %v6638 = vsel %vm1883, %v6602, %v6200
  %v6640 = vsel %vm1883, %v6604, %v6202
  %v6642 = vsel %vm1883, %v6606, %v6204
  %v6644 = vsel %vm1883, %v6608, %v6206
  %v6646 = vsel %vm1883, %v6610, %v6208
  %v6648 = vsel %vm1883, %v6612, %v6210
  %v6650 = vsel %vm1883, %v6614, %v6212
  %v6652 = vsel %vm1883, %v6616, %v6214
  %v6654 = vsel %vm1883, %v6618, %v6216
  %v6656 = vsel %vm1883, %v6620, %v6218
  %v6658 = vsel %vm1883, %v6622, %v6220
  %v6660 = vsel %vm1883, %v6624, %v6222
  %v6662 = vsel %vm1883, %v6626, %v6224
  %v6664 = vsel %vm1883, %v6628, %v6226
  %v6666 = vsel %vm1883, %v6630, %v6228
  %v6668 = vsel %vm1883, %v6632, %v6230
  %v6670 = vsel %vm1883, %v6634, %v6232
  %v6672 = vsel %vm1920, %v6636, %v6251
  %v6674 = vsel %vm1920, %v6638, %v6253
  %v6676 = vsel %vm1920, %v6640, %v6255
  %v6678 = vsel %vm1920, %v6642, %v6257
  %v6680 = vsel %vm1920, %v6644, %v6259
  %v6682 = vsel %vm1920, %v6646, %v6261
  %v6684 = vsel %vm1920, %v6648, %v6263
  %v6686 = vsel %vm1920, %v6650, %v6265
  %v6688 = vsel %vm1920, %v6652, %v6267
  %v6690 = vsel %vm1920, %v6654, %v6269
  %v6692 = vsel %vm1920, %v6656, %v6271
  %v6694 = vsel %vm1920, %v6658, %v6273
  %v6696 = vsel %vm1920, %v6660, %v6275
  %v6698 = vsel %vm1920, %v6662, %v6277
  %v6700 = vsel %vm1920, %v6664, %v6279
  %v6702 = vsel %vm1920, %v6666, %v6281
  %v6704 = vsel %vm1920, %v6668, %v6283
  %v6706 = vsel %vm1920, %v6670, %v6285
  %v6708 = vsel %vm1957, %v6672, %v6380
  %v6710 = vsel %vm1957, %v6674, %v6382
  %v6712 = vsel %vm1957, %v6676, %v6384
  %v6714 = vsel %vm1957, %v6678, %v6386
  %v6716 = vsel %vm1957, %v6680, %v6388
  %v6718 = vsel %vm1957, %v6682, %v6390
  %v6720 = vsel %vm1957, %v6684, %v6392
  %v6722 = vsel %vm1957, %v6686, %v6394
  %v6724 = vsel %vm1957, %v6688, %v6396
  %v6726 = vsel %vm1957, %v6690, %v6398
  %v6728 = vsel %vm1957, %v6692, %v6400
  %v6730 = vsel %vm1957, %v6694, %v6402
  %v6732 = vsel %vm1957, %v6696, %v6404
  %v6734 = vsel %vm1957, %v6698, %v6406
  %v6736 = vsel %vm1957, %v6700, %v6408
  %v6738 = vsel %vm1957, %v6702, %v6410
  %v6740 = vsel %vm1957, %v6704, %v6412
  %v6742 = vsel %vm1957, %v6706, %v6414
  %v6744 = vsel %vm1994, %v6708, %v6456
  %v6746 = vsel %vm1994, %v6710, %v6458
  %v6748 = vsel %vm1994, %v6712, %v6460
  %v6750 = vsel %vm1994, %v6714, %v6462
  %v6752 = vsel %vm1994, %v6716, %v6464
  %v6754 = vsel %vm1994, %v6718, %v6466
  %v6756 = vsel %vm1994, %v6720, %v6468
  %v6758 = vsel %vm1994, %v6722, %v6470
  %v6760 = vsel %vm1994, %v6724, %v6472
  %v6762 = vsel %vm1994, %v6726, %v6474
  %v6764 = vsel %vm1994, %v6728, %v6476
  %v6766 = vsel %vm1994, %v6730, %v6478
  %v6768 = vsel %vm1994, %v6732, %v6480
  %v6770 = vsel %vm1994, %v6734, %v6482
  %v6772 = vsel %vm1994, %v6736, %v6484
  %v6774 = vsel %vm1994, %v6738, %v6486
  %v6776 = vsel %vm1994, %v6740, %v6488
  %v6778 = vsel %vm1994, %v6742, %v6490
  %v6779 = vsel %vm2046, %v6744, 0
  %v6781 = vsel %vm2046, %v6746, 0
  %v6783 = vsel %vm2046, %v6748, 0
  %v6785 = vsel %vm2046, %v6750, 0
  %v6787 = vsel %vm2046, %v6752, 0
  %v6789 = vsel %vm2046, %v6754, 0
  %v6791 = vsel %vm2046, %v6756, 0
  %v6793 = vsel %vm2046, %v6758, 0
  %v6795 = vsel %vm2046, %v6760, 0
  %v6797 = vsel %vm2046, %v6762, 0
  %v6799 = vsel %vm2046, %v6764, 0
  %v6801 = vsel %vm2046, %v6766, 0
  %v6803 = vsel %vm2046, %v6768, 0
  %v6805 = vsel %vm2046, %v6770, 0
  %v6807 = vsel %vm2046, %v6772, 0
  %v6809 = vsel %vm2046, %v6774, 0
  %v6811 = vsel %vm2046, %v6776, 0
  %v6813 = vsel %vm2046, %v6778, 0
  %6815 = vmatpush.bf16.msra.mxu0 0
  %6816 = vmatpush.bf16.msra.mxu0 0
  %6817 = vmatpush.bf16.msra.mxu0 0
  %6818 = vmatpush.bf16.msra.mxu0 0
  %6819 = vmatpush.bf16.msra.mxu0 0
  %6820 = vmatpush.bf16.msra.mxu0 %v2085
  %6821 = vmatpush.bf16.msra.mxu0 %v2042
  %6822 = vmatpush.bf16.msra.mxu0 %v2041
  %6823 = vmatmul.bf16.gmra.mxu0 %v6779
  %v6824 = vpop.f32.mrf.mxu0
  %v6825 = vadd.f32 0.0, %v6824
  %v6826 = vpop.f32.mrf.mxu0
  %v6827 = vadd.f32 0.0, %v6826
  %6828 = vmatmul.bf16.gmra.mxu0 %v6781
  %v6829 = vpop.f32.mrf.mxu0
  %v6830 = vadd.f32 0.0, %v6829
  %v6831 = vpop.f32.mrf.mxu0
  %v6832 = vadd.f32 0.0, %v6831
  %6833 = vmatmul.bf16.gmra.mxu0 %v6783
  %v6834 = vpop.f32.mrf.mxu0
  %v6835 = vadd.f32 0.0, %v6834
  %v6836 = vpop.f32.mrf.mxu0
  %v6837 = vadd.f32 0.0, %v6836
  %6838 = vmatmul.bf16.gmra.mxu0 %v6785
  %v6839 = vpop.f32.mrf.mxu0
  %v6840 = vadd.f32 0.0, %v6839
  %v6841 = vpop.f32.mrf.mxu0
  %v6842 = vadd.f32 0.0, %v6841
  %6843 = vmatmul.bf16.gmra.mxu0 %v6787
  %v6844 = vpop.f32.mrf.mxu0
  %v6845 = vadd.f32 0.0, %v6844
  %v6846 = vpop.f32.mrf.mxu0
  %v6847 = vadd.f32 0.0, %v6846
  %6848 = vmatmul.bf16.gmra.mxu0 %v6789
  %v6849 = vpop.f32.mrf.mxu0
  %v6850 = vadd.f32 0.0, %v6849
  %v6851 = vpop.f32.mrf.mxu0
  %v6852 = vadd.f32 0.0, %v6851
  %6853 = vmatmul.bf16.gmra.mxu0 %v6791
  %v6854 = vpop.f32.mrf.mxu0
  %v6855 = vadd.f32 0.0, %v6854
  %v6856 = vpop.f32.mrf.mxu0
  %v6857 = vadd.f32 0.0, %v6856
  %6858 = vmatmul.bf16.gmra.mxu0 %v6793
  %v6859 = vpop.f32.mrf.mxu0
  %v6860 = vadd.f32 0.0, %v6859
  %v6861 = vpop.f32.mrf.mxu0
  %v6862 = vadd.f32 0.0, %v6861
  %6863 = vmatmul.bf16.gmra.mxu0 %v6795
  %v6864 = vpop.f32.mrf.mxu0
  %v6865 = vadd.f32 0.0, %v6864
  %v6866 = vpop.f32.mrf.mxu0
  %v6867 = vadd.f32 0.0, %v6866
  %6868 = vmatmul.bf16.gmra.mxu0 %v6797
  %v6869 = vpop.f32.mrf.mxu0
  %v6870 = vadd.f32 0.0, %v6869
  %v6871 = vpop.f32.mrf.mxu0
  %v6872 = vadd.f32 0.0, %v6871
  %6873 = vmatmul.bf16.gmra.mxu0 %v6799
  %v6874 = vpop.f32.mrf.mxu0
  %v6875 = vadd.f32 0.0, %v6874
  %v6876 = vpop.f32.mrf.mxu0
  %v6877 = vadd.f32 0.0, %v6876
  %6878 = vmatmul.bf16.gmra.mxu0 %v6801
  %v6879 = vpop.f32.mrf.mxu0
  %v6880 = vadd.f32 0.0, %v6879
  %v6881 = vpop.f32.mrf.mxu0
  %v6882 = vadd.f32 0.0, %v6881
  %6883 = vmatmul.bf16.gmra.mxu0 %v6803
  %v6884 = vpop.f32.mrf.mxu0
  %v6885 = vadd.f32 0.0, %v6884
  %v6886 = vpop.f32.mrf.mxu0
  %v6887 = vadd.f32 0.0, %v6886
  %6888 = vmatmul.bf16.gmra.mxu0 %v6805
  %v6889 = vpop.f32.mrf.mxu0
  %v6890 = vadd.f32 0.0, %v6889
  %v6891 = vpop.f32.mrf.mxu0
  %v6892 = vadd.f32 0.0, %v6891
  %6893 = vmatmul.bf16.gmra.mxu0 %v6807
  %v6894 = vpop.f32.mrf.mxu0
  %v6895 = vadd.f32 0.0, %v6894
  %v6896 = vpop.f32.mrf.mxu0
  %v6897 = vadd.f32 0.0, %v6896
  %6898 = vmatmul.bf16.gmra.mxu0 %v6809
  %v6899 = vpop.f32.mrf.mxu0
  %v6900 = vadd.f32 0.0, %v6899
  %v6901 = vpop.f32.mrf.mxu0
  %v6902 = vadd.f32 0.0, %v6901
  %6903 = vmatmul.bf16.gmra.mxu0 %v6811
  %v6904 = vpop.f32.mrf.mxu0
  %v6905 = vadd.f32 0.0, %v6904
  %v6906 = vpop.f32.mrf.mxu0
  %v6907 = vadd.f32 0.0, %v6906
  %6908 = vmatmul.bf16.gmra.mxu0 %v6813
  %v6909 = vpop.f32.mrf.mxu0
  %v6910 = vadd.f32 0.0, %v6909
  %v6911 = vpop.f32.mrf.mxu0
  %v6912 = vadd.f32 0.0, %v6911
  %6913 = vdwg.mxu0
  %v6914 = vmul.f32 %v6825, %v2187
  %v6915 = vmul.f32 %v6827, %v2187
  %v6916 = vmul.f32 %v6830, %v2187
  %v6917 = vmul.f32 %v6832, %v2187
  %v6918 = vmul.f32 %v6835, %v2187
  %v6919 = vmul.f32 %v6837, %v2187
  %v6920 = vmul.f32 %v6840, %v2187
  %v6921 = vmul.f32 %v6842, %v2187
  %v6922 = vmul.f32 %v6845, %v2187
  %v6923 = vmul.f32 %v6847, %v2187
  %v6924 = vmul.f32 %v6850, %v2187
  %v6925 = vmul.f32 %v6852, %v2187
  %v6926 = vmul.f32 %v6855, %v2187
  %v6927 = vmul.f32 %v6857, %v2187
  %v6928 = vmul.f32 %v6860, %v2187
  %v6929 = vmul.f32 %v6862, %v2187
  %v6930 = vmul.f32 %v6865, %v2187
  %v6931 = vmul.f32 %v6867, %v2187
  %v6932 = vmul.f32 %v6870, %v2187
  %v6933 = vmul.f32 %v6872, %v2187
  %v6934 = vmul.f32 %v6875, %v2187
  %v6935 = vmul.f32 %v6877, %v2187
  %v6936 = vmul.f32 %v6880, %v2187
  %v6937 = vmul.f32 %v6882, %v2187
  %v6938 = vmul.f32 %v6885, %v2187
  %v6939 = vmul.f32 %v6887, %v2187
  %v6940 = vmul.f32 %v6890, %v2187
  %v6941 = vmul.f32 %v6892, %v2187
  %v6942 = vmul.f32 %v6895, %v2187
  %v6943 = vmul.f32 %v6897, %v2187
  %v6944 = vmul.f32 %v6900, %v2187
  %v6945 = vmul.f32 %v6902, %v2187
  %v6946 = vmul.f32 %v6905, %v2187
  %v6947 = vmul.f32 %v6907, %v2187
  %v6948 = vmul.f32 %v6910, %v2187
  %v6949 = vmul.f32 %v6912, %v2187
  %v6950 = vadd.f32 %v6914, %v2226
  %v6951 = vadd.f32 %v6915, %v2226
  %v6952 = vadd.f32 %v6916, %v2226
  %v6953 = vadd.f32 %v6917, %v2226
  %v6954 = vadd.f32 %v6918, %v2226
  %v6955 = vadd.f32 %v6919, %v2226
  %v6956 = vadd.f32 %v6920, %v2226
  %v6957 = vadd.f32 %v6921, %v2226
  %v6958 = vadd.f32 %v6922, %v2226
  %v6959 = vadd.f32 %v6923, %v2226
  %v6960 = vadd.f32 %v6924, %v2226
  %v6961 = vadd.f32 %v6925, %v2226
  %v6962 = vadd.f32 %v6926, %v2226
  %v6963 = vadd.f32 %v6927, %v2226
  %v6964 = vadd.f32 %v6928, %v2226
  %v6965 = vadd.f32 %v6929, %v2226
  %v6966 = vadd.f32 %v6930, %v2226
  %v6967 = vadd.f32 %v6931, %v2226
  %v6968 = vadd.f32 %v6932, %v2226
  %v6969 = vadd.f32 %v6933, %v2226
  %v6970 = vadd.f32 %v6934, %v2226
  %v6971 = vadd.f32 %v6935, %v2226
  %v6972 = vadd.f32 %v6936, %v2226
  %v6973 = vadd.f32 %v6937, %v2226
  %v6974 = vadd.f32 %v6938, %v2226
  %v6975 = vadd.f32 %v6939, %v2226
  %v6976 = vadd.f32 %v6940, %v2226
  %v6977 = vadd.f32 %v6941, %v2226
  %v6978 = vadd.f32 %v6942, %v2226
  %v6979 = vadd.f32 %v6943, %v2226
  %v6980 = vadd.f32 %v6944, %v2226
  %v6981 = vadd.f32 %v6945, %v2226
  %v6982 = vadd.f32 %v6946, %v2226
  %v6983 = vadd.f32 %v6947, %v2226
  %v6984 = vadd.f32 %v6948, %v2226
  %v6985 = vadd.f32 %v6949, %v2226
  %v6986 = vmax.f32 %v6950, 0.0
  %v6987 = vmax.f32 %v6951, 0.0
  %v6988 = vmax.f32 %v6952, 0.0
  %v6989 = vmax.f32 %v6953, 0.0
  %v6990 = vmax.f32 %v6954, 0.0
  %v6991 = vmax.f32 %v6955, 0.0
  %v6992 = vmax.f32 %v6956, 0.0
  %v6993 = vmax.f32 %v6957, 0.0
  %v6994 = vmax.f32 %v6958, 0.0
  %v6995 = vmax.f32 %v6959, 0.0
  %v6996 = vmax.f32 %v6960, 0.0
  %v6997 = vmax.f32 %v6961, 0.0
  %v6998 = vmax.f32 %v6962, 0.0
  %v6999 = vmax.f32 %v6963, 0.0
  %v7000 = vmax.f32 %v6964, 0.0
  %v7001 = vmax.f32 %v6965, 0.0
  %v7002 = vmax.f32 %v6966, 0.0
  %v7003 = vmax.f32 %v6967, 0.0
  %v7004 = vmax.f32 %v6968, 0.0
  %v7005 = vmax.f32 %v6969, 0.0
  %v7006 = vmax.f32 %v6970, 0.0
  %v7007 = vmax.f32 %v6971, 0.0
  %v7008 = vmax.f32 %v6972, 0.0
  %v7009 = vmax.f32 %v6973, 0.0
  %v7010 = vmax.f32 %v6974, 0.0
  %v7011 = vmax.f32 %v6975, 0.0
  %v7012 = vmax.f32 %v6976, 0.0
  %v7013 = vmax.f32 %v6977, 0.0
  %v7014 = vmax.f32 %v6978, 0.0
  %v7015 = vmax.f32 %v6979, 0.0
  %v7016 = vmax.f32 %v6980, 0.0
  %v7017 = vmax.f32 %v6981, 0.0
  %v7018 = vmax.f32 %v6982, 0.0
  %v7019 = vmax.f32 %v6983, 0.0
  %v7020 = vmax.f32 %v6984, 0.0
  %v7021 = vmax.f32 %v6985, 0.0
  %v7022 = vpack.c.bf16 %v6986, %v6986
  %v7023 = vpack.c.bf16 %v6987, %v6987
  %v7024 = vpack.c.bf16 %v6988, %v6988
  %v7025 = vpack.c.bf16 %v6989, %v6989
  %v7026 = vpack.c.bf16 %v6990, %v6990
  %v7027 = vpack.c.bf16 %v6991, %v6991
  %v7028 = vpack.c.bf16 %v6992, %v6992
  %v7029 = vpack.c.bf16 %v6993, %v6993
  %v7030 = vpack.c.bf16 %v6994, %v6994
  %v7031 = vpack.c.bf16 %v6995, %v6995
  %v7032 = vpack.c.bf16 %v6996, %v6996
  %v7033 = vpack.c.bf16 %v6997, %v6997
  %v7034 = vpack.c.bf16 %v6998, %v6998
  %v7035 = vpack.c.bf16 %v6999, %v6999
  %v7036 = vpack.c.bf16 %v7000, %v7000
  %v7037 = vpack.c.bf16 %v7001, %v7001
  %v7038 = vpack.c.bf16 %v7002, %v7002
  %v7039 = vpack.c.bf16 %v7003, %v7003
  %v7040 = vpack.c.bf16 %v7004, %v7004
  %v7041 = vpack.c.bf16 %v7005, %v7005
  %v7042 = vpack.c.bf16 %v7006, %v7006
  %v7043 = vpack.c.bf16 %v7007, %v7007
  %v7044 = vpack.c.bf16 %v7008, %v7008
  %v7045 = vpack.c.bf16 %v7009, %v7009
  %v7046 = vpack.c.bf16 %v7010, %v7010
  %v7047 = vpack.c.bf16 %v7011, %v7011
  %v7048 = vpack.c.bf16 %v7012, %v7012
  %v7049 = vpack.c.bf16 %v7013, %v7013
  %v7050 = vpack.c.bf16 %v7014, %v7014
  %v7051 = vpack.c.bf16 %v7015, %v7015
  %v7052 = vpack.c.bf16 %v7016, %v7016
  %v7053 = vpack.c.bf16 %v7017, %v7017
  %v7054 = vpack.c.bf16 %v7018, %v7018
  %v7055 = vpack.c.bf16 %v7019, %v7019
  %v7056 = vpack.c.bf16 %v7020, %v7020
  %v7057 = vpack.c.bf16 %v7021, %v7021
  %v7060 = vunpack.c.l.b16 %v7022
  %v7061 = vunpack.c.l.b16 %v7023
  %v7062 = vpack.c.b16 %v7061, %v7060
  %v7064 = vshrl.u32 %v7062, 16
  %v7066 = vrot.slane %v7064, 7
  %v7067 = vshll.u32 %v7062, 16
  %v7069 = vor.u32 %v7066, %v7067
  %v7072 = vsel %vm248, 0, %v7069
  %v7073 = vsel %vm248, %v7066, 0
  %v7076 = vunpack.c.l.b16 %v7072
  %v7077 = vunpack.c.h.b16 %v7072
  %v7078 = vunpack.c.l.b16 %v7073
  %v7079 = vpack.c.b16 %v7076, %v7076
  %v7080 = vpack.c.b16 %v7077, %v7077
  %v7081 = vpack.c.b16 %v7078, %v7078
  %v7082 = vrot.slane %v7079, 7
  %v7083 = vrot.slane %v7082, 4
  %v7084 = vrot.slane %v7080, 7
  %v7085 = vsel %vm260, %v7083, %v7084
  %v7086 = vrot.slane %v7084, 4
  %v7087 = vrot.slane %v7081, 7
  %v7088 = vsel %vm260, %v7086, %v7087
  %7092 = vst.msk [vmem:[#allocation3 + $0x8] sm:$0xe] %vm61, %v7082
  %7093 = vst.msk [vmem:[#allocation3 + $0xc] sm:$0xf] %vm56, %v7085
  %7094 = vst.msk [vmem:[#allocation3 + $0x10] sm:$0x3] %vm2372, %v7088
  %v7098 = vunpack.c.l.b16 %v7024
  %v7099 = vunpack.c.l.b16 %v7025
  %v7100 = vunpack.c.l.b16 %v7026
  %v7101 = vpack.c.b16 %v7099, %v7098
  %v7102 = vpack.c.b16 %v7100, %v7100
  %v7104 = vshrl.u32 %v7101, 16
  %v7106 = vshll.u32 %v7101, 16
  %v7108 = vrot.slane %v7106, 1
  %v7109 = vor.u32 %v7104, %v7108
  %v7111 = vshll.u32 %v7102, 16
  %v7113 = vrot.slane %v7111, 1
  %v7114 = vsel %vm953, %v7109, %v7113
  %v7115 = vshrl.u32 %v7102, 16
  %v7119 = vsel %vm248, 0, %v7114
  %v7120 = vsel %vm248, %v7115, 0
  %v7123 = vunpack.c.l.b16 %v7119
  %v7124 = vunpack.c.h.b16 %v7119
  %v7125 = vunpack.c.l.b16 %v7120
  %v7126 = vpack.c.b16 %v7123, %v7123
  %v7127 = vpack.c.b16 %v7124, %v7124
  %v7128 = vpack.c.b16 %v7125, %v7125
  %v7129 = vrot.slane %v7126, 6
  %v7130 = vrot.slane %v7129, 4
  %v7131 = vrot.slane %v7127, 6
  %v7132 = vsel %vm301, %v7130, %v7131
  %v7133 = vrot.slane %v7131, 4
  %v7134 = vrot.slane %v7128, 6
  %v7135 = vsel %vm301, %v7133, %v7134
  %7139 = vst.msk [vmem:[#allocation3 + $0x10] sm:$0xc] %vm2418, %v7129
  %7140 = vst.msk [vmem:[#allocation3 + $0x14] sm:$0xf] %vm56, %v7132
  %7141 = vst.msk [vmem:[#allocation3 + $0x18] sm:$0x7] %vm64, %v7135
  %v7144 = vunpack.c.l.b16 %v7027
  %v7145 = vunpack.c.l.b16 %v7028
  %v7146 = vpack.c.b16 %v7144, %v7100
  %v7147 = vpack.c.b16 %v7145, %v7145
  %v7149 = vshrl.u32 %v7146, 16
  %v7151 = vrot.slane %v7149, 1
  %v7152 = vshll.u32 %v7146, 16
  %v7154 = vrot.slane %v7152, 2
  %v7155 = vor.u32 %v7151, %v7154
  %v7157 = vshrl.u32 %v7147, 16
  %v7159 = vrot.slane %v7157, 1
  %v7160 = vshll.u32 %v7147, 16
  %v7162 = vrot.slane %v7160, 2
  %v7163 = vor.u32 %v7159, %v7162
  %v7164 = vsel %vm1271, %v7155, %v7163
  %v7167 = vsel %vm248, 0, %v7164
  %v7168 = vsel %vm248, %v7159, 0
  %v7171 = vunpack.c.l.b16 %v7167
  %v7172 = vunpack.c.h.b16 %v7167
  %v7173 = vunpack.c.l.b16 %v7168
  %v7174 = vpack.c.b16 %v7171, %v7171
  %v7175 = vpack.c.b16 %v7172, %v7172
  %v7176 = vpack.c.b16 %v7173, %v7173
  %v7177 = vrot.slane %v7174, 5
  %v7178 = vrot.slane %v7177, 4
  %v7179 = vrot.slane %v7175, 5
  %v7180 = vsel %vm342, %v7178, %v7179
  %v7181 = vrot.slane %v7179, 4
  %v7182 = vrot.slane %v7176, 5
  %v7183 = vsel %vm342, %v7181, %v7182
  %7187 = vst.msk [vmem:[#allocation3 + $0x18] sm:$0x8] %vm2467, %v7177
  %7188 = vst.msk [vmem:[#allocation3 + $0x1c] sm:$0xf] %vm56, %v7180
  %7189 = vst.msk [vmem:[#allocation3 + $0x20] sm:$0xf] %vm56, %v7183
  %v7192 = vunpack.c.l.b16 %v7029
  %v7193 = vunpack.c.l.b16 %v7030
  %v7194 = vpack.c.b16 %v7192, %v7145
  %v7195 = vpack.c.b16 %v7193, %v7193
  %v7197 = vshrl.u32 %v7194, 16
  %v7199 = vrot.slane %v7197, 2
  %v7200 = vshll.u32 %v7194, 16
  %v7202 = vrot.slane %v7200, 3
  %v7203 = vor.u32 %v7199, %v7202
  %v7205 = vshrl.u32 %v7195, 16
  %v7207 = vrot.slane %v7205, 2
  %v7208 = vshll.u32 %v7195, 16
  %v7210 = vrot.slane %v7208, 3
  %v7211 = vor.u32 %v7207, %v7210
  %v7212 = vsel %vm1531, %v7203, %v7211
  %v7215 = vsel %vm248, 0, %v7212
  %v7216 = vsel %vm248, %v7207, 0
  %v7219 = vunpack.c.l.b16 %v7215
  %v7220 = vunpack.c.h.b16 %v7215
  %v7221 = vunpack.c.l.b16 %v7216
  %v7222 = vpack.c.b16 %v7219, %v7219
  %v7223 = vpack.c.b16 %v7220, %v7220
  %v7224 = vpack.c.b16 %v7221, %v7221
  %7228 = vst.msk [vmem:[#allocation3 + $0x24] sm:$0xf] %vm56, %v7222
  %7229 = vst.msk [vmem:[#allocation3 + $0x28] sm:$0xf] %vm56, %v7223
  %7230 = vst.msk [vmem:[#allocation3 + $0x2c] sm:$0x1] %vm59, %v7224
  %v7233 = vunpack.c.l.b16 %v7031
  %v7234 = vunpack.c.l.b16 %v7032
  %v7235 = vpack.c.b16 %v7234, %v7233
  %v7237 = vshrl.u32 %v7235, 16
  %v7239 = vrot.slane %v7237, 7
  %v7240 = vshll.u32 %v7235, 16
  %v7242 = vor.u32 %v7239, %v7240
  %v7245 = vsel %vm248, 0, %v7242
  %v7246 = vsel %vm248, %v7239, 0
  %v7249 = vunpack.c.l.b16 %v7245
  %v7250 = vunpack.c.h.b16 %v7245
  %v7251 = vunpack.c.l.b16 %v7246
  %v7252 = vpack.c.b16 %v7249, %v7249
  %v7253 = vpack.c.b16 %v7250, %v7250
  %v7254 = vpack.c.b16 %v7251, %v7251
  %v7255 = vrot.slane %v7252, 7
  %v7256 = vrot.slane %v7255, 4
  %v7257 = vrot.slane %v7253, 7
  %v7258 = vsel %vm260, %v7256, %v7257
  %v7259 = vrot.slane %v7257, 4
  %v7260 = vrot.slane %v7254, 7
  %v7261 = vsel %vm260, %v7259, %v7260
  %7265 = vst.msk [vmem:[#allocation3 + $0x2c] sm:$0xe] %vm61, %v7255
  %7266 = vst.msk [vmem:[#allocation3 + $0x30] sm:$0xf] %vm56, %v7258
  %7267 = vst.msk [vmem:[#allocation3 + $0x34] sm:$0x3] %vm2372, %v7261
  %v7271 = vunpack.c.l.b16 %v7033
  %v7272 = vunpack.c.l.b16 %v7034
  %v7273 = vunpack.c.l.b16 %v7035
  %v7274 = vpack.c.b16 %v7272, %v7271
  %v7275 = vpack.c.b16 %v7273, %v7273
  %v7277 = vshrl.u32 %v7274, 16
  %v7279 = vshll.u32 %v7274, 16
  %v7281 = vrot.slane %v7279, 1
  %v7282 = vor.u32 %v7277, %v7281
  %v7284 = vshll.u32 %v7275, 16
  %v7286 = vrot.slane %v7284, 1
  %v7287 = vsel %vm953, %v7282, %v7286
  %v7288 = vshrl.u32 %v7275, 16
  %v7292 = vsel %vm248, 0, %v7287
  %v7293 = vsel %vm248, %v7288, 0
  %v7296 = vunpack.c.l.b16 %v7292
  %v7297 = vunpack.c.h.b16 %v7292
  %v7298 = vunpack.c.l.b16 %v7293
  %v7299 = vpack.c.b16 %v7296, %v7296
  %v7300 = vpack.c.b16 %v7297, %v7297
  %v7301 = vpack.c.b16 %v7298, %v7298
  %v7302 = vrot.slane %v7299, 6
  %v7303 = vrot.slane %v7302, 4
  %v7304 = vrot.slane %v7300, 6
  %v7305 = vsel %vm301, %v7303, %v7304
  %v7306 = vrot.slane %v7304, 4
  %v7307 = vrot.slane %v7301, 6
  %v7308 = vsel %vm301, %v7306, %v7307
  %7312 = vst.msk [vmem:[#allocation3 + $0x34] sm:$0xc] %vm2418, %v7302
  %7313 = vst.msk [vmem:[#allocation3 + $0x38] sm:$0xf] %vm56, %v7305
  %7314 = vst.msk [vmem:[#allocation3 + $0x3c] sm:$0x7] %vm64, %v7308
  %v7317 = vunpack.c.l.b16 %v7036
  %v7318 = vunpack.c.l.b16 %v7037
  %v7319 = vpack.c.b16 %v7317, %v7273
  %v7320 = vpack.c.b16 %v7318, %v7318
  %v7322 = vshrl.u32 %v7319, 16
  %v7324 = vrot.slane %v7322, 1
  %v7325 = vshll.u32 %v7319, 16
  %v7327 = vrot.slane %v7325, 2
  %v7328 = vor.u32 %v7324, %v7327
  %v7330 = vshrl.u32 %v7320, 16
  %v7332 = vrot.slane %v7330, 1
  %v7333 = vshll.u32 %v7320, 16
  %v7335 = vrot.slane %v7333, 2
  %v7336 = vor.u32 %v7332, %v7335
  %v7337 = vsel %vm1271, %v7328, %v7336
  %v7340 = vsel %vm248, 0, %v7337
  %v7341 = vsel %vm248, %v7332, 0
  %v7344 = vunpack.c.l.b16 %v7340
  %v7345 = vunpack.c.h.b16 %v7340
  %v7346 = vunpack.c.l.b16 %v7341
  %v7347 = vpack.c.b16 %v7344, %v7344
  %v7348 = vpack.c.b16 %v7345, %v7345
  %v7349 = vpack.c.b16 %v7346, %v7346
  %v7350 = vrot.slane %v7347, 5
  %v7351 = vrot.slane %v7350, 4
  %v7352 = vrot.slane %v7348, 5
  %v7353 = vsel %vm342, %v7351, %v7352
  %v7354 = vrot.slane %v7352, 4
  %v7355 = vrot.slane %v7349, 5
  %v7356 = vsel %vm342, %v7354, %v7355
  %7360 = vst.msk [vmem:[#allocation3 + $0x3c] sm:$0x8] %vm2467, %v7350
  %7361 = vst.msk [vmem:[#allocation3 + $0x40] sm:$0xf] %vm56, %v7353
  %7362 = vst.msk [vmem:[#allocation3 + $0x44] sm:$0xf] %vm56, %v7356
  %v7365 = vunpack.c.l.b16 %v7038
  %v7366 = vunpack.c.l.b16 %v7039
  %v7367 = vpack.c.b16 %v7365, %v7318
  %v7368 = vpack.c.b16 %v7366, %v7366
  %v7370 = vshrl.u32 %v7367, 16
  %v7372 = vrot.slane %v7370, 2
  %v7373 = vshll.u32 %v7367, 16
  %v7375 = vrot.slane %v7373, 3
  %v7376 = vor.u32 %v7372, %v7375
  %v7378 = vshrl.u32 %v7368, 16
  %v7380 = vrot.slane %v7378, 2
  %v7381 = vshll.u32 %v7368, 16
  %v7383 = vrot.slane %v7381, 3
  %v7384 = vor.u32 %v7380, %v7383
  %v7385 = vsel %vm1531, %v7376, %v7384
  %v7388 = vsel %vm248, 0, %v7385
  %v7389 = vsel %vm248, %v7380, 0
  %v7392 = vunpack.c.l.b16 %v7388
  %v7393 = vunpack.c.h.b16 %v7388
  %v7394 = vunpack.c.l.b16 %v7389
  %v7395 = vpack.c.b16 %v7392, %v7392
  %v7396 = vpack.c.b16 %v7393, %v7393
  %v7397 = vpack.c.b16 %v7394, %v7394
  %7401 = vst.msk [vmem:[#allocation3 + $0x48] sm:$0xf] %vm56, %v7395
  %7402 = vst.msk [vmem:[#allocation3 + $0x4c] sm:$0xf] %vm56, %v7396
  %7403 = vst.msk [vmem:[#allocation3 + $0x50] sm:$0x1] %vm59, %v7397
  %v7406 = vunpack.c.l.b16 %v7040
  %v7407 = vunpack.c.l.b16 %v7041
  %v7408 = vpack.c.b16 %v7407, %v7406
  %v7410 = vshrl.u32 %v7408, 16
  %v7412 = vrot.slane %v7410, 7
  %v7413 = vshll.u32 %v7408, 16
  %v7415 = vor.u32 %v7412, %v7413
  %v7418 = vsel %vm248, 0, %v7415
  %v7419 = vsel %vm248, %v7412, 0
  %v7422 = vunpack.c.l.b16 %v7418
  %v7423 = vunpack.c.h.b16 %v7418
  %v7424 = vunpack.c.l.b16 %v7419
  %v7425 = vpack.c.b16 %v7422, %v7422
  %v7426 = vpack.c.b16 %v7423, %v7423
  %v7427 = vpack.c.b16 %v7424, %v7424
  %v7428 = vrot.slane %v7425, 7
  %v7429 = vrot.slane %v7428, 4
  %v7430 = vrot.slane %v7426, 7
  %v7431 = vsel %vm260, %v7429, %v7430
  %v7432 = vrot.slane %v7430, 4
  %v7433 = vrot.slane %v7427, 7
  %v7434 = vsel %vm260, %v7432, %v7433
  %7438 = vst.msk [vmem:[#allocation3 + $0x50] sm:$0xe] %vm61, %v7428
  %7439 = vst.msk [vmem:[#allocation3 + $0x54] sm:$0xf] %vm56, %v7431
  %7440 = vst.msk [vmem:[#allocation3 + $0x58] sm:$0x3] %vm2372, %v7434
  %v7444 = vunpack.c.l.b16 %v7042
  %v7445 = vunpack.c.l.b16 %v7043
  %v7446 = vunpack.c.l.b16 %v7044
  %v7447 = vpack.c.b16 %v7445, %v7444
  %v7448 = vpack.c.b16 %v7446, %v7446
  %v7450 = vshrl.u32 %v7447, 16
  %v7452 = vshll.u32 %v7447, 16
  %v7454 = vrot.slane %v7452, 1
  %v7455 = vor.u32 %v7450, %v7454
  %v7457 = vshll.u32 %v7448, 16
  %v7459 = vrot.slane %v7457, 1
  %v7460 = vsel %vm953, %v7455, %v7459
  %v7461 = vshrl.u32 %v7448, 16
  %v7465 = vsel %vm248, 0, %v7460
  %v7466 = vsel %vm248, %v7461, 0
  %v7469 = vunpack.c.l.b16 %v7465
  %v7470 = vunpack.c.h.b16 %v7465
  %v7471 = vunpack.c.l.b16 %v7466
  %v7472 = vpack.c.b16 %v7469, %v7469
  %v7473 = vpack.c.b16 %v7470, %v7470
  %v7474 = vpack.c.b16 %v7471, %v7471
  %v7475 = vrot.slane %v7472, 6
  %v7476 = vrot.slane %v7475, 4
  %v7477 = vrot.slane %v7473, 6
  %v7478 = vsel %vm301, %v7476, %v7477
  %v7479 = vrot.slane %v7477, 4
  %v7480 = vrot.slane %v7474, 6
  %v7481 = vsel %vm301, %v7479, %v7480
  %7485 = vst.msk [vmem:[#allocation3 + $0x58] sm:$0xc] %vm2418, %v7475
  %7486 = vst.msk [vmem:[#allocation3 + $0x5c] sm:$0xf] %vm56, %v7478
  %7487 = vst.msk [vmem:[#allocation3 + $0x60] sm:$0x7] %vm64, %v7481
  %v7490 = vunpack.c.l.b16 %v7045
  %v7491 = vunpack.c.l.b16 %v7046
  %v7492 = vpack.c.b16 %v7490, %v7446
  %v7493 = vpack.c.b16 %v7491, %v7491
  %v7495 = vshrl.u32 %v7492, 16
  %v7497 = vrot.slane %v7495, 1
  %v7498 = vshll.u32 %v7492, 16
  %v7500 = vrot.slane %v7498, 2
  %v7501 = vor.u32 %v7497, %v7500
  %v7503 = vshrl.u32 %v7493, 16
  %v7505 = vrot.slane %v7503, 1
  %v7506 = vshll.u32 %v7493, 16
  %v7508 = vrot.slane %v7506, 2
  %v7509 = vor.u32 %v7505, %v7508
  %v7510 = vsel %vm1271, %v7501, %v7509
  %v7513 = vsel %vm248, 0, %v7510
  %v7514 = vsel %vm248, %v7505, 0
  %v7517 = vunpack.c.l.b16 %v7513
  %v7518 = vunpack.c.h.b16 %v7513
  %v7519 = vunpack.c.l.b16 %v7514
  %v7520 = vpack.c.b16 %v7517, %v7517
  %v7521 = vpack.c.b16 %v7518, %v7518
  %v7522 = vpack.c.b16 %v7519, %v7519
  %v7523 = vrot.slane %v7520, 5
  %v7524 = vrot.slane %v7523, 4
  %v7525 = vrot.slane %v7521, 5
  %v7526 = vsel %vm342, %v7524, %v7525
  %v7527 = vrot.slane %v7525, 4
  %v7528 = vrot.slane %v7522, 5
  %v7529 = vsel %vm342, %v7527, %v7528
  %7533 = vst.msk [vmem:[#allocation3 + $0x60] sm:$0x8] %vm2467, %v7523
  %7534 = vst.msk [vmem:[#allocation3 + $0x64] sm:$0xf] %vm56, %v7526
  %7535 = vst.msk [vmem:[#allocation3 + $0x68] sm:$0xf] %vm56, %v7529
  %v7538 = vunpack.c.l.b16 %v7047
  %v7539 = vunpack.c.l.b16 %v7048
  %v7540 = vpack.c.b16 %v7538, %v7491
  %v7541 = vpack.c.b16 %v7539, %v7539
  %v7543 = vshrl.u32 %v7540, 16
  %v7545 = vrot.slane %v7543, 2
  %v7546 = vshll.u32 %v7540, 16
  %v7548 = vrot.slane %v7546, 3
  %v7549 = vor.u32 %v7545, %v7548
  %v7551 = vshrl.u32 %v7541, 16
  %v7553 = vrot.slane %v7551, 2
  %v7554 = vshll.u32 %v7541, 16
  %v7556 = vrot.slane %v7554, 3
  %v7557 = vor.u32 %v7553, %v7556
  %v7558 = vsel %vm1531, %v7549, %v7557
  %v7561 = vsel %vm248, 0, %v7558
  %v7562 = vsel %vm248, %v7553, 0
  %v7565 = vunpack.c.l.b16 %v7561
  %v7566 = vunpack.c.h.b16 %v7561
  %v7567 = vunpack.c.l.b16 %v7562
  %v7568 = vpack.c.b16 %v7565, %v7565
  %v7569 = vpack.c.b16 %v7566, %v7566
  %v7570 = vpack.c.b16 %v7567, %v7567
  %7574 = vst.msk [vmem:[#allocation3 + $0x6c] sm:$0xf] %vm56, %v7568
  %7575 = vst.msk [vmem:[#allocation3 + $0x70] sm:$0xf] %vm56, %v7569
  %7576 = vst.msk [vmem:[#allocation3 + $0x74] sm:$0x1] %vm59, %v7570
  %v7579 = vunpack.c.l.b16 %v7049
  %v7580 = vunpack.c.l.b16 %v7050
  %v7581 = vpack.c.b16 %v7580, %v7579
  %v7583 = vshrl.u32 %v7581, 16
  %v7585 = vrot.slane %v7583, 7
  %v7586 = vshll.u32 %v7581, 16
  %v7588 = vor.u32 %v7585, %v7586
  %v7591 = vsel %vm248, 0, %v7588
  %v7592 = vsel %vm248, %v7585, 0
  %v7595 = vunpack.c.l.b16 %v7591
  %v7596 = vunpack.c.h.b16 %v7591
  %v7597 = vunpack.c.l.b16 %v7592
  %v7598 = vpack.c.b16 %v7595, %v7595
  %v7599 = vpack.c.b16 %v7596, %v7596
  %v7600 = vpack.c.b16 %v7597, %v7597
  %v7601 = vrot.slane %v7598, 7
  %v7602 = vrot.slane %v7601, 4
  %v7603 = vrot.slane %v7599, 7
  %v7604 = vsel %vm260, %v7602, %v7603
  %v7605 = vrot.slane %v7603, 4
  %v7606 = vrot.slane %v7600, 7
  %v7607 = vsel %vm260, %v7605, %v7606
  %7611 = vst.msk [vmem:[#allocation3 + $0x74] sm:$0xe] %vm61, %v7601
  %7612 = vst.msk [vmem:[#allocation3 + $0x78] sm:$0xf] %vm56, %v7604
  %7613 = vst.msk [vmem:[#allocation3 + $0x7c] sm:$0x3] %vm2372, %v7607
  %v7617 = vunpack.c.l.b16 %v7051
  %v7618 = vunpack.c.l.b16 %v7052
  %v7619 = vunpack.c.l.b16 %v7053
  %v7620 = vpack.c.b16 %v7618, %v7617
  %v7621 = vpack.c.b16 %v7619, %v7619
  %v7623 = vshrl.u32 %v7620, 16
  %v7625 = vshll.u32 %v7620, 16
  %v7627 = vrot.slane %v7625, 1
  %v7628 = vor.u32 %v7623, %v7627
  %v7630 = vshll.u32 %v7621, 16
  %v7632 = vrot.slane %v7630, 1
  %v7633 = vsel %vm953, %v7628, %v7632
  %v7634 = vshrl.u32 %v7621, 16
  %v7638 = vsel %vm248, 0, %v7633
  %v7639 = vsel %vm248, %v7634, 0
  %v7642 = vunpack.c.l.b16 %v7638
  %v7643 = vunpack.c.h.b16 %v7638
  %v7644 = vunpack.c.l.b16 %v7639
  %v7645 = vpack.c.b16 %v7642, %v7642
  %v7646 = vpack.c.b16 %v7643, %v7643
  %v7647 = vpack.c.b16 %v7644, %v7644
  %v7648 = vrot.slane %v7645, 6
  %v7649 = vrot.slane %v7648, 4
  %v7650 = vrot.slane %v7646, 6
  %v7651 = vsel %vm301, %v7649, %v7650
  %v7652 = vrot.slane %v7650, 4
  %v7653 = vrot.slane %v7647, 6
  %v7654 = vsel %vm301, %v7652, %v7653
  %7658 = vst.msk [vmem:[#allocation3 + $0x7c] sm:$0xc] %vm2418, %v7648
  %7659 = vst.msk [vmem:[#allocation3 + $0x80] sm:$0xf] %vm56, %v7651
  %7660 = vst.msk [vmem:[#allocation3 + $0x84] sm:$0x7] %vm64, %v7654
  %v7663 = vunpack.c.l.b16 %v7054
  %v7664 = vunpack.c.l.b16 %v7055
  %v7665 = vpack.c.b16 %v7663, %v7619
  %v7666 = vpack.c.b16 %v7664, %v7664
  %v7668 = vshrl.u32 %v7665, 16
  %v7670 = vrot.slane %v7668, 1
  %v7671 = vshll.u32 %v7665, 16
  %v7673 = vrot.slane %v7671, 2
  %v7674 = vor.u32 %v7670, %v7673
  %v7676 = vshrl.u32 %v7666, 16
  %v7678 = vrot.slane %v7676, 1
  %v7679 = vshll.u32 %v7666, 16
  %v7681 = vrot.slane %v7679, 2
  %v7682 = vor.u32 %v7678, %v7681
  %v7683 = vsel %vm1271, %v7674, %v7682
  %v7686 = vsel %vm248, 0, %v7683
  %v7687 = vsel %vm248, %v7678, 0
  %v7690 = vunpack.c.l.b16 %v7686
  %v7691 = vunpack.c.h.b16 %v7686
  %v7692 = vunpack.c.l.b16 %v7687
  %v7693 = vpack.c.b16 %v7690, %v7690
  %v7694 = vpack.c.b16 %v7691, %v7691
  %v7695 = vpack.c.b16 %v7692, %v7692
  %v7696 = vrot.slane %v7693, 5
  %v7697 = vrot.slane %v7696, 4
  %v7698 = vrot.slane %v7694, 5
  %v7699 = vsel %vm342, %v7697, %v7698
  %v7700 = vrot.slane %v7698, 4
  %v7701 = vrot.slane %v7695, 5
  %v7702 = vsel %vm342, %v7700, %v7701
  %7706 = vst.msk [vmem:[#allocation3 + $0x84] sm:$0x8] %vm2467, %v7696
  %7707 = vst.msk [vmem:[#allocation3 + $0x88] sm:$0xf] %vm56, %v7699
  %7708 = vst.msk [vmem:[#allocation3 + $0x8c] sm:$0xf] %vm56, %v7702
  %v7711 = vunpack.c.l.b16 %v7056
  %v7712 = vunpack.c.l.b16 %v7057
  %v7713 = vpack.c.b16 %v7711, %v7664
  %v7714 = vpack.c.b16 %v7712, %v7712
  %v7716 = vshrl.u32 %v7713, 16
  %v7718 = vrot.slane %v7716, 2
  %v7719 = vshll.u32 %v7713, 16
  %v7721 = vrot.slane %v7719, 3
  %v7722 = vor.u32 %v7718, %v7721
  %v7724 = vshrl.u32 %v7714, 16
  %v7726 = vrot.slane %v7724, 2
  %v7727 = vshll.u32 %v7714, 16
  %v7729 = vrot.slane %v7727, 3
  %v7730 = vor.u32 %v7726, %v7729
  %v7731 = vsel %vm1531, %v7722, %v7730
  %v7734 = vsel %vm248, 0, %v7731
  %v7735 = vsel %vm248, %v7726, 0
  %v7738 = vunpack.c.l.b16 %v7734
  %v7739 = vunpack.c.h.b16 %v7734
  %v7740 = vunpack.c.l.b16 %v7735
  %v7741 = vpack.c.b16 %v7738, %v7738
  %v7742 = vpack.c.b16 %v7739, %v7739
  %v7743 = vpack.c.b16 %v7740, %v7740
  %7747 = vst.msk [vmem:[#allocation3 + $0x90] sm:$0xf] %vm56, %v7741
  %7748 = vst.msk [vmem:[#allocation3 + $0x94] sm:$0xf] %vm56, %v7742
  %7749 = vst.msk [vmem:[#allocation3 + $0x98] sm:$0x1] %vm59, %v7743
  %v7750 = vld [vmem:[#allocation3] sm:$0xf]
  %v7751 = vld [vmem:[#allocation3 + $0x4] sm:$0xf]
  %v7752 = vld [vmem:[#allocation3 + $0x8] sm:$0xf]
  %v7753 = vld [vmem:[#allocation3 + $0xc] sm:$0xf]
  %v7754 = vld [vmem:[#allocation3 + $0x10] sm:$0xf]
  %v7755 = vld [vmem:[#allocation3 + $0x14] sm:$0xf]
  %v7756 = vld [vmem:[#allocation3 + $0x18] sm:$0xf]
  %v7757 = vld [vmem:[#allocation3 + $0x1c] sm:$0xf]
  %v7758 = vld [vmem:[#allocation3 + $0x20] sm:$0xf]
  %v7759 = vld [vmem:[#allocation3 + $0x24] sm:$0xf]
  %v7760 = vld [vmem:[#allocation3 + $0x28] sm:$0xf]
  %v7761 = vld [vmem:[#allocation3 + $0x2c] sm:$0xf]
  %v7762 = vld [vmem:[#allocation3 + $0x30] sm:$0xf]
  %v7763 = vld [vmem:[#allocation3 + $0x34] sm:$0xf]
  %v7764 = vld [vmem:[#allocation3 + $0x38] sm:$0xf]
  %v7765 = vld [vmem:[#allocation3 + $0x3c] sm:$0xf]
  %v7766 = vld [vmem:[#allocation3 + $0x40] sm:$0xf]
  %v7767 = vld [vmem:[#allocation3 + $0x44] sm:$0xf]
  %v7768 = vld [vmem:[#allocation3 + $0x48] sm:$0xf]
  %v7769 = vld [vmem:[#allocation3 + $0x4c] sm:$0xf]
  %v7770 = vld [vmem:[#allocation3 + $0x50] sm:$0xf]
  %v7771 = vld [vmem:[#allocation3 + $0x54] sm:$0xf]
  %v7772 = vld [vmem:[#allocation3 + $0x58] sm:$0xf]
  %v7773 = vld [vmem:[#allocation3 + $0x5c] sm:$0xf]
  %v7774 = vld [vmem:[#allocation3 + $0x60] sm:$0xf]
  %v7775 = vld [vmem:[#allocation3 + $0x64] sm:$0xf]
  %v7776 = vld [vmem:[#allocation3 + $0x68] sm:$0xf]
  %v7777 = vld [vmem:[#allocation3 + $0x6c] sm:$0xf]
  %v7778 = vld [vmem:[#allocation3 + $0x70] sm:$0xf]
  %v7779 = vld [vmem:[#allocation3 + $0x74] sm:$0xf]
  %v7780 = vld [vmem:[#allocation3 + $0x78] sm:$0xf]
  %v7781 = vld [vmem:[#allocation3 + $0x7c] sm:$0xf]
  %v7782 = vld [vmem:[#allocation3 + $0x80] sm:$0xf]
  %v7783 = vld [vmem:[#allocation3 + $0x84] sm:$0xf]
  %v7784 = vld [vmem:[#allocation3 + $0x88] sm:$0xf]
  %v7785 = vld [vmem:[#allocation3 + $0x8c] sm:$0xf]
  %v7786 = vld [vmem:[#allocation3 + $0x90] sm:$0x1]
  %v7787 = vld [vmem:[#allocation3] sm:$0xe]
  %v7788 = vld [vmem:[#allocation3 + $0x8] sm:$0xe]
  %v7789 = vld [vmem:[#allocation3 + $0x90] sm:$0xf]
  %v7790 = vld [vmem:[#allocation3 + $0x94] sm:$0xf]
  %v7791 = vld [vmem:[#allocation3 + $0x98] sm:$0x1]
  %v7792 = vld [vmem:[#allocation3 + $0x98] sm:$0x3]
  %v7793 = vld [vmem:[#allocation3 + $0x8] sm:$0xc]
  %v7794 = vld [vmem:[#allocation3 + $0x10] sm:$0xc]
  %v7795 = vld [vmem:[#allocation3 + $0x98] sm:$0xf]
  %v7796 = vld [vmem:[#allocation3 + $0x9c] sm:$0xf]
  %v7797 = vld [vmem:[#allocation3 + $0xa0] sm:$0x3]
  %v7798 = vld [vmem:[#allocation3 + $0xa0] sm:$0x7]
  %v7799 = vld [vmem:[#allocation3 + $0x10] sm:$0x8]
  %v7800 = vld [vmem:[#allocation2 + $0x8] sm:$0xe]
  %v7801 = vld [vmem:[#allocation2 + $0xc] sm:$0xf]
  %v7802 = vld [vmem:[#allocation2 + $0x10] sm:$0xf]
  %v7803 = vld [vmem:[#allocation2 + $0x14] sm:$0xf]
  %v7804 = vld [vmem:[#allocation2 + $0x18] sm:$0xf]
  %v7805 = vld [vmem:[#allocation2 + $0x1c] sm:$0xf]
  %v7806 = vld [vmem:[#allocation2 + $0x20] sm:$0xf]
  %v7807 = vld [vmem:[#allocation2 + $0x24] sm:$0xf]
  %v7808 = vld [vmem:[#allocation2 + $0x28] sm:$0xf]
  %v7809 = vld [vmem:[#allocation2 + $0x2c] sm:$0xf]
  %v7810 = vld [vmem:[#allocation2 + $0x30] sm:$0xf]
  %v7811 = vld [vmem:[#allocation2 + $0x34] sm:$0xf]
  %v7812 = vld [vmem:[#allocation2 + $0x38] sm:$0xf]
  %v7813 = vld [vmem:[#allocation2 + $0x3c] sm:$0xf]
  %v7814 = vld [vmem:[#allocation2 + $0x40] sm:$0xf]
  %v7815 = vld [vmem:[#allocation2 + $0x44] sm:$0xf]
  %v7816 = vld [vmem:[#allocation2 + $0x48] sm:$0xf]
  %v7817 = vld [vmem:[#allocation2 + $0x4c] sm:$0xf]
  %v7818 = vld [vmem:[#allocation2 + $0x50] sm:$0xf]
  %v7819 = vld [vmem:[#allocation2 + $0x54] sm:$0xf]
  %v7820 = vld [vmem:[#allocation2 + $0x58] sm:$0xf]
  %v7821 = vld [vmem:[#allocation2 + $0x5c] sm:$0xf]
  %v7822 = vld [vmem:[#allocation2 + $0x60] sm:$0xf]
  %v7823 = vld [vmem:[#allocation2 + $0x64] sm:$0xf]
  %v7824 = vld [vmem:[#allocation2 + $0x68] sm:$0xf]
  %v7825 = vld [vmem:[#allocation2 + $0x6c] sm:$0xf]
  %v7826 = vld [vmem:[#allocation2 + $0x70] sm:$0xf]
  %v7827 = vld [vmem:[#allocation2 + $0x74] sm:$0xf]
  %v7828 = vld [vmem:[#allocation2 + $0x78] sm:$0xf]
  %v7829 = vld [vmem:[#allocation2 + $0x7c] sm:$0xf]
  %v7830 = vld [vmem:[#allocation2 + $0x80] sm:$0xf]
  %v7831 = vld [vmem:[#allocation2 + $0x84] sm:$0xf]
  %v7832 = vld [vmem:[#allocation2 + $0x88] sm:$0xf]
  %v7833 = vld [vmem:[#allocation2 + $0x8c] sm:$0xf]
  %v7834 = vld [vmem:[#allocation2 + $0x90] sm:$0xf]
  %v7835 = vld [vmem:[#allocation2 + $0x94] sm:$0xf]
  %v7836 = vld [vmem:[#allocation2 + $0x98] sm:$0x3]
  %v7873 = vunpack.c.l.b16 %v7750
  %v7874 = vunpack.c.l.b16 %v7751
  %v7875 = vunpack.c.l.b16 %v7752
  %v7876 = vunpack.c.l.b16 %v7753
  %v7877 = vunpack.c.l.b16 %v7754
  %v7878 = vunpack.c.l.b16 %v7755
  %v7879 = vunpack.c.l.b16 %v7756
  %v7880 = vunpack.c.l.b16 %v7757
  %v7881 = vunpack.c.l.b16 %v7758
  %v7882 = vunpack.c.l.b16 %v7759
  %v7883 = vunpack.c.l.b16 %v7760
  %v7884 = vunpack.c.l.b16 %v7761
  %v7885 = vunpack.c.l.b16 %v7762
  %v7886 = vunpack.c.l.b16 %v7763
  %v7887 = vunpack.c.l.b16 %v7764
  %v7888 = vunpack.c.l.b16 %v7765
  %v7889 = vunpack.c.l.b16 %v7766
  %v7890 = vunpack.c.l.b16 %v7767
  %v7891 = vunpack.c.l.b16 %v7768
  %v7892 = vunpack.c.l.b16 %v7769
  %v7893 = vunpack.c.l.b16 %v7770
  %v7894 = vunpack.c.l.b16 %v7771
  %v7895 = vunpack.c.l.b16 %v7772
  %v7896 = vunpack.c.l.b16 %v7773
  %v7897 = vunpack.c.l.b16 %v7774
  %v7898 = vunpack.c.l.b16 %v7775
  %v7899 = vunpack.c.l.b16 %v7776
  %v7900 = vunpack.c.l.b16 %v7777
  %v7901 = vunpack.c.l.b16 %v7778
  %v7902 = vunpack.c.l.b16 %v7779
  %v7903 = vunpack.c.l.b16 %v7780
  %v7904 = vunpack.c.l.b16 %v7781
  %v7905 = vunpack.c.l.b16 %v7782
  %v7906 = vunpack.c.l.b16 %v7783
  %v7907 = vunpack.c.l.b16 %v7784
  %v7908 = vunpack.c.l.b16 %v7785
  %v7909 = vpack.c.b16 %v7874, %v7873
  %v7910 = vpack.c.b16 %v7876, %v7875
  %v7911 = vpack.c.b16 %v7878, %v7877
  %v7912 = vpack.c.b16 %v7880, %v7879
  %v7913 = vpack.c.b16 %v7882, %v7881
  %v7914 = vpack.c.b16 %v7884, %v7883
  %v7915 = vpack.c.b16 %v7886, %v7885
  %v7916 = vpack.c.b16 %v7888, %v7887
  %v7917 = vpack.c.b16 %v7890, %v7889
  %v7918 = vpack.c.b16 %v7892, %v7891
  %v7919 = vpack.c.b16 %v7894, %v7893
  %v7920 = vpack.c.b16 %v7896, %v7895
  %v7921 = vpack.c.b16 %v7898, %v7897
  %v7922 = vpack.c.b16 %v7900, %v7899
  %v7923 = vpack.c.b16 %v7902, %v7901
  %v7924 = vpack.c.b16 %v7904, %v7903
  %v7925 = vpack.c.b16 %v7906, %v7905
  %v7926 = vpack.c.b16 %v7908, %v7907
  %v7928 = vunpack.c.l.b16 %v7786
  %v7929 = vpack.c.b16 %v7928, %v7928
  %v7931 = vshrl.u32 %v7909, 16
  %v7933 = vshll.u32 %v7909, 16
  %v7935 = vrot.slane %v7933, 1
  %v7936 = vor.u32 %v7931, %v7935
  %v7938 = vshll.u32 %v7910, 16
  %v7940 = vrot.slane %v7938, 1
  %v7941 = vsel %vm953, %v7936, %v7940
  %v7942 = vshrl.u32 %v7910, 16
  %v7944 = vor.u32 %v7942, %v7940
  %v7946 = vshll.u32 %v7911, 16
  %v7948 = vrot.slane %v7946, 1
  %v7949 = vsel %vm953, %v7944, %v7948
  %v7950 = vshrl.u32 %v7911, 16
  %v7952 = vor.u32 %v7950, %v7948
  %v7954 = vshll.u32 %v7912, 16
  %v7956 = vrot.slane %v7954, 1
  %v7957 = vsel %vm953, %v7952, %v7956
  %v7958 = vshrl.u32 %v7912, 16
  %v7960 = vor.u32 %v7958, %v7956
  %v7962 = vshll.u32 %v7913, 16
  %v7964 = vrot.slane %v7962, 1
  %v7965 = vsel %vm953, %v7960, %v7964
  %v7966 = vshrl.u32 %v7913, 16
  %v7968 = vor.u32 %v7966, %v7964
  %v7970 = vshll.u32 %v7914, 16
  %v7972 = vrot.slane %v7970, 1
  %v7973 = vsel %vm953, %v7968, %v7972
  %v7974 = vshrl.u32 %v7914, 16
  %v7976 = vor.u32 %v7974, %v7972
  %v7978 = vshll.u32 %v7915, 16
  %v7980 = vrot.slane %v7978, 1
  %v7981 = vsel %vm953, %v7976, %v7980
  %v7982 = vshrl.u32 %v7915, 16
  %v7984 = vor.u32 %v7982, %v7980
  %v7986 = vshll.u32 %v7916, 16
  %v7988 = vrot.slane %v7986, 1
  %v7989 = vsel %vm953, %v7984, %v7988
  %v7990 = vshrl.u32 %v7916, 16
  %v7992 = vor.u32 %v7990, %v7988
  %v7994 = vshll.u32 %v7917, 16
  %v7996 = vrot.slane %v7994, 1
  %v7997 = vsel %vm953, %v7992, %v7996
  %v7998 = vshrl.u32 %v7917, 16
  %v8000 = vor.u32 %v7998, %v7996
  %v8002 = vshll.u32 %v7918, 16
  %v8004 = vrot.slane %v8002, 1
  %v8005 = vsel %vm953, %v8000, %v8004
  %v8006 = vshrl.u32 %v7918, 16
  %v8008 = vor.u32 %v8006, %v8004
  %v8010 = vshll.u32 %v7919, 16
  %v8012 = vrot.slane %v8010, 1
  %v8013 = vsel %vm953, %v8008, %v8012
  %v8014 = vshrl.u32 %v7919, 16
  %v8016 = vor.u32 %v8014, %v8012
  %v8018 = vshll.u32 %v7920, 16
  %v8020 = vrot.slane %v8018, 1
  %v8021 = vsel %vm953, %v8016, %v8020
  %v8022 = vshrl.u32 %v7920, 16
  %v8024 = vor.u32 %v8022, %v8020
  %v8026 = vshll.u32 %v7921, 16
  %v8028 = vrot.slane %v8026, 1
  %v8029 = vsel %vm953, %v8024, %v8028
  %v8030 = vshrl.u32 %v7921, 16
  %v8032 = vor.u32 %v8030, %v8028
  %v8034 = vshll.u32 %v7922, 16
  %v8036 = vrot.slane %v8034, 1
  %v8037 = vsel %vm953, %v8032, %v8036
  %v8038 = vshrl.u32 %v7922, 16
  %v8040 = vor.u32 %v8038, %v8036
  %v8042 = vshll.u32 %v7923, 16
  %v8044 = vrot.slane %v8042, 1
  %v8045 = vsel %vm953, %v8040, %v8044
  %v8046 = vshrl.u32 %v7923, 16
  %v8048 = vor.u32 %v8046, %v8044
  %v8050 = vshll.u32 %v7924, 16
  %v8052 = vrot.slane %v8050, 1
  %v8053 = vsel %vm953, %v8048, %v8052
  %v8054 = vshrl.u32 %v7924, 16
  %v8056 = vor.u32 %v8054, %v8052
  %v8058 = vshll.u32 %v7925, 16
  %v8060 = vrot.slane %v8058, 1
  %v8061 = vsel %vm953, %v8056, %v8060
  %v8062 = vshrl.u32 %v7925, 16
  %v8064 = vor.u32 %v8062, %v8060
  %v8066 = vshll.u32 %v7926, 16
  %v8068 = vrot.slane %v8066, 1
  %v8069 = vsel %vm953, %v8064, %v8068
  %v8070 = vshrl.u32 %v7926, 16
  %v8072 = vor.u32 %v8070, %v8068
  %v8074 = vshll.u32 %v7929, 16
  %v8076 = vrot.slane %v8074, 1
  %v8077 = vsel %vm953, %v8072, %v8076
  %8078 = vrot.lane.b32.xlu0 %v7941, 8
  %v8079 = vpop.permute.xlu0 %8078
  %8080 = vrot.lane.b32.xlu0 %v7949, 8
  %v8081 = vpop.permute.xlu0 %8080
  %8082 = vrot.lane.b32.xlu0 %v7957, 8
  %v8083 = vpop.permute.xlu0 %8082
  %8084 = vrot.lane.b32.xlu0 %v7965, 8
  %v8085 = vpop.permute.xlu0 %8084
  %8086 = vrot.lane.b32.xlu0 %v7973, 8
  %v8087 = vpop.permute.xlu0 %8086
  %8088 = vrot.lane.b32.xlu0 %v7981, 8
  %v8089 = vpop.permute.xlu0 %8088
  %8090 = vrot.lane.b32.xlu0 %v7989, 8
  %v8091 = vpop.permute.xlu0 %8090
  %8092 = vrot.lane.b32.xlu0 %v7997, 8
  %v8093 = vpop.permute.xlu0 %8092
  %8094 = vrot.lane.b32.xlu0 %v8005, 8
  %v8095 = vpop.permute.xlu0 %8094
  %8096 = vrot.lane.b32.xlu0 %v8013, 8
  %v8097 = vpop.permute.xlu0 %8096
  %8098 = vrot.lane.b32.xlu0 %v8021, 8
  %v8099 = vpop.permute.xlu0 %8098
  %8100 = vrot.lane.b32.xlu0 %v8029, 8
  %v8101 = vpop.permute.xlu0 %8100
  %8102 = vrot.lane.b32.xlu0 %v8037, 8
  %v8103 = vpop.permute.xlu0 %8102
  %8104 = vrot.lane.b32.xlu0 %v8045, 8
  %v8105 = vpop.permute.xlu0 %8104
  %8106 = vrot.lane.b32.xlu0 %v8053, 8
  %v8107 = vpop.permute.xlu0 %8106
  %8108 = vrot.lane.b32.xlu0 %v8061, 8
  %v8109 = vpop.permute.xlu0 %8108
  %8110 = vrot.lane.b32.xlu0 %v8069, 8
  %v8111 = vpop.permute.xlu0 %8110
  %8112 = vrot.lane.b32.xlu0 %v8077, 8
  %v8113 = vpop.permute.xlu0 %8112
  %v8115 = vunpack.c.l.b16 %v7787
  %v8116 = vpack.c.b16 %v7874, %v8115
  %v8117 = vrot.slane %v8116, 1
  %v8118 = vrot.slane %v7910, 1
  %v8119 = vsel %vm1141, %v8117, %v8118
  %v8120 = vrot.slane %v7911, 1
  %v8121 = vsel %vm1141, %v8118, %v8120
  %v8122 = vrot.slane %v7912, 1
  %v8123 = vsel %vm1141, %v8120, %v8122
  %v8124 = vrot.slane %v7913, 1
  %v8125 = vsel %vm1141, %v8122, %v8124
  %v8126 = vrot.slane %v7914, 1
  %v8127 = vsel %vm1141, %v8124, %v8126
  %v8128 = vrot.slane %v7915, 1
  %v8129 = vsel %vm1141, %v8126, %v8128
  %v8130 = vrot.slane %v7916, 1
  %v8131 = vsel %vm1141, %v8128, %v8130
  %v8132 = vrot.slane %v7917, 1
  %v8133 = vsel %vm1141, %v8130, %v8132
  %v8134 = vrot.slane %v7918, 1
  %v8135 = vsel %vm1141, %v8132, %v8134
  %v8136 = vrot.slane %v7919, 1
  %v8137 = vsel %vm1141, %v8134, %v8136
  %v8138 = vrot.slane %v7920, 1
  %v8139 = vsel %vm1141, %v8136, %v8138
  %v8140 = vrot.slane %v7921, 1
  %v8141 = vsel %vm1141, %v8138, %v8140
  %v8142 = vrot.slane %v7922, 1
  %v8143 = vsel %vm1141, %v8140, %v8142
  %v8144 = vrot.slane %v7923, 1
  %v8145 = vsel %vm1141, %v8142, %v8144
  %v8146 = vrot.slane %v7924, 1
  %v8147 = vsel %vm1141, %v8144, %v8146
  %v8148 = vrot.slane %v7925, 1
  %v8149 = vsel %vm1141, %v8146, %v8148
  %v8150 = vrot.slane %v7926, 1
  %v8151 = vsel %vm1141, %v8148, %v8150
  %v8152 = vrot.slane %v7929, 1
  %v8153 = vsel %vm1141, %v8150, %v8152
  %8154 = vrot.lane.b32.xlu0 %v8119, 16
  %v8155 = vpop.permute.xlu0 %8154
  %8156 = vrot.lane.b32.xlu0 %v8121, 16
  %v8157 = vpop.permute.xlu0 %8156
  %8158 = vrot.lane.b32.xlu0 %v8123, 16
  %v8159 = vpop.permute.xlu0 %8158
  %8160 = vrot.lane.b32.xlu0 %v8125, 16
  %v8161 = vpop.permute.xlu0 %8160
  %8162 = vrot.lane.b32.xlu0 %v8127, 16
  %v8163 = vpop.permute.xlu0 %8162
  %8164 = vrot.lane.b32.xlu0 %v8129, 16
  %v8165 = vpop.permute.xlu0 %8164
  %8166 = vrot.lane.b32.xlu0 %v8131, 16
  %v8167 = vpop.permute.xlu0 %8166
  %8168 = vrot.lane.b32.xlu0 %v8133, 16
  %v8169 = vpop.permute.xlu0 %8168
  %8170 = vrot.lane.b32.xlu0 %v8135, 16
  %v8171 = vpop.permute.xlu0 %8170
  %8172 = vrot.lane.b32.xlu0 %v8137, 16
  %v8173 = vpop.permute.xlu0 %8172
  %8174 = vrot.lane.b32.xlu0 %v8139, 16
  %v8175 = vpop.permute.xlu0 %8174
  %8176 = vrot.lane.b32.xlu0 %v8141, 16
  %v8177 = vpop.permute.xlu0 %8176
  %8178 = vrot.lane.b32.xlu0 %v8143, 16
  %v8179 = vpop.permute.xlu0 %8178
  %8180 = vrot.lane.b32.xlu0 %v8145, 16
  %v8181 = vpop.permute.xlu0 %8180
  %8182 = vrot.lane.b32.xlu0 %v8147, 16
  %v8183 = vpop.permute.xlu0 %8182
  %8184 = vrot.lane.b32.xlu0 %v8149, 16
  %v8185 = vpop.permute.xlu0 %8184
  %8186 = vrot.lane.b32.xlu0 %v8151, 16
  %v8187 = vpop.permute.xlu0 %8186
  %8188 = vrot.lane.b32.xlu0 %v8153, 16
  %v8189 = vpop.permute.xlu0 %8188
  %v8194 = vunpack.c.l.b16 %v7788
  %v8195 = vunpack.c.l.b16 %v7789
  %v8196 = vunpack.c.l.b16 %v7790
  %v8197 = vunpack.c.l.b16 %v7791
  %v8198 = vpack.c.b16 %v7876, %v8194
  %v8199 = vpack.c.b16 %v8196, %v8195
  %v8200 = vpack.c.b16 %v8197, %v8197
  %v8201 = vrot.slane %v8198, 1
  %v8202 = vsel %vm1141, %v8201, %v8120
  %v8203 = vrot.slane %v8199, 1
  %v8204 = vsel %vm1141, %v8150, %v8203
  %v8205 = vrot.slane %v8200, 1
  %v8206 = vsel %vm1141, %v8203, %v8205
  %8207 = vrot.lane.b32.xlu0 %v8202, 24
  %v8208 = vpop.permute.xlu0 %8207
  %8209 = vrot.lane.b32.xlu0 %v8123, 24
  %v8210 = vpop.permute.xlu0 %8209
  %8211 = vrot.lane.b32.xlu0 %v8125, 24
  %v8212 = vpop.permute.xlu0 %8211
  %8213 = vrot.lane.b32.xlu0 %v8127, 24
  %v8214 = vpop.permute.xlu0 %8213
  %8215 = vrot.lane.b32.xlu0 %v8129, 24
  %v8216 = vpop.permute.xlu0 %8215
  %8217 = vrot.lane.b32.xlu0 %v8131, 24
  %v8218 = vpop.permute.xlu0 %8217
  %8219 = vrot.lane.b32.xlu0 %v8133, 24
  %v8220 = vpop.permute.xlu0 %8219
  %8221 = vrot.lane.b32.xlu0 %v8135, 24
  %v8222 = vpop.permute.xlu0 %8221
  %8223 = vrot.lane.b32.xlu0 %v8137, 24
  %v8224 = vpop.permute.xlu0 %8223
  %8225 = vrot.lane.b32.xlu0 %v8139, 24
  %v8226 = vpop.permute.xlu0 %8225
  %8227 = vrot.lane.b32.xlu0 %v8141, 24
  %v8228 = vpop.permute.xlu0 %8227
  %8229 = vrot.lane.b32.xlu0 %v8143, 24
  %v8230 = vpop.permute.xlu0 %8229
  %8231 = vrot.lane.b32.xlu0 %v8145, 24
  %v8232 = vpop.permute.xlu0 %8231
  %8233 = vrot.lane.b32.xlu0 %v8147, 24
  %v8234 = vpop.permute.xlu0 %8233
  %8235 = vrot.lane.b32.xlu0 %v8149, 24
  %v8236 = vpop.permute.xlu0 %8235
  %8237 = vrot.lane.b32.xlu0 %v8151, 24
  %v8238 = vpop.permute.xlu0 %8237
  %8239 = vrot.lane.b32.xlu0 %v8204, 24
  %v8240 = vpop.permute.xlu0 %8239
  %8241 = vrot.lane.b32.xlu0 %v8206, 24
  %v8242 = vpop.permute.xlu0 %8241
  %v8244 = vunpack.c.l.b16 %v7792
  %v8245 = vpack.c.b16 %v8244, %v8244
  %v8247 = vshrl.u32 %v8198, 16
  %v8249 = vrot.slane %v8247, 1
  %v8250 = vshll.u32 %v8198, 16
  %v8252 = vrot.slane %v8250, 2
  %v8253 = vor.u32 %v8249, %v8252
  %v8254 = vrot.slane %v7950, 1
  %v8255 = vrot.slane %v7946, 2
  %v8256 = vor.u32 %v8254, %v8255
  %v8257 = vsel %vm1271, %v8253, %v8256
  %v8258 = vrot.slane %v7958, 1
  %v8259 = vrot.slane %v7954, 2
  %v8260 = vor.u32 %v8258, %v8259
  %v8261 = vsel %vm1271, %v8256, %v8260
  %v8262 = vrot.slane %v7966, 1
  %v8263 = vrot.slane %v7962, 2
  %v8264 = vor.u32 %v8262, %v8263
  %v8265 = vsel %vm1271, %v8260, %v8264
  %v8266 = vrot.slane %v7974, 1
  %v8267 = vrot.slane %v7970, 2
  %v8268 = vor.u32 %v8266, %v8267
  %v8269 = vsel %vm1271, %v8264, %v8268
  %v8270 = vrot.slane %v7982, 1
  %v8271 = vrot.slane %v7978, 2
  %v8272 = vor.u32 %v8270, %v8271
  %v8273 = vsel %vm1271, %v8268, %v8272
  %v8274 = vrot.slane %v7990, 1
  %v8275 = vrot.slane %v7986, 2
  %v8276 = vor.u32 %v8274, %v8275
  %v8277 = vsel %vm1271, %v8272, %v8276
  %v8278 = vrot.slane %v7998, 1
  %v8279 = vrot.slane %v7994, 2
  %v8280 = vor.u32 %v8278, %v8279
  %v8281 = vsel %vm1271, %v8276, %v8280
  %v8282 = vrot.slane %v8006, 1
  %v8283 = vrot.slane %v8002, 2
  %v8284 = vor.u32 %v8282, %v8283
  %v8285 = vsel %vm1271, %v8280, %v8284
  %v8286 = vrot.slane %v8014, 1
  %v8287 = vrot.slane %v8010, 2
  %v8288 = vor.u32 %v8286, %v8287
  %v8289 = vsel %vm1271, %v8284, %v8288
  %v8290 = vrot.slane %v8022, 1
  %v8291 = vrot.slane %v8018, 2
  %v8292 = vor.u32 %v8290, %v8291
  %v8293 = vsel %vm1271, %v8288, %v8292
  %v8294 = vrot.slane %v8030, 1
  %v8295 = vrot.slane %v8026, 2
  %v8296 = vor.u32 %v8294, %v8295
  %v8297 = vsel %vm1271, %v8292, %v8296
  %v8298 = vrot.slane %v8038, 1
  %v8299 = vrot.slane %v8034, 2
  %v8300 = vor.u32 %v8298, %v8299
  %v8301 = vsel %vm1271, %v8296, %v8300
  %v8302 = vrot.slane %v8046, 1
  %v8303 = vrot.slane %v8042, 2
  %v8304 = vor.u32 %v8302, %v8303
  %v8305 = vsel %vm1271, %v8300, %v8304
  %v8306 = vrot.slane %v8054, 1
  %v8307 = vrot.slane %v8050, 2
  %v8308 = vor.u32 %v8306, %v8307
  %v8309 = vsel %vm1271, %v8304, %v8308
  %v8310 = vrot.slane %v8062, 1
  %v8311 = vrot.slane %v8058, 2
  %v8312 = vor.u32 %v8310, %v8311
  %v8313 = vsel %vm1271, %v8308, %v8312
  %v8314 = vrot.slane %v8070, 1
  %v8315 = vrot.slane %v8066, 2
  %v8316 = vor.u32 %v8314, %v8315
  %v8317 = vsel %vm1271, %v8312, %v8316
  %v8319 = vshrl.u32 %v8199, 16
  %v8321 = vrot.slane %v8319, 1
  %v8322 = vshll.u32 %v8199, 16
  %v8324 = vrot.slane %v8322, 2
  %v8325 = vor.u32 %v8321, %v8324
  %v8326 = vsel %vm1271, %v8316, %v8325
  %v8328 = vshrl.u32 %v8245, 16
  %v8330 = vrot.slane %v8328, 1
  %v8331 = vshll.u32 %v8245, 16
  %v8333 = vrot.slane %v8331, 2
  %v8334 = vor.u32 %v8330, %v8333
  %v8335 = vsel %vm1271, %v8325, %v8334
  %8336 = vrot.lane.b32.xlu0 %v8257, 32
  %v8337 = vpop.permute.xlu0 %8336
  %8338 = vrot.lane.b32.xlu0 %v8261, 32
  %v8339 = vpop.permute.xlu0 %8338
  %8340 = vrot.lane.b32.xlu0 %v8265, 32
  %v8341 = vpop.permute.xlu0 %8340
  %8342 = vrot.lane.b32.xlu0 %v8269, 32
  %v8343 = vpop.permute.xlu0 %8342
  %8344 = vrot.lane.b32.xlu0 %v8273, 32
  %v8345 = vpop.permute.xlu0 %8344
  %8346 = vrot.lane.b32.xlu0 %v8277, 32
  %v8347 = vpop.permute.xlu0 %8346
  %8348 = vrot.lane.b32.xlu0 %v8281, 32
  %v8349 = vpop.permute.xlu0 %8348
  %8350 = vrot.lane.b32.xlu0 %v8285, 32
  %v8351 = vpop.permute.xlu0 %8350
  %8352 = vrot.lane.b32.xlu0 %v8289, 32
  %v8353 = vpop.permute.xlu0 %8352
  %8354 = vrot.lane.b32.xlu0 %v8293, 32
  %v8355 = vpop.permute.xlu0 %8354
  %8356 = vrot.lane.b32.xlu0 %v8297, 32
  %v8357 = vpop.permute.xlu0 %8356
  %8358 = vrot.lane.b32.xlu0 %v8301, 32
  %v8359 = vpop.permute.xlu0 %8358
  %8360 = vrot.lane.b32.xlu0 %v8305, 32
  %v8361 = vpop.permute.xlu0 %8360
  %8362 = vrot.lane.b32.xlu0 %v8309, 32
  %v8363 = vpop.permute.xlu0 %8362
  %8364 = vrot.lane.b32.xlu0 %v8313, 32
  %v8365 = vpop.permute.xlu0 %8364
  %8366 = vrot.lane.b32.xlu0 %v8317, 32
  %v8367 = vpop.permute.xlu0 %8366
  %8368 = vrot.lane.b32.xlu0 %v8326, 32
  %v8369 = vpop.permute.xlu0 %8368
  %8370 = vrot.lane.b32.xlu0 %v8335, 32
  %v8371 = vpop.permute.xlu0 %8370
  %v8373 = vunpack.c.l.b16 %v7793
  %v8374 = vpack.c.b16 %v7876, %v8373
  %v8375 = vrot.slane %v8374, 2
  %v8376 = vrot.slane %v7911, 2
  %v8377 = vsel %vm1401, %v8375, %v8376
  %v8378 = vrot.slane %v7912, 2
  %v8379 = vsel %vm1401, %v8376, %v8378
  %v8380 = vrot.slane %v7913, 2
  %v8381 = vsel %vm1401, %v8378, %v8380
  %v8382 = vrot.slane %v7914, 2
  %v8383 = vsel %vm1401, %v8380, %v8382
  %v8384 = vrot.slane %v7915, 2
  %v8385 = vsel %vm1401, %v8382, %v8384
  %v8386 = vrot.slane %v7916, 2
  %v8387 = vsel %vm1401, %v8384, %v8386
  %v8388 = vrot.slane %v7917, 2
  %v8389 = vsel %vm1401, %v8386, %v8388
  %v8390 = vrot.slane %v7918, 2
  %v8391 = vsel %vm1401, %v8388, %v8390
  %v8392 = vrot.slane %v7919, 2
  %v8393 = vsel %vm1401, %v8390, %v8392
  %v8394 = vrot.slane %v7920, 2
  %v8395 = vsel %vm1401, %v8392, %v8394
  %v8396 = vrot.slane %v7921, 2
  %v8397 = vsel %vm1401, %v8394, %v8396
  %v8398 = vrot.slane %v7922, 2
  %v8399 = vsel %vm1401, %v8396, %v8398
  %v8400 = vrot.slane %v7923, 2
  %v8401 = vsel %vm1401, %v8398, %v8400
  %v8402 = vrot.slane %v7924, 2
  %v8403 = vsel %vm1401, %v8400, %v8402
  %v8404 = vrot.slane %v7925, 2
  %v8405 = vsel %vm1401, %v8402, %v8404
  %v8406 = vrot.slane %v7926, 2
  %v8407 = vsel %vm1401, %v8404, %v8406
  %v8408 = vrot.slane %v8199, 2
  %v8409 = vsel %vm1401, %v8406, %v8408
  %v8410 = vrot.slane %v8245, 2
  %v8411 = vsel %vm1401, %v8408, %v8410
  %8412 = vrot.lane.b32.xlu0 %v8377, 40
  %v8413 = vpop.permute.xlu0 %8412
  %8414 = vrot.lane.b32.xlu0 %v8379, 40
  %v8415 = vpop.permute.xlu0 %8414
  %8416 = vrot.lane.b32.xlu0 %v8381, 40
  %v8417 = vpop.permute.xlu0 %8416
  %8418 = vrot.lane.b32.xlu0 %v8383, 40
  %v8419 = vpop.permute.xlu0 %8418
  %8420 = vrot.lane.b32.xlu0 %v8385, 40
  %v8421 = vpop.permute.xlu0 %8420
  %8422 = vrot.lane.b32.xlu0 %v8387, 40
  %v8423 = vpop.permute.xlu0 %8422
  %8424 = vrot.lane.b32.xlu0 %v8389, 40
  %v8425 = vpop.permute.xlu0 %8424
  %8426 = vrot.lane.b32.xlu0 %v8391, 40
  %v8427 = vpop.permute.xlu0 %8426
  %8428 = vrot.lane.b32.xlu0 %v8393, 40
  %v8429 = vpop.permute.xlu0 %8428
  %8430 = vrot.lane.b32.xlu0 %v8395, 40
  %v8431 = vpop.permute.xlu0 %8430
  %8432 = vrot.lane.b32.xlu0 %v8397, 40
  %v8433 = vpop.permute.xlu0 %8432
  %8434 = vrot.lane.b32.xlu0 %v8399, 40
  %v8435 = vpop.permute.xlu0 %8434
  %8436 = vrot.lane.b32.xlu0 %v8401, 40
  %v8437 = vpop.permute.xlu0 %8436
  %8438 = vrot.lane.b32.xlu0 %v8403, 40
  %v8439 = vpop.permute.xlu0 %8438
  %8440 = vrot.lane.b32.xlu0 %v8405, 40
  %v8441 = vpop.permute.xlu0 %8440
  %8442 = vrot.lane.b32.xlu0 %v8407, 40
  %v8443 = vpop.permute.xlu0 %8442
  %8444 = vrot.lane.b32.xlu0 %v8409, 40
  %v8445 = vpop.permute.xlu0 %8444
  %8446 = vrot.lane.b32.xlu0 %v8411, 40
  %v8447 = vpop.permute.xlu0 %8446
  %v8452 = vunpack.c.l.b16 %v7794
  %v8453 = vunpack.c.l.b16 %v7795
  %v8454 = vunpack.c.l.b16 %v7796
  %v8455 = vunpack.c.l.b16 %v7797
  %v8456 = vpack.c.b16 %v7878, %v8452
  %v8457 = vpack.c.b16 %v8454, %v8453
  %v8458 = vpack.c.b16 %v8455, %v8455
  %v8459 = vrot.slane %v8456, 2
  %v8460 = vsel %vm1401, %v8459, %v8378
  %v8461 = vrot.slane %v8457, 2
  %v8462 = vsel %vm1401, %v8408, %v8461
  %v8463 = vrot.slane %v8458, 2
  %v8464 = vsel %vm1401, %v8461, %v8463
  %8465 = vrot.lane.b32.xlu0 %v8460, 48
  %v8466 = vpop.permute.xlu0 %8465
  %8467 = vrot.lane.b32.xlu0 %v8381, 48
  %v8468 = vpop.permute.xlu0 %8467
  %8469 = vrot.lane.b32.xlu0 %v8383, 48
  %v8470 = vpop.permute.xlu0 %8469
  %8471 = vrot.lane.b32.xlu0 %v8385, 48
  %v8472 = vpop.permute.xlu0 %8471
  %8473 = vrot.lane.b32.xlu0 %v8387, 48
  %v8474 = vpop.permute.xlu0 %8473
  %8475 = vrot.lane.b32.xlu0 %v8389, 48
  %v8476 = vpop.permute.xlu0 %8475
  %8477 = vrot.lane.b32.xlu0 %v8391, 48
  %v8478 = vpop.permute.xlu0 %8477
  %8479 = vrot.lane.b32.xlu0 %v8393, 48
  %v8480 = vpop.permute.xlu0 %8479
  %8481 = vrot.lane.b32.xlu0 %v8395, 48
  %v8482 = vpop.permute.xlu0 %8481
  %8483 = vrot.lane.b32.xlu0 %v8397, 48
  %v8484 = vpop.permute.xlu0 %8483
  %8485 = vrot.lane.b32.xlu0 %v8399, 48
  %v8486 = vpop.permute.xlu0 %8485
  %8487 = vrot.lane.b32.xlu0 %v8401, 48
  %v8488 = vpop.permute.xlu0 %8487
  %8489 = vrot.lane.b32.xlu0 %v8403, 48
  %v8490 = vpop.permute.xlu0 %8489
  %8491 = vrot.lane.b32.xlu0 %v8405, 48
  %v8492 = vpop.permute.xlu0 %8491
  %8493 = vrot.lane.b32.xlu0 %v8407, 48
  %v8494 = vpop.permute.xlu0 %8493
  %8495 = vrot.lane.b32.xlu0 %v8409, 48
  %v8496 = vpop.permute.xlu0 %8495
  %8497 = vrot.lane.b32.xlu0 %v8462, 48
  %v8498 = vpop.permute.xlu0 %8497
  %8499 = vrot.lane.b32.xlu0 %v8464, 48
  %v8500 = vpop.permute.xlu0 %8499
  %v8502 = vunpack.c.l.b16 %v7798
  %v8503 = vpack.c.b16 %v8502, %v8502
  %v8505 = vshrl.u32 %v8456, 16
  %v8507 = vrot.slane %v8505, 2
  %v8508 = vshll.u32 %v8456, 16
  %v8510 = vrot.slane %v8508, 3
  %v8511 = vor.u32 %v8507, %v8510
  %v8512 = vrot.slane %v7958, 2
  %v8513 = vrot.slane %v7954, 3
  %v8514 = vor.u32 %v8512, %v8513
  %v8515 = vsel %vm1531, %v8511, %v8514
  %v8516 = vrot.slane %v7966, 2
  %v8517 = vrot.slane %v7962, 3
  %v8518 = vor.u32 %v8516, %v8517
  %v8519 = vsel %vm1531, %v8514, %v8518
  %v8520 = vrot.slane %v7974, 2
  %v8521 = vrot.slane %v7970, 3
  %v8522 = vor.u32 %v8520, %v8521
  %v8523 = vsel %vm1531, %v8518, %v8522
  %v8524 = vrot.slane %v7982, 2
  %v8525 = vrot.slane %v7978, 3
  %v8526 = vor.u32 %v8524, %v8525
  %v8527 = vsel %vm1531, %v8522, %v8526
  %v8528 = vrot.slane %v7990, 2
  %v8529 = vrot.slane %v7986, 3
  %v8530 = vor.u32 %v8528, %v8529
  %v8531 = vsel %vm1531, %v8526, %v8530
  %v8532 = vrot.slane %v7998, 2
  %v8533 = vrot.slane %v7994, 3
  %v8534 = vor.u32 %v8532, %v8533
  %v8535 = vsel %vm1531, %v8530, %v8534
  %v8536 = vrot.slane %v8006, 2
  %v8537 = vrot.slane %v8002, 3
  %v8538 = vor.u32 %v8536, %v8537
  %v8539 = vsel %vm1531, %v8534, %v8538
  %v8540 = vrot.slane %v8014, 2
  %v8541 = vrot.slane %v8010, 3
  %v8542 = vor.u32 %v8540, %v8541
  %v8543 = vsel %vm1531, %v8538, %v8542
  %v8544 = vrot.slane %v8022, 2
  %v8545 = vrot.slane %v8018, 3
  %v8546 = vor.u32 %v8544, %v8545
  %v8547 = vsel %vm1531, %v8542, %v8546
  %v8548 = vrot.slane %v8030, 2
  %v8549 = vrot.slane %v8026, 3
  %v8550 = vor.u32 %v8548, %v8549
  %v8551 = vsel %vm1531, %v8546, %v8550
  %v8552 = vrot.slane %v8038, 2
  %v8553 = vrot.slane %v8034, 3
  %v8554 = vor.u32 %v8552, %v8553
  %v8555 = vsel %vm1531, %v8550, %v8554
  %v8556 = vrot.slane %v8046, 2
  %v8557 = vrot.slane %v8042, 3
  %v8558 = vor.u32 %v8556, %v8557
  %v8559 = vsel %vm1531, %v8554, %v8558
  %v8560 = vrot.slane %v8054, 2
  %v8561 = vrot.slane %v8050, 3
  %v8562 = vor.u32 %v8560, %v8561
  %v8563 = vsel %vm1531, %v8558, %v8562
  %v8564 = vrot.slane %v8062, 2
  %v8565 = vrot.slane %v8058, 3
  %v8566 = vor.u32 %v8564, %v8565
  %v8567 = vsel %vm1531, %v8562, %v8566
  %v8568 = vrot.slane %v8070, 2
  %v8569 = vrot.slane %v8066, 3
  %v8570 = vor.u32 %v8568, %v8569
  %v8571 = vsel %vm1531, %v8566, %v8570
  %v8572 = vrot.slane %v8319, 2
  %v8573 = vrot.slane %v8322, 3
  %v8574 = vor.u32 %v8572, %v8573
  %v8575 = vsel %vm1531, %v8570, %v8574
  %v8577 = vshrl.u32 %v8457, 16
  %v8579 = vrot.slane %v8577, 2
  %v8580 = vshll.u32 %v8457, 16
  %v8582 = vrot.slane %v8580, 3
  %v8583 = vor.u32 %v8579, %v8582
  %v8584 = vsel %vm1531, %v8574, %v8583
  %v8586 = vshrl.u32 %v8503, 16
  %v8588 = vrot.slane %v8586, 2
  %v8589 = vshll.u32 %v8503, 16
  %v8591 = vrot.slane %v8589, 3
  %v8592 = vor.u32 %v8588, %v8591
  %v8593 = vsel %vm1531, %v8583, %v8592
  %8594 = vrot.lane.b32.xlu0 %v8515, 56
  %v8595 = vpop.permute.xlu0 %8594
  %8596 = vrot.lane.b32.xlu0 %v8519, 56
  %v8597 = vpop.permute.xlu0 %8596
  %8598 = vrot.lane.b32.xlu0 %v8523, 56
  %v8599 = vpop.permute.xlu0 %8598
  %8600 = vrot.lane.b32.xlu0 %v8527, 56
  %v8601 = vpop.permute.xlu0 %8600
  %8602 = vrot.lane.b32.xlu0 %v8531, 56
  %v8603 = vpop.permute.xlu0 %8602
  %8604 = vrot.lane.b32.xlu0 %v8535, 56
  %v8605 = vpop.permute.xlu0 %8604
  %8606 = vrot.lane.b32.xlu0 %v8539, 56
  %v8607 = vpop.permute.xlu0 %8606
  %8608 = vrot.lane.b32.xlu0 %v8543, 56
  %v8609 = vpop.permute.xlu0 %8608
  %8610 = vrot.lane.b32.xlu0 %v8547, 56
  %v8611 = vpop.permute.xlu0 %8610
  %8612 = vrot.lane.b32.xlu0 %v8551, 56
  %v8613 = vpop.permute.xlu0 %8612
  %8614 = vrot.lane.b32.xlu0 %v8555, 56
  %v8615 = vpop.permute.xlu0 %8614
  %8616 = vrot.lane.b32.xlu0 %v8559, 56
  %v8617 = vpop.permute.xlu0 %8616
  %8618 = vrot.lane.b32.xlu0 %v8563, 56
  %v8619 = vpop.permute.xlu0 %8618
  %8620 = vrot.lane.b32.xlu0 %v8567, 56
  %v8621 = vpop.permute.xlu0 %8620
  %8622 = vrot.lane.b32.xlu0 %v8571, 56
  %v8623 = vpop.permute.xlu0 %8622
  %8624 = vrot.lane.b32.xlu0 %v8575, 56
  %v8625 = vpop.permute.xlu0 %8624
  %8626 = vrot.lane.b32.xlu0 %v8584, 56
  %v8627 = vpop.permute.xlu0 %8626
  %8628 = vrot.lane.b32.xlu0 %v8593, 56
  %v8629 = vpop.permute.xlu0 %8628
  %v8631 = vunpack.c.l.b16 %v7799
  %v8632 = vpack.c.b16 %v7878, %v8631
  %v8633 = vrot.slane %v8632, 3
  %v8634 = vrot.slane %v7912, 3
  %v8635 = vsel %vm1661, %v8633, %v8634
  %v8636 = vrot.slane %v7913, 3
  %v8637 = vsel %vm1661, %v8634, %v8636
  %v8638 = vrot.slane %v7914, 3
  %v8639 = vsel %vm1661, %v8636, %v8638
  %v8640 = vrot.slane %v7915, 3
  %v8641 = vsel %vm1661, %v8638, %v8640
  %v8642 = vrot.slane %v7916, 3
  %v8643 = vsel %vm1661, %v8640, %v8642
  %v8644 = vrot.slane %v7917, 3
  %v8645 = vsel %vm1661, %v8642, %v8644
  %v8646 = vrot.slane %v7918, 3
  %v8647 = vsel %vm1661, %v8644, %v8646
  %v8648 = vrot.slane %v7919, 3
  %v8649 = vsel %vm1661, %v8646, %v8648
  %v8650 = vrot.slane %v7920, 3
  %v8651 = vsel %vm1661, %v8648, %v8650
  %v8652 = vrot.slane %v7921, 3
  %v8653 = vsel %vm1661, %v8650, %v8652
  %v8654 = vrot.slane %v7922, 3
  %v8655 = vsel %vm1661, %v8652, %v8654
  %v8656 = vrot.slane %v7923, 3
  %v8657 = vsel %vm1661, %v8654, %v8656
  %v8658 = vrot.slane %v7924, 3
  %v8659 = vsel %vm1661, %v8656, %v8658
  %v8660 = vrot.slane %v7925, 3
  %v8661 = vsel %vm1661, %v8658, %v8660
  %v8662 = vrot.slane %v7926, 3
  %v8663 = vsel %vm1661, %v8660, %v8662
  %v8664 = vrot.slane %v8199, 3
  %v8665 = vsel %vm1661, %v8662, %v8664
  %v8666 = vrot.slane %v8457, 3
  %v8667 = vsel %vm1661, %v8664, %v8666
  %v8668 = vrot.slane %v8503, 3
  %v8669 = vsel %vm1661, %v8666, %v8668
  %8670 = vrot.lane.b32.xlu0 %v8635, 64
  %v8671 = vpop.permute.xlu0 %8670
  %8672 = vrot.lane.b32.xlu0 %v8637, 64
  %v8673 = vpop.permute.xlu0 %8672
  %8674 = vrot.lane.b32.xlu0 %v8639, 64
  %v8675 = vpop.permute.xlu0 %8674
  %8676 = vrot.lane.b32.xlu0 %v8641, 64
  %v8677 = vpop.permute.xlu0 %8676
  %8678 = vrot.lane.b32.xlu0 %v8643, 64
  %v8679 = vpop.permute.xlu0 %8678
  %8680 = vrot.lane.b32.xlu0 %v8645, 64
  %v8681 = vpop.permute.xlu0 %8680
  %8682 = vrot.lane.b32.xlu0 %v8647, 64
  %v8683 = vpop.permute.xlu0 %8682
  %8684 = vrot.lane.b32.xlu0 %v8649, 64
  %v8685 = vpop.permute.xlu0 %8684
  %8686 = vrot.lane.b32.xlu0 %v8651, 64
  %v8687 = vpop.permute.xlu0 %8686
  %8688 = vrot.lane.b32.xlu0 %v8653, 64
  %v8689 = vpop.permute.xlu0 %8688
  %8690 = vrot.lane.b32.xlu0 %v8655, 64
  %v8691 = vpop.permute.xlu0 %8690
  %8692 = vrot.lane.b32.xlu0 %v8657, 64
  %v8693 = vpop.permute.xlu0 %8692
  %8694 = vrot.lane.b32.xlu0 %v8659, 64
  %v8695 = vpop.permute.xlu0 %8694
  %8696 = vrot.lane.b32.xlu0 %v8661, 64
  %v8697 = vpop.permute.xlu0 %8696
  %8698 = vrot.lane.b32.xlu0 %v8663, 64
  %v8699 = vpop.permute.xlu0 %8698
  %8700 = vrot.lane.b32.xlu0 %v8665, 64
  %v8701 = vpop.permute.xlu0 %8700
  %8702 = vrot.lane.b32.xlu0 %v8667, 64
  %v8703 = vpop.permute.xlu0 %8702
  %8704 = vrot.lane.b32.xlu0 %v8669, 64
  %v8705 = vpop.permute.xlu0 %8704
  %v8743 = vunpack.c.l.b16 %v7800
  %v8744 = vunpack.c.l.b16 %v7801
  %v8745 = vunpack.c.l.b16 %v7802
  %v8746 = vunpack.c.l.b16 %v7803
  %v8747 = vunpack.c.l.b16 %v7804
  %v8748 = vunpack.c.l.b16 %v7805
  %v8749 = vunpack.c.l.b16 %v7806
  %v8750 = vunpack.c.l.b16 %v7807
  %v8751 = vunpack.c.l.b16 %v7808
  %v8752 = vunpack.c.l.b16 %v7809
  %v8753 = vunpack.c.l.b16 %v7810
  %v8754 = vunpack.c.l.b16 %v7811
  %v8755 = vunpack.c.l.b16 %v7812
  %v8756 = vunpack.c.l.b16 %v7813
  %v8757 = vunpack.c.l.b16 %v7814
  %v8758 = vunpack.c.l.b16 %v7815
  %v8759 = vunpack.c.l.b16 %v7816
  %v8760 = vunpack.c.l.b16 %v7817
  %v8761 = vunpack.c.l.b16 %v7818
  %v8762 = vunpack.c.l.b16 %v7819
  %v8763 = vunpack.c.l.b16 %v7820
  %v8764 = vunpack.c.l.b16 %v7821
  %v8765 = vunpack.c.l.b16 %v7822
  %v8766 = vunpack.c.l.b16 %v7823
  %v8767 = vunpack.c.l.b16 %v7824
  %v8768 = vunpack.c.l.b16 %v7825
  %v8769 = vunpack.c.l.b16 %v7826
  %v8770 = vunpack.c.l.b16 %v7827
  %v8771 = vunpack.c.l.b16 %v7828
  %v8772 = vunpack.c.l.b16 %v7829
  %v8773 = vunpack.c.l.b16 %v7830
  %v8774 = vunpack.c.l.b16 %v7831
  %v8775 = vunpack.c.l.b16 %v7832
  %v8776 = vunpack.c.l.b16 %v7833
  %v8777 = vunpack.c.l.b16 %v7834
  %v8778 = vunpack.c.l.b16 %v7835
  %v8779 = vunpack.c.l.b16 %v7836
  %v8780 = vpack.c.b16 %v8744, %v8743
  %v8781 = vpack.c.b16 %v8746, %v8745
  %v8782 = vpack.c.b16 %v8748, %v8747
  %v8783 = vpack.c.b16 %v8750, %v8749
  %v8784 = vpack.c.b16 %v8752, %v8751
  %v8785 = vpack.c.b16 %v8754, %v8753
  %v8786 = vpack.c.b16 %v8756, %v8755
  %v8787 = vpack.c.b16 %v8758, %v8757
  %v8788 = vpack.c.b16 %v8760, %v8759
  %v8789 = vpack.c.b16 %v8762, %v8761
  %v8790 = vpack.c.b16 %v8764, %v8763
  %v8791 = vpack.c.b16 %v8766, %v8765
  %v8792 = vpack.c.b16 %v8768, %v8767
  %v8793 = vpack.c.b16 %v8770, %v8769
  %v8794 = vpack.c.b16 %v8772, %v8771
  %v8795 = vpack.c.b16 %v8774, %v8773
  %v8796 = vpack.c.b16 %v8776, %v8775
  %v8797 = vpack.c.b16 %v8778, %v8777
  %v8798 = vpack.c.b16 %v8779, %v8779
  %v8800 = vshrl.u32 %v8780, 16
  %v8802 = vrot.slane %v8800, 1
  %v8803 = vshll.u32 %v8780, 16
  %v8805 = vrot.slane %v8803, 2
  %v8806 = vor.u32 %v8802, %v8805
  %v8808 = vshrl.u32 %v8781, 16
  %v8810 = vrot.slane %v8808, 1
  %v8811 = vshll.u32 %v8781, 16
  %v8813 = vrot.slane %v8811, 2
  %v8814 = vor.u32 %v8810, %v8813
  %v8815 = vsel %vm1271, %v8806, %v8814
  %v8817 = vshrl.u32 %v8782, 16
  %v8819 = vrot.slane %v8817, 1
  %v8820 = vshll.u32 %v8782, 16
  %v8822 = vrot.slane %v8820, 2
  %v8823 = vor.u32 %v8819, %v8822
  %v8824 = vsel %vm1271, %v8814, %v8823
  %v8826 = vshrl.u32 %v8783, 16
  %v8828 = vrot.slane %v8826, 1
  %v8829 = vshll.u32 %v8783, 16
  %v8831 = vrot.slane %v8829, 2
  %v8832 = vor.u32 %v8828, %v8831
  %v8833 = vsel %vm1271, %v8823, %v8832
  %v8835 = vshrl.u32 %v8784, 16
  %v8837 = vrot.slane %v8835, 1
  %v8838 = vshll.u32 %v8784, 16
  %v8840 = vrot.slane %v8838, 2
  %v8841 = vor.u32 %v8837, %v8840
  %v8842 = vsel %vm1271, %v8832, %v8841
  %v8844 = vshrl.u32 %v8785, 16
  %v8846 = vrot.slane %v8844, 1
  %v8847 = vshll.u32 %v8785, 16
  %v8849 = vrot.slane %v8847, 2
  %v8850 = vor.u32 %v8846, %v8849
  %v8851 = vsel %vm1271, %v8841, %v8850
  %v8853 = vshrl.u32 %v8786, 16
  %v8855 = vrot.slane %v8853, 1
  %v8856 = vshll.u32 %v8786, 16
  %v8858 = vrot.slane %v8856, 2
  %v8859 = vor.u32 %v8855, %v8858
  %v8860 = vsel %vm1271, %v8850, %v8859
  %v8862 = vshrl.u32 %v8787, 16
  %v8864 = vrot.slane %v8862, 1
  %v8865 = vshll.u32 %v8787, 16
  %v8867 = vrot.slane %v8865, 2
  %v8868 = vor.u32 %v8864, %v8867
  %v8869 = vsel %vm1271, %v8859, %v8868
  %v8871 = vshrl.u32 %v8788, 16
  %v8873 = vrot.slane %v8871, 1
  %v8874 = vshll.u32 %v8788, 16
  %v8876 = vrot.slane %v8874, 2
  %v8877 = vor.u32 %v8873, %v8876
  %v8878 = vsel %vm1271, %v8868, %v8877
  %v8880 = vshrl.u32 %v8789, 16
  %v8882 = vrot.slane %v8880, 1
  %v8883 = vshll.u32 %v8789, 16
  %v8885 = vrot.slane %v8883, 2
  %v8886 = vor.u32 %v8882, %v8885
  %v8887 = vsel %vm1271, %v8877, %v8886
  %v8889 = vshrl.u32 %v8790, 16
  %v8891 = vrot.slane %v8889, 1
  %v8892 = vshll.u32 %v8790, 16
  %v8894 = vrot.slane %v8892, 2
  %v8895 = vor.u32 %v8891, %v8894
  %v8896 = vsel %vm1271, %v8886, %v8895
  %v8898 = vshrl.u32 %v8791, 16
  %v8900 = vrot.slane %v8898, 1
  %v8901 = vshll.u32 %v8791, 16
  %v8903 = vrot.slane %v8901, 2
  %v8904 = vor.u32 %v8900, %v8903
  %v8905 = vsel %vm1271, %v8895, %v8904
  %v8907 = vshrl.u32 %v8792, 16
  %v8909 = vrot.slane %v8907, 1
  %v8910 = vshll.u32 %v8792, 16
  %v8912 = vrot.slane %v8910, 2
  %v8913 = vor.u32 %v8909, %v8912
  %v8914 = vsel %vm1271, %v8904, %v8913
  %v8916 = vshrl.u32 %v8793, 16
  %v8918 = vrot.slane %v8916, 1
  %v8919 = vshll.u32 %v8793, 16
  %v8921 = vrot.slane %v8919, 2
  %v8922 = vor.u32 %v8918, %v8921
  %v8923 = vsel %vm1271, %v8913, %v8922
  %v8925 = vshrl.u32 %v8794, 16
  %v8927 = vrot.slane %v8925, 1
  %v8928 = vshll.u32 %v8794, 16
  %v8930 = vrot.slane %v8928, 2
  %v8931 = vor.u32 %v8927, %v8930
  %v8932 = vsel %vm1271, %v8922, %v8931
  %v8934 = vshrl.u32 %v8795, 16
  %v8936 = vrot.slane %v8934, 1
  %v8937 = vshll.u32 %v8795, 16
  %v8939 = vrot.slane %v8937, 2
  %v8940 = vor.u32 %v8936, %v8939
  %v8941 = vsel %vm1271, %v8931, %v8940
  %v8943 = vshrl.u32 %v8796, 16
  %v8945 = vrot.slane %v8943, 1
  %v8946 = vshll.u32 %v8796, 16
  %v8948 = vrot.slane %v8946, 2
  %v8949 = vor.u32 %v8945, %v8948
  %v8950 = vsel %vm1271, %v8940, %v8949
  %v8952 = vshrl.u32 %v8797, 16
  %v8954 = vrot.slane %v8952, 1
  %v8955 = vshll.u32 %v8797, 16
  %v8957 = vrot.slane %v8955, 2
  %v8958 = vor.u32 %v8954, %v8957
  %v8959 = vsel %vm1271, %v8949, %v8958
  %v8961 = vshrl.u32 %v8798, 16
  %v8963 = vrot.slane %v8961, 1
  %v8964 = vshll.u32 %v8798, 16
  %v8966 = vrot.slane %v8964, 2
  %v8967 = vor.u32 %v8963, %v8966
  %v8968 = vsel %vm1271, %v8958, %v8967
  %8969 = vrot.lane.b32.xlu0 %v8815, 72
  %v8970 = vpop.permute.xlu0 %8969
  %8971 = vrot.lane.b32.xlu0 %v8824, 72
  %v8972 = vpop.permute.xlu0 %8971
  %8973 = vrot.lane.b32.xlu0 %v8833, 72
  %v8974 = vpop.permute.xlu0 %8973
  %8975 = vrot.lane.b32.xlu0 %v8842, 72
  %v8976 = vpop.permute.xlu0 %8975
  %8977 = vrot.lane.b32.xlu0 %v8851, 72
  %v8978 = vpop.permute.xlu0 %8977
  %8979 = vrot.lane.b32.xlu0 %v8860, 72
  %v8980 = vpop.permute.xlu0 %8979
  %8981 = vrot.lane.b32.xlu0 %v8869, 72
  %v8982 = vpop.permute.xlu0 %8981
  %8983 = vrot.lane.b32.xlu0 %v8878, 72
  %v8984 = vpop.permute.xlu0 %8983
  %8985 = vrot.lane.b32.xlu0 %v8887, 72
  %v8986 = vpop.permute.xlu0 %8985
  %8987 = vrot.lane.b32.xlu0 %v8896, 72
  %v8988 = vpop.permute.xlu0 %8987
  %8989 = vrot.lane.b32.xlu0 %v8905, 72
  %v8990 = vpop.permute.xlu0 %8989
  %8991 = vrot.lane.b32.xlu0 %v8914, 72
  %v8992 = vpop.permute.xlu0 %8991
  %8993 = vrot.lane.b32.xlu0 %v8923, 72
  %v8994 = vpop.permute.xlu0 %8993
  %8995 = vrot.lane.b32.xlu0 %v8932, 72
  %v8996 = vpop.permute.xlu0 %8995
  %8997 = vrot.lane.b32.xlu0 %v8941, 72
  %v8998 = vpop.permute.xlu0 %8997
  %8999 = vrot.lane.b32.xlu0 %v8950, 72
  %v9000 = vpop.permute.xlu0 %8999
  %9001 = vrot.lane.b32.xlu0 %v8959, 72
  %v9002 = vpop.permute.xlu0 %9001
  %9003 = vrot.lane.b32.xlu0 %v8968, 72
  %v9004 = vpop.permute.xlu0 %9003
  %v9006 = vsel %vm1772, %v7909, %v8079
  %v9008 = vsel %vm1772, %v7910, %v8081
  %v9010 = vsel %vm1772, %v7911, %v8083
  %v9012 = vsel %vm1772, %v7912, %v8085
  %v9014 = vsel %vm1772, %v7913, %v8087
  %v9016 = vsel %vm1772, %v7914, %v8089
  %v9018 = vsel %vm1772, %v7915, %v8091
  %v9020 = vsel %vm1772, %v7916, %v8093
  %v9022 = vsel %vm1772, %v7917, %v8095
  %v9024 = vsel %vm1772, %v7918, %v8097
  %v9026 = vsel %vm1772, %v7919, %v8099
  %v9028 = vsel %vm1772, %v7920, %v8101
  %v9030 = vsel %vm1772, %v7921, %v8103
  %v9032 = vsel %vm1772, %v7922, %v8105
  %v9034 = vsel %vm1772, %v7923, %v8107
  %v9036 = vsel %vm1772, %v7924, %v8109
  %v9038 = vsel %vm1772, %v7925, %v8111
  %v9040 = vsel %vm1772, %v7926, %v8113
  %v9042 = vsel %vm1846, %v9006, %v8155
  %v9044 = vsel %vm1846, %v9008, %v8157
  %v9046 = vsel %vm1846, %v9010, %v8159
  %v9048 = vsel %vm1846, %v9012, %v8161
  %v9050 = vsel %vm1846, %v9014, %v8163
  %v9052 = vsel %vm1846, %v9016, %v8165
  %v9054 = vsel %vm1846, %v9018, %v8167
  %v9056 = vsel %vm1846, %v9020, %v8169
  %v9058 = vsel %vm1846, %v9022, %v8171
  %v9060 = vsel %vm1846, %v9024, %v8173
  %v9062 = vsel %vm1846, %v9026, %v8175
  %v9064 = vsel %vm1846, %v9028, %v8177
  %v9066 = vsel %vm1846, %v9030, %v8179
  %v9068 = vsel %vm1846, %v9032, %v8181
  %v9070 = vsel %vm1846, %v9034, %v8183
  %v9072 = vsel %vm1846, %v9036, %v8185
  %v9074 = vsel %vm1846, %v9038, %v8187
  %v9076 = vsel %vm1846, %v9040, %v8189
  %v9078 = vsel %vm1920, %v9042, %v8208
  %v9080 = vsel %vm1920, %v9044, %v8210
  %v9082 = vsel %vm1920, %v9046, %v8212
  %v9084 = vsel %vm1920, %v9048, %v8214
  %v9086 = vsel %vm1920, %v9050, %v8216
  %v9088 = vsel %vm1920, %v9052, %v8218
  %v9090 = vsel %vm1920, %v9054, %v8220
  %v9092 = vsel %vm1920, %v9056, %v8222
  %v9094 = vsel %vm1920, %v9058, %v8224
  %v9096 = vsel %vm1920, %v9060, %v8226
  %v9098 = vsel %vm1920, %v9062, %v8228
  %v9100 = vsel %vm1920, %v9064, %v8230
  %v9102 = vsel %vm1920, %v9066, %v8232
  %v9104 = vsel %vm1920, %v9068, %v8234
  %v9106 = vsel %vm1920, %v9070, %v8236
  %v9108 = vsel %vm1920, %v9072, %v8238
  %v9110 = vsel %vm1920, %v9074, %v8240
  %v9112 = vsel %vm1920, %v9076, %v8242
  %v9114 = vsel %vm1994, %v9078, %v8337
  %v9116 = vsel %vm1994, %v9080, %v8339
  %v9118 = vsel %vm1994, %v9082, %v8341
  %v9120 = vsel %vm1994, %v9084, %v8343
  %v9122 = vsel %vm1994, %v9086, %v8345
  %v9124 = vsel %vm1994, %v9088, %v8347
  %v9126 = vsel %vm1994, %v9090, %v8349
  %v9128 = vsel %vm1994, %v9092, %v8351
  %v9130 = vsel %vm1994, %v9094, %v8353
  %v9132 = vsel %vm1994, %v9096, %v8355
  %v9134 = vsel %vm1994, %v9098, %v8357
  %v9136 = vsel %vm1994, %v9100, %v8359
  %v9138 = vsel %vm1994, %v9102, %v8361
  %v9140 = vsel %vm1994, %v9104, %v8363
  %v9142 = vsel %vm1994, %v9106, %v8365
  %v9144 = vsel %vm1994, %v9108, %v8367
  %v9146 = vsel %vm1994, %v9110, %v8369
  %v9148 = vsel %vm1994, %v9112, %v8371
  %v9150 = vsel %vm4430, %v9114, %v8413
  %v9152 = vsel %vm4430, %v9116, %v8415
  %v9154 = vsel %vm4430, %v9118, %v8417
  %v9156 = vsel %vm4430, %v9120, %v8419
  %v9158 = vsel %vm4430, %v9122, %v8421
  %v9160 = vsel %vm4430, %v9124, %v8423
  %v9162 = vsel %vm4430, %v9126, %v8425
  %v9164 = vsel %vm4430, %v9128, %v8427
  %v9166 = vsel %vm4430, %v9130, %v8429
  %v9168 = vsel %vm4430, %v9132, %v8431
  %v9170 = vsel %vm4430, %v9134, %v8433
  %v9172 = vsel %vm4430, %v9136, %v8435
  %v9174 = vsel %vm4430, %v9138, %v8437
  %v9176 = vsel %vm4430, %v9140, %v8439
  %v9178 = vsel %vm4430, %v9142, %v8441
  %v9180 = vsel %vm4430, %v9144, %v8443
  %v9182 = vsel %vm4430, %v9146, %v8445
  %v9184 = vsel %vm4430, %v9148, %v8447
  %v9186 = vsel %vm4467, %v9150, %v8466
  %v9188 = vsel %vm4467, %v9152, %v8468
  %v9190 = vsel %vm4467, %v9154, %v8470
  %v9192 = vsel %vm4467, %v9156, %v8472
  %v9194 = vsel %vm4467, %v9158, %v8474
  %v9196 = vsel %vm4467, %v9160, %v8476
  %v9198 = vsel %vm4467, %v9162, %v8478
  %v9200 = vsel %vm4467, %v9164, %v8480
  %v9202 = vsel %vm4467, %v9166, %v8482
  %v9204 = vsel %vm4467, %v9168, %v8484
  %v9206 = vsel %vm4467, %v9170, %v8486
  %v9208 = vsel %vm4467, %v9172, %v8488
  %v9210 = vsel %vm4467, %v9174, %v8490
  %v9212 = vsel %vm4467, %v9176, %v8492
  %v9214 = vsel %vm4467, %v9178, %v8494
  %v9216 = vsel %vm4467, %v9180, %v8496
  %v9218 = vsel %vm4467, %v9182, %v8498
  %v9220 = vsel %vm4467, %v9184, %v8500
  %v9222 = vsel %vm4504, %v9186, %v8595
  %v9224 = vsel %vm4504, %v9188, %v8597
  %v9226 = vsel %vm4504, %v9190, %v8599
  %v9228 = vsel %vm4504, %v9192, %v8601
  %v9230 = vsel %vm4504, %v9194, %v8603
  %v9232 = vsel %vm4504, %v9196, %v8605
  %v9234 = vsel %vm4504, %v9198, %v8607
  %v9236 = vsel %vm4504, %v9200, %v8609
  %v9238 = vsel %vm4504, %v9202, %v8611
  %v9240 = vsel %vm4504, %v9204, %v8613
  %v9242 = vsel %vm4504, %v9206, %v8615
  %v9244 = vsel %vm4504, %v9208, %v8617
  %v9246 = vsel %vm4504, %v9210, %v8619
  %v9248 = vsel %vm4504, %v9212, %v8621
  %v9250 = vsel %vm4504, %v9214, %v8623
  %v9252 = vsel %vm4504, %v9216, %v8625
  %v9254 = vsel %vm4504, %v9218, %v8627
  %v9256 = vsel %vm4504, %v9220, %v8629
  %v9258 = vsel %vm4541, %v9222, %v8671
  %v9260 = vsel %vm4541, %v9224, %v8673
  %v9262 = vsel %vm4541, %v9226, %v8675
  %v9264 = vsel %vm4541, %v9228, %v8677
  %v9266 = vsel %vm4541, %v9230, %v8679
  %v9268 = vsel %vm4541, %v9232, %v8681
  %v9270 = vsel %vm4541, %v9234, %v8683
  %v9272 = vsel %vm4541, %v9236, %v8685
  %v9274 = vsel %vm4541, %v9238, %v8687
  %v9276 = vsel %vm4541, %v9240, %v8689
  %v9278 = vsel %vm4541, %v9242, %v8691
  %v9280 = vsel %vm4541, %v9244, %v8693
  %v9282 = vsel %vm4541, %v9246, %v8695
  %v9284 = vsel %vm4541, %v9248, %v8697
  %v9286 = vsel %vm4541, %v9250, %v8699
  %v9288 = vsel %vm4541, %v9252, %v8701
  %v9290 = vsel %vm4541, %v9254, %v8703
  %v9292 = vsel %vm4541, %v9256, %v8705
  %v9294 = vsel %vm4578, %v9258, %v8970
  %v9296 = vsel %vm4578, %v9260, %v8972
  %v9298 = vsel %vm4578, %v9262, %v8974
  %v9300 = vsel %vm4578, %v9264, %v8976
  %v9302 = vsel %vm4578, %v9266, %v8978
  %v9304 = vsel %vm4578, %v9268, %v8980
  %v9306 = vsel %vm4578, %v9270, %v8982
  %v9308 = vsel %vm4578, %v9272, %v8984
  %v9310 = vsel %vm4578, %v9274, %v8986
  %v9312 = vsel %vm4578, %v9276, %v8988
  %v9314 = vsel %vm4578, %v9278, %v8990
  %v9316 = vsel %vm4578, %v9280, %v8992
  %v9318 = vsel %vm4578, %v9282, %v8994
  %v9320 = vsel %vm4578, %v9284, %v8996
  %v9322 = vsel %vm4578, %v9286, %v8998
  %v9324 = vsel %vm4578, %v9288, %v9000
  %v9326 = vsel %vm4578, %v9290, %v9002
  %v9328 = vsel %vm4578, %v9292, %v9004
  %v9329 = vsel %vm4644, %v9294, 0
  %v9331 = vsel %vm4644, %v9296, 0
  %v9333 = vsel %vm4644, %v9298, 0
  %v9335 = vsel %vm4644, %v9300, 0
  %v9337 = vsel %vm4644, %v9302, 0
  %v9339 = vsel %vm4644, %v9304, 0
  %v9341 = vsel %vm4644, %v9306, 0
  %v9343 = vsel %vm4644, %v9308, 0
  %v9345 = vsel %vm4644, %v9310, 0
  %v9347 = vsel %vm4644, %v9312, 0
  %v9349 = vsel %vm4644, %v9314, 0
  %v9351 = vsel %vm4644, %v9316, 0
  %v9353 = vsel %vm4644, %v9318, 0
  %v9355 = vsel %vm4644, %v9320, 0
  %v9357 = vsel %vm4644, %v9322, 0
  %v9359 = vsel %vm4644, %v9324, 0
  %v9361 = vsel %vm4644, %v9326, 0
  %v9363 = vsel %vm4644, %v9328, 0
  %9365 = vmatpush.bf16.msra.mxu0 0
  %9366 = vmatpush.bf16.msra.mxu0 0
  %9367 = vmatpush.bf16.msra.mxu0 0
  %9368 = vmatpush.bf16.msra.mxu0 %v4683
  %9369 = vmatpush.bf16.msra.mxu0 %v4638
  %9370 = vmatpush.bf16.msra.mxu0 %v4637
  %9371 = vmatpush.bf16.msra.mxu0 %v4636
  %9372 = vmatpush.bf16.msra.mxu0 %v4635
  %9373 = vmatmul.bf16.gmra.mxu0 %v9329
  %v9374 = vpop.f32.mrf.mxu0
  %v9375 = vadd.f32 0.0, %v9374
  %v9376 = vpop.f32.mrf.mxu0
  %v9377 = vadd.f32 0.0, %v9376
  %9378 = vmatmul.bf16.gmra.mxu0 %v9331
  %v9379 = vpop.f32.mrf.mxu0
  %v9380 = vadd.f32 0.0, %v9379
  %v9381 = vpop.f32.mrf.mxu0
  %v9382 = vadd.f32 0.0, %v9381
  %9383 = vmatmul.bf16.gmra.mxu0 %v9333
  %v9384 = vpop.f32.mrf.mxu0
  %v9385 = vadd.f32 0.0, %v9384
  %v9386 = vpop.f32.mrf.mxu0
  %v9387 = vadd.f32 0.0, %v9386
  %9388 = vmatmul.bf16.gmra.mxu0 %v9335
  %v9389 = vpop.f32.mrf.mxu0
  %v9390 = vadd.f32 0.0, %v9389
  %v9391 = vpop.f32.mrf.mxu0
  %v9392 = vadd.f32 0.0, %v9391
  %9393 = vmatmul.bf16.gmra.mxu0 %v9337
  %v9394 = vpop.f32.mrf.mxu0
  %v9395 = vadd.f32 0.0, %v9394
  %v9396 = vpop.f32.mrf.mxu0
  %v9397 = vadd.f32 0.0, %v9396
  %9398 = vmatmul.bf16.gmra.mxu0 %v9339
  %v9399 = vpop.f32.mrf.mxu0
  %v9400 = vadd.f32 0.0, %v9399
  %v9401 = vpop.f32.mrf.mxu0
  %v9402 = vadd.f32 0.0, %v9401
  %9403 = vmatmul.bf16.gmra.mxu0 %v9341
  %v9404 = vpop.f32.mrf.mxu0
  %v9405 = vadd.f32 0.0, %v9404
  %v9406 = vpop.f32.mrf.mxu0
  %v9407 = vadd.f32 0.0, %v9406
  %9408 = vmatmul.bf16.gmra.mxu0 %v9343
  %v9409 = vpop.f32.mrf.mxu0
  %v9410 = vadd.f32 0.0, %v9409
  %v9411 = vpop.f32.mrf.mxu0
  %v9412 = vadd.f32 0.0, %v9411
  %9413 = vmatmul.bf16.gmra.mxu0 %v9345
  %v9414 = vpop.f32.mrf.mxu0
  %v9415 = vadd.f32 0.0, %v9414
  %v9416 = vpop.f32.mrf.mxu0
  %v9417 = vadd.f32 0.0, %v9416
  %9418 = vmatmul.bf16.gmra.mxu0 %v9347
  %v9419 = vpop.f32.mrf.mxu0
  %v9420 = vadd.f32 0.0, %v9419
  %v9421 = vpop.f32.mrf.mxu0
  %v9422 = vadd.f32 0.0, %v9421
  %9423 = vmatmul.bf16.gmra.mxu0 %v9349
  %v9424 = vpop.f32.mrf.mxu0
  %v9425 = vadd.f32 0.0, %v9424
  %v9426 = vpop.f32.mrf.mxu0
  %v9427 = vadd.f32 0.0, %v9426
  %9428 = vmatmul.bf16.gmra.mxu0 %v9351
  %v9429 = vpop.f32.mrf.mxu0
  %v9430 = vadd.f32 0.0, %v9429
  %v9431 = vpop.f32.mrf.mxu0
  %v9432 = vadd.f32 0.0, %v9431
  %9433 = vmatmul.bf16.gmra.mxu0 %v9353
  %v9434 = vpop.f32.mrf.mxu0
  %v9435 = vadd.f32 0.0, %v9434
  %v9436 = vpop.f32.mrf.mxu0
  %v9437 = vadd.f32 0.0, %v9436
  %9438 = vmatmul.bf16.gmra.mxu0 %v9355
  %v9439 = vpop.f32.mrf.mxu0
  %v9440 = vadd.f32 0.0, %v9439
  %v9441 = vpop.f32.mrf.mxu0
  %v9442 = vadd.f32 0.0, %v9441
  %9443 = vmatmul.bf16.gmra.mxu0 %v9357
  %v9444 = vpop.f32.mrf.mxu0
  %v9445 = vadd.f32 0.0, %v9444
  %v9446 = vpop.f32.mrf.mxu0
  %v9447 = vadd.f32 0.0, %v9446
  %9448 = vmatmul.bf16.gmra.mxu0 %v9359
  %v9449 = vpop.f32.mrf.mxu0
  %v9450 = vadd.f32 0.0, %v9449
  %v9451 = vpop.f32.mrf.mxu0
  %v9452 = vadd.f32 0.0, %v9451
  %9453 = vmatmul.bf16.gmra.mxu0 %v9361
  %v9454 = vpop.f32.mrf.mxu0
  %v9455 = vadd.f32 0.0, %v9454
  %v9456 = vpop.f32.mrf.mxu0
  %v9457 = vadd.f32 0.0, %v9456
  %9458 = vmatmul.bf16.gmra.mxu0 %v9363
  %v9459 = vpop.f32.mrf.mxu0
  %v9460 = vadd.f32 0.0, %v9459
  %v9461 = vpop.f32.mrf.mxu0
  %v9462 = vadd.f32 0.0, %v9461
  %9463 = vdwg.mxu0
  %s9464 = scalar_lea.vmem %s7, 256
  %9465 = vst.msk [vmem:[%s9464] sm:$0xff] %vm1772, %v9375
  %9466 = vst.msk [vmem:[%s9464 + $0x8] sm:$0xff] %vm1772, %v9377
  %s9467 = scalar_lea.vmem %s7, 272
  %9468 = vst.msk [vmem:[%s9467 - $0x2] sm:$0xfc] %vm4787, %v9380
  %9469 = vst.msk [vmem:[%s9467 + $0x6] sm:$0xff] %vm1772, %v9382
  %9470 = vst.msk [vmem:[%s9467 + $0xe] sm:$0x3] %vm2372, %v9385
  %s9471 = scalar_lea.vmem %s7, 288
  %9472 = vst.msk [vmem:[%s9471 - $0x4] sm:$0xf0] %vm4792, %v9385
  %9473 = vst.msk [vmem:[%s9471 + $0x4] sm:$0xff] %vm1772, %v9387
  %9474 = vst.msk [vmem:[%s9471 + $0xc] sm:$0xf] %vm56, %v9390
  %s9475 = scalar_lea.vmem %s7, 304
  %9476 = vst.msk [vmem:[%s9475 - $0x6] sm:$0xc0] %vm4797, %v9390
  %9477 = vst.msk [vmem:[%s9475 + $0x2] sm:$0xff] %vm1772, %v9392
  %9478 = vst.msk [vmem:[%s9475 + $0xa] sm:$0x3f] %vm4800, %v9395
  %s9479 = scalar_lea.vmem %s7, 320
  %9480 = vst.msk [vmem:[%s9479] sm:$0xff] %vm1772, %v9397
  %9481 = vst.msk [vmem:[%s9479 + $0x8] sm:$0xff] %vm1772, %v9400
  %s9482 = scalar_lea.vmem %s7, 336
  %9483 = vst.msk [vmem:[%s9482 - $0x2] sm:$0xfc] %vm4787, %v9402
  %9484 = vst.msk [vmem:[%s9482 + $0x6] sm:$0xff] %vm1772, %v9405
  %9485 = vst.msk [vmem:[%s9482 + $0xe] sm:$0x3] %vm2372, %v9407
  %s9486 = scalar_lea.vmem %s7, 352
  %9487 = vst.msk [vmem:[%s9486 - $0x4] sm:$0xf0] %vm4792, %v9407
  %9488 = vst.msk [vmem:[%s9486 + $0x4] sm:$0xff] %vm1772, %v9410
  %9489 = vst.msk [vmem:[%s9486 + $0xc] sm:$0xf] %vm56, %v9412
  %s9490 = scalar_lea.vmem %s7, 368
  %9491 = vst.msk [vmem:[%s9490 - $0x6] sm:$0xc0] %vm4797, %v9412
  %9492 = vst.msk [vmem:[%s9490 + $0x2] sm:$0xff] %vm1772, %v9415
  %9493 = vst.msk [vmem:[%s9490 + $0xa] sm:$0x3f] %vm4800, %v9417
  %s9494 = scalar_lea.vmem %s7, 384
  %9495 = vst.msk [vmem:[%s9494] sm:$0xff] %vm1772, %v9420
  %9496 = vst.msk [vmem:[%s9494 + $0x8] sm:$0xff] %vm1772, %v9422
  %s9497 = scalar_lea.vmem %s7, 400
  %9498 = vst.msk [vmem:[%s9497 - $0x2] sm:$0xfc] %vm4787, %v9425
  %9499 = vst.msk [vmem:[%s9497 + $0x6] sm:$0xff] %vm1772, %v9427
  %9500 = vst.msk [vmem:[%s9497 + $0xe] sm:$0x3] %vm2372, %v9430
  %s9501 = scalar_lea.vmem %s7, 416
  %9502 = vst.msk [vmem:[%s9501 - $0x4] sm:$0xf0] %vm4792, %v9430
  %9503 = vst.msk [vmem:[%s9501 + $0x4] sm:$0xff] %vm1772, %v9432
  %9504 = vst.msk [vmem:[%s9501 + $0xc] sm:$0xf] %vm56, %v9435
  %s9505 = scalar_lea.vmem %s7, 432
  %9506 = vst.msk [vmem:[%s9505 - $0x6] sm:$0xc0] %vm4797, %v9435
  %9507 = vst.msk [vmem:[%s9505 + $0x2] sm:$0xff] %vm1772, %v9437
  %9508 = vst.msk [vmem:[%s9505 + $0xa] sm:$0x3f] %vm4800, %v9440
  %s9509 = scalar_lea.vmem %s7, 448
  %9510 = vst.msk [vmem:[%s9509] sm:$0xff] %vm1772, %v9442
  %9511 = vst.msk [vmem:[%s9509 + $0x8] sm:$0xff] %vm1772, %v9445
  %s9512 = scalar_lea.vmem %s7, 464
  %9513 = vst.msk [vmem:[%s9512 - $0x2] sm:$0xfc] %vm4787, %v9447
  %9514 = vst.msk [vmem:[%s9512 + $0x6] sm:$0xff] %vm1772, %v9450
  %9515 = vst.msk [vmem:[%s9512 + $0xe] sm:$0x3] %vm2372, %v9452
  %s9516 = scalar_lea.vmem %s7, 480
  %9517 = vst.msk [vmem:[%s9516 - $0x4] sm:$0xf0] %vm4792, %v9452
  %9518 = vst.msk [vmem:[%s9516 + $0x4] sm:$0xff] %vm1772, %v9455
  %9519 = vst.msk [vmem:[%s9516 + $0xc] sm:$0xf] %vm56, %v9457
  %s9520 = scalar_lea.vmem %s7, 496
  %9521 = vst.msk [vmem:[%s9520 - $0x6] sm:$0xc0] %vm4797, %v9457
  %9522 = vst.msk [vmem:[%s9520 + $0x2] sm:$0xff] %vm1772, %v9460
  %9523 = vst.msk [vmem:[%s9520 + $0xa] sm:$0x3f] %vm4800, %v9462
  // Predicated region
  $region30: #{tpu_custom_call.1} parent=0 // pred_check
    _
  $region31: #{tpu_custom_call.1} parent=0 // pred_check_branch
    %9525 = sbr.rel (0) target = $region33
  $region32: #{tpu_custom_call.1} parent=0 // pred_region
    _
  $region33: #{tpu_custom_call.1} parent=0 // pred_fallthru
    _
  // Predicated region
  $region34: #{tpu_custom_call.1} parent=0 // pred_check
    _
  $region35: #{tpu_custom_call.1} parent=0 // pred_check_branch
    %9527 = sbr.rel (0) target = $region37
  $region36: #{tpu_custom_call.1} parent=0 // pred_region
    _
  $region37: #{tpu_custom_call.1} parent=0 // pred_fallthru
    _

</llo_original>
